<compile_context>
chip_gen: v5e
topology: v5e:2x2
jax: 0.10.0
libtpu: 0.0.40
codegen_flags: <defaults>
</compile_context>

<pallas_src>
import functools

import jax
import jax.numpy as jnp
from jax import lax
from jax.experimental import pallas as pl
from jax.experimental.pallas import tpu as pltpu


def _basic_block_kernel(xpad_ref, w1_ref, s1_ref, b1_ref, w2_ref, s2_ref, b2_ref,
                        mask_ref, o_ref, ypad_ref, patches_ref, *, H, W, Cp):
    Wp = W + 2                      # padded row width
    M = H * Wp                      # rows of the output slab (incl. 2 junk cols/row)
    Nr = ypad_ref.shape[0]          # rows of the padded slabs (incl. slack)
    TOP = Wp + 1                    # slab store offset into the padded buffer
    BOT = (H + 1) * Wp + 1          # first row after the slab store
    mm_dtype = patches_ref.dtype

    mask = mask_ref[...]            # (M, 1) f32: 1.0 on valid cols, 0.0 on pad cols

    def im2col(src_ref):
        # 9 taps of a 3x3 'same' conv == 9 contiguous row-slices of the flat
        # padded slab; copy each into its lane-aligned 128-wide column block.
        for dh in range(3):
            for dw in range(3):
                j = dh * 3 + dw
                off = dh * Wp + dw
                patches_ref[:, j * Cp:(j + 1) * Cp] = (
                    src_ref[off:off + M, :].astype(mm_dtype))

    # ---- conv1 (single deep-K MXU call) + bn1 + relu ----
    im2col(xpad_ref)
    h1 = jnp.dot(patches_ref[...], w1_ref[...], preferred_element_type=jnp.float32)
    h1 = jnp.maximum(h1 * s1_ref[...] + b1_ref[...], 0.0) * mask

    # Refresh only the small halo regions the slab store below does not cover.
    ypad_ref[0:TOP, :] = jnp.zeros((TOP, Cp), jnp.float32)
    ypad_ref[BOT:Nr, :] = jnp.zeros((Nr - BOT, Cp), jnp.float32)
    # The slab's junk columns land exactly on padding positions and were masked
    # to zero above, so one contiguous store preserves zero-padding semantics.
    ypad_ref[TOP:TOP + M, :] = h1

    # ---- conv2 + bn2 + residual add + relu ----
    im2col(ypad_ref)
    h2 = jnp.dot(patches_ref[...], w2_ref[...], preferred_element_type=jnp.float32)
    h2 = h2 * s2_ref[...] + b2_ref[...]
    res = xpad_ref[TOP:TOP + M, :].astype(jnp.float32)   # residual = interior of x
    o_ref[...] = jnp.maximum(h2 + res, 0.0).astype(o_ref.dtype)


def basic_block_pallas(x_nchw, w1_oihw, bn1, w2_oihw, bn2, eps=1e-5,
                       matmul_dtype=jnp.float32):
    """Fused BasicBlock (stride=1, no downsample). x_nchw: (N, C, H, W) float32."""
    N, C, H, W = x_nchw.shape
    P = w1_oihw.shape[0]
    assert C == P, "stride=1 / no-downsample BasicBlock requires inplanes == planes"

    Cp = max(128, ((C + 127) // 128) * 128)       # lane-dense channel padding
    Wp = W + 2
    M = H * Wp
    Nr = (H + 2) * Wp + 8                         # + slack rows for tap offsets

    # ---- glue: layout conversion, channel/spatial zero-padding, BN folding ----
    x = jnp.transpose(x_nchw, (0, 2, 3, 1))                          # NHWC
    x = jnp.pad(x, ((0, 0), (1, 1), (1, 1), (0, Cp - C)))            # spatial+chan pad
    xpad = x.reshape(N, (H + 2) * Wp, Cp)
    xpad = jnp.pad(xpad, ((0, 0), (0, Nr - (H + 2) * Wp), (0, 0)))   # slack rows

    def prep_w(w):
        w = jnp.transpose(w, (2, 3, 1, 0))                           # (3,3,Cin,Cout)
        w = jnp.pad(w, ((0, 0), (0, 0), (0, Cp - C), (0, Cp - P)))
        return w.reshape(9 * Cp, Cp).astype(matmul_dtype)            # (9*Cp, Cp)

    w1 = prep_w(w1_oihw)
    w2 = prep_w(w2_oihw)

    def fold_bn(bn):
        gamma, beta, mean, var = bn
        scale = gamma / jnp.sqrt(var + eps)
        bias = beta - mean * scale
        scale = jnp.pad(scale, (0, Cp - P)).reshape(1, Cp).astype(jnp.float32)
        bias = jnp.pad(bias, (0, Cp - P)).reshape(1, Cp).astype(jnp.float32)
        return scale, bias

    s1, b1 = fold_bn(bn1)
    s2, b2 = fold_bn(bn2)

    # column-validity mask for the output slab (junk cols w in {W, W+1} per row)
    col = jnp.arange(M, dtype=jnp.int32) % Wp
    mask = (col < W).astype(jnp.float32).reshape(M, 1)

    kernel = functools.partial(_basic_block_kernel, H=H, W=W, Cp=Cp)
    itemsize = jnp.dtype(matmul_dtype).itemsize

    out_slab = pl.pallas_call(
        kernel,
        out_shape=jax.ShapeDtypeStruct((N, M, Cp), x_nchw.dtype),
        grid_spec=pltpu.PrefetchScalarGridSpec(
            num_scalar_prefetch=0,
            grid=(N,),
            in_specs=[
                pl.BlockSpec((pl.Squeezed(), Nr, Cp), lambda n: (n, 0, 0)),
                pl.BlockSpec((9 * Cp, Cp), lambda n: (0, 0)),
                pl.BlockSpec((1, Cp), lambda n: (0, 0)),
                pl.BlockSpec((1, Cp), lambda n: (0, 0)),
                pl.BlockSpec((9 * Cp, Cp), lambda n: (0, 0)),
                pl.BlockSpec((1, Cp), lambda n: (0, 0)),
                pl.BlockSpec((1, Cp), lambda n: (0, 0)),
                pl.BlockSpec((M, 1), lambda n: (0, 0)),
            ],
            out_specs=pl.BlockSpec((pl.Squeezed(), M, Cp), lambda n: (n, 0, 0)),
            scratch_shapes=[
                pltpu.VMEM((Nr, Cp), jnp.float32),        # conv2 input slab
                pltpu.VMEM((M, 9 * Cp), matmul_dtype),    # shared im2col patches
            ],
        ),
        compiler_params=pltpu.CompilerParams(
            dimension_semantics=("parallel",)),
        cost_estimate=pl.CostEstimate(
            flops=2 * 2 * N * M * 9 * Cp * Cp,
            transcendentals=0,
            bytes_accessed=(4 * N * Nr * Cp + 4 * N * M * Cp
                            + 2 * 9 * Cp * Cp * itemsize + 4 * 4 * Cp + 4 * M)),
    )(xpad, w1, s1, b1, w2, s2, b2, mask)

    # drop junk columns / padded channels, back to NCHW
    out = out_slab.reshape(N, H, Wp, Cp)[:, :, :W, :C]
    return jnp.transpose(out, (0, 3, 1, 2))


def basic_block_reference(x, w1, bn1, w2, bn2, eps=1e-5):
    """Pure-JAX NCHW reference for verification."""
    def bn_apply(o, bn):
        gamma, beta, mean, var = bn
        scale = (gamma / jnp.sqrt(var + eps)).reshape(1, -1, 1, 1)
        bias = (beta - mean * gamma / jnp.sqrt(var + eps)).reshape(1, -1, 1, 1)
        return o * scale + bias

    dn = ("NCHW", "OIHW", "NCHW")
    out = lax.conv_general_dilated(x, w1, (1, 1), "SAME", dimension_numbers=dn)
    out = jnp.maximum(bn_apply(out, bn1), 0.0)
    out = lax.conv_general_dilated(out, w2, (1, 1), "SAME", dimension_numbers=dn)
    out = bn_apply(out, bn2)
    return jnp.maximum(out + x, 0.0)


if __name__ == "__main__":
    N, C, H, W = 2, 8, 16, 16     # inplanes = planes = 8, stride = 1
    key = jax.random.PRNGKey(0)
    ks = jax.random.split(key, 8)

    x = jax.random.normal(ks[0], (N, C, H, W), jnp.float32)
    w1 = jax.random.normal(ks[1], (C, C, 3, 3), jnp.float32) * 0.1
    w2 = jax.random.normal(ks[2], (C, C, 3, 3), jnp.float32) * 0.1
    # deterministic, non-trivial BatchNorm parameters (eval-mode running stats)
    bn1 = (1.0 + 0.1 * jax.random.normal(ks[3], (C,), jnp.float32),   # gamma
           0.1 * jax.random.normal(ks[4], (C,), jnp.float32),         # beta
           0.05 * jnp.arange(C, dtype=jnp.float32),                   # running_mean
           1.0 + 0.02 * jnp.arange(C, dtype=jnp.float32))             # running_var
    bn2 = (1.0 + 0.1 * jax.random.normal(ks[5], (C,), jnp.float32),
           0.1 * jax.random.normal(ks[6], (C,), jnp.float32),
           -0.03 * jnp.arange(C, dtype=jnp.float32),
           1.0 + 0.01 * jnp.arange(C, dtype=jnp.float32))

    ref = basic_block_reference(x, w1, bn1, w2, bn2)

    # f32 matmul path (bit-tight check)
    out_f32 = basic_block_pallas(x, w1, bn1, w2, bn2, matmul_dtype=jnp.float32)
    jax.block_until_ready(out_f32)
    assert out_f32.shape == ref.shape == (N, C, H, W)
    assert jnp.max(jnp.abs(out_f32 - ref)) < 1e-4, "f32 mismatch vs reference"

    # bf16 matmul-operand path (MXU-native on v5e/v6e/v7x; BN/ReLU/residual stay f32)
    out_bf16 = basic_block_pallas(x, w1, bn1, w2, bn2, matmul_dtype=jnp.bfloat16)
    jax.block_until_ready(out_bf16)
    assert jnp.max(jnp.abs(out_bf16 - ref)) < 1e-1, "bf16 mismatch vs reference"

    print("KERNEL_OK")
</pallas_src>

<mosaic_0001>
module attributes {stable_mosaic.version = 11 : i64} {
  func.func @_basic_block_kernel(%arg0: i32, %arg1: memref<1x332x128xf32, #tpu.memory_space<vmem>>, %arg2: memref<1152x128xf32, #tpu.memory_space<vmem>>, %arg3: memref<1x128xf32, #tpu.memory_space<vmem>>, %arg4: memref<1x128xf32, #tpu.memory_space<vmem>>, %arg5: memref<1152x128xf32, #tpu.memory_space<vmem>>, %arg6: memref<1x128xf32, #tpu.memory_space<vmem>>, %arg7: memref<1x128xf32, #tpu.memory_space<vmem>>, %arg8: memref<288x1xf32, #tpu.memory_space<vmem>>, %arg9: memref<1x288x128xf32, #tpu.memory_space<vmem>>, %arg10: memref<332x128xf32, #tpu.memory_space<vmem>>, %arg11: memref<288x1152xf32, #tpu.memory_space<vmem>>) attributes {dimension_semantics = [#tpu.dimension_semantics<parallel>], iteration_bounds = array<i64: 2>, scalar_prefetch = 0 : i64, scratch_operands = 2 : i64, tpu.core_type = #tpu.core_type<tc>, window_params = [{transform_indices = @transform_0, window_bounds = array<i64: 1, 332, 128>}, {pipeline_mode = #tpu.pipeline_mode<synchronous>, transform_indices = @transform_1, window_bounds = array<i64: 1152, 128>}, {pipeline_mode = #tpu.pipeline_mode<synchronous>, transform_indices = @transform_2, window_bounds = array<i64: 1, 128>}, {pipeline_mode = #tpu.pipeline_mode<synchronous>, transform_indices = @transform_3, window_bounds = array<i64: 1, 128>}, {pipeline_mode = #tpu.pipeline_mode<synchronous>, transform_indices = @transform_4, window_bounds = array<i64: 1152, 128>}, {pipeline_mode = #tpu.pipeline_mode<synchronous>, transform_indices = @transform_5, window_bounds = array<i64: 1, 128>}, {pipeline_mode = #tpu.pipeline_mode<synchronous>, transform_indices = @transform_6, window_bounds = array<i64: 1, 128>}, {pipeline_mode = #tpu.pipeline_mode<synchronous>, transform_indices = @transform_7, window_bounds = array<i64: 288, 1>}, {transform_indices = @transform_8, window_bounds = array<i64: 1, 288, 128>}]} {
    %c0 = arith.constant 0 : index
    %c0_0 = arith.constant 0 : index
    %0 = vector.load %arg8[%c0, %c0_0] : memref<288x1xf32, #tpu.memory_space<vmem>>, vector<288x1xf32>
    %c0_1 = arith.constant 0 : index
    %c0_2 = arith.constant 0 : index
    %c0_3 = arith.constant 0 : index
    %1 = vector.load %arg1[%c0_1, %c0_2, %c0_3] : memref<1x332x128xf32, #tpu.memory_space<vmem>>, vector<1x288x128xf32>
    %2 = vector.shape_cast %1 : vector<1x288x128xf32> to vector<288x128xf32>
    %c0_4 = arith.constant 0 : index
    %c0_5 = arith.constant 0 : index
    %3 = vector.load %arg11[%c0_4, %c0_5] : memref<288x1152xf32, #tpu.memory_space<vmem>>, vector<288x128xf32>
    tpu.vector_store %arg11[%c0_4, %c0_5], %2 {strides = array<i32>} : memref<288x1152xf32, #tpu.memory_space<vmem>>, vector<288x128xf32>,
    %c0_6 = arith.constant 0 : index
    %c1 = arith.constant 1 : index
    %c0_7 = arith.constant 0 : index
    %4 = vector.load %arg1[%c0_6, %c1, %c0_7] : memref<1x332x128xf32, #tpu.memory_space<vmem>>, vector<1x288x128xf32>
    %5 = vector.shape_cast %4 : vector<1x288x128xf32> to vector<288x128xf32>
    %c0_8 = arith.constant 0 : index
    %c128 = arith.constant 128 : index
    %6 = vector.load %arg11[%c0_8, %c128] : memref<288x1152xf32, #tpu.memory_space<vmem>>, vector<288x128xf32>
    tpu.vector_store %arg11[%c0_8, %c128], %5 {strides = array<i32>} : memref<288x1152xf32, #tpu.memory_space<vmem>>, vector<288x128xf32>,
    %c0_9 = arith.constant 0 : index
    %c2 = arith.constant 2 : index
    %c0_10 = arith.constant 0 : index
    %7 = vector.load %arg1[%c0_9, %c2, %c0_10] : memref<1x332x128xf32, #tpu.memory_space<vmem>>, vector<1x288x128xf32>
    %8 = vector.shape_cast %7 : vector<1x288x128xf32> to vector<288x128xf32>
    %c0_11 = arith.constant 0 : index
    %c256 = arith.constant 256 : index
    %9 = vector.load %arg11[%c0_11, %c256] : memref<288x1152xf32, #tpu.memory_space<vmem>>, vector<288x128xf32>
    tpu.vector_store %arg11[%c0_11, %c256], %8 {strides = array<i32>} : memref<288x1152xf32, #tpu.memory_space<vmem>>, vector<288x128xf32>,
    %c0_12 = arith.constant 0 : index
    %c18 = arith.constant 18 : index
    %c0_13 = arith.constant 0 : index
    %10 = vector.load %arg1[%c0_12, %c18, %c0_13] : memref<1x332x128xf32, #tpu.memory_space<vmem>>, vector<1x288x128xf32>
    %11 = vector.shape_cast %10 : vector<1x288x128xf32> to vector<288x128xf32>
    %c0_14 = arith.constant 0 : index
    %c384 = arith.constant 384 : index
    %12 = vector.load %arg11[%c0_14, %c384] : memref<288x1152xf32, #tpu.memory_space<vmem>>, vector<288x128xf32>
    tpu.vector_store %arg11[%c0_14, %c384], %11 {strides = array<i32>} : memref<288x1152xf32, #tpu.memory_space<vmem>>, vector<288x128xf32>,
    %c0_15 = arith.constant 0 : index
    %c19 = arith.constant 19 : index
    %c0_16 = arith.constant 0 : index
    %13 = vector.load %arg1[%c0_15, %c19, %c0_16] : memref<1x332x128xf32, #tpu.memory_space<vmem>>, vector<1x288x128xf32>
    %14 = vector.shape_cast %13 : vector<1x288x128xf32> to vector<288x128xf32>
    %c0_17 = arith.constant 0 : index
    %c512 = arith.constant 512 : index
    %15 = vector.load %arg11[%c0_17, %c512] : memref<288x1152xf32, #tpu.memory_space<vmem>>, vector<288x128xf32>
    tpu.vector_store %arg11[%c0_17, %c512], %14 {strides = array<i32>} : memref<288x1152xf32, #tpu.memory_space<vmem>>, vector<288x128xf32>,
    %c0_18 = arith.constant 0 : index
    %c20 = arith.constant 20 : index
    %c0_19 = arith.constant 0 : index
    %16 = vector.load %arg1[%c0_18, %c20, %c0_19] : memref<1x332x128xf32, #tpu.memory_space<vmem>>, vector<1x288x128xf32>
    %17 = vector.shape_cast %16 : vector<1x288x128xf32> to vector<288x128xf32>
    %c0_20 = arith.constant 0 : index
    %c640 = arith.constant 640 : index
    %18 = vector.load %arg11[%c0_20, %c640] : memref<288x1152xf32, #tpu.memory_space<vmem>>, vector<288x128xf32>
    tpu.vector_store %arg11[%c0_20, %c640], %17 {strides = array<i32>} : memref<288x1152xf32, #tpu.memory_space<vmem>>, vector<288x128xf32>,
    %c0_21 = arith.constant 0 : index
    %c36 = arith.constant 36 : index
    %c0_22 = arith.constant 0 : index
    %19 = vector.load %arg1[%c0_21, %c36, %c0_22] : memref<1x332x128xf32, #tpu.memory_space<vmem>>, vector<1x288x128xf32>
    %20 = vector.shape_cast %19 : vector<1x288x128xf32> to vector<288x128xf32>
    %c0_23 = arith.constant 0 : index
    %c768 = arith.constant 768 : index
    %21 = vector.load %arg11[%c0_23, %c768] : memref<288x1152xf32, #tpu.memory_space<vmem>>, vector<288x128xf32>
    tpu.vector_store %arg11[%c0_23, %c768], %20 {strides = array<i32>} : memref<288x1152xf32, #tpu.memory_space<vmem>>, vector<288x128xf32>,
    %c0_24 = arith.constant 0 : index
    %c37 = arith.constant 37 : index
    %c0_25 = arith.constant 0 : index
    %22 = vector.load %arg1[%c0_24, %c37, %c0_25] : memref<1x332x128xf32, #tpu.memory_space<vmem>>, vector<1x288x128xf32>
    %23 = vector.shape_cast %22 : vector<1x288x128xf32> to vector<288x128xf32>
    %c0_26 = arith.constant 0 : index
    %c896 = arith.constant 896 : index
    %24 = vector.load %arg11[%c0_26, %c896] : memref<288x1152xf32, #tpu.memory_space<vmem>>, vector<288x128xf32>
    tpu.vector_store %arg11[%c0_26, %c896], %23 {strides = array<i32>} : memref<288x1152xf32, #tpu.memory_space<vmem>>, vector<288x128xf32>,
    %c0_27 = arith.constant 0 : index
    %c38 = arith.constant 38 : index
    %c0_28 = arith.constant 0 : index
    %25 = vector.load %arg1[%c0_27, %c38, %c0_28] : memref<1x332x128xf32, #tpu.memory_space<vmem>>, vector<1x288x128xf32>
    %26 = vector.shape_cast %25 : vector<1x288x128xf32> to vector<288x128xf32>
    %c0_29 = arith.constant 0 : index
    %c1024 = arith.constant 1024 : index
    %27 = vector.load %arg11[%c0_29, %c1024] : memref<288x1152xf32, #tpu.memory_space<vmem>>, vector<288x128xf32>
    tpu.vector_store %arg11[%c0_29, %c1024], %26 {strides = array<i32>} : memref<288x1152xf32, #tpu.memory_space<vmem>>, vector<288x128xf32>,
    %c0_30 = arith.constant 0 : index
    %c0_31 = arith.constant 0 : index
    %28 = vector.load %arg11[%c0_30, %c0_31] : memref<288x1152xf32, #tpu.memory_space<vmem>>, vector<288x1152xf32>
    %c0_32 = arith.constant 0 : index
    %c0_33 = arith.constant 0 : index
    %29 = vector.load %arg2[%c0_32, %c0_33] : memref<1152x128xf32, #tpu.memory_space<vmem>>, vector<1152x128xf32>
    %cst = arith.constant dense<0.000000e+00> : vector<288x128xf32>
    %30 = tpu.matmul %28, %29, %cst {dimension_numbers = #tpu.dot_dimension_numbers<[1], [0], [0], [1], [0, 0, 1, 1], [], []>} : vector<288x1152xf32>, vector<1152x128xf32>, vector<288x128xf32> -> vector<288x128xf32>
    %c0_34 = arith.constant 0 : index
    %c0_35 = arith.constant 0 : index
    %31 = vector.load %arg3[%c0_34, %c0_35] : memref<1x128xf32, #tpu.memory_space<vmem>>, vector<1x128xf32>
    %32 = vector.broadcast %31 : vector<1x128xf32> to vector<288x128xf32>
    %33 = arith.mulf %30, %32 : vector<288x128xf32>
    %c0_36 = arith.constant 0 : index
    %c0_37 = arith.constant 0 : index
    %34 = vector.load %arg4[%c0_36, %c0_37] : memref<1x128xf32, #tpu.memory_space<vmem>>, vector<1x128xf32>
    %35 = vector.broadcast %34 : vector<1x128xf32> to vector<288x128xf32>
    %36 = arith.addf %33, %35 : vector<288x128xf32>
    %cst_38 = arith.constant 0.000000e+00 : f32
    %37 = vector.broadcast %cst_38 : f32 to vector<288x128xf32>
    %38 = arith.maximumf %36, %37 : vector<288x128xf32>
    %39 = vector.broadcast %0 : vector<288x1xf32> to vector<288x128xf32>
    %40 = arith.mulf %38, %39 : vector<288x128xf32>
    %cst_39 = arith.constant 0.000000e+00 : f32
    %41 = vector.broadcast %cst_39 : f32 to vector<19x128xf32>
    %c0_40 = arith.constant 0 : index
    %c0_41 = arith.constant 0 : index
    %42 = vector.load %arg10[%c0_40, %c0_41] : memref<332x128xf32, #tpu.memory_space<vmem>>, vector<19x128xf32>
    tpu.vector_store %arg10[%c0_40, %c0_41], %41 {strides = array<i32>} : memref<332x128xf32, #tpu.memory_space<vmem>>, vector<19x128xf32>,
    %cst_42 = arith.constant 0.000000e+00 : f32
    %43 = vector.broadcast %cst_42 : f32 to vector<25x128xf32>
    %c307 = arith.constant 307 : index
    %c0_43 = arith.constant 0 : index
    %44 = vector.load %arg10[%c307, %c0_43] : memref<332x128xf32, #tpu.memory_space<vmem>>, vector<25x128xf32>
    tpu.vector_store %arg10[%c307, %c0_43], %43 {strides = array<i32>} : memref<332x128xf32, #tpu.memory_space<vmem>>, vector<25x128xf32>,
    %c19_44 = arith.constant 19 : index
    %c0_45 = arith.constant 0 : index
    %45 = vector.load %arg10[%c19_44, %c0_45] : memref<332x128xf32, #tpu.memory_space<vmem>>, vector<288x128xf32>
    tpu.vector_store %arg10[%c19_44, %c0_45], %40 {strides = array<i32>} : memref<332x128xf32, #tpu.memory_space<vmem>>, vector<288x128xf32>,
    %c0_46 = arith.constant 0 : index
    %c0_47 = arith.constant 0 : index
    %46 = vector.load %arg10[%c0_46, %c0_47] : memref<332x128xf32, #tpu.memory_space<vmem>>, vector<288x128xf32>
    %c0_48 = arith.constant 0 : index
    %c0_49 = arith.constant 0 : index
    %47 = vector.load %arg11[%c0_48, %c0_49] : memref<288x1152xf32, #tpu.memory_space<vmem>>, vector<288x128xf32>
    tpu.vector_store %arg11[%c0_48, %c0_49], %46 {strides = array<i32>} : memref<288x1152xf32, #tpu.memory_space<vmem>>, vector<288x128xf32>,
    %c1_50 = arith.constant 1 : index
    %c0_51 = arith.constant 0 : index
    %48 = vector.load %arg10[%c1_50, %c0_51] : memref<332x128xf32, #tpu.memory_space<vmem>>, vector<288x128xf32>
    %c0_52 = arith.constant 0 : index
    %c128_53 = arith.constant 128 : index
    %49 = vector.load %arg11[%c0_52, %c128_53] : memref<288x1152xf32, #tpu.memory_space<vmem>>, vector<288x128xf32>
    tpu.vector_store %arg11[%c0_52, %c128_53], %48 {strides = array<i32>} : memref<288x1152xf32, #tpu.memory_space<vmem>>, vector<288x128xf32>,
    %c2_54 = arith.constant 2 : index
    %c0_55 = arith.constant 0 : index
    %50 = vector.load %arg10[%c2_54, %c0_55] : memref<332x128xf32, #tpu.memory_space<vmem>>, vector<288x128xf32>
    %c0_56 = arith.constant 0 : index
    %c256_57 = arith.constant 256 : index
    %51 = vector.load %arg11[%c0_56, %c256_57] : memref<288x1152xf32, #tpu.memory_space<vmem>>, vector<288x128xf32>
    tpu.vector_store %arg11[%c0_56, %c256_57], %50 {strides = array<i32>} : memref<288x1152xf32, #tpu.memory_space<vmem>>, vector<288x128xf32>,
    %c18_58 = arith.constant 18 : index
    %c0_59 = arith.constant 0 : index
    %52 = vector.load %arg10[%c18_58, %c0_59] : memref<332x128xf32, #tpu.memory_space<vmem>>, vector<288x128xf32>
    %c0_60 = arith.constant 0 : index
    %c384_61 = arith.constant 384 : index
    %53 = vector.load %arg11[%c0_60, %c384_61] : memref<288x1152xf32, #tpu.memory_space<vmem>>, vector<288x128xf32>
    tpu.vector_store %arg11[%c0_60, %c384_61], %52 {strides = array<i32>} : memref<288x1152xf32, #tpu.memory_space<vmem>>, vector<288x128xf32>,
    %c19_62 = arith.constant 19 : index
    %c0_63 = arith.constant 0 : index
    %54 = vector.load %arg10[%c19_62, %c0_63] : memref<332x128xf32, #tpu.memory_space<vmem>>, vector<288x128xf32>
    %c0_64 = arith.constant 0 : index
    %c512_65 = arith.constant 512 : index
    %55 = vector.load %arg11[%c0_64, %c512_65] : memref<288x1152xf32, #tpu.memory_space<vmem>>, vector<288x128xf32>
    tpu.vector_store %arg11[%c0_64, %c512_65], %54 {strides = array<i32>} : memref<288x1152xf32, #tpu.memory_space<vmem>>, vector<288x128xf32>,
    %c20_66 = arith.constant 20 : index
    %c0_67 = arith.constant 0 : index
    %56 = vector.load %arg10[%c20_66, %c0_67] : memref<332x128xf32, #tpu.memory_space<vmem>>, vector<288x128xf32>
    %c0_68 = arith.constant 0 : index
    %c640_69 = arith.constant 640 : index
    %57 = vector.load %arg11[%c0_68, %c640_69] : memref<288x1152xf32, #tpu.memory_space<vmem>>, vector<288x128xf32>
    tpu.vector_store %arg11[%c0_68, %c640_69], %56 {strides = array<i32>} : memref<288x1152xf32, #tpu.memory_space<vmem>>, vector<288x128xf32>,
    %c36_70 = arith.constant 36 : index
    %c0_71 = arith.constant 0 : index
    %58 = vector.load %arg10[%c36_70, %c0_71] : memref<332x128xf32, #tpu.memory_space<vmem>>, vector<288x128xf32>
    %c0_72 = arith.constant 0 : index
    %c768_73 = arith.constant 768 : index
    %59 = vector.load %arg11[%c0_72, %c768_73] : memref<288x1152xf32, #tpu.memory_space<vmem>>, vector<288x128xf32>
    tpu.vector_store %arg11[%c0_72, %c768_73], %58 {strides = array<i32>} : memref<288x1152xf32, #tpu.memory_space<vmem>>, vector<288x128xf32>,
    %c37_74 = arith.constant 37 : index
    %c0_75 = arith.constant 0 : index
    %60 = vector.load %arg10[%c37_74, %c0_75] : memref<332x128xf32, #tpu.memory_space<vmem>>, vector<288x128xf32>
    %c0_76 = arith.constant 0 : index
    %c896_77 = arith.constant 896 : index
    %61 = vector.load %arg11[%c0_76, %c896_77] : memref<288x1152xf32, #tpu.memory_space<vmem>>, vector<288x128xf32>
    tpu.vector_store %arg11[%c0_76, %c896_77], %60 {strides = array<i32>} : memref<288x1152xf32, #tpu.memory_space<vmem>>, vector<288x128xf32>,
    %c38_78 = arith.constant 38 : index
    %c0_79 = arith.constant 0 : index
    %62 = vector.load %arg10[%c38_78, %c0_79] : memref<332x128xf32, #tpu.memory_space<vmem>>, vector<288x128xf32>
    %c0_80 = arith.constant 0 : index
    %c1024_81 = arith.constant 1024 : index
    %63 = vector.load %arg11[%c0_80, %c1024_81] : memref<288x1152xf32, #tpu.memory_space<vmem>>, vector<288x128xf32>
    tpu.vector_store %arg11[%c0_80, %c1024_81], %62 {strides = array<i32>} : memref<288x1152xf32, #tpu.memory_space<vmem>>, vector<288x128xf32>,
    %c0_82 = arith.constant 0 : index
    %c0_83 = arith.constant 0 : index
    %64 = vector.load %arg11[%c0_82, %c0_83] : memref<288x1152xf32, #tpu.memory_space<vmem>>, vector<288x1152xf32>
    %c0_84 = arith.constant 0 : index
    %c0_85 = arith.constant 0 : index
    %65 = vector.load %arg5[%c0_84, %c0_85] : memref<1152x128xf32, #tpu.memory_space<vmem>>, vector<1152x128xf32>
    %cst_86 = arith.constant dense<0.000000e+00> : vector<288x128xf32>
    %66 = tpu.matmul %64, %65, %cst_86 {dimension_numbers = #tpu.dot_dimension_numbers<[1], [0], [0], [1], [0, 0, 1, 1], [], []>} : vector<288x1152xf32>, vector<1152x128xf32>, vector<288x128xf32> -> vector<288x128xf32>
    %c0_87 = arith.constant 0 : index
    %c0_88 = arith.constant 0 : index
    %67 = vector.load %arg6[%c0_87, %c0_88] : memref<1x128xf32, #tpu.memory_space<vmem>>, vector<1x128xf32>
    %68 = vector.broadcast %67 : vector<1x128xf32> to vector<288x128xf32>
    %69 = arith.mulf %66, %68 : vector<288x128xf32>
    %c0_89 = arith.constant 0 : index
    %c0_90 = arith.constant 0 : index
    %70 = vector.load %arg7[%c0_89, %c0_90] : memref<1x128xf32, #tpu.memory_space<vmem>>, vector<1x128xf32>
    %71 = vector.broadcast %70 : vector<1x128xf32> to vector<288x128xf32>
    %72 = arith.addf %69, %71 : vector<288x128xf32>
    %c0_91 = arith.constant 0 : index
    %c19_92 = arith.constant 19 : index
    %c0_93 = arith.constant 0 : index
    %73 = vector.load %arg1[%c0_91, %c19_92, %c0_93] : memref<1x332x128xf32, #tpu.memory_space<vmem>>, vector<1x288x128xf32>
    %74 = vector.shape_cast %73 : vector<1x288x128xf32> to vector<288x128xf32>
    %75 = arith.addf %72, %74 : vector<288x128xf32>
    %cst_94 = arith.constant 0.000000e+00 : f32
    %76 = vector.broadcast %cst_94 : f32 to vector<288x128xf32>
    %77 = arith.maximumf %75, %76 : vector<288x128xf32>
    %c0_95 = arith.constant 0 : index
    %c0_96 = arith.constant 0 : index
    %c0_97 = arith.constant 0 : index
    %78 = vector.load %arg9[%c0_95, %c0_96, %c0_97] : memref<1x288x128xf32, #tpu.memory_space<vmem>>, vector<1x288x128xf32>
    %79 = vector.shape_cast %78 : vector<1x288x128xf32> to vector<288x128xf32>
    %80 = vector.shape_cast %77 : vector<288x128xf32> to vector<1x288x128xf32>
    tpu.vector_store %arg9[%c0_95, %c0_96, %c0_97], %80 {strides = array<i32>} : memref<1x288x128xf32, #tpu.memory_space<vmem>>, vector<1x288x128xf32>,
    return
  }
  func.func @transform_0(%arg0: i32) -> (i32, i32, i32) {
    %c0_i32 = arith.constant 0 : i32
    %c0_i32_0 = arith.constant 0 : i32
    %c0_i32_1 = arith.constant 0 : i32
    return %arg0, %c0_i32, %c0_i32_0 : i32, i32, i32
  }
  func.func @transform_1(%arg0: i32) -> (i32, i32) {
    %c0_i32 = arith.constant 0 : i32
    %c0_i32_0 = arith.constant 0 : i32
    %c0_i32_1 = arith.constant 0 : i32
    return %c0_i32, %c0_i32_0 : i32, i32
  }
  func.func @transform_2(%arg0: i32) -> (i32, i32) {
    %c0_i32 = arith.constant 0 : i32
    %c0_i32_0 = arith.constant 0 : i32
    %c0_i32_1 = arith.constant 0 : i32
    return %c0_i32, %c0_i32_0 : i32, i32
  }
  func.func @transform_3(%arg0: i32) -> (i32, i32) {
    %c0_i32 = arith.constant 0 : i32
    %c0_i32_0 = arith.constant 0 : i32
    %c0_i32_1 = arith.constant 0 : i32
    return %c0_i32, %c0_i32_0 : i32, i32
  }
  func.func @transform_4(%arg0: i32) -> (i32, i32) {
    %c0_i32 = arith.constant 0 : i32
    %c0_i32_0 = arith.constant 0 : i32
    %c0_i32_1 = arith.constant 0 : i32
    return %c0_i32, %c0_i32_0 : i32, i32
  }
  func.func @transform_5(%arg0: i32) -> (i32, i32) {
    %c0_i32 = arith.constant 0 : i32
    %c0_i32_0 = arith.constant 0 : i32
    %c0_i32_1 = arith.constant 0 : i32
    return %c0_i32, %c0_i32_0 : i32, i32
  }
  func.func @transform_6(%arg0: i32) -> (i32, i32) {
    %c0_i32 = arith.constant 0 : i32
    %c0_i32_0 = arith.constant 0 : i32
    %c0_i32_1 = arith.constant 0 : i32
    return %c0_i32, %c0_i32_0 : i32, i32
  }
  func.func @transform_7(%arg0: i32) -> (i32, i32) {
    %c0_i32 = arith.constant 0 : i32
    %c0_i32_0 = arith.constant 0 : i32
    %c0_i32_1 = arith.constant 0 : i32
    return %c0_i32, %c0_i32_0 : i32, i32
  }
  func.func @transform_8(%arg0: i32) -> (i32, i32, i32) {
    %c0_i32 = arith.constant 0 : i32
    %c0_i32_0 = arith.constant 0 : i32
    %c0_i32_1 = arith.constant 0 : i32
    return %arg0, %c0_i32, %c0_i32_0 : i32, i32, i32
  }
}

</mosaic_0001>

<llo_original>
// kernel: tpu_custom_call.1
$region0: #{tpu_custom_call.1}
  #allocation0 [shape = 'u32[]', space=smem, size = 0x4, offset = 0x4, fixed_abs, tag = 'smem constant byte address 0x4 - core index']
  #allocation1 [shape = 'u32[72,128]{1,0:T(1,128)}', space=vmem, size = 0x9000, scoped, tag = 'internal scratch']
  #allocation2 [shape = 'f32[332,128]{1,0:T(8,128)}', space=vmem, size = 0x2a000, scoped, tag = 'scratch operand']
  #allocation3 [shape = 'f32[288,1152]{1,0:T(8,128)}', space=vmem, size = 0x144000, scoped, tag = 'scratch operand']
  %s0 = inlined_call_operand.vmem [shape: f32[2,332,128], index: 0, kind: input, shape index: {}]
  %s1 = inlined_call_operand.vmem [shape: f32[1152,128], index: 1, kind: input, shape index: {}]
  %s2 = inlined_call_operand.vmem [shape: f32[1,128], index: 2, kind: input, shape index: {}]
  %s3 = inlined_call_operand.vmem [shape: f32[1,128], index: 3, kind: input, shape index: {}]
  %s4 = inlined_call_operand.hbm [shape: f32[1152,128], index: 4, kind: input, shape index: {}]
  %s5 = inlined_call_operand.vmem [shape: f32[1,128], index: 5, kind: input, shape index: {}]
  %s6 = inlined_call_operand.vmem [shape: f32[1,128], index: 6, kind: input, shape index: {}]
  %s7 = inlined_call_operand.vmem [shape: f32[288,1], index: 7, kind: input, shape index: {}]
  %s8 = inlined_call_operand.hbm [shape: f32[2,288,128], index: 8, kind: output, shape index: {}]
  %s9 = sld [smem:[#allocation0]]
  $region69: #{tpu_custom_call.1} parent=0
    _
  %s11 = ssub.s32 1, %s9
  %s12 = scalar_select 0, %s11, %s9
  $region1: #{tpu_custom_call.1} parent=0
    #allocation4 [shape = 'u8[589824]{0}', space=vmem, size = 0x90000, scoped, tag = 'input window, operand 4, single buffered']
    #allocation5 [shape = 's32[2]{0}', space=sflag, size = 0x8, scoped, tag = 'scoped memory for tpu_custom_call.1']
    #allocation6 [shape = 's32[2]{0}', space=sflag, size = 0x8, scoped, tag = 'scoped memory for tpu_custom_call.1']
    #allocation7 [shape = 'u8[294912]{0}', space=vmem, size = 0x48000, scoped, tag = 'output window, operand 0']
    %13 = vsyncpa [#allocation5], 0
    %14 = vsyncpa [#allocation6], 0
    %s15 = scalar_lea.sflag [#allocation6], 1
    %16 = vsyncpa %s15, 0
    loop: start=0, step=1, limit=4
    $region2: #{tpu_custom_call.1} parent=1 // loop_pre_header
      _
    $region3: #{tpu_custom_call.1} parent=1 // loop_header
      %s18 = sphi 0, %s22
      %p19 = scmp.ge.s32.totalorder %s18, 4
      %s28 = sphi 0, %s30
      %s31 = sphi 0, %s28
      %s32 = sphi 0, %s31
      %s48 = sphi 0, %s32
      %s52 = sphi 0, %s52
      %s54 = sphi 0, %s52
      %s55 = sphi 0, %s54
      %s69 = sphi 0, %s55
      %s73 = sphi 0, %s73
      %s75 = sphi 0, %s73
      %s76 = sphi 0, %s75
      %s90 = sphi 0, %s76
      %s94 = sphi 0, %s94
      %s96 = sphi 0, %s94
      %s97 = sphi 0, %s96
      %s111 = sphi 0, %s97
      %s115 = sphi 0, %s115
      %s117 = sphi 0, %s115
      %s118 = sphi 0, %s117
      %s132 = sphi 0, %s118
      %s136 = sphi 0, %s136
      %s138 = sphi 0, %s136
      %s139 = sphi 0, %s138
      %s153 = sphi 0, %s139
      %s157 = sphi 0, %s157
      %s159 = sphi 0, %s157
      %s160 = sphi 0, %s159
      %s174 = sphi 0, %s160
      %s178 = sphi 0, %s178
      %s180 = sphi 0, %s178
      %s181 = sphi 0, %s180
      %s195 = sphi 0, %s181
      %s201 = sphi 0, %s203
      %s204 = sphi 0, %s201
      %s205 = sphi 0, %s204
      %s221 = sphi 0, %s205
    $region4: #{tpu_custom_call.1} parent=1 // loop_header_branch
      %21 = sbr.rel (%p19) target = $region8
    $region5: #{tpu_custom_call.1} parent=1 // loop_body
      %s23 = ssub.s32 %s18, 1
      %s24 = ssub.s32 %s18, 2
      %s25 = sadd.s32 %s18, 1
      %s26 = ssub.s32 %s18, %s25
      %p27 = scmp.eq.s32.totalorder %s26, 0
      %s29 = sadd.s32 %s28, 1
      %s30 = scalar_select %p27, %s28, %s29
      %p33 = pneg %p27
      %p34 = scmp.eq.s32.totalorder %s18, 1
      %p35 = por %p33, %p34
      %p36 = scmp.ne.s32.totalorder %s28, %s31
      %p37 = scmp.eq.s32.totalorder %s18, 0
      %p38 = por %p36, %p37
      %p39 = scmp.ne.s32.totalorder %s28, %s31
      %p40 = scmp.eq.s32.totalorder %s23, 1
      %p41 = por %p39, %p40
      %p42 = scmp.ne.s32.totalorder %s31, %s32
      %p43 = scmp.eq.s32.totalorder %s23, 0
      %p44 = por %p42, %p43
      %p45 = scmp.ne.s32.totalorder %s31, %s32
      %p46 = scmp.eq.s32.totalorder %s24, 1
      %p47 = por %p45, %p46
      %p49 = scmp.ne.s32.totalorder %s32, %s48
      %p50 = scmp.eq.s32.totalorder %s24, 0
      %p51 = por %p49, %p50
      %s53 = sadd.s32 %s52, 1
      %p56 = scmp.eq.s32.totalorder %s18, 1
      %p57 = scmp.ne.s32.totalorder %s52, %s54
      %p58 = scmp.eq.s32.totalorder %s18, 0
      %p59 = por %p57, %p58
      %p60 = scmp.ne.s32.totalorder %s52, %s54
      %p61 = scmp.eq.s32.totalorder %s23, 1
      %p62 = por %p60, %p61
      %p63 = scmp.ne.s32.totalorder %s54, %s55
      %p64 = scmp.eq.s32.totalorder %s23, 0
      %p65 = por %p63, %p64
      %p66 = scmp.ne.s32.totalorder %s54, %s55
      %p67 = scmp.eq.s32.totalorder %s24, 1
      %p68 = por %p66, %p67
      %p70 = scmp.ne.s32.totalorder %s55, %s69
      %p71 = scmp.eq.s32.totalorder %s24, 0
      %p72 = por %p70, %p71
      %s74 = sadd.s32 %s73, 1
      %p77 = scmp.eq.s32.totalorder %s18, 1
      %p78 = scmp.ne.s32.totalorder %s73, %s75
      %p79 = scmp.eq.s32.totalorder %s18, 0
      %p80 = por %p78, %p79
      %p81 = scmp.ne.s32.totalorder %s73, %s75
      %p82 = scmp.eq.s32.totalorder %s23, 1
      %p83 = por %p81, %p82
      %p84 = scmp.ne.s32.totalorder %s75, %s76
      %p85 = scmp.eq.s32.totalorder %s23, 0
      %p86 = por %p84, %p85
      %p87 = scmp.ne.s32.totalorder %s75, %s76
      %p88 = scmp.eq.s32.totalorder %s24, 1
      %p89 = por %p87, %p88
      %p91 = scmp.ne.s32.totalorder %s76, %s90
      %p92 = scmp.eq.s32.totalorder %s24, 0
      %p93 = por %p91, %p92
      %s95 = sadd.s32 %s94, 1
      %p98 = scmp.eq.s32.totalorder %s18, 1
      %p99 = scmp.ne.s32.totalorder %s94, %s96
      %p100 = scmp.eq.s32.totalorder %s18, 0
      %p101 = por %p99, %p100
      %p102 = scmp.ne.s32.totalorder %s94, %s96
      %p103 = scmp.eq.s32.totalorder %s23, 1
      %p104 = por %p102, %p103
      %p105 = scmp.ne.s32.totalorder %s96, %s97
      %p106 = scmp.eq.s32.totalorder %s23, 0
      %p107 = por %p105, %p106
      %p108 = scmp.ne.s32.totalorder %s96, %s97
      %p109 = scmp.eq.s32.totalorder %s24, 1
      %p110 = por %p108, %p109
      %p112 = scmp.ne.s32.totalorder %s97, %s111
      %p113 = scmp.eq.s32.totalorder %s24, 0
      %p114 = por %p112, %p113
      %s116 = sadd.s32 %s115, 1
      %p119 = scmp.eq.s32.totalorder %s18, 1
      %p120 = scmp.ne.s32.totalorder %s115, %s117
      %p121 = scmp.eq.s32.totalorder %s18, 0
      %p122 = por %p120, %p121
      %p123 = scmp.ne.s32.totalorder %s115, %s117
      %p124 = scmp.eq.s32.totalorder %s23, 1
      %p125 = por %p123, %p124
      %p126 = scmp.ne.s32.totalorder %s117, %s118
      %p127 = scmp.eq.s32.totalorder %s23, 0
      %p128 = por %p126, %p127
      %p129 = scmp.ne.s32.totalorder %s117, %s118
      %p130 = scmp.eq.s32.totalorder %s24, 1
      %p131 = por %p129, %p130
      %p133 = scmp.ne.s32.totalorder %s118, %s132
      %p134 = scmp.eq.s32.totalorder %s24, 0
      %p135 = por %p133, %p134
      %s137 = sadd.s32 %s136, 1
      %p140 = scmp.eq.s32.totalorder %s18, 1
      %p141 = scmp.ne.s32.totalorder %s136, %s138
      %p142 = scmp.eq.s32.totalorder %s18, 0
      %p143 = por %p141, %p142
      %p144 = scmp.ne.s32.totalorder %s136, %s138
      %p145 = scmp.eq.s32.totalorder %s23, 1
      %p146 = por %p144, %p145
      %p147 = scmp.ne.s32.totalorder %s138, %s139
      %p148 = scmp.eq.s32.totalorder %s23, 0
      %p149 = por %p147, %p148
      %p150 = scmp.ne.s32.totalorder %s138, %s139
      %p151 = scmp.eq.s32.totalorder %s24, 1
      %p152 = por %p150, %p151
      %p154 = scmp.ne.s32.totalorder %s139, %s153
      %p155 = scmp.eq.s32.totalorder %s24, 0
      %p156 = por %p154, %p155
      %s158 = sadd.s32 %s157, 1
      %p161 = scmp.eq.s32.totalorder %s18, 1
      %p162 = scmp.ne.s32.totalorder %s157, %s159
      %p163 = scmp.eq.s32.totalorder %s18, 0
      %p164 = por %p162, %p163
      %p165 = scmp.ne.s32.totalorder %s157, %s159
      %p166 = scmp.eq.s32.totalorder %s23, 1
      %p167 = por %p165, %p166
      %p168 = scmp.ne.s32.totalorder %s159, %s160
      %p169 = scmp.eq.s32.totalorder %s23, 0
      %p170 = por %p168, %p169
      %p171 = scmp.ne.s32.totalorder %s159, %s160
      %p172 = scmp.eq.s32.totalorder %s24, 1
      %p173 = por %p171, %p172
      %p175 = scmp.ne.s32.totalorder %s160, %s174
      %p176 = scmp.eq.s32.totalorder %s24, 0
      %p177 = por %p175, %p176
      %s179 = sadd.s32 %s178, 1
      %p182 = scmp.eq.s32.totalorder %s18, 1
      %p183 = scmp.ne.s32.totalorder %s178, %s180
      %p184 = scmp.eq.s32.totalorder %s18, 0
      %p185 = por %p183, %p184
      %p186 = scmp.ne.s32.totalorder %s178, %s180
      %p187 = scmp.eq.s32.totalorder %s23, 1
      %p188 = por %p186, %p187
      %p189 = scmp.ne.s32.totalorder %s180, %s181
      %p190 = scmp.eq.s32.totalorder %s23, 0
      %p191 = por %p189, %p190
      %p192 = scmp.ne.s32.totalorder %s180, %s181
      %p193 = scmp.eq.s32.totalorder %s24, 1
      %p194 = por %p192, %p193
      %p196 = scmp.ne.s32.totalorder %s181, %s195
      %p197 = scmp.eq.s32.totalorder %s24, 0
      %p198 = por %p196, %p197
      %s199 = ssub.s32 %s18, %s25
      %p200 = scmp.eq.s32.totalorder %s199, 0
      %s202 = sadd.s32 %s201, 1
      %s203 = scalar_select %p200, %s201, %s202
      %p206 = pneg %p200
      %p207 = scmp.eq.s32.totalorder %s18, 1
      %p208 = por %p206, %p207
      %p209 = scmp.ne.s32.totalorder %s201, %s204
      %p210 = scmp.eq.s32.totalorder %s18, 0
      %p211 = por %p209, %p210
      %p212 = scmp.ne.s32.totalorder %s201, %s204
      %p213 = scmp.eq.s32.totalorder %s23, 1
      %p214 = por %p212, %p213
      %p215 = scmp.ne.s32.totalorder %s204, %s205
      %p216 = scmp.eq.s32.totalorder %s23, 0
      %p217 = por %p215, %p216
      %p218 = scmp.ne.s32.totalorder %s204, %s205
      %p219 = scmp.eq.s32.totalorder %s24, 1
      %p220 = por %p218, %p219
      %p222 = scmp.ne.s32.totalorder %s205, %s221
      %p223 = scmp.eq.s32.totalorder %s24, 0
      %p224 = por %p222, %p223
      %p225 = scmp.le.s32.totalorder 1, %s18
      %p226 = scmp.lt.s32.totalorder %s18, 3
      %p227 = pnand %p225, %p226
      %p228 = pneg %p227
      // Predicated region
      $region9: #{tpu_custom_call.1} parent=5 // pred_check
        _
      $region10: #{tpu_custom_call.1} parent=5 // pred_check_branch
        %230 = sbr.rel (%p227) target = $region12
      $region11: #{tpu_custom_call.1} parent=5 // pred_region
        %s231 = ssub.s32 %s18, 1
        // Predicated region
        $region13: #{tpu_custom_call.1} parent=11 // pred_check
          %p232 = pneg %p65
        $region14: #{tpu_custom_call.1} parent=11 // pred_check_branch
          %234 = sbr.rel (%p232) target = $region16
        $region15: #{tpu_custom_call.1} parent=11 // pred_region
          _
        $region16: #{tpu_custom_call.1} parent=11 // pred_fallthru
          _
        // Predicated region
        $region17: #{tpu_custom_call.1} parent=11 // pred_check
          %p235 = pneg %p86
        $region18: #{tpu_custom_call.1} parent=11 // pred_check_branch
          %237 = sbr.rel (%p235) target = $region20
        $region19: #{tpu_custom_call.1} parent=11 // pred_region
          _
        $region20: #{tpu_custom_call.1} parent=11 // pred_fallthru
          _
        // Predicated region
        $region21: #{tpu_custom_call.1} parent=11 // pred_check
          %p238 = pneg %p107
        $region22: #{tpu_custom_call.1} parent=11 // pred_check_branch
          %240 = sbr.rel (%p238) target = $region24
        $region23: #{tpu_custom_call.1} parent=11 // pred_region
          _
        $region24: #{tpu_custom_call.1} parent=11 // pred_fallthru
          _
        // Predicated region
        $region25: #{tpu_custom_call.1} parent=11 // pred_check
          %p241 = pneg %p128
        $region26: #{tpu_custom_call.1} parent=11 // pred_check_branch
          %243 = sbr.rel (%p241) target = $region28
        $region27: #{tpu_custom_call.1} parent=11 // pred_region
          %245 = vsyncadd [#allocation5], 0
          %s246 = sshll.u32 %s4, 4
          %s247 = int_to_ptr.hbm [resolvable:$true] %s246
          %s248 = sshll.u32 [#allocation4], 4
          %s249 = int_to_ptr.vmem [resolvable:$true] %s248
          %254 = dma.hbm_to_vmem [thread:$0]  %s247, 18432, %s249, [#allocation5], 128, 128, 8
        $region28: #{tpu_custom_call.1} parent=11 // pred_fallthru
          _
        // Predicated region
        $region29: #{tpu_custom_call.1} parent=11 // pred_check
          %p255 = pneg %p149
        $region30: #{tpu_custom_call.1} parent=11 // pred_check_branch
          %257 = sbr.rel (%p255) target = $region32
        $region31: #{tpu_custom_call.1} parent=11 // pred_region
          _
        $region32: #{tpu_custom_call.1} parent=11 // pred_fallthru
          _
        // Predicated region
        $region33: #{tpu_custom_call.1} parent=11 // pred_check
          %p258 = pneg %p170
        $region34: #{tpu_custom_call.1} parent=11 // pred_check_branch
          %260 = sbr.rel (%p258) target = $region36
        $region35: #{tpu_custom_call.1} parent=11 // pred_region
          _
        $region36: #{tpu_custom_call.1} parent=11 // pred_fallthru
          _
        // Predicated region
        $region37: #{tpu_custom_call.1} parent=11 // pred_check
          %p261 = pneg %p191
        $region38: #{tpu_custom_call.1} parent=11 // pred_check_branch
          %263 = sbr.rel (%p261) target = $region40
        $region39: #{tpu_custom_call.1} parent=11 // pred_region
          _
        $region40: #{tpu_custom_call.1} parent=11 // pred_fallthru
          _
      $region12: #{tpu_custom_call.1} parent=5 // pred_fallthru
        _
      %p264 = scmp.lt.s32.totalorder %s18, 2
      // Predicated region
      $region41: #{tpu_custom_call.1} parent=5 // pred_check
        %p265 = pneg %p264
      $region42: #{tpu_custom_call.1} parent=5 // pred_check_branch
        %267 = sbr.rel (%p265) target = $region44
      $region43: #{tpu_custom_call.1} parent=5 // pred_region
        // Predicated region
        $region45: #{tpu_custom_call.1} parent=43 // pred_check
          %p268 = pneg %p38
        $region46: #{tpu_custom_call.1} parent=43 // pred_check_branch
          %270 = sbr.rel (%p268) target = $region48
        $region47: #{tpu_custom_call.1} parent=43 // pred_region
          %p271 = scmp.lt.s32.totalorder %s18, 1
          %s272 = scalar_select %p271, %s18, 1
          %s273 = smul.addr %s272, 42
          %s274 = smul.addr %s273, 8
          %s275 = scalar_lea.vmem %s0, %s274
        $region48: #{tpu_custom_call.1} parent=43 // pred_fallthru
          _
      $region44: #{tpu_custom_call.1} parent=5 // pred_fallthru
        _
      %p276 = scmp.le.s32.totalorder 1, %s18
      %p277 = scmp.lt.s32.totalorder %s18, 3
      %p278 = pnand %p276, %p277
      %p279 = pneg %p278
      // Predicated region
      $region49: #{tpu_custom_call.1} parent=5 // pred_check
        _
      $region50: #{tpu_custom_call.1} parent=5 // pred_check_branch
        %281 = sbr.rel (%p278) target = $region52
      $region51: #{tpu_custom_call.1} parent=5 // pred_region
        %s282 = ssub.s32 %s18, 1
        // Predicated region
        $region53: #{tpu_custom_call.1} parent=51 // pred_check
          %p283 = pneg %p128
        $region54: #{tpu_custom_call.1} parent=51 // pred_check_branch
          %285 = sbr.rel (%p283) target = $region56
        $region55: #{tpu_custom_call.1} parent=51 // pred_region
          %287 = dma.done [#allocation5], 18432
        $region56: #{tpu_custom_call.1} parent=51 // pred_fallthru
          _
        %p288 = scmp.lt.s32.totalorder %s23, 1
        %s289 = scalar_select %p288, %s23, 1
        %s290 = smul.addr %s289, 42
        %s291 = smul.addr %s290, 8
        %s292 = scalar_lea.vmem %s0, %s291
        %p293 = pneg %p44
        %p294 = pneg %p41
        %p295 = pneg %p65
        %p296 = pneg %p62
        %p297 = pneg %p86
        %p298 = pneg %p83
        %p299 = pneg %p107
        %p300 = pneg %p104
        %p301 = pneg %p128
        %p302 = pneg %p125
        %p303 = pneg %p149
        %p304 = pneg %p146
        %p305 = pneg %p170
        %p306 = pneg %p167
        %p307 = pneg %p191
        %p308 = pneg %p188
        %p309 = pneg %p217
        %p310 = pneg %p214
        %s311 = sand.u32 %s204, 1
        %s312 = scalar_lea.sflag [#allocation6], %s311
        %s313 = sand.u32 %s204, 1
        %s314 = smul.addr %s313, 288
        %s315 = scalar_lea.vmem [#allocation7], %s314
        %p316 = scmp.lt.s32.totalorder %s23, 1
        %s317 = scalar_select %p316, %s23, 1
        %s318 = smul.addr %s317, 42
        %s319 = smul.addr %s318, 8
        %s320 = scalar_lea.vmem %s0, %s319
        %v321 = vld [vmem:[%s7] sm:$0xff]
        %v322 = vld [vmem:[%s7 + $0x8] sm:$0xff]
        %v323 = vld [vmem:[%s7 + $0x10] sm:$0xff]
        %v324 = vld [vmem:[%s7 + $0x18] sm:$0xff]
        %v325 = vld [vmem:[%s7 + $0x20] sm:$0xff]
        %v326 = vld [vmem:[%s7 + $0x28] sm:$0xff]
        %v327 = vld [vmem:[%s7 + $0x30] sm:$0xff]
        %v328 = vld [vmem:[%s7 + $0x38] sm:$0xff]
        %v329 = vld [vmem:[%s7 + $0x40] sm:$0xff]
        %v330 = vld [vmem:[%s7 + $0x48] sm:$0xff]
        %v331 = vld [vmem:[%s7 + $0x50] sm:$0xff]
        %v332 = vld [vmem:[%s7 + $0x58] sm:$0xff]
        %v333 = vld [vmem:[%s7 + $0x60] sm:$0xff]
        %v334 = vld [vmem:[%s7 + $0x68] sm:$0xff]
        %v335 = vld [vmem:[%s7 + $0x70] sm:$0xff]
        %v336 = vld [vmem:[%s7 + $0x78] sm:$0xff]
        %v337 = vld [vmem:[%s7 + $0x80] sm:$0xff]
        %v338 = vld [vmem:[%s7 + $0x88] sm:$0xff]
        %v339 = vld [vmem:[%s7 + $0x90] sm:$0xff]
        %v340 = vld [vmem:[%s7 + $0x98] sm:$0xff]
        %v341 = vld [vmem:[%s7 + $0xa0] sm:$0xff]
        %v342 = vld [vmem:[%s7 + $0xa8] sm:$0xff]
        %v343 = vld [vmem:[%s7 + $0xb0] sm:$0xff]
        %v344 = vld [vmem:[%s7 + $0xb8] sm:$0xff]
        %v345 = vld [vmem:[%s7 + $0xc0] sm:$0xff]
        %v346 = vld [vmem:[%s7 + $0xc8] sm:$0xff]
        %v347 = vld [vmem:[%s7 + $0xd0] sm:$0xff]
        %v348 = vld [vmem:[%s7 + $0xd8] sm:$0xff]
        %v349 = vld [vmem:[%s7 + $0xe0] sm:$0xff]
        %v350 = vld [vmem:[%s7 + $0xe8] sm:$0xff]
        %v351 = vld [vmem:[%s7 + $0xf0] sm:$0xff]
        %v352 = vld [vmem:[%s7 + $0xf8] sm:$0xff]
        %v353 = vld [vmem:[%s7 + $0x100] sm:$0xff]
        %v354 = vld [vmem:[%s7 + $0x108] sm:$0xff]
        %v355 = vld [vmem:[%s7 + $0x110] sm:$0xff]
        %v356 = vld [vmem:[%s7 + $0x118] sm:$0xff]
        %v357 = vld [vmem:[%s320] sm:$0xff]
        %v358 = vld [vmem:[%s320 + $0x8] sm:$0xff]
        %v359 = vld [vmem:[%s320 + $0x10] sm:$0xff]
        %v360 = vld [vmem:[%s320 + $0x18] sm:$0xff]
        %v361 = vld [vmem:[%s320 + $0x20] sm:$0xff]
        %v362 = vld [vmem:[%s320 + $0x28] sm:$0xff]
        %v363 = vld [vmem:[%s320 + $0x30] sm:$0xff]
        %v364 = vld [vmem:[%s320 + $0x38] sm:$0xff]
        %v365 = vld [vmem:[%s320 + $0x40] sm:$0xff]
        %v366 = vld [vmem:[%s320 + $0x48] sm:$0xff]
        %v367 = vld [vmem:[%s320 + $0x50] sm:$0xff]
        %v368 = vld [vmem:[%s320 + $0x58] sm:$0xff]
        %v369 = vld [vmem:[%s320 + $0x60] sm:$0xff]
        %v370 = vld [vmem:[%s320 + $0x68] sm:$0xff]
        %v371 = vld [vmem:[%s320 + $0x70] sm:$0xff]
        %v372 = vld [vmem:[%s320 + $0x78] sm:$0xff]
        %v373 = vld [vmem:[%s320 + $0x80] sm:$0xff]
        %v374 = vld [vmem:[%s320 + $0x88] sm:$0xff]
        %v375 = vld [vmem:[%s320 + $0x90] sm:$0xff]
        %v376 = vld [vmem:[%s320 + $0x98] sm:$0xff]
        %v377 = vld [vmem:[%s320 + $0xa0] sm:$0xff]
        %v378 = vld [vmem:[%s320 + $0xa8] sm:$0xff]
        %v379 = vld [vmem:[%s320 + $0xb0] sm:$0xff]
        %v380 = vld [vmem:[%s320 + $0xb8] sm:$0xff]
        %v381 = vld [vmem:[%s320 + $0xc0] sm:$0xff]
        %v382 = vld [vmem:[%s320 + $0xc8] sm:$0xff]
        %v383 = vld [vmem:[%s320 + $0xd0] sm:$0xff]
        %v384 = vld [vmem:[%s320 + $0xd8] sm:$0xff]
        %v385 = vld [vmem:[%s320 + $0xe0] sm:$0xff]
        %v386 = vld [vmem:[%s320 + $0xe8] sm:$0xff]
        %v387 = vld [vmem:[%s320 + $0xf0] sm:$0xff]
        %v388 = vld [vmem:[%s320 + $0xf8] sm:$0xff]
        %v389 = vld [vmem:[%s320 + $0x100] sm:$0xff]
        %v390 = vld [vmem:[%s320 + $0x108] sm:$0xff]
        %v391 = vld [vmem:[%s320 + $0x110] sm:$0xff]
        %v392 = vld [vmem:[%s320 + $0x118] sm:$0xff]
        %393 = vst [vmem:[#allocation3] sm:$0xff] %v357
        %394 = vst [vmem:[#allocation3 + $0x48] sm:$0xff] %v358
        %395 = vst [vmem:[#allocation3 + $0x90] sm:$0xff] %v359
        %396 = vst [vmem:[#allocation3 + $0xd8] sm:$0xff] %v360
        %397 = vst [vmem:[#allocation3 + $0x120] sm:$0xff] %v361
        %398 = vst [vmem:[#allocation3 + $0x168] sm:$0xff] %v362
        %399 = vst [vmem:[#allocation3 + $0x1b0] sm:$0xff] %v363
        %400 = vst [vmem:[#allocation3 + $0x1f8] sm:$0xff] %v364
        %401 = vst [vmem:[#allocation3 + $0x240] sm:$0xff] %v365
        %402 = vst [vmem:[#allocation3 + $0x288] sm:$0xff] %v366
        %403 = vst [vmem:[#allocation3 + $0x2d0] sm:$0xff] %v367
        %404 = vst [vmem:[#allocation3 + $0x318] sm:$0xff] %v368
        %405 = vst [vmem:[#allocation3 + $0x360] sm:$0xff] %v369
        %406 = vst [vmem:[#allocation3 + $0x3a8] sm:$0xff] %v370
        %407 = vst [vmem:[#allocation3 + $0x3f0] sm:$0xff] %v371
        %408 = vst [vmem:[#allocation3 + $0x438] sm:$0xff] %v372
        %409 = vst [vmem:[#allocation3 + $0x480] sm:$0xff] %v373
        %410 = vst [vmem:[#allocation3 + $0x4c8] sm:$0xff] %v374
        %411 = vst [vmem:[#allocation3 + $0x510] sm:$0xff] %v375
        %412 = vst [vmem:[#allocation3 + $0x558] sm:$0xff] %v376
        %413 = vst [vmem:[#allocation3 + $0x5a0] sm:$0xff] %v377
        %414 = vst [vmem:[#allocation3 + $0x5e8] sm:$0xff] %v378
        %415 = vst [vmem:[#allocation3 + $0x630] sm:$0xff] %v379
        %416 = vst [vmem:[#allocation3 + $0x678] sm:$0xff] %v380
        %417 = vst [vmem:[#allocation3 + $0x6c0] sm:$0xff] %v381
        %418 = vst [vmem:[#allocation3 + $0x708] sm:$0xff] %v382
        %419 = vst [vmem:[#allocation3 + $0x750] sm:$0xff] %v383
        %420 = vst [vmem:[#allocation3 + $0x798] sm:$0xff] %v384
        %421 = vst [vmem:[#allocation3 + $0x7e0] sm:$0xff] %v385
        %422 = vst [vmem:[#allocation3 + $0x828] sm:$0xff] %v386
        %423 = vst [vmem:[#allocation3 + $0x870] sm:$0xff] %v387
        %424 = vst [vmem:[#allocation3 + $0x8b8] sm:$0xff] %v388
        %425 = vst [vmem:[#allocation3 + $0x900] sm:$0xff] %v389
        %426 = vst [vmem:[#allocation3 + $0x948] sm:$0xff] %v390
        %427 = vst [vmem:[#allocation3 + $0x990] sm:$0xff] %v391
        %428 = vst [vmem:[#allocation3 + $0x9d8] sm:$0xff] %v392
        %v429 = vld [vmem:[%s320 + $0x1] sm:$0xff]
        %v430 = vld [vmem:[%s320 + $0x9] sm:$0xff]
        %v431 = vld [vmem:[%s320 + $0x11] sm:$0xff]
        %v432 = vld [vmem:[%s320 + $0x19] sm:$0xff]
        %v433 = vld [vmem:[%s320 + $0x21] sm:$0xff]
        %v434 = vld [vmem:[%s320 + $0x29] sm:$0xff]
        %v435 = vld [vmem:[%s320 + $0x31] sm:$0xff]
        %v436 = vld [vmem:[%s320 + $0x39] sm:$0xff]
        %v437 = vld [vmem:[%s320 + $0x41] sm:$0xff]
        %v438 = vld [vmem:[%s320 + $0x49] sm:$0xff]
        %v439 = vld [vmem:[%s320 + $0x51] sm:$0xff]
        %v440 = vld [vmem:[%s320 + $0x59] sm:$0xff]
        %v441 = vld [vmem:[%s320 + $0x61] sm:$0xff]
        %v442 = vld [vmem:[%s320 + $0x69] sm:$0xff]
        %v443 = vld [vmem:[%s320 + $0x71] sm:$0xff]
        %v444 = vld [vmem:[%s320 + $0x79] sm:$0xff]
        %v445 = vld [vmem:[%s320 + $0x81] sm:$0xff]
        %v446 = vld [vmem:[%s320 + $0x89] sm:$0xff]
        %v447 = vld [vmem:[%s320 + $0x91] sm:$0xff]
        %v448 = vld [vmem:[%s320 + $0x99] sm:$0xff]
        %v449 = vld [vmem:[%s320 + $0xa1] sm:$0xff]
        %v450 = vld [vmem:[%s320 + $0xa9] sm:$0xff]
        %v451 = vld [vmem:[%s320 + $0xb1] sm:$0xff]
        %v452 = vld [vmem:[%s320 + $0xb9] sm:$0xff]
        %v453 = vld [vmem:[%s320 + $0xc1] sm:$0xff]
        %v454 = vld [vmem:[%s320 + $0xc9] sm:$0xff]
        %v455 = vld [vmem:[%s320 + $0xd1] sm:$0xff]
        %v456 = vld [vmem:[%s320 + $0xd9] sm:$0xff]
        %v457 = vld [vmem:[%s320 + $0xe1] sm:$0xff]
        %v458 = vld [vmem:[%s320 + $0xe9] sm:$0xff]
        %v459 = vld [vmem:[%s320 + $0xf1] sm:$0xff]
        %v460 = vld [vmem:[%s320 + $0xf9] sm:$0xff]
        %v461 = vld [vmem:[%s320 + $0x101] sm:$0xff]
        %v462 = vld [vmem:[%s320 + $0x109] sm:$0xff]
        %v463 = vld [vmem:[%s320 + $0x111] sm:$0xff]
        %v464 = vld [vmem:[%s320 + $0x119] sm:$0xff]
        %465 = vst [vmem:[#allocation3 + $0x8] sm:$0xff] %v429
        %466 = vst [vmem:[#allocation3 + $0x50] sm:$0xff] %v430
        %467 = vst [vmem:[#allocation3 + $0x98] sm:$0xff] %v431
        %468 = vst [vmem:[#allocation3 + $0xe0] sm:$0xff] %v432
        %469 = vst [vmem:[#allocation3 + $0x128] sm:$0xff] %v433
        %470 = vst [vmem:[#allocation3 + $0x170] sm:$0xff] %v434
        %471 = vst [vmem:[#allocation3 + $0x1b8] sm:$0xff] %v435
        %472 = vst [vmem:[#allocation3 + $0x200] sm:$0xff] %v436
        %473 = vst [vmem:[#allocation3 + $0x248] sm:$0xff] %v437
        %474 = vst [vmem:[#allocation3 + $0x290] sm:$0xff] %v438
        %475 = vst [vmem:[#allocation3 + $0x2d8] sm:$0xff] %v439
        %476 = vst [vmem:[#allocation3 + $0x320] sm:$0xff] %v440
        %477 = vst [vmem:[#allocation3 + $0x368] sm:$0xff] %v441
        %478 = vst [vmem:[#allocation3 + $0x3b0] sm:$0xff] %v442
        %479 = vst [vmem:[#allocation3 + $0x3f8] sm:$0xff] %v443
        %480 = vst [vmem:[#allocation3 + $0x440] sm:$0xff] %v444
        %481 = vst [vmem:[#allocation3 + $0x488] sm:$0xff] %v445
        %482 = vst [vmem:[#allocation3 + $0x4d0] sm:$0xff] %v446
        %483 = vst [vmem:[#allocation3 + $0x518] sm:$0xff] %v447
        %484 = vst [vmem:[#allocation3 + $0x560] sm:$0xff] %v448
        %485 = vst [vmem:[#allocation3 + $0x5a8] sm:$0xff] %v449
        %486 = vst [vmem:[#allocation3 + $0x5f0] sm:$0xff] %v450
        %487 = vst [vmem:[#allocation3 + $0x638] sm:$0xff] %v451
        %488 = vst [vmem:[#allocation3 + $0x680] sm:$0xff] %v452
        %489 = vst [vmem:[#allocation3 + $0x6c8] sm:$0xff] %v453
        %490 = vst [vmem:[#allocation3 + $0x710] sm:$0xff] %v454
        %491 = vst [vmem:[#allocation3 + $0x758] sm:$0xff] %v455
        %492 = vst [vmem:[#allocation3 + $0x7a0] sm:$0xff] %v456
        %493 = vst [vmem:[#allocation3 + $0x7e8] sm:$0xff] %v457
        %494 = vst [vmem:[#allocation3 + $0x830] sm:$0xff] %v458
        %495 = vst [vmem:[#allocation3 + $0x878] sm:$0xff] %v459
        %496 = vst [vmem:[#allocation3 + $0x8c0] sm:$0xff] %v460
        %497 = vst [vmem:[#allocation3 + $0x908] sm:$0xff] %v461
        %498 = vst [vmem:[#allocation3 + $0x950] sm:$0xff] %v462
        %499 = vst [vmem:[#allocation3 + $0x998] sm:$0xff] %v463
        %500 = vst [vmem:[#allocation3 + $0x9e0] sm:$0xff] %v464
        %v501 = vld [vmem:[%s320 + $0x2] sm:$0xff]
        %v502 = vld [vmem:[%s320 + $0xa] sm:$0xff]
        %v503 = vld [vmem:[%s320 + $0x12] sm:$0xff]
        %v504 = vld [vmem:[%s320 + $0x1a] sm:$0xff]
        %v505 = vld [vmem:[%s320 + $0x22] sm:$0xff]
        %v506 = vld [vmem:[%s320 + $0x2a] sm:$0xff]
        %v507 = vld [vmem:[%s320 + $0x32] sm:$0xff]
        %v508 = vld [vmem:[%s320 + $0x3a] sm:$0xff]
        %v509 = vld [vmem:[%s320 + $0x42] sm:$0xff]
        %v510 = vld [vmem:[%s320 + $0x4a] sm:$0xff]
        %v511 = vld [vmem:[%s320 + $0x52] sm:$0xff]
        %v512 = vld [vmem:[%s320 + $0x5a] sm:$0xff]
        %v513 = vld [vmem:[%s320 + $0x62] sm:$0xff]
        %v514 = vld [vmem:[%s320 + $0x6a] sm:$0xff]
        %v515 = vld [vmem:[%s320 + $0x72] sm:$0xff]
        %v516 = vld [vmem:[%s320 + $0x7a] sm:$0xff]
        %v517 = vld [vmem:[%s320 + $0x82] sm:$0xff]
        %v518 = vld [vmem:[%s320 + $0x8a] sm:$0xff]
        %v519 = vld [vmem:[%s320 + $0x92] sm:$0xff]
        %v520 = vld [vmem:[%s320 + $0x9a] sm:$0xff]
        %v521 = vld [vmem:[%s320 + $0xa2] sm:$0xff]
        %v522 = vld [vmem:[%s320 + $0xaa] sm:$0xff]
        %v523 = vld [vmem:[%s320 + $0xb2] sm:$0xff]
        %v524 = vld [vmem:[%s320 + $0xba] sm:$0xff]
        %v525 = vld [vmem:[%s320 + $0xc2] sm:$0xff]
        %v526 = vld [vmem:[%s320 + $0xca] sm:$0xff]
        %v527 = vld [vmem:[%s320 + $0xd2] sm:$0xff]
        %v528 = vld [vmem:[%s320 + $0xda] sm:$0xff]
        %v529 = vld [vmem:[%s320 + $0xe2] sm:$0xff]
        %v530 = vld [vmem:[%s320 + $0xea] sm:$0xff]
        %v531 = vld [vmem:[%s320 + $0xf2] sm:$0xff]
        %v532 = vld [vmem:[%s320 + $0xfa] sm:$0xff]
        %v533 = vld [vmem:[%s320 + $0x102] sm:$0xff]
        %v534 = vld [vmem:[%s320 + $0x10a] sm:$0xff]
        %v535 = vld [vmem:[%s320 + $0x112] sm:$0xff]
        %v536 = vld [vmem:[%s320 + $0x11a] sm:$0xff]
        %537 = vst [vmem:[#allocation3 + $0x10] sm:$0xff] %v501
        %538 = vst [vmem:[#allocation3 + $0x58] sm:$0xff] %v502
        %539 = vst [vmem:[#allocation3 + $0xa0] sm:$0xff] %v503
        %540 = vst [vmem:[#allocation3 + $0xe8] sm:$0xff] %v504
        %541 = vst [vmem:[#allocation3 + $0x130] sm:$0xff] %v505
        %542 = vst [vmem:[#allocation3 + $0x178] sm:$0xff] %v506
        %543 = vst [vmem:[#allocation3 + $0x1c0] sm:$0xff] %v507
        %544 = vst [vmem:[#allocation3 + $0x208] sm:$0xff] %v508
        %545 = vst [vmem:[#allocation3 + $0x250] sm:$0xff] %v509
        %546 = vst [vmem:[#allocation3 + $0x298] sm:$0xff] %v510
        %547 = vst [vmem:[#allocation3 + $0x2e0] sm:$0xff] %v511
        %548 = vst [vmem:[#allocation3 + $0x328] sm:$0xff] %v512
        %549 = vst [vmem:[#allocation3 + $0x370] sm:$0xff] %v513
        %550 = vst [vmem:[#allocation3 + $0x3b8] sm:$0xff] %v514
        %551 = vst [vmem:[#allocation3 + $0x400] sm:$0xff] %v515
        %552 = vst [vmem:[#allocation3 + $0x448] sm:$0xff] %v516
        %553 = vst [vmem:[#allocation3 + $0x490] sm:$0xff] %v517
        %554 = vst [vmem:[#allocation3 + $0x4d8] sm:$0xff] %v518
        %555 = vst [vmem:[#allocation3 + $0x520] sm:$0xff] %v519
        %556 = vst [vmem:[#allocation3 + $0x568] sm:$0xff] %v520
        %557 = vst [vmem:[#allocation3 + $0x5b0] sm:$0xff] %v521
        %558 = vst [vmem:[#allocation3 + $0x5f8] sm:$0xff] %v522
        %559 = vst [vmem:[#allocation3 + $0x640] sm:$0xff] %v523
        %560 = vst [vmem:[#allocation3 + $0x688] sm:$0xff] %v524
        %561 = vst [vmem:[#allocation3 + $0x6d0] sm:$0xff] %v525
        %562 = vst [vmem:[#allocation3 + $0x718] sm:$0xff] %v526
        %563 = vst [vmem:[#allocation3 + $0x760] sm:$0xff] %v527
        %564 = vst [vmem:[#allocation3 + $0x7a8] sm:$0xff] %v528
        %565 = vst [vmem:[#allocation3 + $0x7f0] sm:$0xff] %v529
        %566 = vst [vmem:[#allocation3 + $0x838] sm:$0xff] %v530
        %567 = vst [vmem:[#allocation3 + $0x880] sm:$0xff] %v531
        %568 = vst [vmem:[#allocation3 + $0x8c8] sm:$0xff] %v532
        %569 = vst [vmem:[#allocation3 + $0x910] sm:$0xff] %v533
        %570 = vst [vmem:[#allocation3 + $0x958] sm:$0xff] %v534
        %571 = vst [vmem:[#allocation3 + $0x9a0] sm:$0xff] %v535
        %572 = vst [vmem:[#allocation3 + $0x9e8] sm:$0xff] %v536
        %v573 = vld [vmem:[%s320 + $0x12] sm:$0xff]
        %v574 = vld [vmem:[%s320 + $0x1a] sm:$0xff]
        %v575 = vld [vmem:[%s320 + $0x22] sm:$0xff]
        %v576 = vld [vmem:[%s320 + $0x2a] sm:$0xff]
        %v577 = vld [vmem:[%s320 + $0x32] sm:$0xff]
        %v578 = vld [vmem:[%s320 + $0x3a] sm:$0xff]
        %v579 = vld [vmem:[%s320 + $0x42] sm:$0xff]
        %v580 = vld [vmem:[%s320 + $0x4a] sm:$0xff]
        %v581 = vld [vmem:[%s320 + $0x52] sm:$0xff]
        %v582 = vld [vmem:[%s320 + $0x5a] sm:$0xff]
        %v583 = vld [vmem:[%s320 + $0x62] sm:$0xff]
        %v584 = vld [vmem:[%s320 + $0x6a] sm:$0xff]
        %v585 = vld [vmem:[%s320 + $0x72] sm:$0xff]
        %v586 = vld [vmem:[%s320 + $0x7a] sm:$0xff]
        %v587 = vld [vmem:[%s320 + $0x82] sm:$0xff]
        %v588 = vld [vmem:[%s320 + $0x8a] sm:$0xff]
        %v589 = vld [vmem:[%s320 + $0x92] sm:$0xff]
        %v590 = vld [vmem:[%s320 + $0x9a] sm:$0xff]
        %v591 = vld [vmem:[%s320 + $0xa2] sm:$0xff]
        %v592 = vld [vmem:[%s320 + $0xaa] sm:$0xff]
        %v593 = vld [vmem:[%s320 + $0xb2] sm:$0xff]
        %v594 = vld [vmem:[%s320 + $0xba] sm:$0xff]
        %v595 = vld [vmem:[%s320 + $0xc2] sm:$0xff]
        %v596 = vld [vmem:[%s320 + $0xca] sm:$0xff]
        %v597 = vld [vmem:[%s320 + $0xd2] sm:$0xff]
        %v598 = vld [vmem:[%s320 + $0xda] sm:$0xff]
        %v599 = vld [vmem:[%s320 + $0xe2] sm:$0xff]
        %v600 = vld [vmem:[%s320 + $0xea] sm:$0xff]
        %v601 = vld [vmem:[%s320 + $0xf2] sm:$0xff]
        %v602 = vld [vmem:[%s320 + $0xfa] sm:$0xff]
        %v603 = vld [vmem:[%s320 + $0x102] sm:$0xff]
        %v604 = vld [vmem:[%s320 + $0x10a] sm:$0xff]
        %v605 = vld [vmem:[%s320 + $0x112] sm:$0xff]
        %v606 = vld [vmem:[%s320 + $0x11a] sm:$0xff]
        %v607 = vld [vmem:[%s320 + $0x122] sm:$0xff]
        %v608 = vld [vmem:[%s320 + $0x12a] sm:$0xff]
        %609 = vst [vmem:[#allocation3 + $0x18] sm:$0xff] %v573
        %610 = vst [vmem:[#allocation3 + $0x60] sm:$0xff] %v574
        %611 = vst [vmem:[#allocation3 + $0xa8] sm:$0xff] %v575
        %612 = vst [vmem:[#allocation3 + $0xf0] sm:$0xff] %v576
        %613 = vst [vmem:[#allocation3 + $0x138] sm:$0xff] %v577
        %614 = vst [vmem:[#allocation3 + $0x180] sm:$0xff] %v578
        %615 = vst [vmem:[#allocation3 + $0x1c8] sm:$0xff] %v579
        %616 = vst [vmem:[#allocation3 + $0x210] sm:$0xff] %v580
        %617 = vst [vmem:[#allocation3 + $0x258] sm:$0xff] %v581
        %618 = vst [vmem:[#allocation3 + $0x2a0] sm:$0xff] %v582
        %619 = vst [vmem:[#allocation3 + $0x2e8] sm:$0xff] %v583
        %620 = vst [vmem:[#allocation3 + $0x330] sm:$0xff] %v584
        %621 = vst [vmem:[#allocation3 + $0x378] sm:$0xff] %v585
        %622 = vst [vmem:[#allocation3 + $0x3c0] sm:$0xff] %v586
        %623 = vst [vmem:[#allocation3 + $0x408] sm:$0xff] %v587
        %624 = vst [vmem:[#allocation3 + $0x450] sm:$0xff] %v588
        %625 = vst [vmem:[#allocation3 + $0x498] sm:$0xff] %v589
        %626 = vst [vmem:[#allocation3 + $0x4e0] sm:$0xff] %v590
        %627 = vst [vmem:[#allocation3 + $0x528] sm:$0xff] %v591
        %628 = vst [vmem:[#allocation3 + $0x570] sm:$0xff] %v592
        %629 = vst [vmem:[#allocation3 + $0x5b8] sm:$0xff] %v593
        %630 = vst [vmem:[#allocation3 + $0x600] sm:$0xff] %v594
        %631 = vst [vmem:[#allocation3 + $0x648] sm:$0xff] %v595
        %632 = vst [vmem:[#allocation3 + $0x690] sm:$0xff] %v596
        %633 = vst [vmem:[#allocation3 + $0x6d8] sm:$0xff] %v597
        %634 = vst [vmem:[#allocation3 + $0x720] sm:$0xff] %v598
        %635 = vst [vmem:[#allocation3 + $0x768] sm:$0xff] %v599
        %636 = vst [vmem:[#allocation3 + $0x7b0] sm:$0xff] %v600
        %637 = vst [vmem:[#allocation3 + $0x7f8] sm:$0xff] %v601
        %638 = vst [vmem:[#allocation3 + $0x840] sm:$0xff] %v602
        %639 = vst [vmem:[#allocation3 + $0x888] sm:$0xff] %v603
        %640 = vst [vmem:[#allocation3 + $0x8d0] sm:$0xff] %v604
        %641 = vst [vmem:[#allocation3 + $0x918] sm:$0xff] %v605
        %642 = vst [vmem:[#allocation3 + $0x960] sm:$0xff] %v606
        %643 = vst [vmem:[#allocation3 + $0x9a8] sm:$0xff] %v607
        %644 = vst [vmem:[#allocation3 + $0x9f0] sm:$0xff] %v608
        %v645 = vld [vmem:[%s320 + $0x13] sm:$0xff]
        %v646 = vld [vmem:[%s320 + $0x1b] sm:$0xff]
        %v647 = vld [vmem:[%s320 + $0x23] sm:$0xff]
        %v648 = vld [vmem:[%s320 + $0x2b] sm:$0xff]
        %v649 = vld [vmem:[%s320 + $0x33] sm:$0xff]
        %v650 = vld [vmem:[%s320 + $0x3b] sm:$0xff]
        %v651 = vld [vmem:[%s320 + $0x43] sm:$0xff]
        %v652 = vld [vmem:[%s320 + $0x4b] sm:$0xff]
        %v653 = vld [vmem:[%s320 + $0x53] sm:$0xff]
        %v654 = vld [vmem:[%s320 + $0x5b] sm:$0xff]
        %v655 = vld [vmem:[%s320 + $0x63] sm:$0xff]
        %v656 = vld [vmem:[%s320 + $0x6b] sm:$0xff]
        %v657 = vld [vmem:[%s320 + $0x73] sm:$0xff]
        %v658 = vld [vmem:[%s320 + $0x7b] sm:$0xff]
        %v659 = vld [vmem:[%s320 + $0x83] sm:$0xff]
        %v660 = vld [vmem:[%s320 + $0x8b] sm:$0xff]
        %v661 = vld [vmem:[%s320 + $0x93] sm:$0xff]
        %v662 = vld [vmem:[%s320 + $0x9b] sm:$0xff]
        %v663 = vld [vmem:[%s320 + $0xa3] sm:$0xff]
        %v664 = vld [vmem:[%s320 + $0xab] sm:$0xff]
        %v665 = vld [vmem:[%s320 + $0xb3] sm:$0xff]
        %v666 = vld [vmem:[%s320 + $0xbb] sm:$0xff]
        %v667 = vld [vmem:[%s320 + $0xc3] sm:$0xff]
        %v668 = vld [vmem:[%s320 + $0xcb] sm:$0xff]
        %v669 = vld [vmem:[%s320 + $0xd3] sm:$0xff]
        %v670 = vld [vmem:[%s320 + $0xdb] sm:$0xff]
        %v671 = vld [vmem:[%s320 + $0xe3] sm:$0xff]
        %v672 = vld [vmem:[%s320 + $0xeb] sm:$0xff]
        %v673 = vld [vmem:[%s320 + $0xf3] sm:$0xff]
        %v674 = vld [vmem:[%s320 + $0xfb] sm:$0xff]
        %v675 = vld [vmem:[%s320 + $0x103] sm:$0xff]
        %v676 = vld [vmem:[%s320 + $0x10b] sm:$0xff]
        %v677 = vld [vmem:[%s320 + $0x113] sm:$0xff]
        %v678 = vld [vmem:[%s320 + $0x11b] sm:$0xff]
        %v679 = vld [vmem:[%s320 + $0x123] sm:$0xff]
        %v680 = vld [vmem:[%s320 + $0x12b] sm:$0xff]
        %681 = vst [vmem:[#allocation3 + $0x20] sm:$0xff] %v645
        %682 = vst [vmem:[#allocation3 + $0x68] sm:$0xff] %v646
        %683 = vst [vmem:[#allocation3 + $0xb0] sm:$0xff] %v647
        %684 = vst [vmem:[#allocation3 + $0xf8] sm:$0xff] %v648
        %685 = vst [vmem:[#allocation3 + $0x140] sm:$0xff] %v649
        %686 = vst [vmem:[#allocation3 + $0x188] sm:$0xff] %v650
        %687 = vst [vmem:[#allocation3 + $0x1d0] sm:$0xff] %v651
        %688 = vst [vmem:[#allocation3 + $0x218] sm:$0xff] %v652
        %689 = vst [vmem:[#allocation3 + $0x260] sm:$0xff] %v653
        %690 = vst [vmem:[#allocation3 + $0x2a8] sm:$0xff] %v654
        %691 = vst [vmem:[#allocation3 + $0x2f0] sm:$0xff] %v655
        %692 = vst [vmem:[#allocation3 + $0x338] sm:$0xff] %v656
        %693 = vst [vmem:[#allocation3 + $0x380] sm:$0xff] %v657
        %694 = vst [vmem:[#allocation3 + $0x3c8] sm:$0xff] %v658
        %695 = vst [vmem:[#allocation3 + $0x410] sm:$0xff] %v659
        %696 = vst [vmem:[#allocation3 + $0x458] sm:$0xff] %v660
        %697 = vst [vmem:[#allocation3 + $0x4a0] sm:$0xff] %v661
        %698 = vst [vmem:[#allocation3 + $0x4e8] sm:$0xff] %v662
        %699 = vst [vmem:[#allocation3 + $0x530] sm:$0xff] %v663
        %700 = vst [vmem:[#allocation3 + $0x578] sm:$0xff] %v664
        %701 = vst [vmem:[#allocation3 + $0x5c0] sm:$0xff] %v665
        %702 = vst [vmem:[#allocation3 + $0x608] sm:$0xff] %v666
        %703 = vst [vmem:[#allocation3 + $0x650] sm:$0xff] %v667
        %704 = vst [vmem:[#allocation3 + $0x698] sm:$0xff] %v668
        %705 = vst [vmem:[#allocation3 + $0x6e0] sm:$0xff] %v669
        %706 = vst [vmem:[#allocation3 + $0x728] sm:$0xff] %v670
        %707 = vst [vmem:[#allocation3 + $0x770] sm:$0xff] %v671
        %708 = vst [vmem:[#allocation3 + $0x7b8] sm:$0xff] %v672
        %709 = vst [vmem:[#allocation3 + $0x800] sm:$0xff] %v673
        %710 = vst [vmem:[#allocation3 + $0x848] sm:$0xff] %v674
        %711 = vst [vmem:[#allocation3 + $0x890] sm:$0xff] %v675
        %712 = vst [vmem:[#allocation3 + $0x8d8] sm:$0xff] %v676
        %713 = vst [vmem:[#allocation3 + $0x920] sm:$0xff] %v677
        %714 = vst [vmem:[#allocation3 + $0x968] sm:$0xff] %v678
        %715 = vst [vmem:[#allocation3 + $0x9b0] sm:$0xff] %v679
        %716 = vst [vmem:[#allocation3 + $0x9f8] sm:$0xff] %v680
        %v717 = vld [vmem:[%s320 + $0x14] sm:$0xff]
        %v718 = vld [vmem:[%s320 + $0x1c] sm:$0xff]
        %v719 = vld [vmem:[%s320 + $0x24] sm:$0xff]
        %v720 = vld [vmem:[%s320 + $0x2c] sm:$0xff]
        %v721 = vld [vmem:[%s320 + $0x34] sm:$0xff]
        %v722 = vld [vmem:[%s320 + $0x3c] sm:$0xff]
        %v723 = vld [vmem:[%s320 + $0x44] sm:$0xff]
        %v724 = vld [vmem:[%s320 + $0x4c] sm:$0xff]
        %v725 = vld [vmem:[%s320 + $0x54] sm:$0xff]
        %v726 = vld [vmem:[%s320 + $0x5c] sm:$0xff]
        %v727 = vld [vmem:[%s320 + $0x64] sm:$0xff]
        %v728 = vld [vmem:[%s320 + $0x6c] sm:$0xff]
        %v729 = vld [vmem:[%s320 + $0x74] sm:$0xff]
        %v730 = vld [vmem:[%s320 + $0x7c] sm:$0xff]
        %v731 = vld [vmem:[%s320 + $0x84] sm:$0xff]
        %v732 = vld [vmem:[%s320 + $0x8c] sm:$0xff]
        %v733 = vld [vmem:[%s320 + $0x94] sm:$0xff]
        %v734 = vld [vmem:[%s320 + $0x9c] sm:$0xff]
        %v735 = vld [vmem:[%s320 + $0xa4] sm:$0xff]
        %v736 = vld [vmem:[%s320 + $0xac] sm:$0xff]
        %v737 = vld [vmem:[%s320 + $0xb4] sm:$0xff]
        %v738 = vld [vmem:[%s320 + $0xbc] sm:$0xff]
        %v739 = vld [vmem:[%s320 + $0xc4] sm:$0xff]
        %v740 = vld [vmem:[%s320 + $0xcc] sm:$0xff]
        %v741 = vld [vmem:[%s320 + $0xd4] sm:$0xff]
        %v742 = vld [vmem:[%s320 + $0xdc] sm:$0xff]
        %v743 = vld [vmem:[%s320 + $0xe4] sm:$0xff]
        %v744 = vld [vmem:[%s320 + $0xec] sm:$0xff]
        %v745 = vld [vmem:[%s320 + $0xf4] sm:$0xff]
        %v746 = vld [vmem:[%s320 + $0xfc] sm:$0xff]
        %v747 = vld [vmem:[%s320 + $0x104] sm:$0xff]
        %v748 = vld [vmem:[%s320 + $0x10c] sm:$0xff]
        %v749 = vld [vmem:[%s320 + $0x114] sm:$0xff]
        %v750 = vld [vmem:[%s320 + $0x11c] sm:$0xff]
        %v751 = vld [vmem:[%s320 + $0x124] sm:$0xff]
        %v752 = vld [vmem:[%s320 + $0x12c] sm:$0xff]
        %753 = vst [vmem:[#allocation3 + $0x28] sm:$0xff] %v717
        %754 = vst [vmem:[#allocation3 + $0x70] sm:$0xff] %v718
        %755 = vst [vmem:[#allocation3 + $0xb8] sm:$0xff] %v719
        %756 = vst [vmem:[#allocation3 + $0x100] sm:$0xff] %v720
        %757 = vst [vmem:[#allocation3 + $0x148] sm:$0xff] %v721
        %758 = vst [vmem:[#allocation3 + $0x190] sm:$0xff] %v722
        %759 = vst [vmem:[#allocation3 + $0x1d8] sm:$0xff] %v723
        %760 = vst [vmem:[#allocation3 + $0x220] sm:$0xff] %v724
        %761 = vst [vmem:[#allocation3 + $0x268] sm:$0xff] %v725
        %762 = vst [vmem:[#allocation3 + $0x2b0] sm:$0xff] %v726
        %763 = vst [vmem:[#allocation3 + $0x2f8] sm:$0xff] %v727
        %764 = vst [vmem:[#allocation3 + $0x340] sm:$0xff] %v728
        %765 = vst [vmem:[#allocation3 + $0x388] sm:$0xff] %v729
        %766 = vst [vmem:[#allocation3 + $0x3d0] sm:$0xff] %v730
        %767 = vst [vmem:[#allocation3 + $0x418] sm:$0xff] %v731
        %768 = vst [vmem:[#allocation3 + $0x460] sm:$0xff] %v732
        %769 = vst [vmem:[#allocation3 + $0x4a8] sm:$0xff] %v733
        %770 = vst [vmem:[#allocation3 + $0x4f0] sm:$0xff] %v734
        %771 = vst [vmem:[#allocation3 + $0x538] sm:$0xff] %v735
        %772 = vst [vmem:[#allocation3 + $0x580] sm:$0xff] %v736
        %773 = vst [vmem:[#allocation3 + $0x5c8] sm:$0xff] %v737
        %774 = vst [vmem:[#allocation3 + $0x610] sm:$0xff] %v738
        %775 = vst [vmem:[#allocation3 + $0x658] sm:$0xff] %v739
        %776 = vst [vmem:[#allocation3 + $0x6a0] sm:$0xff] %v740
        %777 = vst [vmem:[#allocation3 + $0x6e8] sm:$0xff] %v741
        %778 = vst [vmem:[#allocation3 + $0x730] sm:$0xff] %v742
        %779 = vst [vmem:[#allocation3 + $0x778] sm:$0xff] %v743
        %780 = vst [vmem:[#allocation3 + $0x7c0] sm:$0xff] %v744
        %781 = vst [vmem:[#allocation3 + $0x808] sm:$0xff] %v745
        %782 = vst [vmem:[#allocation3 + $0x850] sm:$0xff] %v746
        %783 = vst [vmem:[#allocation3 + $0x898] sm:$0xff] %v747
        %784 = vst [vmem:[#allocation3 + $0x8e0] sm:$0xff] %v748
        %785 = vst [vmem:[#allocation3 + $0x928] sm:$0xff] %v749
        %786 = vst [vmem:[#allocation3 + $0x970] sm:$0xff] %v750
        %787 = vst [vmem:[#allocation3 + $0x9b8] sm:$0xff] %v751
        %788 = vst [vmem:[#allocation3 + $0xa00] sm:$0xff] %v752
        %v789 = vld [vmem:[%s320 + $0x24] sm:$0xff]
        %v790 = vld [vmem:[%s320 + $0x2c] sm:$0xff]
        %v791 = vld [vmem:[%s320 + $0x34] sm:$0xff]
        %v792 = vld [vmem:[%s320 + $0x3c] sm:$0xff]
        %v793 = vld [vmem:[%s320 + $0x44] sm:$0xff]
        %v794 = vld [vmem:[%s320 + $0x4c] sm:$0xff]
        %v795 = vld [vmem:[%s320 + $0x54] sm:$0xff]
        %v796 = vld [vmem:[%s320 + $0x5c] sm:$0xff]
        %v797 = vld [vmem:[%s320 + $0x64] sm:$0xff]
        %v798 = vld [vmem:[%s320 + $0x6c] sm:$0xff]
        %v799 = vld [vmem:[%s320 + $0x74] sm:$0xff]
        %v800 = vld [vmem:[%s320 + $0x7c] sm:$0xff]
        %v801 = vld [vmem:[%s320 + $0x84] sm:$0xff]
        %v802 = vld [vmem:[%s320 + $0x8c] sm:$0xff]
        %v803 = vld [vmem:[%s320 + $0x94] sm:$0xff]
        %v804 = vld [vmem:[%s320 + $0x9c] sm:$0xff]
        %v805 = vld [vmem:[%s320 + $0xa4] sm:$0xff]
        %v806 = vld [vmem:[%s320 + $0xac] sm:$0xff]
        %v807 = vld [vmem:[%s320 + $0xb4] sm:$0xff]
        %v808 = vld [vmem:[%s320 + $0xbc] sm:$0xff]
        %v809 = vld [vmem:[%s320 + $0xc4] sm:$0xff]
        %v810 = vld [vmem:[%s320 + $0xcc] sm:$0xff]
        %v811 = vld [vmem:[%s320 + $0xd4] sm:$0xff]
        %v812 = vld [vmem:[%s320 + $0xdc] sm:$0xff]
        %v813 = vld [vmem:[%s320 + $0xe4] sm:$0xff]
        %v814 = vld [vmem:[%s320 + $0xec] sm:$0xff]
        %v815 = vld [vmem:[%s320 + $0xf4] sm:$0xff]
        %v816 = vld [vmem:[%s320 + $0xfc] sm:$0xff]
        %v817 = vld [vmem:[%s320 + $0x104] sm:$0xff]
        %v818 = vld [vmem:[%s320 + $0x10c] sm:$0xff]
        %v819 = vld [vmem:[%s320 + $0x114] sm:$0xff]
        %v820 = vld [vmem:[%s320 + $0x11c] sm:$0xff]
        %v821 = vld [vmem:[%s320 + $0x124] sm:$0xff]
        %v822 = vld [vmem:[%s320 + $0x12c] sm:$0xff]
        %v823 = vld [vmem:[%s320 + $0x134] sm:$0xff]
        %v824 = vld [vmem:[%s320 + $0x13c] sm:$0xff]
        %825 = vst [vmem:[#allocation3 + $0x30] sm:$0xff] %v789
        %826 = vst [vmem:[#allocation3 + $0x78] sm:$0xff] %v790
        %827 = vst [vmem:[#allocation3 + $0xc0] sm:$0xff] %v791
        %828 = vst [vmem:[#allocation3 + $0x108] sm:$0xff] %v792
        %829 = vst [vmem:[#allocation3 + $0x150] sm:$0xff] %v793
        %830 = vst [vmem:[#allocation3 + $0x198] sm:$0xff] %v794
        %831 = vst [vmem:[#allocation3 + $0x1e0] sm:$0xff] %v795
        %832 = vst [vmem:[#allocation3 + $0x228] sm:$0xff] %v796
        %833 = vst [vmem:[#allocation3 + $0x270] sm:$0xff] %v797
        %834 = vst [vmem:[#allocation3 + $0x2b8] sm:$0xff] %v798
        %835 = vst [vmem:[#allocation3 + $0x300] sm:$0xff] %v799
        %836 = vst [vmem:[#allocation3 + $0x348] sm:$0xff] %v800
        %837 = vst [vmem:[#allocation3 + $0x390] sm:$0xff] %v801
        %838 = vst [vmem:[#allocation3 + $0x3d8] sm:$0xff] %v802
        %839 = vst [vmem:[#allocation3 + $0x420] sm:$0xff] %v803
        %840 = vst [vmem:[#allocation3 + $0x468] sm:$0xff] %v804
        %841 = vst [vmem:[#allocation3 + $0x4b0] sm:$0xff] %v805
        %842 = vst [vmem:[#allocation3 + $0x4f8] sm:$0xff] %v806
        %843 = vst [vmem:[#allocation3 + $0x540] sm:$0xff] %v807
        %844 = vst [vmem:[#allocation3 + $0x588] sm:$0xff] %v808
        %845 = vst [vmem:[#allocation3 + $0x5d0] sm:$0xff] %v809
        %846 = vst [vmem:[#allocation3 + $0x618] sm:$0xff] %v810
        %847 = vst [vmem:[#allocation3 + $0x660] sm:$0xff] %v811
        %848 = vst [vmem:[#allocation3 + $0x6a8] sm:$0xff] %v812
        %849 = vst [vmem:[#allocation3 + $0x6f0] sm:$0xff] %v813
        %850 = vst [vmem:[#allocation3 + $0x738] sm:$0xff] %v814
        %851 = vst [vmem:[#allocation3 + $0x780] sm:$0xff] %v815
        %852 = vst [vmem:[#allocation3 + $0x7c8] sm:$0xff] %v816
        %853 = vst [vmem:[#allocation3 + $0x810] sm:$0xff] %v817
        %854 = vst [vmem:[#allocation3 + $0x858] sm:$0xff] %v818
        %855 = vst [vmem:[#allocation3 + $0x8a0] sm:$0xff] %v819
        %856 = vst [vmem:[#allocation3 + $0x8e8] sm:$0xff] %v820
        %857 = vst [vmem:[#allocation3 + $0x930] sm:$0xff] %v821
        %858 = vst [vmem:[#allocation3 + $0x978] sm:$0xff] %v822
        %859 = vst [vmem:[#allocation3 + $0x9c0] sm:$0xff] %v823
        %860 = vst [vmem:[#allocation3 + $0xa08] sm:$0xff] %v824
        %v861 = vld [vmem:[%s320 + $0x25] sm:$0xff]
        %v862 = vld [vmem:[%s320 + $0x2d] sm:$0xff]
        %v863 = vld [vmem:[%s320 + $0x35] sm:$0xff]
        %v864 = vld [vmem:[%s320 + $0x3d] sm:$0xff]
        %v865 = vld [vmem:[%s320 + $0x45] sm:$0xff]
        %v866 = vld [vmem:[%s320 + $0x4d] sm:$0xff]
        %v867 = vld [vmem:[%s320 + $0x55] sm:$0xff]
        %v868 = vld [vmem:[%s320 + $0x5d] sm:$0xff]
        %v869 = vld [vmem:[%s320 + $0x65] sm:$0xff]
        %v870 = vld [vmem:[%s320 + $0x6d] sm:$0xff]
        %v871 = vld [vmem:[%s320 + $0x75] sm:$0xff]
        %v872 = vld [vmem:[%s320 + $0x7d] sm:$0xff]
        %v873 = vld [vmem:[%s320 + $0x85] sm:$0xff]
        %v874 = vld [vmem:[%s320 + $0x8d] sm:$0xff]
        %v875 = vld [vmem:[%s320 + $0x95] sm:$0xff]
        %v876 = vld [vmem:[%s320 + $0x9d] sm:$0xff]
        %v877 = vld [vmem:[%s320 + $0xa5] sm:$0xff]
        %v878 = vld [vmem:[%s320 + $0xad] sm:$0xff]
        %v879 = vld [vmem:[%s320 + $0xb5] sm:$0xff]
        %v880 = vld [vmem:[%s320 + $0xbd] sm:$0xff]
        %v881 = vld [vmem:[%s320 + $0xc5] sm:$0xff]
        %v882 = vld [vmem:[%s320 + $0xcd] sm:$0xff]
        %v883 = vld [vmem:[%s320 + $0xd5] sm:$0xff]
        %v884 = vld [vmem:[%s320 + $0xdd] sm:$0xff]
        %v885 = vld [vmem:[%s320 + $0xe5] sm:$0xff]
        %v886 = vld [vmem:[%s320 + $0xed] sm:$0xff]
        %v887 = vld [vmem:[%s320 + $0xf5] sm:$0xff]
        %v888 = vld [vmem:[%s320 + $0xfd] sm:$0xff]
        %v889 = vld [vmem:[%s320 + $0x105] sm:$0xff]
        %v890 = vld [vmem:[%s320 + $0x10d] sm:$0xff]
        %v891 = vld [vmem:[%s320 + $0x115] sm:$0xff]
        %v892 = vld [vmem:[%s320 + $0x11d] sm:$0xff]
        %v893 = vld [vmem:[%s320 + $0x125] sm:$0xff]
        %v894 = vld [vmem:[%s320 + $0x12d] sm:$0xff]
        %v895 = vld [vmem:[%s320 + $0x135] sm:$0xff]
        %v896 = vld [vmem:[%s320 + $0x13d] sm:$0xff]
        %897 = vst [vmem:[#allocation3 + $0x38] sm:$0xff] %v861
        %898 = vst [vmem:[#allocation3 + $0x80] sm:$0xff] %v862
        %899 = vst [vmem:[#allocation3 + $0xc8] sm:$0xff] %v863
        %900 = vst [vmem:[#allocation3 + $0x110] sm:$0xff] %v864
        %901 = vst [vmem:[#allocation3 + $0x158] sm:$0xff] %v865
        %902 = vst [vmem:[#allocation3 + $0x1a0] sm:$0xff] %v866
        %903 = vst [vmem:[#allocation3 + $0x1e8] sm:$0xff] %v867
        %904 = vst [vmem:[#allocation3 + $0x230] sm:$0xff] %v868
        %905 = vst [vmem:[#allocation3 + $0x278] sm:$0xff] %v869
        %906 = vst [vmem:[#allocation3 + $0x2c0] sm:$0xff] %v870
        %907 = vst [vmem:[#allocation3 + $0x308] sm:$0xff] %v871
        %908 = vst [vmem:[#allocation3 + $0x350] sm:$0xff] %v872
        %909 = vst [vmem:[#allocation3 + $0x398] sm:$0xff] %v873
        %910 = vst [vmem:[#allocation3 + $0x3e0] sm:$0xff] %v874
        %911 = vst [vmem:[#allocation3 + $0x428] sm:$0xff] %v875
        %912 = vst [vmem:[#allocation3 + $0x470] sm:$0xff] %v876
        %913 = vst [vmem:[#allocation3 + $0x4b8] sm:$0xff] %v877
        %914 = vst [vmem:[#allocation3 + $0x500] sm:$0xff] %v878
        %915 = vst [vmem:[#allocation3 + $0x548] sm:$0xff] %v879
        %916 = vst [vmem:[#allocation3 + $0x590] sm:$0xff] %v880
        %917 = vst [vmem:[#allocation3 + $0x5d8] sm:$0xff] %v881
        %918 = vst [vmem:[#allocation3 + $0x620] sm:$0xff] %v882
        %919 = vst [vmem:[#allocation3 + $0x668] sm:$0xff] %v883
        %920 = vst [vmem:[#allocation3 + $0x6b0] sm:$0xff] %v884
        %921 = vst [vmem:[#allocation3 + $0x6f8] sm:$0xff] %v885
        %922 = vst [vmem:[#allocation3 + $0x740] sm:$0xff] %v886
        %923 = vst [vmem:[#allocation3 + $0x788] sm:$0xff] %v887
        %924 = vst [vmem:[#allocation3 + $0x7d0] sm:$0xff] %v888
        %925 = vst [vmem:[#allocation3 + $0x818] sm:$0xff] %v889
        %926 = vst [vmem:[#allocation3 + $0x860] sm:$0xff] %v890
        %927 = vst [vmem:[#allocation3 + $0x8a8] sm:$0xff] %v891
        %928 = vst [vmem:[#allocation3 + $0x8f0] sm:$0xff] %v892
        %929 = vst [vmem:[#allocation3 + $0x938] sm:$0xff] %v893
        %930 = vst [vmem:[#allocation3 + $0x980] sm:$0xff] %v894
        %931 = vst [vmem:[#allocation3 + $0x9c8] sm:$0xff] %v895
        %932 = vst [vmem:[#allocation3 + $0xa10] sm:$0xff] %v896
        %v933 = vld [vmem:[%s320 + $0x26] sm:$0xff]
        %v934 = vld [vmem:[%s320 + $0x2e] sm:$0xff]
        %v935 = vld [vmem:[%s320 + $0x36] sm:$0xff]
        %v936 = vld [vmem:[%s320 + $0x3e] sm:$0xff]
        %v937 = vld [vmem:[%s320 + $0x46] sm:$0xff]
        %v938 = vld [vmem:[%s320 + $0x4e] sm:$0xff]
        %v939 = vld [vmem:[%s320 + $0x56] sm:$0xff]
        %v940 = vld [vmem:[%s320 + $0x5e] sm:$0xff]
        %v941 = vld [vmem:[%s320 + $0x66] sm:$0xff]
        %v942 = vld [vmem:[%s320 + $0x6e] sm:$0xff]
        %v943 = vld [vmem:[%s320 + $0x76] sm:$0xff]
        %v944 = vld [vmem:[%s320 + $0x7e] sm:$0xff]
        %v945 = vld [vmem:[%s320 + $0x86] sm:$0xff]
        %v946 = vld [vmem:[%s320 + $0x8e] sm:$0xff]
        %v947 = vld [vmem:[%s320 + $0x96] sm:$0xff]
        %v948 = vld [vmem:[%s320 + $0x9e] sm:$0xff]
        %v949 = vld [vmem:[%s320 + $0xa6] sm:$0xff]
        %v950 = vld [vmem:[%s320 + $0xae] sm:$0xff]
        %v951 = vld [vmem:[%s320 + $0xb6] sm:$0xff]
        %v952 = vld [vmem:[%s320 + $0xbe] sm:$0xff]
        %v953 = vld [vmem:[%s320 + $0xc6] sm:$0xff]
        %v954 = vld [vmem:[%s320 + $0xce] sm:$0xff]
        %v955 = vld [vmem:[%s320 + $0xd6] sm:$0xff]
        %v956 = vld [vmem:[%s320 + $0xde] sm:$0xff]
        %v957 = vld [vmem:[%s320 + $0xe6] sm:$0xff]
        %v958 = vld [vmem:[%s320 + $0xee] sm:$0xff]
        %v959 = vld [vmem:[%s320 + $0xf6] sm:$0xff]
        %v960 = vld [vmem:[%s320 + $0xfe] sm:$0xff]
        %v961 = vld [vmem:[%s320 + $0x106] sm:$0xff]
        %v962 = vld [vmem:[%s320 + $0x10e] sm:$0xff]
        %v963 = vld [vmem:[%s320 + $0x116] sm:$0xff]
        %v964 = vld [vmem:[%s320 + $0x11e] sm:$0xff]
        %v965 = vld [vmem:[%s320 + $0x126] sm:$0xff]
        %v966 = vld [vmem:[%s320 + $0x12e] sm:$0xff]
        %v967 = vld [vmem:[%s320 + $0x136] sm:$0xff]
        %v968 = vld [vmem:[%s320 + $0x13e] sm:$0xff]
        %969 = vst [vmem:[#allocation3 + $0x40] sm:$0xff] %v933
        %970 = vst [vmem:[#allocation3 + $0x88] sm:$0xff] %v934
        %971 = vst [vmem:[#allocation3 + $0xd0] sm:$0xff] %v935
        %972 = vst [vmem:[#allocation3 + $0x118] sm:$0xff] %v936
        %973 = vst [vmem:[#allocation3 + $0x160] sm:$0xff] %v937
        %974 = vst [vmem:[#allocation3 + $0x1a8] sm:$0xff] %v938
        %975 = vst [vmem:[#allocation3 + $0x1f0] sm:$0xff] %v939
        %976 = vst [vmem:[#allocation3 + $0x238] sm:$0xff] %v940
        %977 = vst [vmem:[#allocation3 + $0x280] sm:$0xff] %v941
        %978 = vst [vmem:[#allocation3 + $0x2c8] sm:$0xff] %v942
        %979 = vst [vmem:[#allocation3 + $0x310] sm:$0xff] %v943
        %980 = vst [vmem:[#allocation3 + $0x358] sm:$0xff] %v944
        %981 = vst [vmem:[#allocation3 + $0x3a0] sm:$0xff] %v945
        %982 = vst [vmem:[#allocation3 + $0x3e8] sm:$0xff] %v946
        %983 = vst [vmem:[#allocation3 + $0x430] sm:$0xff] %v947
        %984 = vst [vmem:[#allocation3 + $0x478] sm:$0xff] %v948
        %985 = vst [vmem:[#allocation3 + $0x4c0] sm:$0xff] %v949
        %986 = vst [vmem:[#allocation3 + $0x508] sm:$0xff] %v950
        %987 = vst [vmem:[#allocation3 + $0x550] sm:$0xff] %v951
        %988 = vst [vmem:[#allocation3 + $0x598] sm:$0xff] %v952
        %989 = vst [vmem:[#allocation3 + $0x5e0] sm:$0xff] %v953
        %990 = vst [vmem:[#allocation3 + $0x628] sm:$0xff] %v954
        %991 = vst [vmem:[#allocation3 + $0x670] sm:$0xff] %v955
        %992 = vst [vmem:[#allocation3 + $0x6b8] sm:$0xff] %v956
        %993 = vst [vmem:[#allocation3 + $0x700] sm:$0xff] %v957
        %994 = vst [vmem:[#allocation3 + $0x748] sm:$0xff] %v958
        %995 = vst [vmem:[#allocation3 + $0x790] sm:$0xff] %v959
        %996 = vst [vmem:[#allocation3 + $0x7d8] sm:$0xff] %v960
        %997 = vst [vmem:[#allocation3 + $0x820] sm:$0xff] %v961
        %998 = vst [vmem:[#allocation3 + $0x868] sm:$0xff] %v962
        %999 = vst [vmem:[#allocation3 + $0x8b0] sm:$0xff] %v963
        %1000 = vst [vmem:[#allocation3 + $0x8f8] sm:$0xff] %v964
        %1001 = vst [vmem:[#allocation3 + $0x940] sm:$0xff] %v965
        %1002 = vst [vmem:[#allocation3 + $0x988] sm:$0xff] %v966
        %1003 = vst [vmem:[#allocation3 + $0x9d0] sm:$0xff] %v967
        %1004 = vst [vmem:[#allocation3 + $0xa18] sm:$0xff] %v968
        %v1005 = vld [vmem:[#allocation3] sm:$0xff]
        %v1006 = vld [vmem:[#allocation3 + $0x8] sm:$0xff]
        %v1007 = vld [vmem:[#allocation3 + $0x10] sm:$0xff]
        %v1008 = vld [vmem:[#allocation3 + $0x18] sm:$0xff]
        %v1009 = vld [vmem:[#allocation3 + $0x20] sm:$0xff]
        %v1010 = vld [vmem:[#allocation3 + $0x28] sm:$0xff]
        %v1011 = vld [vmem:[#allocation3 + $0x30] sm:$0xff]
        %v1012 = vld [vmem:[#allocation3 + $0x38] sm:$0xff]
        %v1013 = vld [vmem:[#allocation3 + $0x40] sm:$0xff]
        %v1014 = vld [vmem:[#allocation3 + $0x48] sm:$0xff]
        %v1015 = vld [vmem:[#allocation3 + $0x50] sm:$0xff]
        %v1016 = vld [vmem:[#allocation3 + $0x58] sm:$0xff]
        %v1017 = vld [vmem:[#allocation3 + $0x60] sm:$0xff]
        %v1018 = vld [vmem:[#allocation3 + $0x68] sm:$0xff]
        %v1019 = vld [vmem:[#allocation3 + $0x70] sm:$0xff]
        %v1020 = vld [vmem:[#allocation3 + $0x78] sm:$0xff]
        %v1021 = vld [vmem:[#allocation3 + $0x80] sm:$0xff]
        %v1022 = vld [vmem:[#allocation3 + $0x88] sm:$0xff]
        %v1023 = vld [vmem:[#allocation3 + $0x90] sm:$0xff]
        %v1024 = vld [vmem:[#allocation3 + $0x98] sm:$0xff]
        %v1025 = vld [vmem:[#allocation3 + $0xa0] sm:$0xff]
        %v1026 = vld [vmem:[#allocation3 + $0xa8] sm:$0xff]
        %v1027 = vld [vmem:[#allocation3 + $0xb0] sm:$0xff]
        %v1028 = vld [vmem:[#allocation3 + $0xb8] sm:$0xff]
        %v1029 = vld [vmem:[#allocation3 + $0xc0] sm:$0xff]
        %v1030 = vld [vmem:[#allocation3 + $0xc8] sm:$0xff]
        %v1031 = vld [vmem:[#allocation3 + $0xd0] sm:$0xff]
        %v1032 = vld [vmem:[#allocation3 + $0xd8] sm:$0xff]
        %v1033 = vld [vmem:[#allocation3 + $0xe0] sm:$0xff]
        %v1034 = vld [vmem:[#allocation3 + $0xe8] sm:$0xff]
        %v1035 = vld [vmem:[#allocation3 + $0xf0] sm:$0xff]
        %v1036 = vld [vmem:[#allocation3 + $0xf8] sm:$0xff]
        %v1037 = vld [vmem:[#allocation3 + $0x100] sm:$0xff]
        %v1038 = vld [vmem:[#allocation3 + $0x108] sm:$0xff]
        %v1039 = vld [vmem:[#allocation3 + $0x110] sm:$0xff]
        %v1040 = vld [vmem:[#allocation3 + $0x118] sm:$0xff]
        %v1041 = vld [vmem:[#allocation3 + $0x120] sm:$0xff]
        %v1042 = vld [vmem:[#allocation3 + $0x128] sm:$0xff]
        %v1043 = vld [vmem:[#allocation3 + $0x130] sm:$0xff]
        %v1044 = vld [vmem:[#allocation3 + $0x138] sm:$0xff]
        %v1045 = vld [vmem:[#allocation3 + $0x140] sm:$0xff]
        %v1046 = vld [vmem:[#allocation3 + $0x148] sm:$0xff]
        %v1047 = vld [vmem:[#allocation3 + $0x150] sm:$0xff]
        %v1048 = vld [vmem:[#allocation3 + $0x158] sm:$0xff]
        %v1049 = vld [vmem:[#allocation3 + $0x160] sm:$0xff]
        %v1050 = vld [vmem:[#allocation3 + $0x168] sm:$0xff]
        %v1051 = vld [vmem:[#allocation3 + $0x170] sm:$0xff]
        %v1052 = vld [vmem:[#allocation3 + $0x178] sm:$0xff]
        %v1053 = vld [vmem:[#allocation3 + $0x180] sm:$0xff]
        %v1054 = vld [vmem:[#allocation3 + $0x188] sm:$0xff]
        %v1055 = vld [vmem:[#allocation3 + $0x190] sm:$0xff]
        %v1056 = vld [vmem:[#allocation3 + $0x198] sm:$0xff]
        %v1057 = vld [vmem:[#allocation3 + $0x1a0] sm:$0xff]
        %v1058 = vld [vmem:[#allocation3 + $0x1a8] sm:$0xff]
        %v1059 = vld [vmem:[#allocation3 + $0x1b0] sm:$0xff]
        %v1060 = vld [vmem:[#allocation3 + $0x1b8] sm:$0xff]
        %v1061 = vld [vmem:[#allocation3 + $0x1c0] sm:$0xff]
        %v1062 = vld [vmem:[#allocation3 + $0x1c8] sm:$0xff]
        %v1063 = vld [vmem:[#allocation3 + $0x1d0] sm:$0xff]
        %v1064 = vld [vmem:[#allocation3 + $0x1d8] sm:$0xff]
        %v1065 = vld [vmem:[#allocation3 + $0x1e0] sm:$0xff]
        %v1066 = vld [vmem:[#allocation3 + $0x1e8] sm:$0xff]
        %v1067 = vld [vmem:[#allocation3 + $0x1f0] sm:$0xff]
        %v1068 = vld [vmem:[#allocation3 + $0x1f8] sm:$0xff]
        %v1069 = vld [vmem:[#allocation3 + $0x200] sm:$0xff]
        %v1070 = vld [vmem:[#allocation3 + $0x208] sm:$0xff]
        %v1071 = vld [vmem:[#allocation3 + $0x210] sm:$0xff]
        %v1072 = vld [vmem:[#allocation3 + $0x218] sm:$0xff]
        %v1073 = vld [vmem:[#allocation3 + $0x220] sm:$0xff]
        %v1074 = vld [vmem:[#allocation3 + $0x228] sm:$0xff]
        %v1075 = vld [vmem:[#allocation3 + $0x230] sm:$0xff]
        %v1076 = vld [vmem:[#allocation3 + $0x238] sm:$0xff]
        %v1077 = vld [vmem:[#allocation3 + $0x240] sm:$0xff]
        %v1078 = vld [vmem:[#allocation3 + $0x248] sm:$0xff]
        %v1079 = vld [vmem:[#allocation3 + $0x250] sm:$0xff]
        %v1080 = vld [vmem:[#allocation3 + $0x258] sm:$0xff]
        %v1081 = vld [vmem:[#allocation3 + $0x260] sm:$0xff]
        %v1082 = vld [vmem:[#allocation3 + $0x268] sm:$0xff]
        %v1083 = vld [vmem:[#allocation3 + $0x270] sm:$0xff]
        %v1084 = vld [vmem:[#allocation3 + $0x278] sm:$0xff]
        %v1085 = vld [vmem:[#allocation3 + $0x280] sm:$0xff]
        %v1086 = vld [vmem:[#allocation3 + $0x288] sm:$0xff]
        %v1087 = vld [vmem:[#allocation3 + $0x290] sm:$0xff]
        %v1088 = vld [vmem:[#allocation3 + $0x298] sm:$0xff]
        %v1089 = vld [vmem:[#allocation3 + $0x2a0] sm:$0xff]
        %v1090 = vld [vmem:[#allocation3 + $0x2a8] sm:$0xff]
        %v1091 = vld [vmem:[#allocation3 + $0x2b0] sm:$0xff]
        %v1092 = vld [vmem:[#allocation3 + $0x2b8] sm:$0xff]
        %v1093 = vld [vmem:[#allocation3 + $0x2c0] sm:$0xff]
        %v1094 = vld [vmem:[#allocation3 + $0x2c8] sm:$0xff]
        %v1095 = vld [vmem:[#allocation3 + $0x2d0] sm:$0xff]
        %v1096 = vld [vmem:[#allocation3 + $0x2d8] sm:$0xff]
        %v1097 = vld [vmem:[#allocation3 + $0x2e0] sm:$0xff]
        %v1098 = vld [vmem:[#allocation3 + $0x2e8] sm:$0xff]
        %v1099 = vld [vmem:[#allocation3 + $0x2f0] sm:$0xff]
        %v1100 = vld [vmem:[#allocation3 + $0x2f8] sm:$0xff]
        %v1101 = vld [vmem:[#allocation3 + $0x300] sm:$0xff]
        %v1102 = vld [vmem:[#allocation3 + $0x308] sm:$0xff]
        %v1103 = vld [vmem:[#allocation3 + $0x310] sm:$0xff]
        %v1104 = vld [vmem:[#allocation3 + $0x318] sm:$0xff]
        %v1105 = vld [vmem:[#allocation3 + $0x320] sm:$0xff]
        %v1106 = vld [vmem:[#allocation3 + $0x328] sm:$0xff]
        %v1107 = vld [vmem:[#allocation3 + $0x330] sm:$0xff]
        %v1108 = vld [vmem:[#allocation3 + $0x338] sm:$0xff]
        %v1109 = vld [vmem:[#allocation3 + $0x340] sm:$0xff]
        %v1110 = vld [vmem:[#allocation3 + $0x348] sm:$0xff]
        %v1111 = vld [vmem:[#allocation3 + $0x350] sm:$0xff]
        %v1112 = vld [vmem:[#allocation3 + $0x358] sm:$0xff]
        %v1113 = vld [vmem:[#allocation3 + $0x360] sm:$0xff]
        %v1114 = vld [vmem:[#allocation3 + $0x368] sm:$0xff]
        %v1115 = vld [vmem:[#allocation3 + $0x370] sm:$0xff]
        %v1116 = vld [vmem:[#allocation3 + $0x378] sm:$0xff]
        %v1117 = vld [vmem:[#allocation3 + $0x380] sm:$0xff]
        %v1118 = vld [vmem:[#allocation3 + $0x388] sm:$0xff]
        %v1119 = vld [vmem:[#allocation3 + $0x390] sm:$0xff]
        %v1120 = vld [vmem:[#allocation3 + $0x398] sm:$0xff]
        %v1121 = vld [vmem:[#allocation3 + $0x3a0] sm:$0xff]
        %v1122 = vld [vmem:[#allocation3 + $0x3a8] sm:$0xff]
        %v1123 = vld [vmem:[#allocation3 + $0x3b0] sm:$0xff]
        %v1124 = vld [vmem:[#allocation3 + $0x3b8] sm:$0xff]
        %v1125 = vld [vmem:[#allocation3 + $0x3c0] sm:$0xff]
        %v1126 = vld [vmem:[#allocation3 + $0x3c8] sm:$0xff]
        %v1127 = vld [vmem:[#allocation3 + $0x3d0] sm:$0xff]
        %v1128 = vld [vmem:[#allocation3 + $0x3d8] sm:$0xff]
        %v1129 = vld [vmem:[#allocation3 + $0x3e0] sm:$0xff]
        %v1130 = vld [vmem:[#allocation3 + $0x3e8] sm:$0xff]
        %v1131 = vld [vmem:[#allocation3 + $0x3f0] sm:$0xff]
        %v1132 = vld [vmem:[#allocation3 + $0x3f8] sm:$0xff]
        %v1133 = vld [vmem:[#allocation3 + $0x400] sm:$0xff]
        %v1134 = vld [vmem:[#allocation3 + $0x408] sm:$0xff]
        %v1135 = vld [vmem:[#allocation3 + $0x410] sm:$0xff]
        %v1136 = vld [vmem:[#allocation3 + $0x418] sm:$0xff]
        %v1137 = vld [vmem:[#allocation3 + $0x420] sm:$0xff]
        %v1138 = vld [vmem:[#allocation3 + $0x428] sm:$0xff]
        %v1139 = vld [vmem:[#allocation3 + $0x430] sm:$0xff]
        %v1140 = vld [vmem:[#allocation3 + $0x438] sm:$0xff]
        %v1141 = vld [vmem:[#allocation3 + $0x440] sm:$0xff]
        %v1142 = vld [vmem:[#allocation3 + $0x448] sm:$0xff]
        %v1143 = vld [vmem:[#allocation3 + $0x450] sm:$0xff]
        %v1144 = vld [vmem:[#allocation3 + $0x458] sm:$0xff]
        %v1145 = vld [vmem:[#allocation3 + $0x460] sm:$0xff]
        %v1146 = vld [vmem:[#allocation3 + $0x468] sm:$0xff]
        %v1147 = vld [vmem:[#allocation3 + $0x470] sm:$0xff]
        %v1148 = vld [vmem:[#allocation3 + $0x478] sm:$0xff]
        %v1149 = vld [vmem:[#allocation3 + $0x480] sm:$0xff]
        %v1150 = vld [vmem:[#allocation3 + $0x488] sm:$0xff]
        %v1151 = vld [vmem:[#allocation3 + $0x490] sm:$0xff]
        %v1152 = vld [vmem:[#allocation3 + $0x498] sm:$0xff]
        %v1153 = vld [vmem:[#allocation3 + $0x4a0] sm:$0xff]
        %v1154 = vld [vmem:[#allocation3 + $0x4a8] sm:$0xff]
        %v1155 = vld [vmem:[#allocation3 + $0x4b0] sm:$0xff]
        %v1156 = vld [vmem:[#allocation3 + $0x4b8] sm:$0xff]
        %v1157 = vld [vmem:[#allocation3 + $0x4c0] sm:$0xff]
        %v1158 = vld [vmem:[#allocation3 + $0x4c8] sm:$0xff]
        %v1159 = vld [vmem:[#allocation3 + $0x4d0] sm:$0xff]
        %v1160 = vld [vmem:[#allocation3 + $0x4d8] sm:$0xff]
        %v1161 = vld [vmem:[#allocation3 + $0x4e0] sm:$0xff]
        %v1162 = vld [vmem:[#allocation3 + $0x4e8] sm:$0xff]
        %v1163 = vld [vmem:[#allocation3 + $0x4f0] sm:$0xff]
        %v1164 = vld [vmem:[#allocation3 + $0x4f8] sm:$0xff]
        %v1165 = vld [vmem:[#allocation3 + $0x500] sm:$0xff]
        %v1166 = vld [vmem:[#allocation3 + $0x508] sm:$0xff]
        %v1167 = vld [vmem:[#allocation3 + $0x510] sm:$0xff]
        %v1168 = vld [vmem:[#allocation3 + $0x518] sm:$0xff]
        %v1169 = vld [vmem:[#allocation3 + $0x520] sm:$0xff]
        %v1170 = vld [vmem:[#allocation3 + $0x528] sm:$0xff]
        %v1171 = vld [vmem:[#allocation3 + $0x530] sm:$0xff]
        %v1172 = vld [vmem:[#allocation3 + $0x538] sm:$0xff]
        %v1173 = vld [vmem:[#allocation3 + $0x540] sm:$0xff]
        %v1174 = vld [vmem:[#allocation3 + $0x548] sm:$0xff]
        %v1175 = vld [vmem:[#allocation3 + $0x550] sm:$0xff]
        %v1176 = vld [vmem:[#allocation3 + $0x558] sm:$0xff]
        %v1177 = vld [vmem:[#allocation3 + $0x560] sm:$0xff]
        %v1178 = vld [vmem:[#allocation3 + $0x568] sm:$0xff]
        %v1179 = vld [vmem:[#allocation3 + $0x570] sm:$0xff]
        %v1180 = vld [vmem:[#allocation3 + $0x578] sm:$0xff]
        %v1181 = vld [vmem:[#allocation3 + $0x580] sm:$0xff]
        %v1182 = vld [vmem:[#allocation3 + $0x588] sm:$0xff]
        %v1183 = vld [vmem:[#allocation3 + $0x590] sm:$0xff]
        %v1184 = vld [vmem:[#allocation3 + $0x598] sm:$0xff]
        %v1185 = vld [vmem:[#allocation3 + $0x5a0] sm:$0xff]
        %v1186 = vld [vmem:[#allocation3 + $0x5a8] sm:$0xff]
        %v1187 = vld [vmem:[#allocation3 + $0x5b0] sm:$0xff]
        %v1188 = vld [vmem:[#allocation3 + $0x5b8] sm:$0xff]
        %v1189 = vld [vmem:[#allocation3 + $0x5c0] sm:$0xff]
        %v1190 = vld [vmem:[#allocation3 + $0x5c8] sm:$0xff]
        %v1191 = vld [vmem:[#allocation3 + $0x5d0] sm:$0xff]
        %v1192 = vld [vmem:[#allocation3 + $0x5d8] sm:$0xff]
        %v1193 = vld [vmem:[#allocation3 + $0x5e0] sm:$0xff]
        %v1194 = vld [vmem:[#allocation3 + $0x5e8] sm:$0xff]
        %v1195 = vld [vmem:[#allocation3 + $0x5f0] sm:$0xff]
        %v1196 = vld [vmem:[#allocation3 + $0x5f8] sm:$0xff]
        %v1197 = vld [vmem:[#allocation3 + $0x600] sm:$0xff]
        %v1198 = vld [vmem:[#allocation3 + $0x608] sm:$0xff]
        %v1199 = vld [vmem:[#allocation3 + $0x610] sm:$0xff]
        %v1200 = vld [vmem:[#allocation3 + $0x618] sm:$0xff]
        %v1201 = vld [vmem:[#allocation3 + $0x620] sm:$0xff]
        %v1202 = vld [vmem:[#allocation3 + $0x628] sm:$0xff]
        %v1203 = vld [vmem:[#allocation3 + $0x630] sm:$0xff]
        %v1204 = vld [vmem:[#allocation3 + $0x638] sm:$0xff]
        %v1205 = vld [vmem:[#allocation3 + $0x640] sm:$0xff]
        %v1206 = vld [vmem:[#allocation3 + $0x648] sm:$0xff]
        %v1207 = vld [vmem:[#allocation3 + $0x650] sm:$0xff]
        %v1208 = vld [vmem:[#allocation3 + $0x658] sm:$0xff]
        %v1209 = vld [vmem:[#allocation3 + $0x660] sm:$0xff]
        %v1210 = vld [vmem:[#allocation3 + $0x668] sm:$0xff]
        %v1211 = vld [vmem:[#allocation3 + $0x670] sm:$0xff]
        %v1212 = vld [vmem:[#allocation3 + $0x678] sm:$0xff]
        %v1213 = vld [vmem:[#allocation3 + $0x680] sm:$0xff]
        %v1214 = vld [vmem:[#allocation3 + $0x688] sm:$0xff]
        %v1215 = vld [vmem:[#allocation3 + $0x690] sm:$0xff]
        %v1216 = vld [vmem:[#allocation3 + $0x698] sm:$0xff]
        %v1217 = vld [vmem:[#allocation3 + $0x6a0] sm:$0xff]
        %v1218 = vld [vmem:[#allocation3 + $0x6a8] sm:$0xff]
        %v1219 = vld [vmem:[#allocation3 + $0x6b0] sm:$0xff]
        %v1220 = vld [vmem:[#allocation3 + $0x6b8] sm:$0xff]
        %v1221 = vld [vmem:[#allocation3 + $0x6c0] sm:$0xff]
        %v1222 = vld [vmem:[#allocation3 + $0x6c8] sm:$0xff]
        %v1223 = vld [vmem:[#allocation3 + $0x6d0] sm:$0xff]
        %v1224 = vld [vmem:[#allocation3 + $0x6d8] sm:$0xff]
        %v1225 = vld [vmem:[#allocation3 + $0x6e0] sm:$0xff]
        %v1226 = vld [vmem:[#allocation3 + $0x6e8] sm:$0xff]
        %v1227 = vld [vmem:[#allocation3 + $0x6f0] sm:$0xff]
        %v1228 = vld [vmem:[#allocation3 + $0x6f8] sm:$0xff]
        %v1229 = vld [vmem:[#allocation3 + $0x700] sm:$0xff]
        %v1230 = vld [vmem:[#allocation3 + $0x708] sm:$0xff]
        %v1231 = vld [vmem:[#allocation3 + $0x710] sm:$0xff]
        %v1232 = vld [vmem:[#allocation3 + $0x718] sm:$0xff]
        %v1233 = vld [vmem:[#allocation3 + $0x720] sm:$0xff]
        %v1234 = vld [vmem:[#allocation3 + $0x728] sm:$0xff]
        %v1235 = vld [vmem:[#allocation3 + $0x730] sm:$0xff]
        %v1236 = vld [vmem:[#allocation3 + $0x738] sm:$0xff]
        %v1237 = vld [vmem:[#allocation3 + $0x740] sm:$0xff]
        %v1238 = vld [vmem:[#allocation3 + $0x748] sm:$0xff]
        %v1239 = vld [vmem:[#allocation3 + $0x750] sm:$0xff]
        %v1240 = vld [vmem:[#allocation3 + $0x758] sm:$0xff]
        %v1241 = vld [vmem:[#allocation3 + $0x760] sm:$0xff]
        %v1242 = vld [vmem:[#allocation3 + $0x768] sm:$0xff]
        %v1243 = vld [vmem:[#allocation3 + $0x770] sm:$0xff]
        %v1244 = vld [vmem:[#allocation3 + $0x778] sm:$0xff]
        %v1245 = vld [vmem:[#allocation3 + $0x780] sm:$0xff]
        %v1246 = vld [vmem:[#allocation3 + $0x788] sm:$0xff]
        %v1247 = vld [vmem:[#allocation3 + $0x790] sm:$0xff]
        %v1248 = vld [vmem:[#allocation3 + $0x798] sm:$0xff]
        %v1249 = vld [vmem:[#allocation3 + $0x7a0] sm:$0xff]
        %v1250 = vld [vmem:[#allocation3 + $0x7a8] sm:$0xff]
        %v1251 = vld [vmem:[#allocation3 + $0x7b0] sm:$0xff]
        %v1252 = vld [vmem:[#allocation3 + $0x7b8] sm:$0xff]
        %v1253 = vld [vmem:[#allocation3 + $0x7c0] sm:$0xff]
        %v1254 = vld [vmem:[#allocation3 + $0x7c8] sm:$0xff]
        %v1255 = vld [vmem:[#allocation3 + $0x7d0] sm:$0xff]
        %v1256 = vld [vmem:[#allocation3 + $0x7d8] sm:$0xff]
        %v1257 = vld [vmem:[#allocation3 + $0x7e0] sm:$0xff]
        %v1258 = vld [vmem:[#allocation3 + $0x7e8] sm:$0xff]
        %v1259 = vld [vmem:[#allocation3 + $0x7f0] sm:$0xff]
        %v1260 = vld [vmem:[#allocation3 + $0x7f8] sm:$0xff]
        %v1261 = vld [vmem:[#allocation3 + $0x800] sm:$0xff]
        %v1262 = vld [vmem:[#allocation3 + $0x808] sm:$0xff]
        %v1263 = vld [vmem:[#allocation3 + $0x810] sm:$0xff]
        %v1264 = vld [vmem:[#allocation3 + $0x818] sm:$0xff]
        %v1265 = vld [vmem:[#allocation3 + $0x820] sm:$0xff]
        %v1266 = vld [vmem:[#allocation3 + $0x828] sm:$0xff]
        %v1267 = vld [vmem:[#allocation3 + $0x830] sm:$0xff]
        %v1268 = vld [vmem:[#allocation3 + $0x838] sm:$0xff]
        %v1269 = vld [vmem:[#allocation3 + $0x840] sm:$0xff]
        %v1270 = vld [vmem:[#allocation3 + $0x848] sm:$0xff]
        %v1271 = vld [vmem:[#allocation3 + $0x850] sm:$0xff]
        %v1272 = vld [vmem:[#allocation3 + $0x858] sm:$0xff]
        %v1273 = vld [vmem:[#allocation3 + $0x860] sm:$0xff]
        %v1274 = vld [vmem:[#allocation3 + $0x868] sm:$0xff]
        %v1275 = vld [vmem:[#allocation3 + $0x870] sm:$0xff]
        %v1276 = vld [vmem:[#allocation3 + $0x878] sm:$0xff]
        %v1277 = vld [vmem:[#allocation3 + $0x880] sm:$0xff]
        %v1278 = vld [vmem:[#allocation3 + $0x888] sm:$0xff]
        %v1279 = vld [vmem:[#allocation3 + $0x890] sm:$0xff]
        %v1280 = vld [vmem:[#allocation3 + $0x898] sm:$0xff]
        %v1281 = vld [vmem:[#allocation3 + $0x8a0] sm:$0xff]
        %v1282 = vld [vmem:[#allocation3 + $0x8a8] sm:$0xff]
        %v1283 = vld [vmem:[#allocation3 + $0x8b0] sm:$0xff]
        %v1284 = vld [vmem:[#allocation3 + $0x8b8] sm:$0xff]
        %v1285 = vld [vmem:[#allocation3 + $0x8c0] sm:$0xff]
        %v1286 = vld [vmem:[#allocation3 + $0x8c8] sm:$0xff]
        %v1287 = vld [vmem:[#allocation3 + $0x8d0] sm:$0xff]
        %v1288 = vld [vmem:[#allocation3 + $0x8d8] sm:$0xff]
        %v1289 = vld [vmem:[#allocation3 + $0x8e0] sm:$0xff]
        %v1290 = vld [vmem:[#allocation3 + $0x8e8] sm:$0xff]
        %v1291 = vld [vmem:[#allocation3 + $0x8f0] sm:$0xff]
        %v1292 = vld [vmem:[#allocation3 + $0x8f8] sm:$0xff]
        %v1293 = vld [vmem:[#allocation3 + $0x900] sm:$0xff]
        %v1294 = vld [vmem:[#allocation3 + $0x908] sm:$0xff]
        %v1295 = vld [vmem:[#allocation3 + $0x910] sm:$0xff]
        %v1296 = vld [vmem:[#allocation3 + $0x918] sm:$0xff]
        %v1297 = vld [vmem:[#allocation3 + $0x920] sm:$0xff]
        %v1298 = vld [vmem:[#allocation3 + $0x928] sm:$0xff]
        %v1299 = vld [vmem:[#allocation3 + $0x930] sm:$0xff]
        %v1300 = vld [vmem:[#allocation3 + $0x938] sm:$0xff]
        %v1301 = vld [vmem:[#allocation3 + $0x940] sm:$0xff]
        %v1302 = vld [vmem:[#allocation3 + $0x948] sm:$0xff]
        %v1303 = vld [vmem:[#allocation3 + $0x950] sm:$0xff]
        %v1304 = vld [vmem:[#allocation3 + $0x958] sm:$0xff]
        %v1305 = vld [vmem:[#allocation3 + $0x960] sm:$0xff]
        %v1306 = vld [vmem:[#allocation3 + $0x968] sm:$0xff]
        %v1307 = vld [vmem:[#allocation3 + $0x970] sm:$0xff]
        %v1308 = vld [vmem:[#allocation3 + $0x978] sm:$0xff]
        %v1309 = vld [vmem:[#allocation3 + $0x980] sm:$0xff]
        %v1310 = vld [vmem:[#allocation3 + $0x988] sm:$0xff]
        %v1311 = vld [vmem:[#allocation3 + $0x990] sm:$0xff]
        %v1312 = vld [vmem:[#allocation3 + $0x998] sm:$0xff]
        %v1313 = vld [vmem:[#allocation3 + $0x9a0] sm:$0xff]
        %v1314 = vld [vmem:[#allocation3 + $0x9a8] sm:$0xff]
        %v1315 = vld [vmem:[#allocation3 + $0x9b0] sm:$0xff]
        %v1316 = vld [vmem:[#allocation3 + $0x9b8] sm:$0xff]
        %v1317 = vld [vmem:[#allocation3 + $0x9c0] sm:$0xff]
        %v1318 = vld [vmem:[#allocation3 + $0x9c8] sm:$0xff]
        %v1319 = vld [vmem:[#allocation3 + $0x9d0] sm:$0xff]
        %v1320 = vld [vmem:[#allocation3 + $0x9d8] sm:$0xff]
        %v1321 = vld [vmem:[#allocation3 + $0x9e0] sm:$0xff]
        %v1322 = vld [vmem:[#allocation3 + $0x9e8] sm:$0xff]
        %v1323 = vld [vmem:[#allocation3 + $0x9f0] sm:$0xff]
        %v1324 = vld [vmem:[#allocation3 + $0x9f8] sm:$0xff]
        %v1325 = vld [vmem:[#allocation3 + $0xa00] sm:$0xff]
        %v1326 = vld [vmem:[#allocation3 + $0xa08] sm:$0xff]
        %v1327 = vld [vmem:[#allocation3 + $0xa10] sm:$0xff]
        %v1328 = vld [vmem:[#allocation3 + $0xa18] sm:$0xff]
        %v1329 = vld [vmem:[%s1] sm:$0xff]
        %v1330 = vld [vmem:[%s1 + $0x8] sm:$0xff]
        %v1331 = vld [vmem:[%s1 + $0x10] sm:$0xff]
        %v1332 = vld [vmem:[%s1 + $0x18] sm:$0xff]
        %v1333 = vld [vmem:[%s1 + $0x20] sm:$0xff]
        %v1334 = vld [vmem:[%s1 + $0x28] sm:$0xff]
        %v1335 = vld [vmem:[%s1 + $0x30] sm:$0xff]
        %v1336 = vld [vmem:[%s1 + $0x38] sm:$0xff]
        %v1337 = vld [vmem:[%s1 + $0x40] sm:$0xff]
        %v1338 = vld [vmem:[%s1 + $0x48] sm:$0xff]
        %v1339 = vld [vmem:[%s1 + $0x50] sm:$0xff]
        %v1340 = vld [vmem:[%s1 + $0x58] sm:$0xff]
        %v1341 = vld [vmem:[%s1 + $0x60] sm:$0xff]
        %v1342 = vld [vmem:[%s1 + $0x68] sm:$0xff]
        %v1343 = vld [vmem:[%s1 + $0x70] sm:$0xff]
        %v1344 = vld [vmem:[%s1 + $0x78] sm:$0xff]
        %v1345 = vld [vmem:[%s1 + $0x80] sm:$0xff]
        %v1346 = vld [vmem:[%s1 + $0x88] sm:$0xff]
        %v1347 = vld [vmem:[%s1 + $0x90] sm:$0xff]
        %v1348 = vld [vmem:[%s1 + $0x98] sm:$0xff]
        %v1349 = vld [vmem:[%s1 + $0xa0] sm:$0xff]
        %v1350 = vld [vmem:[%s1 + $0xa8] sm:$0xff]
        %v1351 = vld [vmem:[%s1 + $0xb0] sm:$0xff]
        %v1352 = vld [vmem:[%s1 + $0xb8] sm:$0xff]
        %v1353 = vld [vmem:[%s1 + $0xc0] sm:$0xff]
        %v1354 = vld [vmem:[%s1 + $0xc8] sm:$0xff]
        %v1355 = vld [vmem:[%s1 + $0xd0] sm:$0xff]
        %v1356 = vld [vmem:[%s1 + $0xd8] sm:$0xff]
        %v1357 = vld [vmem:[%s1 + $0xe0] sm:$0xff]
        %v1358 = vld [vmem:[%s1 + $0xe8] sm:$0xff]
        %v1359 = vld [vmem:[%s1 + $0xf0] sm:$0xff]
        %v1360 = vld [vmem:[%s1 + $0xf8] sm:$0xff]
        %v1361 = vld [vmem:[%s1 + $0x100] sm:$0xff]
        %v1362 = vld [vmem:[%s1 + $0x108] sm:$0xff]
        %v1363 = vld [vmem:[%s1 + $0x110] sm:$0xff]
        %v1364 = vld [vmem:[%s1 + $0x118] sm:$0xff]
        %v1365 = vld [vmem:[%s1 + $0x120] sm:$0xff]
        %v1366 = vld [vmem:[%s1 + $0x128] sm:$0xff]
        %v1367 = vld [vmem:[%s1 + $0x130] sm:$0xff]
        %v1368 = vld [vmem:[%s1 + $0x138] sm:$0xff]
        %v1369 = vld [vmem:[%s1 + $0x140] sm:$0xff]
        %v1370 = vld [vmem:[%s1 + $0x148] sm:$0xff]
        %v1371 = vld [vmem:[%s1 + $0x150] sm:$0xff]
        %v1372 = vld [vmem:[%s1 + $0x158] sm:$0xff]
        %v1373 = vld [vmem:[%s1 + $0x160] sm:$0xff]
        %v1374 = vld [vmem:[%s1 + $0x168] sm:$0xff]
        %v1375 = vld [vmem:[%s1 + $0x170] sm:$0xff]
        %v1376 = vld [vmem:[%s1 + $0x178] sm:$0xff]
        %v1377 = vld [vmem:[%s1 + $0x180] sm:$0xff]
        %v1378 = vld [vmem:[%s1 + $0x188] sm:$0xff]
        %v1379 = vld [vmem:[%s1 + $0x190] sm:$0xff]
        %v1380 = vld [vmem:[%s1 + $0x198] sm:$0xff]
        %v1381 = vld [vmem:[%s1 + $0x1a0] sm:$0xff]
        %v1382 = vld [vmem:[%s1 + $0x1a8] sm:$0xff]
        %v1383 = vld [vmem:[%s1 + $0x1b0] sm:$0xff]
        %v1384 = vld [vmem:[%s1 + $0x1b8] sm:$0xff]
        %v1385 = vld [vmem:[%s1 + $0x1c0] sm:$0xff]
        %v1386 = vld [vmem:[%s1 + $0x1c8] sm:$0xff]
        %v1387 = vld [vmem:[%s1 + $0x1d0] sm:$0xff]
        %v1388 = vld [vmem:[%s1 + $0x1d8] sm:$0xff]
        %v1389 = vld [vmem:[%s1 + $0x1e0] sm:$0xff]
        %v1390 = vld [vmem:[%s1 + $0x1e8] sm:$0xff]
        %v1391 = vld [vmem:[%s1 + $0x1f0] sm:$0xff]
        %v1392 = vld [vmem:[%s1 + $0x1f8] sm:$0xff]
        %v1393 = vld [vmem:[%s1 + $0x200] sm:$0xff]
        %v1394 = vld [vmem:[%s1 + $0x208] sm:$0xff]
        %v1395 = vld [vmem:[%s1 + $0x210] sm:$0xff]
        %v1396 = vld [vmem:[%s1 + $0x218] sm:$0xff]
        %v1397 = vld [vmem:[%s1 + $0x220] sm:$0xff]
        %v1398 = vld [vmem:[%s1 + $0x228] sm:$0xff]
        %v1399 = vld [vmem:[%s1 + $0x230] sm:$0xff]
        %v1400 = vld [vmem:[%s1 + $0x238] sm:$0xff]
        %v1401 = vld [vmem:[%s1 + $0x240] sm:$0xff]
        %v1402 = vld [vmem:[%s1 + $0x248] sm:$0xff]
        %v1403 = vld [vmem:[%s1 + $0x250] sm:$0xff]
        %v1404 = vld [vmem:[%s1 + $0x258] sm:$0xff]
        %v1405 = vld [vmem:[%s1 + $0x260] sm:$0xff]
        %v1406 = vld [vmem:[%s1 + $0x268] sm:$0xff]
        %v1407 = vld [vmem:[%s1 + $0x270] sm:$0xff]
        %v1408 = vld [vmem:[%s1 + $0x278] sm:$0xff]
        %v1409 = vld [vmem:[%s1 + $0x280] sm:$0xff]
        %v1410 = vld [vmem:[%s1 + $0x288] sm:$0xff]
        %v1411 = vld [vmem:[%s1 + $0x290] sm:$0xff]
        %v1412 = vld [vmem:[%s1 + $0x298] sm:$0xff]
        %v1413 = vld [vmem:[%s1 + $0x2a0] sm:$0xff]
        %v1414 = vld [vmem:[%s1 + $0x2a8] sm:$0xff]
        %v1415 = vld [vmem:[%s1 + $0x2b0] sm:$0xff]
        %v1416 = vld [vmem:[%s1 + $0x2b8] sm:$0xff]
        %v1417 = vld [vmem:[%s1 + $0x2c0] sm:$0xff]
        %v1418 = vld [vmem:[%s1 + $0x2c8] sm:$0xff]
        %v1419 = vld [vmem:[%s1 + $0x2d0] sm:$0xff]
        %v1420 = vld [vmem:[%s1 + $0x2d8] sm:$0xff]
        %v1421 = vld [vmem:[%s1 + $0x2e0] sm:$0xff]
        %v1422 = vld [vmem:[%s1 + $0x2e8] sm:$0xff]
        %v1423 = vld [vmem:[%s1 + $0x2f0] sm:$0xff]
        %v1424 = vld [vmem:[%s1 + $0x2f8] sm:$0xff]
        %v1425 = vld [vmem:[%s1 + $0x300] sm:$0xff]
        %v1426 = vld [vmem:[%s1 + $0x308] sm:$0xff]
        %v1427 = vld [vmem:[%s1 + $0x310] sm:$0xff]
        %v1428 = vld [vmem:[%s1 + $0x318] sm:$0xff]
        %v1429 = vld [vmem:[%s1 + $0x320] sm:$0xff]
        %v1430 = vld [vmem:[%s1 + $0x328] sm:$0xff]
        %v1431 = vld [vmem:[%s1 + $0x330] sm:$0xff]
        %v1432 = vld [vmem:[%s1 + $0x338] sm:$0xff]
        %v1433 = vld [vmem:[%s1 + $0x340] sm:$0xff]
        %v1434 = vld [vmem:[%s1 + $0x348] sm:$0xff]
        %v1435 = vld [vmem:[%s1 + $0x350] sm:$0xff]
        %v1436 = vld [vmem:[%s1 + $0x358] sm:$0xff]
        %v1437 = vld [vmem:[%s1 + $0x360] sm:$0xff]
        %v1438 = vld [vmem:[%s1 + $0x368] sm:$0xff]
        %v1439 = vld [vmem:[%s1 + $0x370] sm:$0xff]
        %v1440 = vld [vmem:[%s1 + $0x378] sm:$0xff]
        %v1441 = vld [vmem:[%s1 + $0x380] sm:$0xff]
        %v1442 = vld [vmem:[%s1 + $0x388] sm:$0xff]
        %v1443 = vld [vmem:[%s1 + $0x390] sm:$0xff]
        %v1444 = vld [vmem:[%s1 + $0x398] sm:$0xff]
        %v1445 = vld [vmem:[%s1 + $0x3a0] sm:$0xff]
        %v1446 = vld [vmem:[%s1 + $0x3a8] sm:$0xff]
        %v1447 = vld [vmem:[%s1 + $0x3b0] sm:$0xff]
        %v1448 = vld [vmem:[%s1 + $0x3b8] sm:$0xff]
        %v1449 = vld [vmem:[%s1 + $0x3c0] sm:$0xff]
        %v1450 = vld [vmem:[%s1 + $0x3c8] sm:$0xff]
        %v1451 = vld [vmem:[%s1 + $0x3d0] sm:$0xff]
        %v1452 = vld [vmem:[%s1 + $0x3d8] sm:$0xff]
        %v1453 = vld [vmem:[%s1 + $0x3e0] sm:$0xff]
        %v1454 = vld [vmem:[%s1 + $0x3e8] sm:$0xff]
        %v1455 = vld [vmem:[%s1 + $0x3f0] sm:$0xff]
        %v1456 = vld [vmem:[%s1 + $0x3f8] sm:$0xff]
        %v1457 = vld [vmem:[%s1 + $0x400] sm:$0xff]
        %v1458 = vld [vmem:[%s1 + $0x408] sm:$0xff]
        %v1459 = vld [vmem:[%s1 + $0x410] sm:$0xff]
        %v1460 = vld [vmem:[%s1 + $0x418] sm:$0xff]
        %v1461 = vld [vmem:[%s1 + $0x420] sm:$0xff]
        %v1462 = vld [vmem:[%s1 + $0x428] sm:$0xff]
        %v1463 = vld [vmem:[%s1 + $0x430] sm:$0xff]
        %v1464 = vld [vmem:[%s1 + $0x438] sm:$0xff]
        %v1465 = vld [vmem:[%s1 + $0x440] sm:$0xff]
        %v1466 = vld [vmem:[%s1 + $0x448] sm:$0xff]
        %v1467 = vld [vmem:[%s1 + $0x450] sm:$0xff]
        %v1468 = vld [vmem:[%s1 + $0x458] sm:$0xff]
        %v1469 = vld [vmem:[%s1 + $0x460] sm:$0xff]
        %v1470 = vld [vmem:[%s1 + $0x468] sm:$0xff]
        %v1471 = vld [vmem:[%s1 + $0x470] sm:$0xff]
        %v1472 = vld [vmem:[%s1 + $0x478] sm:$0xff]
        %1473 = vmatpush.msra.mxu0 %v1344
        %1474 = vmatpush.msra.mxu0 %v1343
        %1475 = vmatpush.msra.mxu0 %v1342
        %1476 = vmatpush.msra.mxu0 %v1341
        %1477 = vmatpush.msra.mxu0 %v1340
        %1478 = vmatpush.msra.mxu0 %v1339
        %1479 = vmatpush.msra.mxu0 %v1338
        %1480 = vmatpush.msra.mxu0 %v1337
        %1481 = vmatpush.msra.mxu0 %v1336
        %1482 = vmatpush.msra.mxu0 %v1335
        %1483 = vmatpush.msra.mxu0 %v1334
        %1484 = vmatpush.msra.mxu0 %v1333
        %1485 = vmatpush.msra.mxu0 %v1332
        %1486 = vmatpush.msra.mxu0 %v1331
        %1487 = vmatpush.msra.mxu0 %v1330
        %1488 = vmatpush.msra.mxu0 %v1329
        %1489 = vmatmul.f32.gmra.mxu0 %v1005
        %v1490 = vpop.f32.mrf.mxu0
        %v1491 = vadd.f32 0.0, %v1490
        %1492 = vmatmul.f32.gmra.mxu0 %v1014
        %v1493 = vpop.f32.mrf.mxu0
        %v1494 = vadd.f32 0.0, %v1493
        %1495 = vmatmul.f32.gmra.mxu0 %v1023
        %v1496 = vpop.f32.mrf.mxu0
        %v1497 = vadd.f32 0.0, %v1496
        %1498 = vmatmul.f32.gmra.mxu0 %v1032
        %v1499 = vpop.f32.mrf.mxu0
        %v1500 = vadd.f32 0.0, %v1499
        %1501 = vmatmul.f32.gmra.mxu0 %v1041
        %v1502 = vpop.f32.mrf.mxu0
        %v1503 = vadd.f32 0.0, %v1502
        %1504 = vmatmul.f32.gmra.mxu0 %v1050
        %v1505 = vpop.f32.mrf.mxu0
        %v1506 = vadd.f32 0.0, %v1505
        %1507 = vmatmul.f32.gmra.mxu0 %v1059
        %v1508 = vpop.f32.mrf.mxu0
        %v1509 = vadd.f32 0.0, %v1508
        %1510 = vmatmul.f32.gmra.mxu0 %v1068
        %v1511 = vpop.f32.mrf.mxu0
        %v1512 = vadd.f32 0.0, %v1511
        %1513 = vmatmul.f32.gmra.mxu0 %v1077
        %v1514 = vpop.f32.mrf.mxu0
        %v1515 = vadd.f32 0.0, %v1514
        %1516 = vmatmul.f32.gmra.mxu0 %v1086
        %v1517 = vpop.f32.mrf.mxu0
        %v1518 = vadd.f32 0.0, %v1517
        %1519 = vmatmul.f32.gmra.mxu0 %v1095
        %v1520 = vpop.f32.mrf.mxu0
        %v1521 = vadd.f32 0.0, %v1520
        %1522 = vmatmul.f32.gmra.mxu0 %v1104
        %v1523 = vpop.f32.mrf.mxu0
        %v1524 = vadd.f32 0.0, %v1523
        %1525 = vmatmul.f32.gmra.mxu0 %v1113
        %v1526 = vpop.f32.mrf.mxu0
        %v1527 = vadd.f32 0.0, %v1526
        %1528 = vmatmul.f32.gmra.mxu0 %v1122
        %v1529 = vpop.f32.mrf.mxu0
        %v1530 = vadd.f32 0.0, %v1529
        %1531 = vmatmul.f32.gmra.mxu0 %v1131
        %v1532 = vpop.f32.mrf.mxu0
        %v1533 = vadd.f32 0.0, %v1532
        %1534 = vmatmul.f32.gmra.mxu0 %v1140
        %v1535 = vpop.f32.mrf.mxu0
        %v1536 = vadd.f32 0.0, %v1535
        %1537 = vmatmul.f32.gmra.mxu0 %v1149
        %v1538 = vpop.f32.mrf.mxu0
        %v1539 = vadd.f32 0.0, %v1538
        %1540 = vmatmul.f32.gmra.mxu0 %v1158
        %v1541 = vpop.f32.mrf.mxu0
        %v1542 = vadd.f32 0.0, %v1541
        %1543 = vmatmul.f32.gmra.mxu0 %v1167
        %v1544 = vpop.f32.mrf.mxu0
        %v1545 = vadd.f32 0.0, %v1544
        %1546 = vmatmul.f32.gmra.mxu0 %v1176
        %v1547 = vpop.f32.mrf.mxu0
        %v1548 = vadd.f32 0.0, %v1547
        %1549 = vmatmul.f32.gmra.mxu0 %v1185
        %v1550 = vpop.f32.mrf.mxu0
        %v1551 = vadd.f32 0.0, %v1550
        %1552 = vmatmul.f32.gmra.mxu0 %v1194
        %v1553 = vpop.f32.mrf.mxu0
        %v1554 = vadd.f32 0.0, %v1553
        %1555 = vmatmul.f32.gmra.mxu0 %v1203
        %v1556 = vpop.f32.mrf.mxu0
        %v1557 = vadd.f32 0.0, %v1556
        %1558 = vmatmul.f32.gmra.mxu0 %v1212
        %v1559 = vpop.f32.mrf.mxu0
        %v1560 = vadd.f32 0.0, %v1559
        %1561 = vmatmul.f32.gmra.mxu0 %v1221
        %v1562 = vpop.f32.mrf.mxu0
        %v1563 = vadd.f32 0.0, %v1562
        %1564 = vmatmul.f32.gmra.mxu0 %v1230
        %v1565 = vpop.f32.mrf.mxu0
        %v1566 = vadd.f32 0.0, %v1565
        %1567 = vmatmul.f32.gmra.mxu0 %v1239
        %v1568 = vpop.f32.mrf.mxu0
        %v1569 = vadd.f32 0.0, %v1568
        %1570 = vmatmul.f32.gmra.mxu0 %v1248
        %v1571 = vpop.f32.mrf.mxu0
        %v1572 = vadd.f32 0.0, %v1571
        %1573 = vmatmul.f32.gmra.mxu0 %v1257
        %v1574 = vpop.f32.mrf.mxu0
        %v1575 = vadd.f32 0.0, %v1574
        %1576 = vmatmul.f32.gmra.mxu0 %v1266
        %v1577 = vpop.f32.mrf.mxu0
        %v1578 = vadd.f32 0.0, %v1577
        %1579 = vmatmul.f32.gmra.mxu0 %v1275
        %v1580 = vpop.f32.mrf.mxu0
        %v1581 = vadd.f32 0.0, %v1580
        %1582 = vmatmul.f32.gmra.mxu0 %v1284
        %v1583 = vpop.f32.mrf.mxu0
        %v1584 = vadd.f32 0.0, %v1583
        %1585 = vmatmul.f32.gmra.mxu0 %v1293
        %v1586 = vpop.f32.mrf.mxu0
        %v1587 = vadd.f32 0.0, %v1586
        %1588 = vmatmul.f32.gmra.mxu0 %v1302
        %v1589 = vpop.f32.mrf.mxu0
        %v1590 = vadd.f32 0.0, %v1589
        %1591 = vmatmul.f32.gmra.mxu0 %v1311
        %v1592 = vpop.f32.mrf.mxu0
        %v1593 = vadd.f32 0.0, %v1592
        %1594 = vmatmul.f32.gmra.mxu0 %v1320
        %v1595 = vpop.f32.mrf.mxu0
        %v1596 = vadd.f32 0.0, %v1595
        %1597 = vdwg.mxu0
        %1598 = vmatpush.msra.mxu0 %v1360
        %1599 = vmatpush.msra.mxu0 %v1359
        %1600 = vmatpush.msra.mxu0 %v1358
        %1601 = vmatpush.msra.mxu0 %v1357
        %1602 = vmatpush.msra.mxu0 %v1356
        %1603 = vmatpush.msra.mxu0 %v1355
        %1604 = vmatpush.msra.mxu0 %v1354
        %1605 = vmatpush.msra.mxu0 %v1353
        %1606 = vmatpush.msra.mxu0 %v1352
        %1607 = vmatpush.msra.mxu0 %v1351
        %1608 = vmatpush.msra.mxu0 %v1350
        %1609 = vmatpush.msra.mxu0 %v1349
        %1610 = vmatpush.msra.mxu0 %v1348
        %1611 = vmatpush.msra.mxu0 %v1347
        %1612 = vmatpush.msra.mxu0 %v1346
        %1613 = vmatpush.msra.mxu0 %v1345
        %1614 = vmatmul.f32.gmra.mxu0 %v1006
        %v1615 = vpop.f32.mrf.mxu0
        %v1616 = vadd.f32 %v1491, %v1615
        %1617 = vmatmul.f32.gmra.mxu0 %v1015
        %v1618 = vpop.f32.mrf.mxu0
        %v1619 = vadd.f32 %v1494, %v1618
        %1620 = vmatmul.f32.gmra.mxu0 %v1024
        %v1621 = vpop.f32.mrf.mxu0
        %v1622 = vadd.f32 %v1497, %v1621
        %1623 = vmatmul.f32.gmra.mxu0 %v1033
        %v1624 = vpop.f32.mrf.mxu0
        %v1625 = vadd.f32 %v1500, %v1624
        %1626 = vmatmul.f32.gmra.mxu0 %v1042
        %v1627 = vpop.f32.mrf.mxu0
        %v1628 = vadd.f32 %v1503, %v1627
        %1629 = vmatmul.f32.gmra.mxu0 %v1051
        %v1630 = vpop.f32.mrf.mxu0
        %v1631 = vadd.f32 %v1506, %v1630
        %1632 = vmatmul.f32.gmra.mxu0 %v1060
        %v1633 = vpop.f32.mrf.mxu0
        %v1634 = vadd.f32 %v1509, %v1633
        %1635 = vmatmul.f32.gmra.mxu0 %v1069
        %v1636 = vpop.f32.mrf.mxu0
        %v1637 = vadd.f32 %v1512, %v1636
        %1638 = vmatmul.f32.gmra.mxu0 %v1078
        %v1639 = vpop.f32.mrf.mxu0
        %v1640 = vadd.f32 %v1515, %v1639
        %1641 = vmatmul.f32.gmra.mxu0 %v1087
        %v1642 = vpop.f32.mrf.mxu0
        %v1643 = vadd.f32 %v1518, %v1642
        %1644 = vmatmul.f32.gmra.mxu0 %v1096
        %v1645 = vpop.f32.mrf.mxu0
        %v1646 = vadd.f32 %v1521, %v1645
        %1647 = vmatmul.f32.gmra.mxu0 %v1105
        %v1648 = vpop.f32.mrf.mxu0
        %v1649 = vadd.f32 %v1524, %v1648
        %1650 = vmatmul.f32.gmra.mxu0 %v1114
        %v1651 = vpop.f32.mrf.mxu0
        %v1652 = vadd.f32 %v1527, %v1651
        %1653 = vmatmul.f32.gmra.mxu0 %v1123
        %v1654 = vpop.f32.mrf.mxu0
        %v1655 = vadd.f32 %v1530, %v1654
        %1656 = vmatmul.f32.gmra.mxu0 %v1132
        %v1657 = vpop.f32.mrf.mxu0
        %v1658 = vadd.f32 %v1533, %v1657
        %1659 = vmatmul.f32.gmra.mxu0 %v1141
        %v1660 = vpop.f32.mrf.mxu0
        %v1661 = vadd.f32 %v1536, %v1660
        %1662 = vmatmul.f32.gmra.mxu0 %v1150
        %v1663 = vpop.f32.mrf.mxu0
        %v1664 = vadd.f32 %v1539, %v1663
        %1665 = vmatmul.f32.gmra.mxu0 %v1159
        %v1666 = vpop.f32.mrf.mxu0
        %v1667 = vadd.f32 %v1542, %v1666
        %1668 = vmatmul.f32.gmra.mxu0 %v1168
        %v1669 = vpop.f32.mrf.mxu0
        %v1670 = vadd.f32 %v1545, %v1669
        %1671 = vmatmul.f32.gmra.mxu0 %v1177
        %v1672 = vpop.f32.mrf.mxu0
        %v1673 = vadd.f32 %v1548, %v1672
        %1674 = vmatmul.f32.gmra.mxu0 %v1186
        %v1675 = vpop.f32.mrf.mxu0
        %v1676 = vadd.f32 %v1551, %v1675
        %1677 = vmatmul.f32.gmra.mxu0 %v1195
        %v1678 = vpop.f32.mrf.mxu0
        %v1679 = vadd.f32 %v1554, %v1678
        %1680 = vmatmul.f32.gmra.mxu0 %v1204
        %v1681 = vpop.f32.mrf.mxu0
        %v1682 = vadd.f32 %v1557, %v1681
        %1683 = vmatmul.f32.gmra.mxu0 %v1213
        %v1684 = vpop.f32.mrf.mxu0
        %v1685 = vadd.f32 %v1560, %v1684
        %1686 = vmatmul.f32.gmra.mxu0 %v1222
        %v1687 = vpop.f32.mrf.mxu0
        %v1688 = vadd.f32 %v1563, %v1687
        %1689 = vmatmul.f32.gmra.mxu0 %v1231
        %v1690 = vpop.f32.mrf.mxu0
        %v1691 = vadd.f32 %v1566, %v1690
        %1692 = vmatmul.f32.gmra.mxu0 %v1240
        %v1693 = vpop.f32.mrf.mxu0
        %v1694 = vadd.f32 %v1569, %v1693
        %1695 = vmatmul.f32.gmra.mxu0 %v1249
        %v1696 = vpop.f32.mrf.mxu0
        %v1697 = vadd.f32 %v1572, %v1696
        %1698 = vmatmul.f32.gmra.mxu0 %v1258
        %v1699 = vpop.f32.mrf.mxu0
        %v1700 = vadd.f32 %v1575, %v1699
        %1701 = vmatmul.f32.gmra.mxu0 %v1267
        %v1702 = vpop.f32.mrf.mxu0
        %v1703 = vadd.f32 %v1578, %v1702
        %1704 = vmatmul.f32.gmra.mxu0 %v1276
        %v1705 = vpop.f32.mrf.mxu0
        %v1706 = vadd.f32 %v1581, %v1705
        %1707 = vmatmul.f32.gmra.mxu0 %v1285
        %v1708 = vpop.f32.mrf.mxu0
        %v1709 = vadd.f32 %v1584, %v1708
        %1710 = vmatmul.f32.gmra.mxu0 %v1294
        %v1711 = vpop.f32.mrf.mxu0
        %v1712 = vadd.f32 %v1587, %v1711
        %1713 = vmatmul.f32.gmra.mxu0 %v1303
        %v1714 = vpop.f32.mrf.mxu0
        %v1715 = vadd.f32 %v1590, %v1714
        %1716 = vmatmul.f32.gmra.mxu0 %v1312
        %v1717 = vpop.f32.mrf.mxu0
        %v1718 = vadd.f32 %v1593, %v1717
        %1719 = vmatmul.f32.gmra.mxu0 %v1321
        %v1720 = vpop.f32.mrf.mxu0
        %v1721 = vadd.f32 %v1596, %v1720
        %1722 = vdwg.mxu0
        %1723 = vmatpush.msra.mxu0 %v1376
        %1724 = vmatpush.msra.mxu0 %v1375
        %1725 = vmatpush.msra.mxu0 %v1374
        %1726 = vmatpush.msra.mxu0 %v1373
        %1727 = vmatpush.msra.mxu0 %v1372
        %1728 = vmatpush.msra.mxu0 %v1371
        %1729 = vmatpush.msra.mxu0 %v1370
        %1730 = vmatpush.msra.mxu0 %v1369
        %1731 = vmatpush.msra.mxu0 %v1368
        %1732 = vmatpush.msra.mxu0 %v1367
        %1733 = vmatpush.msra.mxu0 %v1366
        %1734 = vmatpush.msra.mxu0 %v1365
        %1735 = vmatpush.msra.mxu0 %v1364
        %1736 = vmatpush.msra.mxu0 %v1363
        %1737 = vmatpush.msra.mxu0 %v1362
        %1738 = vmatpush.msra.mxu0 %v1361
        %1739 = vmatmul.f32.gmra.mxu0 %v1007
        %v1740 = vpop.f32.mrf.mxu0
        %v1741 = vadd.f32 %v1616, %v1740
        %1742 = vmatmul.f32.gmra.mxu0 %v1016
        %v1743 = vpop.f32.mrf.mxu0
        %v1744 = vadd.f32 %v1619, %v1743
        %1745 = vmatmul.f32.gmra.mxu0 %v1025
        %v1746 = vpop.f32.mrf.mxu0
        %v1747 = vadd.f32 %v1622, %v1746
        %1748 = vmatmul.f32.gmra.mxu0 %v1034
        %v1749 = vpop.f32.mrf.mxu0
        %v1750 = vadd.f32 %v1625, %v1749
        %1751 = vmatmul.f32.gmra.mxu0 %v1043
        %v1752 = vpop.f32.mrf.mxu0
        %v1753 = vadd.f32 %v1628, %v1752
        %1754 = vmatmul.f32.gmra.mxu0 %v1052
        %v1755 = vpop.f32.mrf.mxu0
        %v1756 = vadd.f32 %v1631, %v1755
        %1757 = vmatmul.f32.gmra.mxu0 %v1061
        %v1758 = vpop.f32.mrf.mxu0
        %v1759 = vadd.f32 %v1634, %v1758
        %1760 = vmatmul.f32.gmra.mxu0 %v1070
        %v1761 = vpop.f32.mrf.mxu0
        %v1762 = vadd.f32 %v1637, %v1761
        %1763 = vmatmul.f32.gmra.mxu0 %v1079
        %v1764 = vpop.f32.mrf.mxu0
        %v1765 = vadd.f32 %v1640, %v1764
        %1766 = vmatmul.f32.gmra.mxu0 %v1088
        %v1767 = vpop.f32.mrf.mxu0
        %v1768 = vadd.f32 %v1643, %v1767
        %1769 = vmatmul.f32.gmra.mxu0 %v1097
        %v1770 = vpop.f32.mrf.mxu0
        %v1771 = vadd.f32 %v1646, %v1770
        %1772 = vmatmul.f32.gmra.mxu0 %v1106
        %v1773 = vpop.f32.mrf.mxu0
        %v1774 = vadd.f32 %v1649, %v1773
        %1775 = vmatmul.f32.gmra.mxu0 %v1115
        %v1776 = vpop.f32.mrf.mxu0
        %v1777 = vadd.f32 %v1652, %v1776
        %1778 = vmatmul.f32.gmra.mxu0 %v1124
        %v1779 = vpop.f32.mrf.mxu0
        %v1780 = vadd.f32 %v1655, %v1779
        %1781 = vmatmul.f32.gmra.mxu0 %v1133
        %v1782 = vpop.f32.mrf.mxu0
        %v1783 = vadd.f32 %v1658, %v1782
        %1784 = vmatmul.f32.gmra.mxu0 %v1142
        %v1785 = vpop.f32.mrf.mxu0
        %v1786 = vadd.f32 %v1661, %v1785
        %1787 = vmatmul.f32.gmra.mxu0 %v1151
        %v1788 = vpop.f32.mrf.mxu0
        %v1789 = vadd.f32 %v1664, %v1788
        %1790 = vmatmul.f32.gmra.mxu0 %v1160
        %v1791 = vpop.f32.mrf.mxu0
        %v1792 = vadd.f32 %v1667, %v1791
        %1793 = vmatmul.f32.gmra.mxu0 %v1169
        %v1794 = vpop.f32.mrf.mxu0
        %v1795 = vadd.f32 %v1670, %v1794
        %1796 = vmatmul.f32.gmra.mxu0 %v1178
        %v1797 = vpop.f32.mrf.mxu0
        %v1798 = vadd.f32 %v1673, %v1797
        %1799 = vmatmul.f32.gmra.mxu0 %v1187
        %v1800 = vpop.f32.mrf.mxu0
        %v1801 = vadd.f32 %v1676, %v1800
        %1802 = vmatmul.f32.gmra.mxu0 %v1196
        %v1803 = vpop.f32.mrf.mxu0
        %v1804 = vadd.f32 %v1679, %v1803
        %1805 = vmatmul.f32.gmra.mxu0 %v1205
        %v1806 = vpop.f32.mrf.mxu0
        %v1807 = vadd.f32 %v1682, %v1806
        %1808 = vmatmul.f32.gmra.mxu0 %v1214
        %v1809 = vpop.f32.mrf.mxu0
        %v1810 = vadd.f32 %v1685, %v1809
        %1811 = vmatmul.f32.gmra.mxu0 %v1223
        %v1812 = vpop.f32.mrf.mxu0
        %v1813 = vadd.f32 %v1688, %v1812
        %1814 = vmatmul.f32.gmra.mxu0 %v1232
        %v1815 = vpop.f32.mrf.mxu0
        %v1816 = vadd.f32 %v1691, %v1815
        %1817 = vmatmul.f32.gmra.mxu0 %v1241
        %v1818 = vpop.f32.mrf.mxu0
        %v1819 = vadd.f32 %v1694, %v1818
        %1820 = vmatmul.f32.gmra.mxu0 %v1250
        %v1821 = vpop.f32.mrf.mxu0
        %v1822 = vadd.f32 %v1697, %v1821
        %1823 = vmatmul.f32.gmra.mxu0 %v1259
        %v1824 = vpop.f32.mrf.mxu0
        %v1825 = vadd.f32 %v1700, %v1824
        %1826 = vmatmul.f32.gmra.mxu0 %v1268
        %v1827 = vpop.f32.mrf.mxu0
        %v1828 = vadd.f32 %v1703, %v1827
        %1829 = vmatmul.f32.gmra.mxu0 %v1277
        %v1830 = vpop.f32.mrf.mxu0
        %v1831 = vadd.f32 %v1706, %v1830
        %1832 = vmatmul.f32.gmra.mxu0 %v1286
        %v1833 = vpop.f32.mrf.mxu0
        %v1834 = vadd.f32 %v1709, %v1833
        %1835 = vmatmul.f32.gmra.mxu0 %v1295
        %v1836 = vpop.f32.mrf.mxu0
        %v1837 = vadd.f32 %v1712, %v1836
        %1838 = vmatmul.f32.gmra.mxu0 %v1304
        %v1839 = vpop.f32.mrf.mxu0
        %v1840 = vadd.f32 %v1715, %v1839
        %1841 = vmatmul.f32.gmra.mxu0 %v1313
        %v1842 = vpop.f32.mrf.mxu0
        %v1843 = vadd.f32 %v1718, %v1842
        %1844 = vmatmul.f32.gmra.mxu0 %v1322
        %v1845 = vpop.f32.mrf.mxu0
        %v1846 = vadd.f32 %v1721, %v1845
        %1847 = vdwg.mxu0
        %1848 = vmatpush.msra.mxu0 %v1392
        %1849 = vmatpush.msra.mxu0 %v1391
        %1850 = vmatpush.msra.mxu0 %v1390
        %1851 = vmatpush.msra.mxu0 %v1389
        %1852 = vmatpush.msra.mxu0 %v1388
        %1853 = vmatpush.msra.mxu0 %v1387
        %1854 = vmatpush.msra.mxu0 %v1386
        %1855 = vmatpush.msra.mxu0 %v1385
        %1856 = vmatpush.msra.mxu0 %v1384
        %1857 = vmatpush.msra.mxu0 %v1383
        %1858 = vmatpush.msra.mxu0 %v1382
        %1859 = vmatpush.msra.mxu0 %v1381
        %1860 = vmatpush.msra.mxu0 %v1380
        %1861 = vmatpush.msra.mxu0 %v1379
        %1862 = vmatpush.msra.mxu0 %v1378
        %1863 = vmatpush.msra.mxu0 %v1377
        %1864 = vmatmul.f32.gmra.mxu0 %v1008
        %v1865 = vpop.f32.mrf.mxu0
        %v1866 = vadd.f32 %v1741, %v1865
        %1867 = vmatmul.f32.gmra.mxu0 %v1017
        %v1868 = vpop.f32.mrf.mxu0
        %v1869 = vadd.f32 %v1744, %v1868
        %1870 = vmatmul.f32.gmra.mxu0 %v1026
        %v1871 = vpop.f32.mrf.mxu0
        %v1872 = vadd.f32 %v1747, %v1871
        %1873 = vmatmul.f32.gmra.mxu0 %v1035
        %v1874 = vpop.f32.mrf.mxu0
        %v1875 = vadd.f32 %v1750, %v1874
        %1876 = vmatmul.f32.gmra.mxu0 %v1044
        %v1877 = vpop.f32.mrf.mxu0
        %v1878 = vadd.f32 %v1753, %v1877
        %1879 = vmatmul.f32.gmra.mxu0 %v1053
        %v1880 = vpop.f32.mrf.mxu0
        %v1881 = vadd.f32 %v1756, %v1880
        %1882 = vmatmul.f32.gmra.mxu0 %v1062
        %v1883 = vpop.f32.mrf.mxu0
        %v1884 = vadd.f32 %v1759, %v1883
        %1885 = vmatmul.f32.gmra.mxu0 %v1071
        %v1886 = vpop.f32.mrf.mxu0
        %v1887 = vadd.f32 %v1762, %v1886
        %1888 = vmatmul.f32.gmra.mxu0 %v1080
        %v1889 = vpop.f32.mrf.mxu0
        %v1890 = vadd.f32 %v1765, %v1889
        %1891 = vmatmul.f32.gmra.mxu0 %v1089
        %v1892 = vpop.f32.mrf.mxu0
        %v1893 = vadd.f32 %v1768, %v1892
        %1894 = vmatmul.f32.gmra.mxu0 %v1098
        %v1895 = vpop.f32.mrf.mxu0
        %v1896 = vadd.f32 %v1771, %v1895
        %1897 = vmatmul.f32.gmra.mxu0 %v1107
        %v1898 = vpop.f32.mrf.mxu0
        %v1899 = vadd.f32 %v1774, %v1898
        %1900 = vmatmul.f32.gmra.mxu0 %v1116
        %v1901 = vpop.f32.mrf.mxu0
        %v1902 = vadd.f32 %v1777, %v1901
        %1903 = vmatmul.f32.gmra.mxu0 %v1125
        %v1904 = vpop.f32.mrf.mxu0
        %v1905 = vadd.f32 %v1780, %v1904
        %1906 = vmatmul.f32.gmra.mxu0 %v1134
        %v1907 = vpop.f32.mrf.mxu0
        %v1908 = vadd.f32 %v1783, %v1907
        %1909 = vmatmul.f32.gmra.mxu0 %v1143
        %v1910 = vpop.f32.mrf.mxu0
        %v1911 = vadd.f32 %v1786, %v1910
        %1912 = vmatmul.f32.gmra.mxu0 %v1152
        %v1913 = vpop.f32.mrf.mxu0
        %v1914 = vadd.f32 %v1789, %v1913
        %1915 = vmatmul.f32.gmra.mxu0 %v1161
        %v1916 = vpop.f32.mrf.mxu0
        %v1917 = vadd.f32 %v1792, %v1916
        %1918 = vmatmul.f32.gmra.mxu0 %v1170
        %v1919 = vpop.f32.mrf.mxu0
        %v1920 = vadd.f32 %v1795, %v1919
        %1921 = vmatmul.f32.gmra.mxu0 %v1179
        %v1922 = vpop.f32.mrf.mxu0
        %v1923 = vadd.f32 %v1798, %v1922
        %1924 = vmatmul.f32.gmra.mxu0 %v1188
        %v1925 = vpop.f32.mrf.mxu0
        %v1926 = vadd.f32 %v1801, %v1925
        %1927 = vmatmul.f32.gmra.mxu0 %v1197
        %v1928 = vpop.f32.mrf.mxu0
        %v1929 = vadd.f32 %v1804, %v1928
        %1930 = vmatmul.f32.gmra.mxu0 %v1206
        %v1931 = vpop.f32.mrf.mxu0
        %v1932 = vadd.f32 %v1807, %v1931
        %1933 = vmatmul.f32.gmra.mxu0 %v1215
        %v1934 = vpop.f32.mrf.mxu0
        %v1935 = vadd.f32 %v1810, %v1934
        %1936 = vmatmul.f32.gmra.mxu0 %v1224
        %v1937 = vpop.f32.mrf.mxu0
        %v1938 = vadd.f32 %v1813, %v1937
        %1939 = vmatmul.f32.gmra.mxu0 %v1233
        %v1940 = vpop.f32.mrf.mxu0
        %v1941 = vadd.f32 %v1816, %v1940
        %1942 = vmatmul.f32.gmra.mxu0 %v1242
        %v1943 = vpop.f32.mrf.mxu0
        %v1944 = vadd.f32 %v1819, %v1943
        %1945 = vmatmul.f32.gmra.mxu0 %v1251
        %v1946 = vpop.f32.mrf.mxu0
        %v1947 = vadd.f32 %v1822, %v1946
        %1948 = vmatmul.f32.gmra.mxu0 %v1260
        %v1949 = vpop.f32.mrf.mxu0
        %v1950 = vadd.f32 %v1825, %v1949
        %1951 = vmatmul.f32.gmra.mxu0 %v1269
        %v1952 = vpop.f32.mrf.mxu0
        %v1953 = vadd.f32 %v1828, %v1952
        %1954 = vmatmul.f32.gmra.mxu0 %v1278
        %v1955 = vpop.f32.mrf.mxu0
        %v1956 = vadd.f32 %v1831, %v1955
        %1957 = vmatmul.f32.gmra.mxu0 %v1287
        %v1958 = vpop.f32.mrf.mxu0
        %v1959 = vadd.f32 %v1834, %v1958
        %1960 = vmatmul.f32.gmra.mxu0 %v1296
        %v1961 = vpop.f32.mrf.mxu0
        %v1962 = vadd.f32 %v1837, %v1961
        %1963 = vmatmul.f32.gmra.mxu0 %v1305
        %v1964 = vpop.f32.mrf.mxu0
        %v1965 = vadd.f32 %v1840, %v1964
        %1966 = vmatmul.f32.gmra.mxu0 %v1314
        %v1967 = vpop.f32.mrf.mxu0
        %v1968 = vadd.f32 %v1843, %v1967
        %1969 = vmatmul.f32.gmra.mxu0 %v1323
        %v1970 = vpop.f32.mrf.mxu0
        %v1971 = vadd.f32 %v1846, %v1970
        %1972 = vdwg.mxu0
        %1973 = vmatpush.msra.mxu0 %v1408
        %1974 = vmatpush.msra.mxu0 %v1407
        %1975 = vmatpush.msra.mxu0 %v1406
        %1976 = vmatpush.msra.mxu0 %v1405
        %1977 = vmatpush.msra.mxu0 %v1404
        %1978 = vmatpush.msra.mxu0 %v1403
        %1979 = vmatpush.msra.mxu0 %v1402
        %1980 = vmatpush.msra.mxu0 %v1401
        %1981 = vmatpush.msra.mxu0 %v1400
        %1982 = vmatpush.msra.mxu0 %v1399
        %1983 = vmatpush.msra.mxu0 %v1398
        %1984 = vmatpush.msra.mxu0 %v1397
        %1985 = vmatpush.msra.mxu0 %v1396
        %1986 = vmatpush.msra.mxu0 %v1395
        %1987 = vmatpush.msra.mxu0 %v1394
        %1988 = vmatpush.msra.mxu0 %v1393
        %1989 = vmatmul.f32.gmra.mxu0 %v1009
        %v1990 = vpop.f32.mrf.mxu0
        %v1991 = vadd.f32 %v1866, %v1990
        %1992 = vmatmul.f32.gmra.mxu0 %v1018
        %v1993 = vpop.f32.mrf.mxu0
        %v1994 = vadd.f32 %v1869, %v1993
        %1995 = vmatmul.f32.gmra.mxu0 %v1027
        %v1996 = vpop.f32.mrf.mxu0
        %v1997 = vadd.f32 %v1872, %v1996
        %1998 = vmatmul.f32.gmra.mxu0 %v1036
        %v1999 = vpop.f32.mrf.mxu0
        %v2000 = vadd.f32 %v1875, %v1999
        %2001 = vmatmul.f32.gmra.mxu0 %v1045
        %v2002 = vpop.f32.mrf.mxu0
        %v2003 = vadd.f32 %v1878, %v2002
        %2004 = vmatmul.f32.gmra.mxu0 %v1054
        %v2005 = vpop.f32.mrf.mxu0
        %v2006 = vadd.f32 %v1881, %v2005
        %2007 = vmatmul.f32.gmra.mxu0 %v1063
        %v2008 = vpop.f32.mrf.mxu0
        %v2009 = vadd.f32 %v1884, %v2008
        %2010 = vmatmul.f32.gmra.mxu0 %v1072
        %v2011 = vpop.f32.mrf.mxu0
        %v2012 = vadd.f32 %v1887, %v2011
        %2013 = vmatmul.f32.gmra.mxu0 %v1081
        %v2014 = vpop.f32.mrf.mxu0
        %v2015 = vadd.f32 %v1890, %v2014
        %2016 = vmatmul.f32.gmra.mxu0 %v1090
        %v2017 = vpop.f32.mrf.mxu0
        %v2018 = vadd.f32 %v1893, %v2017
        %2019 = vmatmul.f32.gmra.mxu0 %v1099
        %v2020 = vpop.f32.mrf.mxu0
        %v2021 = vadd.f32 %v1896, %v2020
        %2022 = vmatmul.f32.gmra.mxu0 %v1108
        %v2023 = vpop.f32.mrf.mxu0
        %v2024 = vadd.f32 %v1899, %v2023
        %2025 = vmatmul.f32.gmra.mxu0 %v1117
        %v2026 = vpop.f32.mrf.mxu0
        %v2027 = vadd.f32 %v1902, %v2026
        %2028 = vmatmul.f32.gmra.mxu0 %v1126
        %v2029 = vpop.f32.mrf.mxu0
        %v2030 = vadd.f32 %v1905, %v2029
        %2031 = vmatmul.f32.gmra.mxu0 %v1135
        %v2032 = vpop.f32.mrf.mxu0
        %v2033 = vadd.f32 %v1908, %v2032
        %2034 = vmatmul.f32.gmra.mxu0 %v1144
        %v2035 = vpop.f32.mrf.mxu0
        %v2036 = vadd.f32 %v1911, %v2035
        %2037 = vmatmul.f32.gmra.mxu0 %v1153
        %v2038 = vpop.f32.mrf.mxu0
        %v2039 = vadd.f32 %v1914, %v2038
        %2040 = vmatmul.f32.gmra.mxu0 %v1162
        %v2041 = vpop.f32.mrf.mxu0
        %v2042 = vadd.f32 %v1917, %v2041
        %2043 = vmatmul.f32.gmra.mxu0 %v1171
        %v2044 = vpop.f32.mrf.mxu0
        %v2045 = vadd.f32 %v1920, %v2044
        %2046 = vmatmul.f32.gmra.mxu0 %v1180
        %v2047 = vpop.f32.mrf.mxu0
        %v2048 = vadd.f32 %v1923, %v2047
        %2049 = vmatmul.f32.gmra.mxu0 %v1189
        %v2050 = vpop.f32.mrf.mxu0
        %v2051 = vadd.f32 %v1926, %v2050
        %2052 = vmatmul.f32.gmra.mxu0 %v1198
        %v2053 = vpop.f32.mrf.mxu0
        %v2054 = vadd.f32 %v1929, %v2053
        %2055 = vmatmul.f32.gmra.mxu0 %v1207
        %v2056 = vpop.f32.mrf.mxu0
        %v2057 = vadd.f32 %v1932, %v2056
        %2058 = vmatmul.f32.gmra.mxu0 %v1216
        %v2059 = vpop.f32.mrf.mxu0
        %v2060 = vadd.f32 %v1935, %v2059
        %2061 = vmatmul.f32.gmra.mxu0 %v1225
        %v2062 = vpop.f32.mrf.mxu0
        %v2063 = vadd.f32 %v1938, %v2062
        %2064 = vmatmul.f32.gmra.mxu0 %v1234
        %v2065 = vpop.f32.mrf.mxu0
        %v2066 = vadd.f32 %v1941, %v2065
        %2067 = vmatmul.f32.gmra.mxu0 %v1243
        %v2068 = vpop.f32.mrf.mxu0
        %v2069 = vadd.f32 %v1944, %v2068
        %2070 = vmatmul.f32.gmra.mxu0 %v1252
        %v2071 = vpop.f32.mrf.mxu0
        %v2072 = vadd.f32 %v1947, %v2071
        %2073 = vmatmul.f32.gmra.mxu0 %v1261
        %v2074 = vpop.f32.mrf.mxu0
        %v2075 = vadd.f32 %v1950, %v2074
        %2076 = vmatmul.f32.gmra.mxu0 %v1270
        %v2077 = vpop.f32.mrf.mxu0
        %v2078 = vadd.f32 %v1953, %v2077
        %2079 = vmatmul.f32.gmra.mxu0 %v1279
        %v2080 = vpop.f32.mrf.mxu0
        %v2081 = vadd.f32 %v1956, %v2080
        %2082 = vmatmul.f32.gmra.mxu0 %v1288
        %v2083 = vpop.f32.mrf.mxu0
        %v2084 = vadd.f32 %v1959, %v2083
        %2085 = vmatmul.f32.gmra.mxu0 %v1297
        %v2086 = vpop.f32.mrf.mxu0
        %v2087 = vadd.f32 %v1962, %v2086
        %2088 = vmatmul.f32.gmra.mxu0 %v1306
        %v2089 = vpop.f32.mrf.mxu0
        %v2090 = vadd.f32 %v1965, %v2089
        %2091 = vmatmul.f32.gmra.mxu0 %v1315
        %v2092 = vpop.f32.mrf.mxu0
        %v2093 = vadd.f32 %v1968, %v2092
        %2094 = vmatmul.f32.gmra.mxu0 %v1324
        %v2095 = vpop.f32.mrf.mxu0
        %v2096 = vadd.f32 %v1971, %v2095
        %2097 = vdwg.mxu0
        %2098 = vmatpush.msra.mxu0 %v1424
        %2099 = vmatpush.msra.mxu0 %v1423
        %2100 = vmatpush.msra.mxu0 %v1422
        %2101 = vmatpush.msra.mxu0 %v1421
        %2102 = vmatpush.msra.mxu0 %v1420
        %2103 = vmatpush.msra.mxu0 %v1419
        %2104 = vmatpush.msra.mxu0 %v1418
        %2105 = vmatpush.msra.mxu0 %v1417
        %2106 = vmatpush.msra.mxu0 %v1416
        %2107 = vmatpush.msra.mxu0 %v1415
        %2108 = vmatpush.msra.mxu0 %v1414
        %2109 = vmatpush.msra.mxu0 %v1413
        %2110 = vmatpush.msra.mxu0 %v1412
        %2111 = vmatpush.msra.mxu0 %v1411
        %2112 = vmatpush.msra.mxu0 %v1410
        %2113 = vmatpush.msra.mxu0 %v1409
        %2114 = vmatmul.f32.gmra.mxu0 %v1010
        %v2115 = vpop.f32.mrf.mxu0
        %v2116 = vadd.f32 %v1991, %v2115
        %2117 = vmatmul.f32.gmra.mxu0 %v1019
        %v2118 = vpop.f32.mrf.mxu0
        %v2119 = vadd.f32 %v1994, %v2118
        %2120 = vmatmul.f32.gmra.mxu0 %v1028
        %v2121 = vpop.f32.mrf.mxu0
        %v2122 = vadd.f32 %v1997, %v2121
        %2123 = vmatmul.f32.gmra.mxu0 %v1037
        %v2124 = vpop.f32.mrf.mxu0
        %v2125 = vadd.f32 %v2000, %v2124
        %2126 = vmatmul.f32.gmra.mxu0 %v1046
        %v2127 = vpop.f32.mrf.mxu0
        %v2128 = vadd.f32 %v2003, %v2127
        %2129 = vmatmul.f32.gmra.mxu0 %v1055
        %v2130 = vpop.f32.mrf.mxu0
        %v2131 = vadd.f32 %v2006, %v2130
        %2132 = vmatmul.f32.gmra.mxu0 %v1064
        %v2133 = vpop.f32.mrf.mxu0
        %v2134 = vadd.f32 %v2009, %v2133
        %2135 = vmatmul.f32.gmra.mxu0 %v1073
        %v2136 = vpop.f32.mrf.mxu0
        %v2137 = vadd.f32 %v2012, %v2136
        %2138 = vmatmul.f32.gmra.mxu0 %v1082
        %v2139 = vpop.f32.mrf.mxu0
        %v2140 = vadd.f32 %v2015, %v2139
        %2141 = vmatmul.f32.gmra.mxu0 %v1091
        %v2142 = vpop.f32.mrf.mxu0
        %v2143 = vadd.f32 %v2018, %v2142
        %2144 = vmatmul.f32.gmra.mxu0 %v1100
        %v2145 = vpop.f32.mrf.mxu0
        %v2146 = vadd.f32 %v2021, %v2145
        %2147 = vmatmul.f32.gmra.mxu0 %v1109
        %v2148 = vpop.f32.mrf.mxu0
        %v2149 = vadd.f32 %v2024, %v2148
        %2150 = vmatmul.f32.gmra.mxu0 %v1118
        %v2151 = vpop.f32.mrf.mxu0
        %v2152 = vadd.f32 %v2027, %v2151
        %2153 = vmatmul.f32.gmra.mxu0 %v1127
        %v2154 = vpop.f32.mrf.mxu0
        %v2155 = vadd.f32 %v2030, %v2154
        %2156 = vmatmul.f32.gmra.mxu0 %v1136
        %v2157 = vpop.f32.mrf.mxu0
        %v2158 = vadd.f32 %v2033, %v2157
        %2159 = vmatmul.f32.gmra.mxu0 %v1145
        %v2160 = vpop.f32.mrf.mxu0
        %v2161 = vadd.f32 %v2036, %v2160
        %2162 = vmatmul.f32.gmra.mxu0 %v1154
        %v2163 = vpop.f32.mrf.mxu0
        %v2164 = vadd.f32 %v2039, %v2163
        %2165 = vmatmul.f32.gmra.mxu0 %v1163
        %v2166 = vpop.f32.mrf.mxu0
        %v2167 = vadd.f32 %v2042, %v2166
        %2168 = vmatmul.f32.gmra.mxu0 %v1172
        %v2169 = vpop.f32.mrf.mxu0
        %v2170 = vadd.f32 %v2045, %v2169
        %2171 = vmatmul.f32.gmra.mxu0 %v1181
        %v2172 = vpop.f32.mrf.mxu0
        %v2173 = vadd.f32 %v2048, %v2172
        %2174 = vmatmul.f32.gmra.mxu0 %v1190
        %v2175 = vpop.f32.mrf.mxu0
        %v2176 = vadd.f32 %v2051, %v2175
        %2177 = vmatmul.f32.gmra.mxu0 %v1199
        %v2178 = vpop.f32.mrf.mxu0
        %v2179 = vadd.f32 %v2054, %v2178
        %2180 = vmatmul.f32.gmra.mxu0 %v1208
        %v2181 = vpop.f32.mrf.mxu0
        %v2182 = vadd.f32 %v2057, %v2181
        %2183 = vmatmul.f32.gmra.mxu0 %v1217
        %v2184 = vpop.f32.mrf.mxu0
        %v2185 = vadd.f32 %v2060, %v2184
        %2186 = vmatmul.f32.gmra.mxu0 %v1226
        %v2187 = vpop.f32.mrf.mxu0
        %v2188 = vadd.f32 %v2063, %v2187
        %2189 = vmatmul.f32.gmra.mxu0 %v1235
        %v2190 = vpop.f32.mrf.mxu0
        %v2191 = vadd.f32 %v2066, %v2190
        %2192 = vmatmul.f32.gmra.mxu0 %v1244
        %v2193 = vpop.f32.mrf.mxu0
        %v2194 = vadd.f32 %v2069, %v2193
        %2195 = vmatmul.f32.gmra.mxu0 %v1253
        %v2196 = vpop.f32.mrf.mxu0
        %v2197 = vadd.f32 %v2072, %v2196
        %2198 = vmatmul.f32.gmra.mxu0 %v1262
        %v2199 = vpop.f32.mrf.mxu0
        %v2200 = vadd.f32 %v2075, %v2199
        %2201 = vmatmul.f32.gmra.mxu0 %v1271
        %v2202 = vpop.f32.mrf.mxu0
        %v2203 = vadd.f32 %v2078, %v2202
        %2204 = vmatmul.f32.gmra.mxu0 %v1280
        %v2205 = vpop.f32.mrf.mxu0
        %v2206 = vadd.f32 %v2081, %v2205
        %2207 = vmatmul.f32.gmra.mxu0 %v1289
        %v2208 = vpop.f32.mrf.mxu0
        %v2209 = vadd.f32 %v2084, %v2208
        %2210 = vmatmul.f32.gmra.mxu0 %v1298
        %v2211 = vpop.f32.mrf.mxu0
        %v2212 = vadd.f32 %v2087, %v2211
        %2213 = vmatmul.f32.gmra.mxu0 %v1307
        %v2214 = vpop.f32.mrf.mxu0
        %v2215 = vadd.f32 %v2090, %v2214
        %2216 = vmatmul.f32.gmra.mxu0 %v1316
        %v2217 = vpop.f32.mrf.mxu0
        %v2218 = vadd.f32 %v2093, %v2217
        %2219 = vmatmul.f32.gmra.mxu0 %v1325
        %v2220 = vpop.f32.mrf.mxu0
        %v2221 = vadd.f32 %v2096, %v2220
        %2222 = vdwg.mxu0
        %2223 = vmatpush.msra.mxu0 %v1440
        %2224 = vmatpush.msra.mxu0 %v1439
        %2225 = vmatpush.msra.mxu0 %v1438
        %2226 = vmatpush.msra.mxu0 %v1437
        %2227 = vmatpush.msra.mxu0 %v1436
        %2228 = vmatpush.msra.mxu0 %v1435
        %2229 = vmatpush.msra.mxu0 %v1434
        %2230 = vmatpush.msra.mxu0 %v1433
        %2231 = vmatpush.msra.mxu0 %v1432
        %2232 = vmatpush.msra.mxu0 %v1431
        %2233 = vmatpush.msra.mxu0 %v1430
        %2234 = vmatpush.msra.mxu0 %v1429
        %2235 = vmatpush.msra.mxu0 %v1428
        %2236 = vmatpush.msra.mxu0 %v1427
        %2237 = vmatpush.msra.mxu0 %v1426
        %2238 = vmatpush.msra.mxu0 %v1425
        %2239 = vmatmul.f32.gmra.mxu0 %v1011
        %v2240 = vpop.f32.mrf.mxu0
        %v2241 = vadd.f32 %v2116, %v2240
        %2242 = vmatmul.f32.gmra.mxu0 %v1020
        %v2243 = vpop.f32.mrf.mxu0
        %v2244 = vadd.f32 %v2119, %v2243
        %2245 = vmatmul.f32.gmra.mxu0 %v1029
        %v2246 = vpop.f32.mrf.mxu0
        %v2247 = vadd.f32 %v2122, %v2246
        %2248 = vmatmul.f32.gmra.mxu0 %v1038
        %v2249 = vpop.f32.mrf.mxu0
        %v2250 = vadd.f32 %v2125, %v2249
        %2251 = vmatmul.f32.gmra.mxu0 %v1047
        %v2252 = vpop.f32.mrf.mxu0
        %v2253 = vadd.f32 %v2128, %v2252
        %2254 = vmatmul.f32.gmra.mxu0 %v1056
        %v2255 = vpop.f32.mrf.mxu0
        %v2256 = vadd.f32 %v2131, %v2255
        %2257 = vmatmul.f32.gmra.mxu0 %v1065
        %v2258 = vpop.f32.mrf.mxu0
        %v2259 = vadd.f32 %v2134, %v2258
        %2260 = vmatmul.f32.gmra.mxu0 %v1074
        %v2261 = vpop.f32.mrf.mxu0
        %v2262 = vadd.f32 %v2137, %v2261
        %2263 = vmatmul.f32.gmra.mxu0 %v1083
        %v2264 = vpop.f32.mrf.mxu0
        %v2265 = vadd.f32 %v2140, %v2264
        %2266 = vmatmul.f32.gmra.mxu0 %v1092
        %v2267 = vpop.f32.mrf.mxu0
        %v2268 = vadd.f32 %v2143, %v2267
        %2269 = vmatmul.f32.gmra.mxu0 %v1101
        %v2270 = vpop.f32.mrf.mxu0
        %v2271 = vadd.f32 %v2146, %v2270
        %2272 = vmatmul.f32.gmra.mxu0 %v1110
        %v2273 = vpop.f32.mrf.mxu0
        %v2274 = vadd.f32 %v2149, %v2273
        %2275 = vmatmul.f32.gmra.mxu0 %v1119
        %v2276 = vpop.f32.mrf.mxu0
        %v2277 = vadd.f32 %v2152, %v2276
        %2278 = vmatmul.f32.gmra.mxu0 %v1128
        %v2279 = vpop.f32.mrf.mxu0
        %v2280 = vadd.f32 %v2155, %v2279
        %2281 = vmatmul.f32.gmra.mxu0 %v1137
        %v2282 = vpop.f32.mrf.mxu0
        %v2283 = vadd.f32 %v2158, %v2282
        %2284 = vmatmul.f32.gmra.mxu0 %v1146
        %v2285 = vpop.f32.mrf.mxu0
        %v2286 = vadd.f32 %v2161, %v2285
        %2287 = vmatmul.f32.gmra.mxu0 %v1155
        %v2288 = vpop.f32.mrf.mxu0
        %v2289 = vadd.f32 %v2164, %v2288
        %2290 = vmatmul.f32.gmra.mxu0 %v1164
        %v2291 = vpop.f32.mrf.mxu0
        %v2292 = vadd.f32 %v2167, %v2291
        %2293 = vmatmul.f32.gmra.mxu0 %v1173
        %v2294 = vpop.f32.mrf.mxu0
        %v2295 = vadd.f32 %v2170, %v2294
        %2296 = vmatmul.f32.gmra.mxu0 %v1182
        %v2297 = vpop.f32.mrf.mxu0
        %v2298 = vadd.f32 %v2173, %v2297
        %2299 = vmatmul.f32.gmra.mxu0 %v1191
        %v2300 = vpop.f32.mrf.mxu0
        %v2301 = vadd.f32 %v2176, %v2300
        %2302 = vmatmul.f32.gmra.mxu0 %v1200
        %v2303 = vpop.f32.mrf.mxu0
        %v2304 = vadd.f32 %v2179, %v2303
        %2305 = vmatmul.f32.gmra.mxu0 %v1209
        %v2306 = vpop.f32.mrf.mxu0
        %v2307 = vadd.f32 %v2182, %v2306
        %2308 = vmatmul.f32.gmra.mxu0 %v1218
        %v2309 = vpop.f32.mrf.mxu0
        %v2310 = vadd.f32 %v2185, %v2309
        %2311 = vmatmul.f32.gmra.mxu0 %v1227
        %v2312 = vpop.f32.mrf.mxu0
        %v2313 = vadd.f32 %v2188, %v2312
        %2314 = vmatmul.f32.gmra.mxu0 %v1236
        %v2315 = vpop.f32.mrf.mxu0
        %v2316 = vadd.f32 %v2191, %v2315
        %2317 = vmatmul.f32.gmra.mxu0 %v1245
        %v2318 = vpop.f32.mrf.mxu0
        %v2319 = vadd.f32 %v2194, %v2318
        %2320 = vmatmul.f32.gmra.mxu0 %v1254
        %v2321 = vpop.f32.mrf.mxu0
        %v2322 = vadd.f32 %v2197, %v2321
        %2323 = vmatmul.f32.gmra.mxu0 %v1263
        %v2324 = vpop.f32.mrf.mxu0
        %v2325 = vadd.f32 %v2200, %v2324
        %2326 = vmatmul.f32.gmra.mxu0 %v1272
        %v2327 = vpop.f32.mrf.mxu0
        %v2328 = vadd.f32 %v2203, %v2327
        %2329 = vmatmul.f32.gmra.mxu0 %v1281
        %v2330 = vpop.f32.mrf.mxu0
        %v2331 = vadd.f32 %v2206, %v2330
        %2332 = vmatmul.f32.gmra.mxu0 %v1290
        %v2333 = vpop.f32.mrf.mxu0
        %v2334 = vadd.f32 %v2209, %v2333
        %2335 = vmatmul.f32.gmra.mxu0 %v1299
        %v2336 = vpop.f32.mrf.mxu0
        %v2337 = vadd.f32 %v2212, %v2336
        %2338 = vmatmul.f32.gmra.mxu0 %v1308
        %v2339 = vpop.f32.mrf.mxu0
        %v2340 = vadd.f32 %v2215, %v2339
        %2341 = vmatmul.f32.gmra.mxu0 %v1317
        %v2342 = vpop.f32.mrf.mxu0
        %v2343 = vadd.f32 %v2218, %v2342
        %2344 = vmatmul.f32.gmra.mxu0 %v1326
        %v2345 = vpop.f32.mrf.mxu0
        %v2346 = vadd.f32 %v2221, %v2345
        %2347 = vdwg.mxu0
        %2348 = vmatpush.msra.mxu0 %v1456
        %2349 = vmatpush.msra.mxu0 %v1455
        %2350 = vmatpush.msra.mxu0 %v1454
        %2351 = vmatpush.msra.mxu0 %v1453
        %2352 = vmatpush.msra.mxu0 %v1452
        %2353 = vmatpush.msra.mxu0 %v1451
        %2354 = vmatpush.msra.mxu0 %v1450
        %2355 = vmatpush.msra.mxu0 %v1449
        %2356 = vmatpush.msra.mxu0 %v1448
        %2357 = vmatpush.msra.mxu0 %v1447
        %2358 = vmatpush.msra.mxu0 %v1446
        %2359 = vmatpush.msra.mxu0 %v1445
        %2360 = vmatpush.msra.mxu0 %v1444
        %2361 = vmatpush.msra.mxu0 %v1443
        %2362 = vmatpush.msra.mxu0 %v1442
        %2363 = vmatpush.msra.mxu0 %v1441
        %2364 = vmatmul.f32.gmra.mxu0 %v1012
        %v2365 = vpop.f32.mrf.mxu0
        %v2366 = vadd.f32 %v2241, %v2365
        %2367 = vmatmul.f32.gmra.mxu0 %v1021
        %v2368 = vpop.f32.mrf.mxu0
        %v2369 = vadd.f32 %v2244, %v2368
        %2370 = vmatmul.f32.gmra.mxu0 %v1030
        %v2371 = vpop.f32.mrf.mxu0
        %v2372 = vadd.f32 %v2247, %v2371
        %2373 = vmatmul.f32.gmra.mxu0 %v1039
        %v2374 = vpop.f32.mrf.mxu0
        %v2375 = vadd.f32 %v2250, %v2374
        %2376 = vmatmul.f32.gmra.mxu0 %v1048
        %v2377 = vpop.f32.mrf.mxu0
        %v2378 = vadd.f32 %v2253, %v2377
        %2379 = vmatmul.f32.gmra.mxu0 %v1057
        %v2380 = vpop.f32.mrf.mxu0
        %v2381 = vadd.f32 %v2256, %v2380
        %2382 = vmatmul.f32.gmra.mxu0 %v1066
        %v2383 = vpop.f32.mrf.mxu0
        %v2384 = vadd.f32 %v2259, %v2383
        %2385 = vmatmul.f32.gmra.mxu0 %v1075
        %v2386 = vpop.f32.mrf.mxu0
        %v2387 = vadd.f32 %v2262, %v2386
        %2388 = vmatmul.f32.gmra.mxu0 %v1084
        %v2389 = vpop.f32.mrf.mxu0
        %v2390 = vadd.f32 %v2265, %v2389
        %2391 = vmatmul.f32.gmra.mxu0 %v1093
        %v2392 = vpop.f32.mrf.mxu0
        %v2393 = vadd.f32 %v2268, %v2392
        %2394 = vmatmul.f32.gmra.mxu0 %v1102
        %v2395 = vpop.f32.mrf.mxu0
        %v2396 = vadd.f32 %v2271, %v2395
        %2397 = vmatmul.f32.gmra.mxu0 %v1111
        %v2398 = vpop.f32.mrf.mxu0
        %v2399 = vadd.f32 %v2274, %v2398
        %2400 = vmatmul.f32.gmra.mxu0 %v1120
        %v2401 = vpop.f32.mrf.mxu0
        %v2402 = vadd.f32 %v2277, %v2401
        %2403 = vmatmul.f32.gmra.mxu0 %v1129
        %v2404 = vpop.f32.mrf.mxu0
        %v2405 = vadd.f32 %v2280, %v2404
        %2406 = vmatmul.f32.gmra.mxu0 %v1138
        %v2407 = vpop.f32.mrf.mxu0
        %v2408 = vadd.f32 %v2283, %v2407
        %2409 = vmatmul.f32.gmra.mxu0 %v1147
        %v2410 = vpop.f32.mrf.mxu0
        %v2411 = vadd.f32 %v2286, %v2410
        %2412 = vmatmul.f32.gmra.mxu0 %v1156
        %v2413 = vpop.f32.mrf.mxu0
        %v2414 = vadd.f32 %v2289, %v2413
        %2415 = vmatmul.f32.gmra.mxu0 %v1165
        %v2416 = vpop.f32.mrf.mxu0
        %v2417 = vadd.f32 %v2292, %v2416
        %2418 = vmatmul.f32.gmra.mxu0 %v1174
        %v2419 = vpop.f32.mrf.mxu0
        %v2420 = vadd.f32 %v2295, %v2419
        %2421 = vmatmul.f32.gmra.mxu0 %v1183
        %v2422 = vpop.f32.mrf.mxu0
        %v2423 = vadd.f32 %v2298, %v2422
        %2424 = vmatmul.f32.gmra.mxu0 %v1192
        %v2425 = vpop.f32.mrf.mxu0
        %v2426 = vadd.f32 %v2301, %v2425
        %2427 = vmatmul.f32.gmra.mxu0 %v1201
        %v2428 = vpop.f32.mrf.mxu0
        %v2429 = vadd.f32 %v2304, %v2428
        %2430 = vmatmul.f32.gmra.mxu0 %v1210
        %v2431 = vpop.f32.mrf.mxu0
        %v2432 = vadd.f32 %v2307, %v2431
        %2433 = vmatmul.f32.gmra.mxu0 %v1219
        %v2434 = vpop.f32.mrf.mxu0
        %v2435 = vadd.f32 %v2310, %v2434
        %2436 = vmatmul.f32.gmra.mxu0 %v1228
        %v2437 = vpop.f32.mrf.mxu0
        %v2438 = vadd.f32 %v2313, %v2437
        %2439 = vmatmul.f32.gmra.mxu0 %v1237
        %v2440 = vpop.f32.mrf.mxu0
        %v2441 = vadd.f32 %v2316, %v2440
        %2442 = vmatmul.f32.gmra.mxu0 %v1246
        %v2443 = vpop.f32.mrf.mxu0
        %v2444 = vadd.f32 %v2319, %v2443
        %2445 = vmatmul.f32.gmra.mxu0 %v1255
        %v2446 = vpop.f32.mrf.mxu0
        %v2447 = vadd.f32 %v2322, %v2446
        %2448 = vmatmul.f32.gmra.mxu0 %v1264
        %v2449 = vpop.f32.mrf.mxu0
        %v2450 = vadd.f32 %v2325, %v2449
        %2451 = vmatmul.f32.gmra.mxu0 %v1273
        %v2452 = vpop.f32.mrf.mxu0
        %v2453 = vadd.f32 %v2328, %v2452
        %2454 = vmatmul.f32.gmra.mxu0 %v1282
        %v2455 = vpop.f32.mrf.mxu0
        %v2456 = vadd.f32 %v2331, %v2455
        %2457 = vmatmul.f32.gmra.mxu0 %v1291
        %v2458 = vpop.f32.mrf.mxu0
        %v2459 = vadd.f32 %v2334, %v2458
        %2460 = vmatmul.f32.gmra.mxu0 %v1300
        %v2461 = vpop.f32.mrf.mxu0
        %v2462 = vadd.f32 %v2337, %v2461
        %2463 = vmatmul.f32.gmra.mxu0 %v1309
        %v2464 = vpop.f32.mrf.mxu0
        %v2465 = vadd.f32 %v2340, %v2464
        %2466 = vmatmul.f32.gmra.mxu0 %v1318
        %v2467 = vpop.f32.mrf.mxu0
        %v2468 = vadd.f32 %v2343, %v2467
        %2469 = vmatmul.f32.gmra.mxu0 %v1327
        %v2470 = vpop.f32.mrf.mxu0
        %v2471 = vadd.f32 %v2346, %v2470
        %2472 = vdwg.mxu0
        %2473 = vmatpush.msra.mxu0 %v1472
        %2474 = vmatpush.msra.mxu0 %v1471
        %2475 = vmatpush.msra.mxu0 %v1470
        %2476 = vmatpush.msra.mxu0 %v1469
        %2477 = vmatpush.msra.mxu0 %v1468
        %2478 = vmatpush.msra.mxu0 %v1467
        %2479 = vmatpush.msra.mxu0 %v1466
        %2480 = vmatpush.msra.mxu0 %v1465
        %2481 = vmatpush.msra.mxu0 %v1464
        %2482 = vmatpush.msra.mxu0 %v1463
        %2483 = vmatpush.msra.mxu0 %v1462
        %2484 = vmatpush.msra.mxu0 %v1461
        %2485 = vmatpush.msra.mxu0 %v1460
        %2486 = vmatpush.msra.mxu0 %v1459
        %2487 = vmatpush.msra.mxu0 %v1458
        %2488 = vmatpush.msra.mxu0 %v1457
        %2489 = vmatmul.f32.gmra.mxu0 %v1013
        %v2490 = vpop.f32.mrf.mxu0
        %v2491 = vadd.f32 %v2366, %v2490
        %2492 = vmatmul.f32.gmra.mxu0 %v1022
        %v2493 = vpop.f32.mrf.mxu0
        %v2494 = vadd.f32 %v2369, %v2493
        %2495 = vmatmul.f32.gmra.mxu0 %v1031
        %v2496 = vpop.f32.mrf.mxu0
        %v2497 = vadd.f32 %v2372, %v2496
        %2498 = vmatmul.f32.gmra.mxu0 %v1040
        %v2499 = vpop.f32.mrf.mxu0
        %v2500 = vadd.f32 %v2375, %v2499
        %2501 = vmatmul.f32.gmra.mxu0 %v1049
        %v2502 = vpop.f32.mrf.mxu0
        %v2503 = vadd.f32 %v2378, %v2502
        %2504 = vmatmul.f32.gmra.mxu0 %v1058
        %v2505 = vpop.f32.mrf.mxu0
        %v2506 = vadd.f32 %v2381, %v2505
        %2507 = vmatmul.f32.gmra.mxu0 %v1067
        %v2508 = vpop.f32.mrf.mxu0
        %v2509 = vadd.f32 %v2384, %v2508
        %2510 = vmatmul.f32.gmra.mxu0 %v1076
        %v2511 = vpop.f32.mrf.mxu0
        %v2512 = vadd.f32 %v2387, %v2511
        %2513 = vmatmul.f32.gmra.mxu0 %v1085
        %v2514 = vpop.f32.mrf.mxu0
        %v2515 = vadd.f32 %v2390, %v2514
        %2516 = vmatmul.f32.gmra.mxu0 %v1094
        %v2517 = vpop.f32.mrf.mxu0
        %v2518 = vadd.f32 %v2393, %v2517
        %2519 = vmatmul.f32.gmra.mxu0 %v1103
        %v2520 = vpop.f32.mrf.mxu0
        %v2521 = vadd.f32 %v2396, %v2520
        %2522 = vmatmul.f32.gmra.mxu0 %v1112
        %v2523 = vpop.f32.mrf.mxu0
        %v2524 = vadd.f32 %v2399, %v2523
        %2525 = vmatmul.f32.gmra.mxu0 %v1121
        %v2526 = vpop.f32.mrf.mxu0
        %v2527 = vadd.f32 %v2402, %v2526
        %2528 = vmatmul.f32.gmra.mxu0 %v1130
        %v2529 = vpop.f32.mrf.mxu0
        %v2530 = vadd.f32 %v2405, %v2529
        %2531 = vmatmul.f32.gmra.mxu0 %v1139
        %v2532 = vpop.f32.mrf.mxu0
        %v2533 = vadd.f32 %v2408, %v2532
        %2534 = vmatmul.f32.gmra.mxu0 %v1148
        %v2535 = vpop.f32.mrf.mxu0
        %v2536 = vadd.f32 %v2411, %v2535
        %2537 = vmatmul.f32.gmra.mxu0 %v1157
        %v2538 = vpop.f32.mrf.mxu0
        %v2539 = vadd.f32 %v2414, %v2538
        %2540 = vmatmul.f32.gmra.mxu0 %v1166
        %v2541 = vpop.f32.mrf.mxu0
        %v2542 = vadd.f32 %v2417, %v2541
        %2543 = vmatmul.f32.gmra.mxu0 %v1175
        %v2544 = vpop.f32.mrf.mxu0
        %v2545 = vadd.f32 %v2420, %v2544
        %2546 = vmatmul.f32.gmra.mxu0 %v1184
        %v2547 = vpop.f32.mrf.mxu0
        %v2548 = vadd.f32 %v2423, %v2547
        %2549 = vmatmul.f32.gmra.mxu0 %v1193
        %v2550 = vpop.f32.mrf.mxu0
        %v2551 = vadd.f32 %v2426, %v2550
        %2552 = vmatmul.f32.gmra.mxu0 %v1202
        %v2553 = vpop.f32.mrf.mxu0
        %v2554 = vadd.f32 %v2429, %v2553
        %2555 = vmatmul.f32.gmra.mxu0 %v1211
        %v2556 = vpop.f32.mrf.mxu0
        %v2557 = vadd.f32 %v2432, %v2556
        %2558 = vmatmul.f32.gmra.mxu0 %v1220
        %v2559 = vpop.f32.mrf.mxu0
        %v2560 = vadd.f32 %v2435, %v2559
        %2561 = vmatmul.f32.gmra.mxu0 %v1229
        %v2562 = vpop.f32.mrf.mxu0
        %v2563 = vadd.f32 %v2438, %v2562
        %2564 = vmatmul.f32.gmra.mxu0 %v1238
        %v2565 = vpop.f32.mrf.mxu0
        %v2566 = vadd.f32 %v2441, %v2565
        %2567 = vmatmul.f32.gmra.mxu0 %v1247
        %v2568 = vpop.f32.mrf.mxu0
        %v2569 = vadd.f32 %v2444, %v2568
        %2570 = vmatmul.f32.gmra.mxu0 %v1256
        %v2571 = vpop.f32.mrf.mxu0
        %v2572 = vadd.f32 %v2447, %v2571
        %2573 = vmatmul.f32.gmra.mxu0 %v1265
        %v2574 = vpop.f32.mrf.mxu0
        %v2575 = vadd.f32 %v2450, %v2574
        %2576 = vmatmul.f32.gmra.mxu0 %v1274
        %v2577 = vpop.f32.mrf.mxu0
        %v2578 = vadd.f32 %v2453, %v2577
        %2579 = vmatmul.f32.gmra.mxu0 %v1283
        %v2580 = vpop.f32.mrf.mxu0
        %v2581 = vadd.f32 %v2456, %v2580
        %2582 = vmatmul.f32.gmra.mxu0 %v1292
        %v2583 = vpop.f32.mrf.mxu0
        %v2584 = vadd.f32 %v2459, %v2583
        %2585 = vmatmul.f32.gmra.mxu0 %v1301
        %v2586 = vpop.f32.mrf.mxu0
        %v2587 = vadd.f32 %v2462, %v2586
        %2588 = vmatmul.f32.gmra.mxu0 %v1310
        %v2589 = vpop.f32.mrf.mxu0
        %v2590 = vadd.f32 %v2465, %v2589
        %2591 = vmatmul.f32.gmra.mxu0 %v1319
        %v2592 = vpop.f32.mrf.mxu0
        %v2593 = vadd.f32 %v2468, %v2592
        %2594 = vmatmul.f32.gmra.mxu0 %v1328
        %v2595 = vpop.f32.mrf.mxu0
        %v2596 = vadd.f32 %v2471, %v2595
        %2597 = vdwg.mxu0
        %v2598 = vld [vmem:[%s2] sm:$0x1]
        %v2600 = vperm.slane %v2598, 0
        %v2602 = vmul.f32 %v2491, %v2600
        %v2603 = vmul.f32 %v2494, %v2600
        %v2604 = vmul.f32 %v2497, %v2600
        %v2605 = vmul.f32 %v2500, %v2600
        %v2606 = vmul.f32 %v2503, %v2600
        %v2607 = vmul.f32 %v2506, %v2600
        %v2608 = vmul.f32 %v2509, %v2600
        %v2609 = vmul.f32 %v2512, %v2600
        %v2610 = vmul.f32 %v2515, %v2600
        %v2611 = vmul.f32 %v2518, %v2600
        %v2612 = vmul.f32 %v2521, %v2600
        %v2613 = vmul.f32 %v2524, %v2600
        %v2614 = vmul.f32 %v2527, %v2600
        %v2615 = vmul.f32 %v2530, %v2600
        %v2616 = vmul.f32 %v2533, %v2600
        %v2617 = vmul.f32 %v2536, %v2600
        %v2618 = vmul.f32 %v2539, %v2600
        %v2619 = vmul.f32 %v2542, %v2600
        %v2620 = vmul.f32 %v2545, %v2600
        %v2621 = vmul.f32 %v2548, %v2600
        %v2622 = vmul.f32 %v2551, %v2600
        %v2623 = vmul.f32 %v2554, %v2600
        %v2624 = vmul.f32 %v2557, %v2600
        %v2625 = vmul.f32 %v2560, %v2600
        %v2626 = vmul.f32 %v2563, %v2600
        %v2627 = vmul.f32 %v2566, %v2600
        %v2628 = vmul.f32 %v2569, %v2600
        %v2629 = vmul.f32 %v2572, %v2600
        %v2630 = vmul.f32 %v2575, %v2600
        %v2631 = vmul.f32 %v2578, %v2600
        %v2632 = vmul.f32 %v2581, %v2600
        %v2633 = vmul.f32 %v2584, %v2600
        %v2634 = vmul.f32 %v2587, %v2600
        %v2635 = vmul.f32 %v2590, %v2600
        %v2636 = vmul.f32 %v2593, %v2600
        %v2637 = vmul.f32 %v2596, %v2600
        %v2638 = vld [vmem:[%s3] sm:$0x1]
        %v2640 = vperm.slane %v2638, 0
        %v2642 = vadd.f32 %v2602, %v2640
        %v2643 = vadd.f32 %v2603, %v2640
        %v2644 = vadd.f32 %v2604, %v2640
        %v2645 = vadd.f32 %v2605, %v2640
        %v2646 = vadd.f32 %v2606, %v2640
        %v2647 = vadd.f32 %v2607, %v2640
        %v2648 = vadd.f32 %v2608, %v2640
        %v2649 = vadd.f32 %v2609, %v2640
        %v2650 = vadd.f32 %v2610, %v2640
        %v2651 = vadd.f32 %v2611, %v2640
        %v2652 = vadd.f32 %v2612, %v2640
        %v2653 = vadd.f32 %v2613, %v2640
        %v2654 = vadd.f32 %v2614, %v2640
        %v2655 = vadd.f32 %v2615, %v2640
        %v2656 = vadd.f32 %v2616, %v2640
        %v2657 = vadd.f32 %v2617, %v2640
        %v2658 = vadd.f32 %v2618, %v2640
        %v2659 = vadd.f32 %v2619, %v2640
        %v2660 = vadd.f32 %v2620, %v2640
        %v2661 = vadd.f32 %v2621, %v2640
        %v2662 = vadd.f32 %v2622, %v2640
        %v2663 = vadd.f32 %v2623, %v2640
        %v2664 = vadd.f32 %v2624, %v2640
        %v2665 = vadd.f32 %v2625, %v2640
        %v2666 = vadd.f32 %v2626, %v2640
        %v2667 = vadd.f32 %v2627, %v2640
        %v2668 = vadd.f32 %v2628, %v2640
        %v2669 = vadd.f32 %v2629, %v2640
        %v2670 = vadd.f32 %v2630, %v2640
        %v2671 = vadd.f32 %v2631, %v2640
        %v2672 = vadd.f32 %v2632, %v2640
        %v2673 = vadd.f32 %v2633, %v2640
        %v2674 = vadd.f32 %v2634, %v2640
        %v2675 = vadd.f32 %v2635, %v2640
        %v2676 = vadd.f32 %v2636, %v2640
        %v2677 = vadd.f32 %v2637, %v2640
        %v2678 = vmax.f32 %v2642, 0.0
        %v2679 = vmax.f32 %v2643, 0.0
        %v2680 = vmax.f32 %v2644, 0.0
        %v2681 = vmax.f32 %v2645, 0.0
        %v2682 = vmax.f32 %v2646, 0.0
        %v2683 = vmax.f32 %v2647, 0.0
        %v2684 = vmax.f32 %v2648, 0.0
        %v2685 = vmax.f32 %v2649, 0.0
        %v2686 = vmax.f32 %v2650, 0.0
        %v2687 = vmax.f32 %v2651, 0.0
        %v2688 = vmax.f32 %v2652, 0.0
        %v2689 = vmax.f32 %v2653, 0.0
        %v2690 = vmax.f32 %v2654, 0.0
        %v2691 = vmax.f32 %v2655, 0.0
        %v2692 = vmax.f32 %v2656, 0.0
        %v2693 = vmax.f32 %v2657, 0.0
        %v2694 = vmax.f32 %v2658, 0.0
        %v2695 = vmax.f32 %v2659, 0.0
        %v2696 = vmax.f32 %v2660, 0.0
        %v2697 = vmax.f32 %v2661, 0.0
        %v2698 = vmax.f32 %v2662, 0.0
        %v2699 = vmax.f32 %v2663, 0.0
        %v2700 = vmax.f32 %v2664, 0.0
        %v2701 = vmax.f32 %v2665, 0.0
        %v2702 = vmax.f32 %v2666, 0.0
        %v2703 = vmax.f32 %v2667, 0.0
        %v2704 = vmax.f32 %v2668, 0.0
        %v2705 = vmax.f32 %v2669, 0.0
        %v2706 = vmax.f32 %v2670, 0.0
        %v2707 = vmax.f32 %v2671, 0.0
        %v2708 = vmax.f32 %v2672, 0.0
        %v2709 = vmax.f32 %v2673, 0.0
        %v2710 = vmax.f32 %v2674, 0.0
        %v2711 = vmax.f32 %v2675, 0.0
        %v2712 = vmax.f32 %v2676, 0.0
        %v2713 = vmax.f32 %v2677, 0.0
        %2715 = vset.pattern.permute.xlu0 0
        %2716 = vperm.xlu0 %2715, %v321
        %v2717 = vpop.permute.xlu0 %2716
        %2720 = vset.pattern.permute.xlu0 0
        %2721 = vperm.xlu0 %2720, %v322
        %v2722 = vpop.permute.xlu0 %2721
        %2725 = vset.pattern.permute.xlu0 0
        %2726 = vperm.xlu0 %2725, %v323
        %v2727 = vpop.permute.xlu0 %2726
        %2730 = vset.pattern.permute.xlu0 0
        %2731 = vperm.xlu0 %2730, %v324
        %v2732 = vpop.permute.xlu0 %2731
        %2735 = vset.pattern.permute.xlu0 0
        %2736 = vperm.xlu0 %2735, %v325
        %v2737 = vpop.permute.xlu0 %2736
        %2740 = vset.pattern.permute.xlu0 0
        %2741 = vperm.xlu0 %2740, %v326
        %v2742 = vpop.permute.xlu0 %2741
        %2745 = vset.pattern.permute.xlu0 0
        %2746 = vperm.xlu0 %2745, %v327
        %v2747 = vpop.permute.xlu0 %2746
        %2750 = vset.pattern.permute.xlu0 0
        %2751 = vperm.xlu0 %2750, %v328
        %v2752 = vpop.permute.xlu0 %2751
        %2755 = vset.pattern.permute.xlu0 0
        %2756 = vperm.xlu0 %2755, %v329
        %v2757 = vpop.permute.xlu0 %2756
        %2760 = vset.pattern.permute.xlu0 0
        %2761 = vperm.xlu0 %2760, %v330
        %v2762 = vpop.permute.xlu0 %2761
        %2765 = vset.pattern.permute.xlu0 0
        %2766 = vperm.xlu0 %2765, %v331
        %v2767 = vpop.permute.xlu0 %2766
        %2770 = vset.pattern.permute.xlu0 0
        %2771 = vperm.xlu0 %2770, %v332
        %v2772 = vpop.permute.xlu0 %2771
        %2775 = vset.pattern.permute.xlu0 0
        %2776 = vperm.xlu0 %2775, %v333
        %v2777 = vpop.permute.xlu0 %2776
        %2780 = vset.pattern.permute.xlu0 0
        %2781 = vperm.xlu0 %2780, %v334
        %v2782 = vpop.permute.xlu0 %2781
        %2785 = vset.pattern.permute.xlu0 0
        %2786 = vperm.xlu0 %2785, %v335
        %v2787 = vpop.permute.xlu0 %2786
        %2790 = vset.pattern.permute.xlu0 0
        %2791 = vperm.xlu0 %2790, %v336
        %v2792 = vpop.permute.xlu0 %2791
        %2795 = vset.pattern.permute.xlu0 0
        %2796 = vperm.xlu0 %2795, %v337
        %v2797 = vpop.permute.xlu0 %2796
        %2800 = vset.pattern.permute.xlu0 0
        %2801 = vperm.xlu0 %2800, %v338
        %v2802 = vpop.permute.xlu0 %2801
        %2805 = vset.pattern.permute.xlu0 0
        %2806 = vperm.xlu0 %2805, %v339
        %v2807 = vpop.permute.xlu0 %2806
        %2810 = vset.pattern.permute.xlu0 0
        %2811 = vperm.xlu0 %2810, %v340
        %v2812 = vpop.permute.xlu0 %2811
        %2815 = vset.pattern.permute.xlu0 0
        %2816 = vperm.xlu0 %2815, %v341
        %v2817 = vpop.permute.xlu0 %2816
        %2820 = vset.pattern.permute.xlu0 0
        %2821 = vperm.xlu0 %2820, %v342
        %v2822 = vpop.permute.xlu0 %2821
        %2825 = vset.pattern.permute.xlu0 0
        %2826 = vperm.xlu0 %2825, %v343
        %v2827 = vpop.permute.xlu0 %2826
        %2830 = vset.pattern.permute.xlu0 0
        %2831 = vperm.xlu0 %2830, %v344
        %v2832 = vpop.permute.xlu0 %2831
        %2835 = vset.pattern.permute.xlu0 0
        %2836 = vperm.xlu0 %2835, %v345
        %v2837 = vpop.permute.xlu0 %2836
        %2840 = vset.pattern.permute.xlu0 0
        %2841 = vperm.xlu0 %2840, %v346
        %v2842 = vpop.permute.xlu0 %2841
        %2845 = vset.pattern.permute.xlu0 0
        %2846 = vperm.xlu0 %2845, %v347
        %v2847 = vpop.permute.xlu0 %2846
        %2850 = vset.pattern.permute.xlu0 0
        %2851 = vperm.xlu0 %2850, %v348
        %v2852 = vpop.permute.xlu0 %2851
        %2855 = vset.pattern.permute.xlu0 0
        %2856 = vperm.xlu0 %2855, %v349
        %v2857 = vpop.permute.xlu0 %2856
        %2860 = vset.pattern.permute.xlu0 0
        %2861 = vperm.xlu0 %2860, %v350
        %v2862 = vpop.permute.xlu0 %2861
        %2865 = vset.pattern.permute.xlu0 0
        %2866 = vperm.xlu0 %2865, %v351
        %v2867 = vpop.permute.xlu0 %2866
        %2870 = vset.pattern.permute.xlu0 0
        %2871 = vperm.xlu0 %2870, %v352
        %v2872 = vpop.permute.xlu0 %2871
        %2875 = vset.pattern.permute.xlu0 0
        %2876 = vperm.xlu0 %2875, %v353
        %v2877 = vpop.permute.xlu0 %2876
        %2880 = vset.pattern.permute.xlu0 0
        %2881 = vperm.xlu0 %2880, %v354
        %v2882 = vpop.permute.xlu0 %2881
        %2885 = vset.pattern.permute.xlu0 0
        %2886 = vperm.xlu0 %2885, %v355
        %v2887 = vpop.permute.xlu0 %2886
        %2890 = vset.pattern.permute.xlu0 0
        %2891 = vperm.xlu0 %2890, %v356
        %v2892 = vpop.permute.xlu0 %2891
        %v2894 = vmul.f32 %v2678, %v2717
        %v2895 = vmul.f32 %v2679, %v2722
        %v2896 = vmul.f32 %v2680, %v2727
        %v2897 = vmul.f32 %v2681, %v2732
        %v2898 = vmul.f32 %v2682, %v2737
        %v2899 = vmul.f32 %v2683, %v2742
        %v2900 = vmul.f32 %v2684, %v2747
        %v2901 = vmul.f32 %v2685, %v2752
        %v2902 = vmul.f32 %v2686, %v2757
        %v2903 = vmul.f32 %v2687, %v2762
        %v2904 = vmul.f32 %v2688, %v2767
        %v2905 = vmul.f32 %v2689, %v2772
        %v2906 = vmul.f32 %v2690, %v2777
        %v2907 = vmul.f32 %v2691, %v2782
        %v2908 = vmul.f32 %v2692, %v2787
        %v2909 = vmul.f32 %v2693, %v2792
        %v2910 = vmul.f32 %v2694, %v2797
        %v2911 = vmul.f32 %v2695, %v2802
        %v2912 = vmul.f32 %v2696, %v2807
        %v2913 = vmul.f32 %v2697, %v2812
        %v2914 = vmul.f32 %v2698, %v2817
        %v2915 = vmul.f32 %v2699, %v2822
        %v2916 = vmul.f32 %v2700, %v2827
        %v2917 = vmul.f32 %v2701, %v2832
        %v2918 = vmul.f32 %v2702, %v2837
        %v2919 = vmul.f32 %v2703, %v2842
        %v2920 = vmul.f32 %v2704, %v2847
        %v2921 = vmul.f32 %v2705, %v2852
        %v2922 = vmul.f32 %v2706, %v2857
        %v2923 = vmul.f32 %v2707, %v2862
        %v2924 = vmul.f32 %v2708, %v2867
        %v2925 = vmul.f32 %v2709, %v2872
        %v2926 = vmul.f32 %v2710, %v2877
        %v2927 = vmul.f32 %v2711, %v2882
        %v2928 = vmul.f32 %v2712, %v2887
        %v2929 = vmul.f32 %v2713, %v2892
        %2930 = vst [vmem:[#allocation2] sm:$0xff] 0.0
        %2931 = vst [vmem:[#allocation2 + $0x8] sm:$0xff] 0.0
        %2932 = vst [vmem:[#allocation2 + $0x10] sm:$0x7] 0.0
        %2933 = vst [vmem:[#allocation2 + $0x133] sm:$0xff] 0.0
        %2934 = vst [vmem:[#allocation2 + $0x13b] sm:$0xff] 0.0
        %2935 = vst [vmem:[#allocation2 + $0x143] sm:$0xff] 0.0
        %2936 = vst [vmem:[#allocation2 + $0x14b] sm:$0x1] 0.0
        %2937 = vst [vmem:[#allocation2 + $0x13] sm:$0xff] %v2894
        %2938 = vst [vmem:[#allocation2 + $0x1b] sm:$0xff] %v2895
        %2939 = vst [vmem:[#allocation2 + $0x23] sm:$0xff] %v2896
        %2940 = vst [vmem:[#allocation2 + $0x2b] sm:$0xff] %v2897
        %2941 = vst [vmem:[#allocation2 + $0x33] sm:$0xff] %v2898
        %2942 = vst [vmem:[#allocation2 + $0x3b] sm:$0xff] %v2899
        %2943 = vst [vmem:[#allocation2 + $0x43] sm:$0xff] %v2900
        %2944 = vst [vmem:[#allocation2 + $0x4b] sm:$0xff] %v2901
        %2945 = vst [vmem:[#allocation2 + $0x53] sm:$0xff] %v2902
        %2946 = vst [vmem:[#allocation2 + $0x5b] sm:$0xff] %v2903
        %2947 = vst [vmem:[#allocation2 + $0x63] sm:$0xff] %v2904
        %2948 = vst [vmem:[#allocation2 + $0x6b] sm:$0xff] %v2905
        %2949 = vst [vmem:[#allocation2 + $0x73] sm:$0xff] %v2906
        %2950 = vst [vmem:[#allocation2 + $0x7b] sm:$0xff] %v2907
        %2951 = vst [vmem:[#allocation2 + $0x83] sm:$0xff] %v2908
        %2952 = vst [vmem:[#allocation2 + $0x8b] sm:$0xff] %v2909
        %2953 = vst [vmem:[#allocation2 + $0x93] sm:$0xff] %v2910
        %2954 = vst [vmem:[#allocation2 + $0x9b] sm:$0xff] %v2911
        %2955 = vst [vmem:[#allocation2 + $0xa3] sm:$0xff] %v2912
        %2956 = vst [vmem:[#allocation2 + $0xab] sm:$0xff] %v2913
        %2957 = vst [vmem:[#allocation2 + $0xb3] sm:$0xff] %v2914
        %2958 = vst [vmem:[#allocation2 + $0xbb] sm:$0xff] %v2915
        %2959 = vst [vmem:[#allocation2 + $0xc3] sm:$0xff] %v2916
        %2960 = vst [vmem:[#allocation2 + $0xcb] sm:$0xff] %v2917
        %2961 = vst [vmem:[#allocation2 + $0xd3] sm:$0xff] %v2918
        %2962 = vst [vmem:[#allocation2 + $0xdb] sm:$0xff] %v2919
        %2963 = vst [vmem:[#allocation2 + $0xe3] sm:$0xff] %v2920
        %2964 = vst [vmem:[#allocation2 + $0xeb] sm:$0xff] %v2921
        %2965 = vst [vmem:[#allocation2 + $0xf3] sm:$0xff] %v2922
        %2966 = vst [vmem:[#allocation2 + $0xfb] sm:$0xff] %v2923
        %2967 = vst [vmem:[#allocation2 + $0x103] sm:$0xff] %v2924
        %2968 = vst [vmem:[#allocation2 + $0x10b] sm:$0xff] %v2925
        %2969 = vst [vmem:[#allocation2 + $0x113] sm:$0xff] %v2926
        %2970 = vst [vmem:[#allocation2 + $0x11b] sm:$0xff] %v2927
        %2971 = vst [vmem:[#allocation2 + $0x123] sm:$0xff] %v2928
        %2972 = vst [vmem:[#allocation2 + $0x12b] sm:$0xff] %v2929
        %v2973 = vld [vmem:[#allocation2] sm:$0xff]
        %v2974 = vld [vmem:[#allocation2 + $0x8] sm:$0xff]
        %v2975 = vld [vmem:[#allocation2 + $0x10] sm:$0xff]
        %v2976 = vld [vmem:[#allocation2 + $0x18] sm:$0xff]
        %v2977 = vld [vmem:[#allocation2 + $0x20] sm:$0xff]
        %v2978 = vld [vmem:[#allocation2 + $0x28] sm:$0xff]
        %v2979 = vld [vmem:[#allocation2 + $0x30] sm:$0xff]
        %v2980 = vld [vmem:[#allocation2 + $0x38] sm:$0xff]
        %v2981 = vld [vmem:[#allocation2 + $0x40] sm:$0xff]
        %v2982 = vld [vmem:[#allocation2 + $0x48] sm:$0xff]
        %v2983 = vld [vmem:[#allocation2 + $0x50] sm:$0xff]
        %v2984 = vld [vmem:[#allocation2 + $0x58] sm:$0xff]
        %v2985 = vld [vmem:[#allocation2 + $0x60] sm:$0xff]
        %v2986 = vld [vmem:[#allocation2 + $0x68] sm:$0xff]
        %v2987 = vld [vmem:[#allocation2 + $0x70] sm:$0xff]
        %v2988 = vld [vmem:[#allocation2 + $0x78] sm:$0xff]
        %v2989 = vld [vmem:[#allocation2 + $0x80] sm:$0xff]
        %v2990 = vld [vmem:[#allocation2 + $0x88] sm:$0xff]
        %v2991 = vld [vmem:[#allocation2 + $0x90] sm:$0xff]
        %v2992 = vld [vmem:[#allocation2 + $0x98] sm:$0xff]
        %v2993 = vld [vmem:[#allocation2 + $0xa0] sm:$0xff]
        %v2994 = vld [vmem:[#allocation2 + $0xa8] sm:$0xff]
        %v2995 = vld [vmem:[#allocation2 + $0xb0] sm:$0xff]
        %v2996 = vld [vmem:[#allocation2 + $0xb8] sm:$0xff]
        %v2997 = vld [vmem:[#allocation2 + $0xc0] sm:$0xff]
        %v2998 = vld [vmem:[#allocation2 + $0xc8] sm:$0xff]
        %v2999 = vld [vmem:[#allocation2 + $0xd0] sm:$0xff]
        %v3000 = vld [vmem:[#allocation2 + $0xd8] sm:$0xff]
        %v3001 = vld [vmem:[#allocation2 + $0xe0] sm:$0xff]
        %v3002 = vld [vmem:[#allocation2 + $0xe8] sm:$0xff]
        %v3003 = vld [vmem:[#allocation2 + $0xf0] sm:$0xff]
        %v3004 = vld [vmem:[#allocation2 + $0xf8] sm:$0xff]
        %v3005 = vld [vmem:[#allocation2 + $0x100] sm:$0xff]
        %v3006 = vld [vmem:[#allocation2 + $0x108] sm:$0xff]
        %v3007 = vld [vmem:[#allocation2 + $0x110] sm:$0xff]
        %v3008 = vld [vmem:[#allocation2 + $0x118] sm:$0xff]
        %3009 = vst [vmem:[#allocation3] sm:$0xff] %v2973
        %3010 = vst [vmem:[#allocation3 + $0x48] sm:$0xff] %v2974
        %3011 = vst [vmem:[#allocation3 + $0x90] sm:$0xff] %v2975
        %3012 = vst [vmem:[#allocation3 + $0xd8] sm:$0xff] %v2976
        %3013 = vst [vmem:[#allocation3 + $0x120] sm:$0xff] %v2977
        %3014 = vst [vmem:[#allocation3 + $0x168] sm:$0xff] %v2978
        %3015 = vst [vmem:[#allocation3 + $0x1b0] sm:$0xff] %v2979
        %3016 = vst [vmem:[#allocation3 + $0x1f8] sm:$0xff] %v2980
        %3017 = vst [vmem:[#allocation3 + $0x240] sm:$0xff] %v2981
        %3018 = vst [vmem:[#allocation3 + $0x288] sm:$0xff] %v2982
        %3019 = vst [vmem:[#allocation3 + $0x2d0] sm:$0xff] %v2983
        %3020 = vst [vmem:[#allocation3 + $0x318] sm:$0xff] %v2984
        %3021 = vst [vmem:[#allocation3 + $0x360] sm:$0xff] %v2985
        %3022 = vst [vmem:[#allocation3 + $0x3a8] sm:$0xff] %v2986
        %3023 = vst [vmem:[#allocation3 + $0x3f0] sm:$0xff] %v2987
        %3024 = vst [vmem:[#allocation3 + $0x438] sm:$0xff] %v2988
        %3025 = vst [vmem:[#allocation3 + $0x480] sm:$0xff] %v2989
        %3026 = vst [vmem:[#allocation3 + $0x4c8] sm:$0xff] %v2990
        %3027 = vst [vmem:[#allocation3 + $0x510] sm:$0xff] %v2991
        %3028 = vst [vmem:[#allocation3 + $0x558] sm:$0xff] %v2992
        %3029 = vst [vmem:[#allocation3 + $0x5a0] sm:$0xff] %v2993
        %3030 = vst [vmem:[#allocation3 + $0x5e8] sm:$0xff] %v2994
        %3031 = vst [vmem:[#allocation3 + $0x630] sm:$0xff] %v2995
        %3032 = vst [vmem:[#allocation3 + $0x678] sm:$0xff] %v2996
        %3033 = vst [vmem:[#allocation3 + $0x6c0] sm:$0xff] %v2997
        %3034 = vst [vmem:[#allocation3 + $0x708] sm:$0xff] %v2998
        %3035 = vst [vmem:[#allocation3 + $0x750] sm:$0xff] %v2999
        %3036 = vst [vmem:[#allocation3 + $0x798] sm:$0xff] %v3000
        %3037 = vst [vmem:[#allocation3 + $0x7e0] sm:$0xff] %v3001
        %3038 = vst [vmem:[#allocation3 + $0x828] sm:$0xff] %v3002
        %3039 = vst [vmem:[#allocation3 + $0x870] sm:$0xff] %v3003
        %3040 = vst [vmem:[#allocation3 + $0x8b8] sm:$0xff] %v3004
        %3041 = vst [vmem:[#allocation3 + $0x900] sm:$0xff] %v3005
        %3042 = vst [vmem:[#allocation3 + $0x948] sm:$0xff] %v3006
        %3043 = vst [vmem:[#allocation3 + $0x990] sm:$0xff] %v3007
        %3044 = vst [vmem:[#allocation3 + $0x9d8] sm:$0xff] %v3008
        %v3045 = vld [vmem:[#allocation2 + $0x1] sm:$0xff]
        %v3046 = vld [vmem:[#allocation2 + $0x9] sm:$0xff]
        %v3047 = vld [vmem:[#allocation2 + $0x11] sm:$0xff]
        %v3048 = vld [vmem:[#allocation2 + $0x19] sm:$0xff]
        %v3049 = vld [vmem:[#allocation2 + $0x21] sm:$0xff]
        %v3050 = vld [vmem:[#allocation2 + $0x29] sm:$0xff]
        %v3051 = vld [vmem:[#allocation2 + $0x31] sm:$0xff]
        %v3052 = vld [vmem:[#allocation2 + $0x39] sm:$0xff]
        %v3053 = vld [vmem:[#allocation2 + $0x41] sm:$0xff]
        %v3054 = vld [vmem:[#allocation2 + $0x49] sm:$0xff]
        %v3055 = vld [vmem:[#allocation2 + $0x51] sm:$0xff]
        %v3056 = vld [vmem:[#allocation2 + $0x59] sm:$0xff]
        %v3057 = vld [vmem:[#allocation2 + $0x61] sm:$0xff]
        %v3058 = vld [vmem:[#allocation2 + $0x69] sm:$0xff]
        %v3059 = vld [vmem:[#allocation2 + $0x71] sm:$0xff]
        %v3060 = vld [vmem:[#allocation2 + $0x79] sm:$0xff]
        %v3061 = vld [vmem:[#allocation2 + $0x81] sm:$0xff]
        %v3062 = vld [vmem:[#allocation2 + $0x89] sm:$0xff]
        %v3063 = vld [vmem:[#allocation2 + $0x91] sm:$0xff]
        %v3064 = vld [vmem:[#allocation2 + $0x99] sm:$0xff]
        %v3065 = vld [vmem:[#allocation2 + $0xa1] sm:$0xff]
        %v3066 = vld [vmem:[#allocation2 + $0xa9] sm:$0xff]
        %v3067 = vld [vmem:[#allocation2 + $0xb1] sm:$0xff]
        %v3068 = vld [vmem:[#allocation2 + $0xb9] sm:$0xff]
        %v3069 = vld [vmem:[#allocation2 + $0xc1] sm:$0xff]
        %v3070 = vld [vmem:[#allocation2 + $0xc9] sm:$0xff]
        %v3071 = vld [vmem:[#allocation2 + $0xd1] sm:$0xff]
        %v3072 = vld [vmem:[#allocation2 + $0xd9] sm:$0xff]
        %v3073 = vld [vmem:[#allocation2 + $0xe1] sm:$0xff]
        %v3074 = vld [vmem:[#allocation2 + $0xe9] sm:$0xff]
        %v3075 = vld [vmem:[#allocation2 + $0xf1] sm:$0xff]
        %v3076 = vld [vmem:[#allocation2 + $0xf9] sm:$0xff]
        %v3077 = vld [vmem:[#allocation2 + $0x101] sm:$0xff]
        %v3078 = vld [vmem:[#allocation2 + $0x109] sm:$0xff]
        %v3079 = vld [vmem:[#allocation2 + $0x111] sm:$0xff]
        %v3080 = vld [vmem:[#allocation2 + $0x119] sm:$0xff]
        %3081 = vst [vmem:[#allocation3 + $0x8] sm:$0xff] %v3045
        %3082 = vst [vmem:[#allocation3 + $0x50] sm:$0xff] %v3046
        %3083 = vst [vmem:[#allocation3 + $0x98] sm:$0xff] %v3047
        %3084 = vst [vmem:[#allocation3 + $0xe0] sm:$0xff] %v3048
        %3085 = vst [vmem:[#allocation3 + $0x128] sm:$0xff] %v3049
        %3086 = vst [vmem:[#allocation3 + $0x170] sm:$0xff] %v3050
        %3087 = vst [vmem:[#allocation3 + $0x1b8] sm:$0xff] %v3051
        %3088 = vst [vmem:[#allocation3 + $0x200] sm:$0xff] %v3052
        %3089 = vst [vmem:[#allocation3 + $0x248] sm:$0xff] %v3053
        %3090 = vst [vmem:[#allocation3 + $0x290] sm:$0xff] %v3054
        %3091 = vst [vmem:[#allocation3 + $0x2d8] sm:$0xff] %v3055
        %3092 = vst [vmem:[#allocation3 + $0x320] sm:$0xff] %v3056
        %3093 = vst [vmem:[#allocation3 + $0x368] sm:$0xff] %v3057
        %3094 = vst [vmem:[#allocation3 + $0x3b0] sm:$0xff] %v3058
        %3095 = vst [vmem:[#allocation3 + $0x3f8] sm:$0xff] %v3059
        %3096 = vst [vmem:[#allocation3 + $0x440] sm:$0xff] %v3060
        %3097 = vst [vmem:[#allocation3 + $0x488] sm:$0xff] %v3061
        %3098 = vst [vmem:[#allocation3 + $0x4d0] sm:$0xff] %v3062
        %3099 = vst [vmem:[#allocation3 + $0x518] sm:$0xff] %v3063
        %3100 = vst [vmem:[#allocation3 + $0x560] sm:$0xff] %v3064
        %3101 = vst [vmem:[#allocation3 + $0x5a8] sm:$0xff] %v3065
        %3102 = vst [vmem:[#allocation3 + $0x5f0] sm:$0xff] %v3066
        %3103 = vst [vmem:[#allocation3 + $0x638] sm:$0xff] %v3067
        %3104 = vst [vmem:[#allocation3 + $0x680] sm:$0xff] %v3068
        %3105 = vst [vmem:[#allocation3 + $0x6c8] sm:$0xff] %v3069
        %3106 = vst [vmem:[#allocation3 + $0x710] sm:$0xff] %v3070
        %3107 = vst [vmem:[#allocation3 + $0x758] sm:$0xff] %v3071
        %3108 = vst [vmem:[#allocation3 + $0x7a0] sm:$0xff] %v3072
        %3109 = vst [vmem:[#allocation3 + $0x7e8] sm:$0xff] %v3073
        %3110 = vst [vmem:[#allocation3 + $0x830] sm:$0xff] %v3074
        %3111 = vst [vmem:[#allocation3 + $0x878] sm:$0xff] %v3075
        %3112 = vst [vmem:[#allocation3 + $0x8c0] sm:$0xff] %v3076
        %3113 = vst [vmem:[#allocation3 + $0x908] sm:$0xff] %v3077
        %3114 = vst [vmem:[#allocation3 + $0x950] sm:$0xff] %v3078
        %3115 = vst [vmem:[#allocation3 + $0x998] sm:$0xff] %v3079
        %3116 = vst [vmem:[#allocation3 + $0x9e0] sm:$0xff] %v3080
        %v3117 = vld [vmem:[#allocation2 + $0x2] sm:$0xff]
        %v3118 = vld [vmem:[#allocation2 + $0xa] sm:$0xff]
        %v3119 = vld [vmem:[#allocation2 + $0x12] sm:$0xff]
        %v3120 = vld [vmem:[#allocation2 + $0x1a] sm:$0xff]
        %v3121 = vld [vmem:[#allocation2 + $0x22] sm:$0xff]
        %v3122 = vld [vmem:[#allocation2 + $0x2a] sm:$0xff]
        %v3123 = vld [vmem:[#allocation2 + $0x32] sm:$0xff]
        %v3124 = vld [vmem:[#allocation2 + $0x3a] sm:$0xff]
        %v3125 = vld [vmem:[#allocation2 + $0x42] sm:$0xff]
        %v3126 = vld [vmem:[#allocation2 + $0x4a] sm:$0xff]
        %v3127 = vld [vmem:[#allocation2 + $0x52] sm:$0xff]
        %v3128 = vld [vmem:[#allocation2 + $0x5a] sm:$0xff]
        %v3129 = vld [vmem:[#allocation2 + $0x62] sm:$0xff]
        %v3130 = vld [vmem:[#allocation2 + $0x6a] sm:$0xff]
        %v3131 = vld [vmem:[#allocation2 + $0x72] sm:$0xff]
        %v3132 = vld [vmem:[#allocation2 + $0x7a] sm:$0xff]
        %v3133 = vld [vmem:[#allocation2 + $0x82] sm:$0xff]
        %v3134 = vld [vmem:[#allocation2 + $0x8a] sm:$0xff]
        %v3135 = vld [vmem:[#allocation2 + $0x92] sm:$0xff]
        %v3136 = vld [vmem:[#allocation2 + $0x9a] sm:$0xff]
        %v3137 = vld [vmem:[#allocation2 + $0xa2] sm:$0xff]
        %v3138 = vld [vmem:[#allocation2 + $0xaa] sm:$0xff]
        %v3139 = vld [vmem:[#allocation2 + $0xb2] sm:$0xff]
        %v3140 = vld [vmem:[#allocation2 + $0xba] sm:$0xff]
        %v3141 = vld [vmem:[#allocation2 + $0xc2] sm:$0xff]
        %v3142 = vld [vmem:[#allocation2 + $0xca] sm:$0xff]
        %v3143 = vld [vmem:[#allocation2 + $0xd2] sm:$0xff]
        %v3144 = vld [vmem:[#allocation2 + $0xda] sm:$0xff]
        %v3145 = vld [vmem:[#allocation2 + $0xe2] sm:$0xff]
        %v3146 = vld [vmem:[#allocation2 + $0xea] sm:$0xff]
        %v3147 = vld [vmem:[#allocation2 + $0xf2] sm:$0xff]
        %v3148 = vld [vmem:[#allocation2 + $0xfa] sm:$0xff]
        %v3149 = vld [vmem:[#allocation2 + $0x102] sm:$0xff]
        %v3150 = vld [vmem:[#allocation2 + $0x10a] sm:$0xff]
        %v3151 = vld [vmem:[#allocation2 + $0x112] sm:$0xff]
        %v3152 = vld [vmem:[#allocation2 + $0x11a] sm:$0xff]
        %3153 = vst [vmem:[#allocation3 + $0x10] sm:$0xff] %v3117
        %3154 = vst [vmem:[#allocation3 + $0x58] sm:$0xff] %v3118
        %3155 = vst [vmem:[#allocation3 + $0xa0] sm:$0xff] %v3119
        %3156 = vst [vmem:[#allocation3 + $0xe8] sm:$0xff] %v3120
        %3157 = vst [vmem:[#allocation3 + $0x130] sm:$0xff] %v3121
        %3158 = vst [vmem:[#allocation3 + $0x178] sm:$0xff] %v3122
        %3159 = vst [vmem:[#allocation3 + $0x1c0] sm:$0xff] %v3123
        %3160 = vst [vmem:[#allocation3 + $0x208] sm:$0xff] %v3124
        %3161 = vst [vmem:[#allocation3 + $0x250] sm:$0xff] %v3125
        %3162 = vst [vmem:[#allocation3 + $0x298] sm:$0xff] %v3126
        %3163 = vst [vmem:[#allocation3 + $0x2e0] sm:$0xff] %v3127
        %3164 = vst [vmem:[#allocation3 + $0x328] sm:$0xff] %v3128
        %3165 = vst [vmem:[#allocation3 + $0x370] sm:$0xff] %v3129
        %3166 = vst [vmem:[#allocation3 + $0x3b8] sm:$0xff] %v3130
        %3167 = vst [vmem:[#allocation3 + $0x400] sm:$0xff] %v3131
        %3168 = vst [vmem:[#allocation3 + $0x448] sm:$0xff] %v3132
        %3169 = vst [vmem:[#allocation3 + $0x490] sm:$0xff] %v3133
        %3170 = vst [vmem:[#allocation3 + $0x4d8] sm:$0xff] %v3134
        %3171 = vst [vmem:[#allocation3 + $0x520] sm:$0xff] %v3135
        %3172 = vst [vmem:[#allocation3 + $0x568] sm:$0xff] %v3136
        %3173 = vst [vmem:[#allocation3 + $0x5b0] sm:$0xff] %v3137
        %3174 = vst [vmem:[#allocation3 + $0x5f8] sm:$0xff] %v3138
        %3175 = vst [vmem:[#allocation3 + $0x640] sm:$0xff] %v3139
        %3176 = vst [vmem:[#allocation3 + $0x688] sm:$0xff] %v3140
        %3177 = vst [vmem:[#allocation3 + $0x6d0] sm:$0xff] %v3141
        %3178 = vst [vmem:[#allocation3 + $0x718] sm:$0xff] %v3142
        %3179 = vst [vmem:[#allocation3 + $0x760] sm:$0xff] %v3143
        %3180 = vst [vmem:[#allocation3 + $0x7a8] sm:$0xff] %v3144
        %3181 = vst [vmem:[#allocation3 + $0x7f0] sm:$0xff] %v3145
        %3182 = vst [vmem:[#allocation3 + $0x838] sm:$0xff] %v3146
        %3183 = vst [vmem:[#allocation3 + $0x880] sm:$0xff] %v3147
        %3184 = vst [vmem:[#allocation3 + $0x8c8] sm:$0xff] %v3148
        %3185 = vst [vmem:[#allocation3 + $0x910] sm:$0xff] %v3149
        %3186 = vst [vmem:[#allocation3 + $0x958] sm:$0xff] %v3150
        %3187 = vst [vmem:[#allocation3 + $0x9a0] sm:$0xff] %v3151
        %3188 = vst [vmem:[#allocation3 + $0x9e8] sm:$0xff] %v3152
        %v3189 = vld [vmem:[#allocation2 + $0x12] sm:$0xff]
        %v3190 = vld [vmem:[#allocation2 + $0x1a] sm:$0xff]
        %v3191 = vld [vmem:[#allocation2 + $0x22] sm:$0xff]
        %v3192 = vld [vmem:[#allocation2 + $0x2a] sm:$0xff]
        %v3193 = vld [vmem:[#allocation2 + $0x32] sm:$0xff]
        %v3194 = vld [vmem:[#allocation2 + $0x3a] sm:$0xff]
        %v3195 = vld [vmem:[#allocation2 + $0x42] sm:$0xff]
        %v3196 = vld [vmem:[#allocation2 + $0x4a] sm:$0xff]
        %v3197 = vld [vmem:[#allocation2 + $0x52] sm:$0xff]
        %v3198 = vld [vmem:[#allocation2 + $0x5a] sm:$0xff]
        %v3199 = vld [vmem:[#allocation2 + $0x62] sm:$0xff]
        %v3200 = vld [vmem:[#allocation2 + $0x6a] sm:$0xff]
        %v3201 = vld [vmem:[#allocation2 + $0x72] sm:$0xff]
        %v3202 = vld [vmem:[#allocation2 + $0x7a] sm:$0xff]
        %v3203 = vld [vmem:[#allocation2 + $0x82] sm:$0xff]
        %v3204 = vld [vmem:[#allocation2 + $0x8a] sm:$0xff]
        %v3205 = vld [vmem:[#allocation2 + $0x92] sm:$0xff]
        %v3206 = vld [vmem:[#allocation2 + $0x9a] sm:$0xff]
        %v3207 = vld [vmem:[#allocation2 + $0xa2] sm:$0xff]
        %v3208 = vld [vmem:[#allocation2 + $0xaa] sm:$0xff]
        %v3209 = vld [vmem:[#allocation2 + $0xb2] sm:$0xff]
        %v3210 = vld [vmem:[#allocation2 + $0xba] sm:$0xff]
        %v3211 = vld [vmem:[#allocation2 + $0xc2] sm:$0xff]
        %v3212 = vld [vmem:[#allocation2 + $0xca] sm:$0xff]
        %v3213 = vld [vmem:[#allocation2 + $0xd2] sm:$0xff]
        %v3214 = vld [vmem:[#allocation2 + $0xda] sm:$0xff]
        %v3215 = vld [vmem:[#allocation2 + $0xe2] sm:$0xff]
        %v3216 = vld [vmem:[#allocation2 + $0xea] sm:$0xff]
        %v3217 = vld [vmem:[#allocation2 + $0xf2] sm:$0xff]
        %v3218 = vld [vmem:[#allocation2 + $0xfa] sm:$0xff]
        %v3219 = vld [vmem:[#allocation2 + $0x102] sm:$0xff]
        %v3220 = vld [vmem:[#allocation2 + $0x10a] sm:$0xff]
        %v3221 = vld [vmem:[#allocation2 + $0x112] sm:$0xff]
        %v3222 = vld [vmem:[#allocation2 + $0x11a] sm:$0xff]
        %v3223 = vld [vmem:[#allocation2 + $0x122] sm:$0xff]
        %v3224 = vld [vmem:[#allocation2 + $0x12a] sm:$0xff]
        %3225 = vst [vmem:[#allocation3 + $0x18] sm:$0xff] %v3189
        %3226 = vst [vmem:[#allocation3 + $0x60] sm:$0xff] %v3190
        %3227 = vst [vmem:[#allocation3 + $0xa8] sm:$0xff] %v3191
        %3228 = vst [vmem:[#allocation3 + $0xf0] sm:$0xff] %v3192
        %3229 = vst [vmem:[#allocation3 + $0x138] sm:$0xff] %v3193
        %3230 = vst [vmem:[#allocation3 + $0x180] sm:$0xff] %v3194
        %3231 = vst [vmem:[#allocation3 + $0x1c8] sm:$0xff] %v3195
        %3232 = vst [vmem:[#allocation3 + $0x210] sm:$0xff] %v3196
        %3233 = vst [vmem:[#allocation3 + $0x258] sm:$0xff] %v3197
        %3234 = vst [vmem:[#allocation3 + $0x2a0] sm:$0xff] %v3198
        %3235 = vst [vmem:[#allocation3 + $0x2e8] sm:$0xff] %v3199
        %3236 = vst [vmem:[#allocation3 + $0x330] sm:$0xff] %v3200
        %3237 = vst [vmem:[#allocation3 + $0x378] sm:$0xff] %v3201
        %3238 = vst [vmem:[#allocation3 + $0x3c0] sm:$0xff] %v3202
        %3239 = vst [vmem:[#allocation3 + $0x408] sm:$0xff] %v3203
        %3240 = vst [vmem:[#allocation3 + $0x450] sm:$0xff] %v3204
        %3241 = vst [vmem:[#allocation3 + $0x498] sm:$0xff] %v3205
        %3242 = vst [vmem:[#allocation3 + $0x4e0] sm:$0xff] %v3206
        %3243 = vst [vmem:[#allocation3 + $0x528] sm:$0xff] %v3207
        %3244 = vst [vmem:[#allocation3 + $0x570] sm:$0xff] %v3208
        %3245 = vst [vmem:[#allocation3 + $0x5b8] sm:$0xff] %v3209
        %3246 = vst [vmem:[#allocation3 + $0x600] sm:$0xff] %v3210
        %3247 = vst [vmem:[#allocation3 + $0x648] sm:$0xff] %v3211
        %3248 = vst [vmem:[#allocation3 + $0x690] sm:$0xff] %v3212
        %3249 = vst [vmem:[#allocation3 + $0x6d8] sm:$0xff] %v3213
        %3250 = vst [vmem:[#allocation3 + $0x720] sm:$0xff] %v3214
        %3251 = vst [vmem:[#allocation3 + $0x768] sm:$0xff] %v3215
        %3252 = vst [vmem:[#allocation3 + $0x7b0] sm:$0xff] %v3216
        %3253 = vst [vmem:[#allocation3 + $0x7f8] sm:$0xff] %v3217
        %3254 = vst [vmem:[#allocation3 + $0x840] sm:$0xff] %v3218
        %3255 = vst [vmem:[#allocation3 + $0x888] sm:$0xff] %v3219
        %3256 = vst [vmem:[#allocation3 + $0x8d0] sm:$0xff] %v3220
        %3257 = vst [vmem:[#allocation3 + $0x918] sm:$0xff] %v3221
        %3258 = vst [vmem:[#allocation3 + $0x960] sm:$0xff] %v3222
        %3259 = vst [vmem:[#allocation3 + $0x9a8] sm:$0xff] %v3223
        %3260 = vst [vmem:[#allocation3 + $0x9f0] sm:$0xff] %v3224
        %v3261 = vld [vmem:[#allocation2 + $0x13] sm:$0xff]
        %v3262 = vld [vmem:[#allocation2 + $0x1b] sm:$0xff]
        %v3263 = vld [vmem:[#allocation2 + $0x23] sm:$0xff]
        %v3264 = vld [vmem:[#allocation2 + $0x2b] sm:$0xff]
        %v3265 = vld [vmem:[#allocation2 + $0x33] sm:$0xff]
        %v3266 = vld [vmem:[#allocation2 + $0x3b] sm:$0xff]
        %v3267 = vld [vmem:[#allocation2 + $0x43] sm:$0xff]
        %v3268 = vld [vmem:[#allocation2 + $0x4b] sm:$0xff]
        %v3269 = vld [vmem:[#allocation2 + $0x53] sm:$0xff]
        %v3270 = vld [vmem:[#allocation2 + $0x5b] sm:$0xff]
        %v3271 = vld [vmem:[#allocation2 + $0x63] sm:$0xff]
        %v3272 = vld [vmem:[#allocation2 + $0x6b] sm:$0xff]
        %v3273 = vld [vmem:[#allocation2 + $0x73] sm:$0xff]
        %v3274 = vld [vmem:[#allocation2 + $0x7b] sm:$0xff]
        %v3275 = vld [vmem:[#allocation2 + $0x83] sm:$0xff]
        %v3276 = vld [vmem:[#allocation2 + $0x8b] sm:$0xff]
        %v3277 = vld [vmem:[#allocation2 + $0x93] sm:$0xff]
        %v3278 = vld [vmem:[#allocation2 + $0x9b] sm:$0xff]
        %v3279 = vld [vmem:[#allocation2 + $0xa3] sm:$0xff]
        %v3280 = vld [vmem:[#allocation2 + $0xab] sm:$0xff]
        %v3281 = vld [vmem:[#allocation2 + $0xb3] sm:$0xff]
        %v3282 = vld [vmem:[#allocation2 + $0xbb] sm:$0xff]
        %v3283 = vld [vmem:[#allocation2 + $0xc3] sm:$0xff]
        %v3284 = vld [vmem:[#allocation2 + $0xcb] sm:$0xff]
        %v3285 = vld [vmem:[#allocation2 + $0xd3] sm:$0xff]
        %v3286 = vld [vmem:[#allocation2 + $0xdb] sm:$0xff]
        %v3287 = vld [vmem:[#allocation2 + $0xe3] sm:$0xff]
        %v3288 = vld [vmem:[#allocation2 + $0xeb] sm:$0xff]
        %v3289 = vld [vmem:[#allocation2 + $0xf3] sm:$0xff]
        %v3290 = vld [vmem:[#allocation2 + $0xfb] sm:$0xff]
        %v3291 = vld [vmem:[#allocation2 + $0x103] sm:$0xff]
        %v3292 = vld [vmem:[#allocation2 + $0x10b] sm:$0xff]
        %v3293 = vld [vmem:[#allocation2 + $0x113] sm:$0xff]
        %v3294 = vld [vmem:[#allocation2 + $0x11b] sm:$0xff]
        %v3295 = vld [vmem:[#allocation2 + $0x123] sm:$0xff]
        %v3296 = vld [vmem:[#allocation2 + $0x12b] sm:$0xff]
        %3297 = vst [vmem:[#allocation3 + $0x20] sm:$0xff] %v3261
        %3298 = vst [vmem:[#allocation3 + $0x68] sm:$0xff] %v3262
        %3299 = vst [vmem:[#allocation3 + $0xb0] sm:$0xff] %v3263
        %3300 = vst [vmem:[#allocation3 + $0xf8] sm:$0xff] %v3264
        %3301 = vst [vmem:[#allocation3 + $0x140] sm:$0xff] %v3265
        %3302 = vst [vmem:[#allocation3 + $0x188] sm:$0xff] %v3266
        %3303 = vst [vmem:[#allocation3 + $0x1d0] sm:$0xff] %v3267
        %3304 = vst [vmem:[#allocation3 + $0x218] sm:$0xff] %v3268
        %3305 = vst [vmem:[#allocation3 + $0x260] sm:$0xff] %v3269
        %3306 = vst [vmem:[#allocation3 + $0x2a8] sm:$0xff] %v3270
        %3307 = vst [vmem:[#allocation3 + $0x2f0] sm:$0xff] %v3271
        %3308 = vst [vmem:[#allocation3 + $0x338] sm:$0xff] %v3272
        %3309 = vst [vmem:[#allocation3 + $0x380] sm:$0xff] %v3273
        %3310 = vst [vmem:[#allocation3 + $0x3c8] sm:$0xff] %v3274
        %3311 = vst [vmem:[#allocation3 + $0x410] sm:$0xff] %v3275
        %3312 = vst [vmem:[#allocation3 + $0x458] sm:$0xff] %v3276
        %3313 = vst [vmem:[#allocation3 + $0x4a0] sm:$0xff] %v3277
        %3314 = vst [vmem:[#allocation3 + $0x4e8] sm:$0xff] %v3278
        %3315 = vst [vmem:[#allocation3 + $0x530] sm:$0xff] %v3279
        %3316 = vst [vmem:[#allocation3 + $0x578] sm:$0xff] %v3280
        %3317 = vst [vmem:[#allocation3 + $0x5c0] sm:$0xff] %v3281
        %3318 = vst [vmem:[#allocation3 + $0x608] sm:$0xff] %v3282
        %3319 = vst [vmem:[#allocation3 + $0x650] sm:$0xff] %v3283
        %3320 = vst [vmem:[#allocation3 + $0x698] sm:$0xff] %v3284
        %3321 = vst [vmem:[#allocation3 + $0x6e0] sm:$0xff] %v3285
        %3322 = vst [vmem:[#allocation3 + $0x728] sm:$0xff] %v3286
        %3323 = vst [vmem:[#allocation3 + $0x770] sm:$0xff] %v3287
        %3324 = vst [vmem:[#allocation3 + $0x7b8] sm:$0xff] %v3288
        %3325 = vst [vmem:[#allocation3 + $0x800] sm:$0xff] %v3289
        %3326 = vst [vmem:[#allocation3 + $0x848] sm:$0xff] %v3290
        %3327 = vst [vmem:[#allocation3 + $0x890] sm:$0xff] %v3291
        %3328 = vst [vmem:[#allocation3 + $0x8d8] sm:$0xff] %v3292
        %3329 = vst [vmem:[#allocation3 + $0x920] sm:$0xff] %v3293
        %3330 = vst [vmem:[#allocation3 + $0x968] sm:$0xff] %v3294
        %3331 = vst [vmem:[#allocation3 + $0x9b0] sm:$0xff] %v3295
        %3332 = vst [vmem:[#allocation3 + $0x9f8] sm:$0xff] %v3296
        %v3333 = vld [vmem:[#allocation2 + $0x14] sm:$0xff]
        %v3334 = vld [vmem:[#allocation2 + $0x1c] sm:$0xff]
        %v3335 = vld [vmem:[#allocation2 + $0x24] sm:$0xff]
        %v3336 = vld [vmem:[#allocation2 + $0x2c] sm:$0xff]
        %v3337 = vld [vmem:[#allocation2 + $0x34] sm:$0xff]
        %v3338 = vld [vmem:[#allocation2 + $0x3c] sm:$0xff]
        %v3339 = vld [vmem:[#allocation2 + $0x44] sm:$0xff]
        %v3340 = vld [vmem:[#allocation2 + $0x4c] sm:$0xff]
        %v3341 = vld [vmem:[#allocation2 + $0x54] sm:$0xff]
        %v3342 = vld [vmem:[#allocation2 + $0x5c] sm:$0xff]
        %v3343 = vld [vmem:[#allocation2 + $0x64] sm:$0xff]
        %v3344 = vld [vmem:[#allocation2 + $0x6c] sm:$0xff]
        %v3345 = vld [vmem:[#allocation2 + $0x74] sm:$0xff]
        %v3346 = vld [vmem:[#allocation2 + $0x7c] sm:$0xff]
        %v3347 = vld [vmem:[#allocation2 + $0x84] sm:$0xff]
        %v3348 = vld [vmem:[#allocation2 + $0x8c] sm:$0xff]
        %v3349 = vld [vmem:[#allocation2 + $0x94] sm:$0xff]
        %v3350 = vld [vmem:[#allocation2 + $0x9c] sm:$0xff]
        %v3351 = vld [vmem:[#allocation2 + $0xa4] sm:$0xff]
        %v3352 = vld [vmem:[#allocation2 + $0xac] sm:$0xff]
        %v3353 = vld [vmem:[#allocation2 + $0xb4] sm:$0xff]
        %v3354 = vld [vmem:[#allocation2 + $0xbc] sm:$0xff]
        %v3355 = vld [vmem:[#allocation2 + $0xc4] sm:$0xff]
        %v3356 = vld [vmem:[#allocation2 + $0xcc] sm:$0xff]
        %v3357 = vld [vmem:[#allocation2 + $0xd4] sm:$0xff]
        %v3358 = vld [vmem:[#allocation2 + $0xdc] sm:$0xff]
        %v3359 = vld [vmem:[#allocation2 + $0xe4] sm:$0xff]
        %v3360 = vld [vmem:[#allocation2 + $0xec] sm:$0xff]
        %v3361 = vld [vmem:[#allocation2 + $0xf4] sm:$0xff]
        %v3362 = vld [vmem:[#allocation2 + $0xfc] sm:$0xff]
        %v3363 = vld [vmem:[#allocation2 + $0x104] sm:$0xff]
        %v3364 = vld [vmem:[#allocation2 + $0x10c] sm:$0xff]
        %v3365 = vld [vmem:[#allocation2 + $0x114] sm:$0xff]
        %v3366 = vld [vmem:[#allocation2 + $0x11c] sm:$0xff]
        %v3367 = vld [vmem:[#allocation2 + $0x124] sm:$0xff]
        %v3368 = vld [vmem:[#allocation2 + $0x12c] sm:$0xff]
        %3369 = vst [vmem:[#allocation3 + $0x28] sm:$0xff] %v3333
        %3370 = vst [vmem:[#allocation3 + $0x70] sm:$0xff] %v3334
        %3371 = vst [vmem:[#allocation3 + $0xb8] sm:$0xff] %v3335
        %3372 = vst [vmem:[#allocation3 + $0x100] sm:$0xff] %v3336
        %3373 = vst [vmem:[#allocation3 + $0x148] sm:$0xff] %v3337
        %3374 = vst [vmem:[#allocation3 + $0x190] sm:$0xff] %v3338
        %3375 = vst [vmem:[#allocation3 + $0x1d8] sm:$0xff] %v3339
        %3376 = vst [vmem:[#allocation3 + $0x220] sm:$0xff] %v3340
        %3377 = vst [vmem:[#allocation3 + $0x268] sm:$0xff] %v3341
        %3378 = vst [vmem:[#allocation3 + $0x2b0] sm:$0xff] %v3342
        %3379 = vst [vmem:[#allocation3 + $0x2f8] sm:$0xff] %v3343
        %3380 = vst [vmem:[#allocation3 + $0x340] sm:$0xff] %v3344
        %3381 = vst [vmem:[#allocation3 + $0x388] sm:$0xff] %v3345
        %3382 = vst [vmem:[#allocation3 + $0x3d0] sm:$0xff] %v3346
        %3383 = vst [vmem:[#allocation3 + $0x418] sm:$0xff] %v3347
        %3384 = vst [vmem:[#allocation3 + $0x460] sm:$0xff] %v3348
        %3385 = vst [vmem:[#allocation3 + $0x4a8] sm:$0xff] %v3349
        %3386 = vst [vmem:[#allocation3 + $0x4f0] sm:$0xff] %v3350
        %3387 = vst [vmem:[#allocation3 + $0x538] sm:$0xff] %v3351
        %3388 = vst [vmem:[#allocation3 + $0x580] sm:$0xff] %v3352
        %3389 = vst [vmem:[#allocation3 + $0x5c8] sm:$0xff] %v3353
        %3390 = vst [vmem:[#allocation3 + $0x610] sm:$0xff] %v3354
        %3391 = vst [vmem:[#allocation3 + $0x658] sm:$0xff] %v3355
        %3392 = vst [vmem:[#allocation3 + $0x6a0] sm:$0xff] %v3356
        %3393 = vst [vmem:[#allocation3 + $0x6e8] sm:$0xff] %v3357
        %3394 = vst [vmem:[#allocation3 + $0x730] sm:$0xff] %v3358
        %3395 = vst [vmem:[#allocation3 + $0x778] sm:$0xff] %v3359
        %3396 = vst [vmem:[#allocation3 + $0x7c0] sm:$0xff] %v3360
        %3397 = vst [vmem:[#allocation3 + $0x808] sm:$0xff] %v3361
        %3398 = vst [vmem:[#allocation3 + $0x850] sm:$0xff] %v3362
        %3399 = vst [vmem:[#allocation3 + $0x898] sm:$0xff] %v3363
        %3400 = vst [vmem:[#allocation3 + $0x8e0] sm:$0xff] %v3364
        %3401 = vst [vmem:[#allocation3 + $0x928] sm:$0xff] %v3365
        %3402 = vst [vmem:[#allocation3 + $0x970] sm:$0xff] %v3366
        %3403 = vst [vmem:[#allocation3 + $0x9b8] sm:$0xff] %v3367
        %3404 = vst [vmem:[#allocation3 + $0xa00] sm:$0xff] %v3368
        %v3405 = vld [vmem:[#allocation2 + $0x24] sm:$0xff]
        %v3406 = vld [vmem:[#allocation2 + $0x2c] sm:$0xff]
        %v3407 = vld [vmem:[#allocation2 + $0x34] sm:$0xff]
        %v3408 = vld [vmem:[#allocation2 + $0x3c] sm:$0xff]
        %v3409 = vld [vmem:[#allocation2 + $0x44] sm:$0xff]
        %v3410 = vld [vmem:[#allocation2 + $0x4c] sm:$0xff]
        %v3411 = vld [vmem:[#allocation2 + $0x54] sm:$0xff]
        %v3412 = vld [vmem:[#allocation2 + $0x5c] sm:$0xff]
        %v3413 = vld [vmem:[#allocation2 + $0x64] sm:$0xff]
        %v3414 = vld [vmem:[#allocation2 + $0x6c] sm:$0xff]
        %v3415 = vld [vmem:[#allocation2 + $0x74] sm:$0xff]
        %v3416 = vld [vmem:[#allocation2 + $0x7c] sm:$0xff]
        %v3417 = vld [vmem:[#allocation2 + $0x84] sm:$0xff]
        %v3418 = vld [vmem:[#allocation2 + $0x8c] sm:$0xff]
        %v3419 = vld [vmem:[#allocation2 + $0x94] sm:$0xff]
        %v3420 = vld [vmem:[#allocation2 + $0x9c] sm:$0xff]
        %v3421 = vld [vmem:[#allocation2 + $0xa4] sm:$0xff]
        %v3422 = vld [vmem:[#allocation2 + $0xac] sm:$0xff]
        %v3423 = vld [vmem:[#allocation2 + $0xb4] sm:$0xff]
        %v3424 = vld [vmem:[#allocation2 + $0xbc] sm:$0xff]
        %v3425 = vld [vmem:[#allocation2 + $0xc4] sm:$0xff]
        %v3426 = vld [vmem:[#allocation2 + $0xcc] sm:$0xff]
        %v3427 = vld [vmem:[#allocation2 + $0xd4] sm:$0xff]
        %v3428 = vld [vmem:[#allocation2 + $0xdc] sm:$0xff]
        %v3429 = vld [vmem:[#allocation2 + $0xe4] sm:$0xff]
        %v3430 = vld [vmem:[#allocation2 + $0xec] sm:$0xff]
        %v3431 = vld [vmem:[#allocation2 + $0xf4] sm:$0xff]
        %v3432 = vld [vmem:[#allocation2 + $0xfc] sm:$0xff]
        %v3433 = vld [vmem:[#allocation2 + $0x104] sm:$0xff]
        %v3434 = vld [vmem:[#allocation2 + $0x10c] sm:$0xff]
        %v3435 = vld [vmem:[#allocation2 + $0x114] sm:$0xff]
        %v3436 = vld [vmem:[#allocation2 + $0x11c] sm:$0xff]
        %v3437 = vld [vmem:[#allocation2 + $0x124] sm:$0xff]
        %v3438 = vld [vmem:[#allocation2 + $0x12c] sm:$0xff]
        %v3439 = vld [vmem:[#allocation2 + $0x134] sm:$0xff]
        %v3440 = vld [vmem:[#allocation2 + $0x13c] sm:$0xff]
        %3441 = vst [vmem:[#allocation3 + $0x30] sm:$0xff] %v3405
        %3442 = vst [vmem:[#allocation3 + $0x78] sm:$0xff] %v3406
        %3443 = vst [vmem:[#allocation3 + $0xc0] sm:$0xff] %v3407
        %3444 = vst [vmem:[#allocation3 + $0x108] sm:$0xff] %v3408
        %3445 = vst [vmem:[#allocation3 + $0x150] sm:$0xff] %v3409
        %3446 = vst [vmem:[#allocation3 + $0x198] sm:$0xff] %v3410
        %3447 = vst [vmem:[#allocation3 + $0x1e0] sm:$0xff] %v3411
        %3448 = vst [vmem:[#allocation3 + $0x228] sm:$0xff] %v3412
        %3449 = vst [vmem:[#allocation3 + $0x270] sm:$0xff] %v3413
        %3450 = vst [vmem:[#allocation3 + $0x2b8] sm:$0xff] %v3414
        %3451 = vst [vmem:[#allocation3 + $0x300] sm:$0xff] %v3415
        %3452 = vst [vmem:[#allocation3 + $0x348] sm:$0xff] %v3416
        %3453 = vst [vmem:[#allocation3 + $0x390] sm:$0xff] %v3417
        %3454 = vst [vmem:[#allocation3 + $0x3d8] sm:$0xff] %v3418
        %3455 = vst [vmem:[#allocation3 + $0x420] sm:$0xff] %v3419
        %3456 = vst [vmem:[#allocation3 + $0x468] sm:$0xff] %v3420
        %3457 = vst [vmem:[#allocation3 + $0x4b0] sm:$0xff] %v3421
        %3458 = vst [vmem:[#allocation3 + $0x4f8] sm:$0xff] %v3422
        %3459 = vst [vmem:[#allocation3 + $0x540] sm:$0xff] %v3423
        %3460 = vst [vmem:[#allocation3 + $0x588] sm:$0xff] %v3424
        %3461 = vst [vmem:[#allocation3 + $0x5d0] sm:$0xff] %v3425
        %3462 = vst [vmem:[#allocation3 + $0x618] sm:$0xff] %v3426
        %3463 = vst [vmem:[#allocation3 + $0x660] sm:$0xff] %v3427
        %3464 = vst [vmem:[#allocation3 + $0x6a8] sm:$0xff] %v3428
        %3465 = vst [vmem:[#allocation3 + $0x6f0] sm:$0xff] %v3429
        %3466 = vst [vmem:[#allocation3 + $0x738] sm:$0xff] %v3430
        %3467 = vst [vmem:[#allocation3 + $0x780] sm:$0xff] %v3431
        %3468 = vst [vmem:[#allocation3 + $0x7c8] sm:$0xff] %v3432
        %3469 = vst [vmem:[#allocation3 + $0x810] sm:$0xff] %v3433
        %3470 = vst [vmem:[#allocation3 + $0x858] sm:$0xff] %v3434
        %3471 = vst [vmem:[#allocation3 + $0x8a0] sm:$0xff] %v3435
        %3472 = vst [vmem:[#allocation3 + $0x8e8] sm:$0xff] %v3436
        %3473 = vst [vmem:[#allocation3 + $0x930] sm:$0xff] %v3437
        %3474 = vst [vmem:[#allocation3 + $0x978] sm:$0xff] %v3438
        %3475 = vst [vmem:[#allocation3 + $0x9c0] sm:$0xff] %v3439
        %3476 = vst [vmem:[#allocation3 + $0xa08] sm:$0xff] %v3440
        %v3477 = vld [vmem:[#allocation2 + $0x25] sm:$0xff]
        %v3478 = vld [vmem:[#allocation2 + $0x2d] sm:$0xff]
        %v3479 = vld [vmem:[#allocation2 + $0x35] sm:$0xff]
        %v3480 = vld [vmem:[#allocation2 + $0x3d] sm:$0xff]
        %v3481 = vld [vmem:[#allocation2 + $0x45] sm:$0xff]
        %v3482 = vld [vmem:[#allocation2 + $0x4d] sm:$0xff]
        %v3483 = vld [vmem:[#allocation2 + $0x55] sm:$0xff]
        %v3484 = vld [vmem:[#allocation2 + $0x5d] sm:$0xff]
        %v3485 = vld [vmem:[#allocation2 + $0x65] sm:$0xff]
        %v3486 = vld [vmem:[#allocation2 + $0x6d] sm:$0xff]
        %v3487 = vld [vmem:[#allocation2 + $0x75] sm:$0xff]
        %v3488 = vld [vmem:[#allocation2 + $0x7d] sm:$0xff]
        %v3489 = vld [vmem:[#allocation2 + $0x85] sm:$0xff]
        %v3490 = vld [vmem:[#allocation2 + $0x8d] sm:$0xff]
        %v3491 = vld [vmem:[#allocation2 + $0x95] sm:$0xff]
        %v3492 = vld [vmem:[#allocation2 + $0x9d] sm:$0xff]
        %v3493 = vld [vmem:[#allocation2 + $0xa5] sm:$0xff]
        %v3494 = vld [vmem:[#allocation2 + $0xad] sm:$0xff]
        %v3495 = vld [vmem:[#allocation2 + $0xb5] sm:$0xff]
        %v3496 = vld [vmem:[#allocation2 + $0xbd] sm:$0xff]
        %v3497 = vld [vmem:[#allocation2 + $0xc5] sm:$0xff]
        %v3498 = vld [vmem:[#allocation2 + $0xcd] sm:$0xff]
        %v3499 = vld [vmem:[#allocation2 + $0xd5] sm:$0xff]
        %v3500 = vld [vmem:[#allocation2 + $0xdd] sm:$0xff]
        %v3501 = vld [vmem:[#allocation2 + $0xe5] sm:$0xff]
        %v3502 = vld [vmem:[#allocation2 + $0xed] sm:$0xff]
        %v3503 = vld [vmem:[#allocation2 + $0xf5] sm:$0xff]
        %v3504 = vld [vmem:[#allocation2 + $0xfd] sm:$0xff]
        %v3505 = vld [vmem:[#allocation2 + $0x105] sm:$0xff]
        %v3506 = vld [vmem:[#allocation2 + $0x10d] sm:$0xff]
        %v3507 = vld [vmem:[#allocation2 + $0x115] sm:$0xff]
        %v3508 = vld [vmem:[#allocation2 + $0x11d] sm:$0xff]
        %v3509 = vld [vmem:[#allocation2 + $0x125] sm:$0xff]
        %v3510 = vld [vmem:[#allocation2 + $0x12d] sm:$0xff]
        %v3511 = vld [vmem:[#allocation2 + $0x135] sm:$0xff]
        %v3512 = vld [vmem:[#allocation2 + $0x13d] sm:$0xff]
        %3513 = vst [vmem:[#allocation3 + $0x38] sm:$0xff] %v3477
        %3514 = vst [vmem:[#allocation3 + $0x80] sm:$0xff] %v3478
        %3515 = vst [vmem:[#allocation3 + $0xc8] sm:$0xff] %v3479
        %3516 = vst [vmem:[#allocation3 + $0x110] sm:$0xff] %v3480
        %3517 = vst [vmem:[#allocation3 + $0x158] sm:$0xff] %v3481
        %3518 = vst [vmem:[#allocation3 + $0x1a0] sm:$0xff] %v3482
        %3519 = vst [vmem:[#allocation3 + $0x1e8] sm:$0xff] %v3483
        %3520 = vst [vmem:[#allocation3 + $0x230] sm:$0xff] %v3484
        %3521 = vst [vmem:[#allocation3 + $0x278] sm:$0xff] %v3485
        %3522 = vst [vmem:[#allocation3 + $0x2c0] sm:$0xff] %v3486
        %3523 = vst [vmem:[#allocation3 + $0x308] sm:$0xff] %v3487
        %3524 = vst [vmem:[#allocation3 + $0x350] sm:$0xff] %v3488
        %3525 = vst [vmem:[#allocation3 + $0x398] sm:$0xff] %v3489
        %3526 = vst [vmem:[#allocation3 + $0x3e0] sm:$0xff] %v3490
        %3527 = vst [vmem:[#allocation3 + $0x428] sm:$0xff] %v3491
        %3528 = vst [vmem:[#allocation3 + $0x470] sm:$0xff] %v3492
        %3529 = vst [vmem:[#allocation3 + $0x4b8] sm:$0xff] %v3493
        %3530 = vst [vmem:[#allocation3 + $0x500] sm:$0xff] %v3494
        %3531 = vst [vmem:[#allocation3 + $0x548] sm:$0xff] %v3495
        %3532 = vst [vmem:[#allocation3 + $0x590] sm:$0xff] %v3496
        %3533 = vst [vmem:[#allocation3 + $0x5d8] sm:$0xff] %v3497
        %3534 = vst [vmem:[#allocation3 + $0x620] sm:$0xff] %v3498
        %3535 = vst [vmem:[#allocation3 + $0x668] sm:$0xff] %v3499
        %3536 = vst [vmem:[#allocation3 + $0x6b0] sm:$0xff] %v3500
        %3537 = vst [vmem:[#allocation3 + $0x6f8] sm:$0xff] %v3501
        %3538 = vst [vmem:[#allocation3 + $0x740] sm:$0xff] %v3502
        %3539 = vst [vmem:[#allocation3 + $0x788] sm:$0xff] %v3503
        %3540 = vst [vmem:[#allocation3 + $0x7d0] sm:$0xff] %v3504
        %3541 = vst [vmem:[#allocation3 + $0x818] sm:$0xff] %v3505
        %3542 = vst [vmem:[#allocation3 + $0x860] sm:$0xff] %v3506
        %3543 = vst [vmem:[#allocation3 + $0x8a8] sm:$0xff] %v3507
        %3544 = vst [vmem:[#allocation3 + $0x8f0] sm:$0xff] %v3508
        %3545 = vst [vmem:[#allocation3 + $0x938] sm:$0xff] %v3509
        %3546 = vst [vmem:[#allocation3 + $0x980] sm:$0xff] %v3510
        %3547 = vst [vmem:[#allocation3 + $0x9c8] sm:$0xff] %v3511
        %3548 = vst [vmem:[#allocation3 + $0xa10] sm:$0xff] %v3512
        %v3549 = vld [vmem:[#allocation2 + $0x26] sm:$0xff]
        %v3550 = vld [vmem:[#allocation2 + $0x2e] sm:$0xff]
        %v3551 = vld [vmem:[#allocation2 + $0x36] sm:$0xff]
        %v3552 = vld [vmem:[#allocation2 + $0x3e] sm:$0xff]
        %v3553 = vld [vmem:[#allocation2 + $0x46] sm:$0xff]
        %v3554 = vld [vmem:[#allocation2 + $0x4e] sm:$0xff]
        %v3555 = vld [vmem:[#allocation2 + $0x56] sm:$0xff]
        %v3556 = vld [vmem:[#allocation2 + $0x5e] sm:$0xff]
        %v3557 = vld [vmem:[#allocation2 + $0x66] sm:$0xff]
        %v3558 = vld [vmem:[#allocation2 + $0x6e] sm:$0xff]
        %v3559 = vld [vmem:[#allocation2 + $0x76] sm:$0xff]
        %v3560 = vld [vmem:[#allocation2 + $0x7e] sm:$0xff]
        %v3561 = vld [vmem:[#allocation2 + $0x86] sm:$0xff]
        %v3562 = vld [vmem:[#allocation2 + $0x8e] sm:$0xff]
        %v3563 = vld [vmem:[#allocation2 + $0x96] sm:$0xff]
        %v3564 = vld [vmem:[#allocation2 + $0x9e] sm:$0xff]
        %v3565 = vld [vmem:[#allocation2 + $0xa6] sm:$0xff]
        %v3566 = vld [vmem:[#allocation2 + $0xae] sm:$0xff]
        %v3567 = vld [vmem:[#allocation2 + $0xb6] sm:$0xff]
        %v3568 = vld [vmem:[#allocation2 + $0xbe] sm:$0xff]
        %v3569 = vld [vmem:[#allocation2 + $0xc6] sm:$0xff]
        %v3570 = vld [vmem:[#allocation2 + $0xce] sm:$0xff]
        %v3571 = vld [vmem:[#allocation2 + $0xd6] sm:$0xff]
        %v3572 = vld [vmem:[#allocation2 + $0xde] sm:$0xff]
        %v3573 = vld [vmem:[#allocation2 + $0xe6] sm:$0xff]
        %v3574 = vld [vmem:[#allocation2 + $0xee] sm:$0xff]
        %v3575 = vld [vmem:[#allocation2 + $0xf6] sm:$0xff]
        %v3576 = vld [vmem:[#allocation2 + $0xfe] sm:$0xff]
        %v3577 = vld [vmem:[#allocation2 + $0x106] sm:$0xff]
        %v3578 = vld [vmem:[#allocation2 + $0x10e] sm:$0xff]
        %v3579 = vld [vmem:[#allocation2 + $0x116] sm:$0xff]
        %v3580 = vld [vmem:[#allocation2 + $0x11e] sm:$0xff]
        %v3581 = vld [vmem:[#allocation2 + $0x126] sm:$0xff]
        %v3582 = vld [vmem:[#allocation2 + $0x12e] sm:$0xff]
        %v3583 = vld [vmem:[#allocation2 + $0x136] sm:$0xff]
        %v3584 = vld [vmem:[#allocation2 + $0x13e] sm:$0xff]
        %3585 = vst [vmem:[#allocation3 + $0x40] sm:$0xff] %v3549
        %3586 = vst [vmem:[#allocation3 + $0x88] sm:$0xff] %v3550
        %3587 = vst [vmem:[#allocation3 + $0xd0] sm:$0xff] %v3551
        %3588 = vst [vmem:[#allocation3 + $0x118] sm:$0xff] %v3552
        %3589 = vst [vmem:[#allocation3 + $0x160] sm:$0xff] %v3553
        %3590 = vst [vmem:[#allocation3 + $0x1a8] sm:$0xff] %v3554
        %3591 = vst [vmem:[#allocation3 + $0x1f0] sm:$0xff] %v3555
        %3592 = vst [vmem:[#allocation3 + $0x238] sm:$0xff] %v3556
        %3593 = vst [vmem:[#allocation3 + $0x280] sm:$0xff] %v3557
        %3594 = vst [vmem:[#allocation3 + $0x2c8] sm:$0xff] %v3558
        %3595 = vst [vmem:[#allocation3 + $0x310] sm:$0xff] %v3559
        %3596 = vst [vmem:[#allocation3 + $0x358] sm:$0xff] %v3560
        %3597 = vst [vmem:[#allocation3 + $0x3a0] sm:$0xff] %v3561
        %3598 = vst [vmem:[#allocation3 + $0x3e8] sm:$0xff] %v3562
        %3599 = vst [vmem:[#allocation3 + $0x430] sm:$0xff] %v3563
        %3600 = vst [vmem:[#allocation3 + $0x478] sm:$0xff] %v3564
        %3601 = vst [vmem:[#allocation3 + $0x4c0] sm:$0xff] %v3565
        %3602 = vst [vmem:[#allocation3 + $0x508] sm:$0xff] %v3566
        %3603 = vst [vmem:[#allocation3 + $0x550] sm:$0xff] %v3567
        %3604 = vst [vmem:[#allocation3 + $0x598] sm:$0xff] %v3568
        %3605 = vst [vmem:[#allocation3 + $0x5e0] sm:$0xff] %v3569
        %3606 = vst [vmem:[#allocation3 + $0x628] sm:$0xff] %v3570
        %3607 = vst [vmem:[#allocation3 + $0x670] sm:$0xff] %v3571
        %3608 = vst [vmem:[#allocation3 + $0x6b8] sm:$0xff] %v3572
        %3609 = vst [vmem:[#allocation3 + $0x700] sm:$0xff] %v3573
        %3610 = vst [vmem:[#allocation3 + $0x748] sm:$0xff] %v3574
        %3611 = vst [vmem:[#allocation3 + $0x790] sm:$0xff] %v3575
        %3612 = vst [vmem:[#allocation3 + $0x7d8] sm:$0xff] %v3576
        %3613 = vst [vmem:[#allocation3 + $0x820] sm:$0xff] %v3577
        %3614 = vst [vmem:[#allocation3 + $0x868] sm:$0xff] %v3578
        %3615 = vst [vmem:[#allocation3 + $0x8b0] sm:$0xff] %v3579
        %3616 = vst [vmem:[#allocation3 + $0x8f8] sm:$0xff] %v3580
        %3617 = vst [vmem:[#allocation3 + $0x940] sm:$0xff] %v3581
        %3618 = vst [vmem:[#allocation3 + $0x988] sm:$0xff] %v3582
        %3619 = vst [vmem:[#allocation3 + $0x9d0] sm:$0xff] %v3583
        %3620 = vst [vmem:[#allocation3 + $0xa18] sm:$0xff] %v3584
        %v3621 = vld [vmem:[#allocation3] sm:$0xff]
        %v3622 = vld [vmem:[#allocation3 + $0x8] sm:$0xff]
        %v3623 = vld [vmem:[#allocation3 + $0x10] sm:$0xff]
        %v3624 = vld [vmem:[#allocation3 + $0x18] sm:$0xff]
        %v3625 = vld [vmem:[#allocation3 + $0x20] sm:$0xff]
        %v3626 = vld [vmem:[#allocation3 + $0x28] sm:$0xff]
        %v3627 = vld [vmem:[#allocation3 + $0x30] sm:$0xff]
        %v3628 = vld [vmem:[#allocation3 + $0x38] sm:$0xff]
        %v3629 = vld [vmem:[#allocation3 + $0x40] sm:$0xff]
        %v3630 = vld [vmem:[#allocation3 + $0x48] sm:$0xff]
        %v3631 = vld [vmem:[#allocation3 + $0x50] sm:$0xff]
        %v3632 = vld [vmem:[#allocation3 + $0x58] sm:$0xff]
        %v3633 = vld [vmem:[#allocation3 + $0x60] sm:$0xff]
        %v3634 = vld [vmem:[#allocation3 + $0x68] sm:$0xff]
        %v3635 = vld [vmem:[#allocation3 + $0x70] sm:$0xff]
        %v3636 = vld [vmem:[#allocation3 + $0x78] sm:$0xff]
        %v3637 = vld [vmem:[#allocation3 + $0x80] sm:$0xff]
        %v3638 = vld [vmem:[#allocation3 + $0x88] sm:$0xff]
        %v3639 = vld [vmem:[#allocation3 + $0x90] sm:$0xff]
        %v3640 = vld [vmem:[#allocation3 + $0x98] sm:$0xff]
        %v3641 = vld [vmem:[#allocation3 + $0xa0] sm:$0xff]
        %v3642 = vld [vmem:[#allocation3 + $0xa8] sm:$0xff]
        %v3643 = vld [vmem:[#allocation3 + $0xb0] sm:$0xff]
        %v3644 = vld [vmem:[#allocation3 + $0xb8] sm:$0xff]
        %v3645 = vld [vmem:[#allocation3 + $0xc0] sm:$0xff]
        %v3646 = vld [vmem:[#allocation3 + $0xc8] sm:$0xff]
        %v3647 = vld [vmem:[#allocation3 + $0xd0] sm:$0xff]
        %v3648 = vld [vmem:[#allocation3 + $0xd8] sm:$0xff]
        %v3649 = vld [vmem:[#allocation3 + $0xe0] sm:$0xff]
        %v3650 = vld [vmem:[#allocation3 + $0xe8] sm:$0xff]
        %v3651 = vld [vmem:[#allocation3 + $0xf0] sm:$0xff]
        %v3652 = vld [vmem:[#allocation3 + $0xf8] sm:$0xff]
        %v3653 = vld [vmem:[#allocation3 + $0x100] sm:$0xff]
        %v3654 = vld [vmem:[#allocation3 + $0x108] sm:$0xff]
        %v3655 = vld [vmem:[#allocation3 + $0x110] sm:$0xff]
        %v3656 = vld [vmem:[#allocation3 + $0x118] sm:$0xff]
        %v3657 = vld [vmem:[#allocation3 + $0x120] sm:$0xff]
        %v3658 = vld [vmem:[#allocation3 + $0x128] sm:$0xff]
        %v3659 = vld [vmem:[#allocation3 + $0x130] sm:$0xff]
        %v3660 = vld [vmem:[#allocation3 + $0x138] sm:$0xff]
        %v3661 = vld [vmem:[#allocation3 + $0x140] sm:$0xff]
        %v3662 = vld [vmem:[#allocation3 + $0x148] sm:$0xff]
        %v3663 = vld [vmem:[#allocation3 + $0x150] sm:$0xff]
        %v3664 = vld [vmem:[#allocation3 + $0x158] sm:$0xff]
        %v3665 = vld [vmem:[#allocation3 + $0x160] sm:$0xff]
        %v3666 = vld [vmem:[#allocation3 + $0x168] sm:$0xff]
        %v3667 = vld [vmem:[#allocation3 + $0x170] sm:$0xff]
        %v3668 = vld [vmem:[#allocation3 + $0x178] sm:$0xff]
        %v3669 = vld [vmem:[#allocation3 + $0x180] sm:$0xff]
        %v3670 = vld [vmem:[#allocation3 + $0x188] sm:$0xff]
        %v3671 = vld [vmem:[#allocation3 + $0x190] sm:$0xff]
        %v3672 = vld [vmem:[#allocation3 + $0x198] sm:$0xff]
        %v3673 = vld [vmem:[#allocation3 + $0x1a0] sm:$0xff]
        %v3674 = vld [vmem:[#allocation3 + $0x1a8] sm:$0xff]
        %v3675 = vld [vmem:[#allocation3 + $0x1b0] sm:$0xff]
        %v3676 = vld [vmem:[#allocation3 + $0x1b8] sm:$0xff]
        %v3677 = vld [vmem:[#allocation3 + $0x1c0] sm:$0xff]
        %v3678 = vld [vmem:[#allocation3 + $0x1c8] sm:$0xff]
        %v3679 = vld [vmem:[#allocation3 + $0x1d0] sm:$0xff]
        %v3680 = vld [vmem:[#allocation3 + $0x1d8] sm:$0xff]
        %v3681 = vld [vmem:[#allocation3 + $0x1e0] sm:$0xff]
        %v3682 = vld [vmem:[#allocation3 + $0x1e8] sm:$0xff]
        %v3683 = vld [vmem:[#allocation3 + $0x1f0] sm:$0xff]
        %v3684 = vld [vmem:[#allocation3 + $0x1f8] sm:$0xff]
        %v3685 = vld [vmem:[#allocation3 + $0x200] sm:$0xff]
        %v3686 = vld [vmem:[#allocation3 + $0x208] sm:$0xff]
        %v3687 = vld [vmem:[#allocation3 + $0x210] sm:$0xff]
        %v3688 = vld [vmem:[#allocation3 + $0x218] sm:$0xff]
        %v3689 = vld [vmem:[#allocation3 + $0x220] sm:$0xff]
        %v3690 = vld [vmem:[#allocation3 + $0x228] sm:$0xff]
        %v3691 = vld [vmem:[#allocation3 + $0x230] sm:$0xff]
        %v3692 = vld [vmem:[#allocation3 + $0x238] sm:$0xff]
        %v3693 = vld [vmem:[#allocation3 + $0x240] sm:$0xff]
        %v3694 = vld [vmem:[#allocation3 + $0x248] sm:$0xff]
        %v3695 = vld [vmem:[#allocation3 + $0x250] sm:$0xff]
        %v3696 = vld [vmem:[#allocation3 + $0x258] sm:$0xff]
        %v3697 = vld [vmem:[#allocation3 + $0x260] sm:$0xff]
        %v3698 = vld [vmem:[#allocation3 + $0x268] sm:$0xff]
        %v3699 = vld [vmem:[#allocation3 + $0x270] sm:$0xff]
        %v3700 = vld [vmem:[#allocation3 + $0x278] sm:$0xff]
        %v3701 = vld [vmem:[#allocation3 + $0x280] sm:$0xff]
        %v3702 = vld [vmem:[#allocation3 + $0x288] sm:$0xff]
        %v3703 = vld [vmem:[#allocation3 + $0x290] sm:$0xff]
        %v3704 = vld [vmem:[#allocation3 + $0x298] sm:$0xff]
        %v3705 = vld [vmem:[#allocation3 + $0x2a0] sm:$0xff]
        %v3706 = vld [vmem:[#allocation3 + $0x2a8] sm:$0xff]
        %v3707 = vld [vmem:[#allocation3 + $0x2b0] sm:$0xff]
        %v3708 = vld [vmem:[#allocation3 + $0x2b8] sm:$0xff]
        %v3709 = vld [vmem:[#allocation3 + $0x2c0] sm:$0xff]
        %v3710 = vld [vmem:[#allocation3 + $0x2c8] sm:$0xff]
        %v3711 = vld [vmem:[#allocation3 + $0x2d0] sm:$0xff]
        %v3712 = vld [vmem:[#allocation3 + $0x2d8] sm:$0xff]
        %v3713 = vld [vmem:[#allocation3 + $0x2e0] sm:$0xff]
        %v3714 = vld [vmem:[#allocation3 + $0x2e8] sm:$0xff]
        %v3715 = vld [vmem:[#allocation3 + $0x2f0] sm:$0xff]
        %v3716 = vld [vmem:[#allocation3 + $0x2f8] sm:$0xff]
        %v3717 = vld [vmem:[#allocation3 + $0x300] sm:$0xff]
        %v3718 = vld [vmem:[#allocation3 + $0x308] sm:$0xff]
        %v3719 = vld [vmem:[#allocation3 + $0x310] sm:$0xff]
        %v3720 = vld [vmem:[#allocation3 + $0x318] sm:$0xff]
        %v3721 = vld [vmem:[#allocation3 + $0x320] sm:$0xff]
        %v3722 = vld [vmem:[#allocation3 + $0x328] sm:$0xff]
        %v3723 = vld [vmem:[#allocation3 + $0x330] sm:$0xff]
        %v3724 = vld [vmem:[#allocation3 + $0x338] sm:$0xff]
        %v3725 = vld [vmem:[#allocation3 + $0x340] sm:$0xff]
        %v3726 = vld [vmem:[#allocation3 + $0x348] sm:$0xff]
        %v3727 = vld [vmem:[#allocation3 + $0x350] sm:$0xff]
        %v3728 = vld [vmem:[#allocation3 + $0x358] sm:$0xff]
        %v3729 = vld [vmem:[#allocation3 + $0x360] sm:$0xff]
        %v3730 = vld [vmem:[#allocation3 + $0x368] sm:$0xff]
        %v3731 = vld [vmem:[#allocation3 + $0x370] sm:$0xff]
        %v3732 = vld [vmem:[#allocation3 + $0x378] sm:$0xff]
        %v3733 = vld [vmem:[#allocation3 + $0x380] sm:$0xff]
        %v3734 = vld [vmem:[#allocation3 + $0x388] sm:$0xff]
        %v3735 = vld [vmem:[#allocation3 + $0x390] sm:$0xff]
        %v3736 = vld [vmem:[#allocation3 + $0x398] sm:$0xff]
        %v3737 = vld [vmem:[#allocation3 + $0x3a0] sm:$0xff]
        %v3738 = vld [vmem:[#allocation3 + $0x3a8] sm:$0xff]
        %v3739 = vld [vmem:[#allocation3 + $0x3b0] sm:$0xff]
        %v3740 = vld [vmem:[#allocation3 + $0x3b8] sm:$0xff]
        %v3741 = vld [vmem:[#allocation3 + $0x3c0] sm:$0xff]
        %v3742 = vld [vmem:[#allocation3 + $0x3c8] sm:$0xff]
        %v3743 = vld [vmem:[#allocation3 + $0x3d0] sm:$0xff]
        %v3744 = vld [vmem:[#allocation3 + $0x3d8] sm:$0xff]
        %v3745 = vld [vmem:[#allocation3 + $0x3e0] sm:$0xff]
        %v3746 = vld [vmem:[#allocation3 + $0x3e8] sm:$0xff]
        %v3747 = vld [vmem:[#allocation3 + $0x3f0] sm:$0xff]
        %v3748 = vld [vmem:[#allocation3 + $0x3f8] sm:$0xff]
        %v3749 = vld [vmem:[#allocation3 + $0x400] sm:$0xff]
        %v3750 = vld [vmem:[#allocation3 + $0x408] sm:$0xff]
        %v3751 = vld [vmem:[#allocation3 + $0x410] sm:$0xff]
        %v3752 = vld [vmem:[#allocation3 + $0x418] sm:$0xff]
        %v3753 = vld [vmem:[#allocation3 + $0x420] sm:$0xff]
        %v3754 = vld [vmem:[#allocation3 + $0x428] sm:$0xff]
        %v3755 = vld [vmem:[#allocation3 + $0x430] sm:$0xff]
        %v3756 = vld [vmem:[#allocation3 + $0x438] sm:$0xff]
        %v3757 = vld [vmem:[#allocation3 + $0x440] sm:$0xff]
        %v3758 = vld [vmem:[#allocation3 + $0x448] sm:$0xff]
        %v3759 = vld [vmem:[#allocation3 + $0x450] sm:$0xff]
        %v3760 = vld [vmem:[#allocation3 + $0x458] sm:$0xff]
        %v3761 = vld [vmem:[#allocation3 + $0x460] sm:$0xff]
        %v3762 = vld [vmem:[#allocation3 + $0x468] sm:$0xff]
        %v3763 = vld [vmem:[#allocation3 + $0x470] sm:$0xff]
        %v3764 = vld [vmem:[#allocation3 + $0x478] sm:$0xff]
        %v3765 = vld [vmem:[#allocation3 + $0x480] sm:$0xff]
        %v3766 = vld [vmem:[#allocation3 + $0x488] sm:$0xff]
        %v3767 = vld [vmem:[#allocation3 + $0x490] sm:$0xff]
        %v3768 = vld [vmem:[#allocation3 + $0x498] sm:$0xff]
        %v3769 = vld [vmem:[#allocation3 + $0x4a0] sm:$0xff]
        %v3770 = vld [vmem:[#allocation3 + $0x4a8] sm:$0xff]
        %v3771 = vld [vmem:[#allocation3 + $0x4b0] sm:$0xff]
        %v3772 = vld [vmem:[#allocation3 + $0x4b8] sm:$0xff]
        %v3773 = vld [vmem:[#allocation3 + $0x4c0] sm:$0xff]
        %v3774 = vld [vmem:[#allocation3 + $0x4c8] sm:$0xff]
        %v3775 = vld [vmem:[#allocation3 + $0x4d0] sm:$0xff]
        %v3776 = vld [vmem:[#allocation3 + $0x4d8] sm:$0xff]
        %v3777 = vld [vmem:[#allocation3 + $0x4e0] sm:$0xff]
        %v3778 = vld [vmem:[#allocation3 + $0x4e8] sm:$0xff]
        %v3779 = vld [vmem:[#allocation3 + $0x4f0] sm:$0xff]
        %v3780 = vld [vmem:[#allocation3 + $0x4f8] sm:$0xff]
        %v3781 = vld [vmem:[#allocation3 + $0x500] sm:$0xff]
        %v3782 = vld [vmem:[#allocation3 + $0x508] sm:$0xff]
        %v3783 = vld [vmem:[#allocation3 + $0x510] sm:$0xff]
        %v3784 = vld [vmem:[#allocation3 + $0x518] sm:$0xff]
        %v3785 = vld [vmem:[#allocation3 + $0x520] sm:$0xff]
        %v3786 = vld [vmem:[#allocation3 + $0x528] sm:$0xff]
        %v3787 = vld [vmem:[#allocation3 + $0x530] sm:$0xff]
        %v3788 = vld [vmem:[#allocation3 + $0x538] sm:$0xff]
        %v3789 = vld [vmem:[#allocation3 + $0x540] sm:$0xff]
        %v3790 = vld [vmem:[#allocation3 + $0x548] sm:$0xff]
        %v3791 = vld [vmem:[#allocation3 + $0x550] sm:$0xff]
        %v3792 = vld [vmem:[#allocation3 + $0x558] sm:$0xff]
        %v3793 = vld [vmem:[#allocation3 + $0x560] sm:$0xff]
        %v3794 = vld [vmem:[#allocation3 + $0x568] sm:$0xff]
        %v3795 = vld [vmem:[#allocation3 + $0x570] sm:$0xff]
        %v3796 = vld [vmem:[#allocation3 + $0x578] sm:$0xff]
        %v3797 = vld [vmem:[#allocation3 + $0x580] sm:$0xff]
        %v3798 = vld [vmem:[#allocation3 + $0x588] sm:$0xff]
        %v3799 = vld [vmem:[#allocation3 + $0x590] sm:$0xff]
        %v3800 = vld [vmem:[#allocation3 + $0x598] sm:$0xff]
        %v3801 = vld [vmem:[#allocation3 + $0x5a0] sm:$0xff]
        %v3802 = vld [vmem:[#allocation3 + $0x5a8] sm:$0xff]
        %v3803 = vld [vmem:[#allocation3 + $0x5b0] sm:$0xff]
        %v3804 = vld [vmem:[#allocation3 + $0x5b8] sm:$0xff]
        %v3805 = vld [vmem:[#allocation3 + $0x5c0] sm:$0xff]
        %v3806 = vld [vmem:[#allocation3 + $0x5c8] sm:$0xff]
        %v3807 = vld [vmem:[#allocation3 + $0x5d0] sm:$0xff]
        %v3808 = vld [vmem:[#allocation3 + $0x5d8] sm:$0xff]
        %v3809 = vld [vmem:[#allocation3 + $0x5e0] sm:$0xff]
        %v3810 = vld [vmem:[#allocation3 + $0x5e8] sm:$0xff]
        %v3811 = vld [vmem:[#allocation3 + $0x5f0] sm:$0xff]
        %v3812 = vld [vmem:[#allocation3 + $0x5f8] sm:$0xff]
        %v3813 = vld [vmem:[#allocation3 + $0x600] sm:$0xff]
        %v3814 = vld [vmem:[#allocation3 + $0x608] sm:$0xff]
        %v3815 = vld [vmem:[#allocation3 + $0x610] sm:$0xff]
        %v3816 = vld [vmem:[#allocation3 + $0x618] sm:$0xff]
        %v3817 = vld [vmem:[#allocation3 + $0x620] sm:$0xff]
        %v3818 = vld [vmem:[#allocation3 + $0x628] sm:$0xff]
        %v3819 = vld [vmem:[#allocation3 + $0x630] sm:$0xff]
        %v3820 = vld [vmem:[#allocation3 + $0x638] sm:$0xff]
        %v3821 = vld [vmem:[#allocation3 + $0x640] sm:$0xff]
        %v3822 = vld [vmem:[#allocation3 + $0x648] sm:$0xff]
        %v3823 = vld [vmem:[#allocation3 + $0x650] sm:$0xff]
        %v3824 = vld [vmem:[#allocation3 + $0x658] sm:$0xff]
        %v3825 = vld [vmem:[#allocation3 + $0x660] sm:$0xff]
        %v3826 = vld [vmem:[#allocation3 + $0x668] sm:$0xff]
        %v3827 = vld [vmem:[#allocation3 + $0x670] sm:$0xff]
        %v3828 = vld [vmem:[#allocation3 + $0x678] sm:$0xff]
        %v3829 = vld [vmem:[#allocation3 + $0x680] sm:$0xff]
        %v3830 = vld [vmem:[#allocation3 + $0x688] sm:$0xff]
        %v3831 = vld [vmem:[#allocation3 + $0x690] sm:$0xff]
        %v3832 = vld [vmem:[#allocation3 + $0x698] sm:$0xff]
        %v3833 = vld [vmem:[#allocation3 + $0x6a0] sm:$0xff]
        %v3834 = vld [vmem:[#allocation3 + $0x6a8] sm:$0xff]
        %v3835 = vld [vmem:[#allocation3 + $0x6b0] sm:$0xff]
        %v3836 = vld [vmem:[#allocation3 + $0x6b8] sm:$0xff]
        %v3837 = vld [vmem:[#allocation3 + $0x6c0] sm:$0xff]
        %v3838 = vld [vmem:[#allocation3 + $0x6c8] sm:$0xff]
        %v3839 = vld [vmem:[#allocation3 + $0x6d0] sm:$0xff]
        %v3840 = vld [vmem:[#allocation3 + $0x6d8] sm:$0xff]
        %v3841 = vld [vmem:[#allocation3 + $0x6e0] sm:$0xff]
        %v3842 = vld [vmem:[#allocation3 + $0x6e8] sm:$0xff]
        %v3843 = vld [vmem:[#allocation3 + $0x6f0] sm:$0xff]
        %v3844 = vld [vmem:[#allocation3 + $0x6f8] sm:$0xff]
        %v3845 = vld [vmem:[#allocation3 + $0x700] sm:$0xff]
        %v3846 = vld [vmem:[#allocation3 + $0x708] sm:$0xff]
        %v3847 = vld [vmem:[#allocation3 + $0x710] sm:$0xff]
        %v3848 = vld [vmem:[#allocation3 + $0x718] sm:$0xff]
        %v3849 = vld [vmem:[#allocation3 + $0x720] sm:$0xff]
        %v3850 = vld [vmem:[#allocation3 + $0x728] sm:$0xff]
        %v3851 = vld [vmem:[#allocation3 + $0x730] sm:$0xff]
        %v3852 = vld [vmem:[#allocation3 + $0x738] sm:$0xff]
        %v3853 = vld [vmem:[#allocation3 + $0x740] sm:$0xff]
        %v3854 = vld [vmem:[#allocation3 + $0x748] sm:$0xff]
        %v3855 = vld [vmem:[#allocation3 + $0x750] sm:$0xff]
        %v3856 = vld [vmem:[#allocation3 + $0x758] sm:$0xff]
        %v3857 = vld [vmem:[#allocation3 + $0x760] sm:$0xff]
        %v3858 = vld [vmem:[#allocation3 + $0x768] sm:$0xff]
        %v3859 = vld [vmem:[#allocation3 + $0x770] sm:$0xff]
        %v3860 = vld [vmem:[#allocation3 + $0x778] sm:$0xff]
        %v3861 = vld [vmem:[#allocation3 + $0x780] sm:$0xff]
        %v3862 = vld [vmem:[#allocation3 + $0x788] sm:$0xff]
        %v3863 = vld [vmem:[#allocation3 + $0x790] sm:$0xff]
        %v3864 = vld [vmem:[#allocation3 + $0x798] sm:$0xff]
        %v3865 = vld [vmem:[#allocation3 + $0x7a0] sm:$0xff]
        %v3866 = vld [vmem:[#allocation3 + $0x7a8] sm:$0xff]
        %v3867 = vld [vmem:[#allocation3 + $0x7b0] sm:$0xff]
        %v3868 = vld [vmem:[#allocation3 + $0x7b8] sm:$0xff]
        %v3869 = vld [vmem:[#allocation3 + $0x7c0] sm:$0xff]
        %v3870 = vld [vmem:[#allocation3 + $0x7c8] sm:$0xff]
        %v3871 = vld [vmem:[#allocation3 + $0x7d0] sm:$0xff]
        %v3872 = vld [vmem:[#allocation3 + $0x7d8] sm:$0xff]
        %v3873 = vld [vmem:[#allocation3 + $0x7e0] sm:$0xff]
        %v3874 = vld [vmem:[#allocation3 + $0x7e8] sm:$0xff]
        %v3875 = vld [vmem:[#allocation3 + $0x7f0] sm:$0xff]
        %v3876 = vld [vmem:[#allocation3 + $0x7f8] sm:$0xff]
        %v3877 = vld [vmem:[#allocation3 + $0x800] sm:$0xff]
        %v3878 = vld [vmem:[#allocation3 + $0x808] sm:$0xff]
        %v3879 = vld [vmem:[#allocation3 + $0x810] sm:$0xff]
        %v3880 = vld [vmem:[#allocation3 + $0x818] sm:$0xff]
        %v3881 = vld [vmem:[#allocation3 + $0x820] sm:$0xff]
        %v3882 = vld [vmem:[#allocation3 + $0x828] sm:$0xff]
        %v3883 = vld [vmem:[#allocation3 + $0x830] sm:$0xff]
        %v3884 = vld [vmem:[#allocation3 + $0x838] sm:$0xff]
        %v3885 = vld [vmem:[#allocation3 + $0x840] sm:$0xff]
        %v3886 = vld [vmem:[#allocation3 + $0x848] sm:$0xff]
        %v3887 = vld [vmem:[#allocation3 + $0x850] sm:$0xff]
        %v3888 = vld [vmem:[#allocation3 + $0x858] sm:$0xff]
        %v3889 = vld [vmem:[#allocation3 + $0x860] sm:$0xff]
        %v3890 = vld [vmem:[#allocation3 + $0x868] sm:$0xff]
        %v3891 = vld [vmem:[#allocation3 + $0x870] sm:$0xff]
        %v3892 = vld [vmem:[#allocation3 + $0x878] sm:$0xff]
        %v3893 = vld [vmem:[#allocation3 + $0x880] sm:$0xff]
        %v3894 = vld [vmem:[#allocation3 + $0x888] sm:$0xff]
        %v3895 = vld [vmem:[#allocation3 + $0x890] sm:$0xff]
        %v3896 = vld [vmem:[#allocation3 + $0x898] sm:$0xff]
        %v3897 = vld [vmem:[#allocation3 + $0x8a0] sm:$0xff]
        %v3898 = vld [vmem:[#allocation3 + $0x8a8] sm:$0xff]
        %v3899 = vld [vmem:[#allocation3 + $0x8b0] sm:$0xff]
        %v3900 = vld [vmem:[#allocation3 + $0x8b8] sm:$0xff]
        %v3901 = vld [vmem:[#allocation3 + $0x8c0] sm:$0xff]
        %v3902 = vld [vmem:[#allocation3 + $0x8c8] sm:$0xff]
        %v3903 = vld [vmem:[#allocation3 + $0x8d0] sm:$0xff]
        %v3904 = vld [vmem:[#allocation3 + $0x8d8] sm:$0xff]
        %v3905 = vld [vmem:[#allocation3 + $0x8e0] sm:$0xff]
        %v3906 = vld [vmem:[#allocation3 + $0x8e8] sm:$0xff]
        %v3907 = vld [vmem:[#allocation3 + $0x8f0] sm:$0xff]
        %v3908 = vld [vmem:[#allocation3 + $0x8f8] sm:$0xff]
        %v3909 = vld [vmem:[#allocation3 + $0x900] sm:$0xff]
        %v3910 = vld [vmem:[#allocation3 + $0x908] sm:$0xff]
        %v3911 = vld [vmem:[#allocation3 + $0x910] sm:$0xff]
        %v3912 = vld [vmem:[#allocation3 + $0x918] sm:$0xff]
        %v3913 = vld [vmem:[#allocation3 + $0x920] sm:$0xff]
        %v3914 = vld [vmem:[#allocation3 + $0x928] sm:$0xff]
        %v3915 = vld [vmem:[#allocation3 + $0x930] sm:$0xff]
        %v3916 = vld [vmem:[#allocation3 + $0x938] sm:$0xff]
        %v3917 = vld [vmem:[#allocation3 + $0x940] sm:$0xff]
        %v3918 = vld [vmem:[#allocation3 + $0x948] sm:$0xff]
        %v3919 = vld [vmem:[#allocation3 + $0x950] sm:$0xff]
        %v3920 = vld [vmem:[#allocation3 + $0x958] sm:$0xff]
        %v3921 = vld [vmem:[#allocation3 + $0x960] sm:$0xff]
        %v3922 = vld [vmem:[#allocation3 + $0x968] sm:$0xff]
        %v3923 = vld [vmem:[#allocation3 + $0x970] sm:$0xff]
        %v3924 = vld [vmem:[#allocation3 + $0x978] sm:$0xff]
        %v3925 = vld [vmem:[#allocation3 + $0x980] sm:$0xff]
        %v3926 = vld [vmem:[#allocation3 + $0x988] sm:$0xff]
        %v3927 = vld [vmem:[#allocation3 + $0x990] sm:$0xff]
        %v3928 = vld [vmem:[#allocation3 + $0x998] sm:$0xff]
        %v3929 = vld [vmem:[#allocation3 + $0x9a0] sm:$0xff]
        %v3930 = vld [vmem:[#allocation3 + $0x9a8] sm:$0xff]
        %v3931 = vld [vmem:[#allocation3 + $0x9b0] sm:$0xff]
        %v3932 = vld [vmem:[#allocation3 + $0x9b8] sm:$0xff]
        %v3933 = vld [vmem:[#allocation3 + $0x9c0] sm:$0xff]
        %v3934 = vld [vmem:[#allocation3 + $0x9c8] sm:$0xff]
        %v3935 = vld [vmem:[#allocation3 + $0x9d0] sm:$0xff]
        %v3936 = vld [vmem:[#allocation3 + $0x9d8] sm:$0xff]
        %v3937 = vld [vmem:[#allocation3 + $0x9e0] sm:$0xff]
        %v3938 = vld [vmem:[#allocation3 + $0x9e8] sm:$0xff]
        %v3939 = vld [vmem:[#allocation3 + $0x9f0] sm:$0xff]
        %v3940 = vld [vmem:[#allocation3 + $0x9f8] sm:$0xff]
        %v3941 = vld [vmem:[#allocation3 + $0xa00] sm:$0xff]
        %v3942 = vld [vmem:[#allocation3 + $0xa08] sm:$0xff]
        %v3943 = vld [vmem:[#allocation3 + $0xa10] sm:$0xff]
        %v3944 = vld [vmem:[#allocation3 + $0xa18] sm:$0xff]
        %v3945 = vld [vmem:[#allocation4] sm:$0xff]
        %v3946 = vld [vmem:[#allocation4 + $0x8] sm:$0xff]
        %v3947 = vld [vmem:[#allocation4 + $0x10] sm:$0xff]
        %v3948 = vld [vmem:[#allocation4 + $0x18] sm:$0xff]
        %v3949 = vld [vmem:[#allocation4 + $0x20] sm:$0xff]
        %v3950 = vld [vmem:[#allocation4 + $0x28] sm:$0xff]
        %v3951 = vld [vmem:[#allocation4 + $0x30] sm:$0xff]
        %v3952 = vld [vmem:[#allocation4 + $0x38] sm:$0xff]
        %v3953 = vld [vmem:[#allocation4 + $0x40] sm:$0xff]
        %v3954 = vld [vmem:[#allocation4 + $0x48] sm:$0xff]
        %v3955 = vld [vmem:[#allocation4 + $0x50] sm:$0xff]
        %v3956 = vld [vmem:[#allocation4 + $0x58] sm:$0xff]
        %v3957 = vld [vmem:[#allocation4 + $0x60] sm:$0xff]
        %v3958 = vld [vmem:[#allocation4 + $0x68] sm:$0xff]
        %v3959 = vld [vmem:[#allocation4 + $0x70] sm:$0xff]
        %v3960 = vld [vmem:[#allocation4 + $0x78] sm:$0xff]
        %v3961 = vld [vmem:[#allocation4 + $0x80] sm:$0xff]
        %v3962 = vld [vmem:[#allocation4 + $0x88] sm:$0xff]
        %v3963 = vld [vmem:[#allocation4 + $0x90] sm:$0xff]
        %v3964 = vld [vmem:[#allocation4 + $0x98] sm:$0xff]
        %v3965 = vld [vmem:[#allocation4 + $0xa0] sm:$0xff]
        %v3966 = vld [vmem:[#allocation4 + $0xa8] sm:$0xff]
        %v3967 = vld [vmem:[#allocation4 + $0xb0] sm:$0xff]
        %v3968 = vld [vmem:[#allocation4 + $0xb8] sm:$0xff]
        %v3969 = vld [vmem:[#allocation4 + $0xc0] sm:$0xff]
        %v3970 = vld [vmem:[#allocation4 + $0xc8] sm:$0xff]
        %v3971 = vld [vmem:[#allocation4 + $0xd0] sm:$0xff]
        %v3972 = vld [vmem:[#allocation4 + $0xd8] sm:$0xff]
        %v3973 = vld [vmem:[#allocation4 + $0xe0] sm:$0xff]
        %v3974 = vld [vmem:[#allocation4 + $0xe8] sm:$0xff]
        %v3975 = vld [vmem:[#allocation4 + $0xf0] sm:$0xff]
        %v3976 = vld [vmem:[#allocation4 + $0xf8] sm:$0xff]
        %v3977 = vld [vmem:[#allocation4 + $0x100] sm:$0xff]
        %v3978 = vld [vmem:[#allocation4 + $0x108] sm:$0xff]
        %v3979 = vld [vmem:[#allocation4 + $0x110] sm:$0xff]
        %v3980 = vld [vmem:[#allocation4 + $0x118] sm:$0xff]
        %v3981 = vld [vmem:[#allocation4 + $0x120] sm:$0xff]
        %v3982 = vld [vmem:[#allocation4 + $0x128] sm:$0xff]
        %v3983 = vld [vmem:[#allocation4 + $0x130] sm:$0xff]
        %v3984 = vld [vmem:[#allocation4 + $0x138] sm:$0xff]
        %v3985 = vld [vmem:[#allocation4 + $0x140] sm:$0xff]
        %v3986 = vld [vmem:[#allocation4 + $0x148] sm:$0xff]
        %v3987 = vld [vmem:[#allocation4 + $0x150] sm:$0xff]
        %v3988 = vld [vmem:[#allocation4 + $0x158] sm:$0xff]
        %v3989 = vld [vmem:[#allocation4 + $0x160] sm:$0xff]
        %v3990 = vld [vmem:[#allocation4 + $0x168] sm:$0xff]
        %v3991 = vld [vmem:[#allocation4 + $0x170] sm:$0xff]
        %v3992 = vld [vmem:[#allocation4 + $0x178] sm:$0xff]
        %v3993 = vld [vmem:[#allocation4 + $0x180] sm:$0xff]
        %v3994 = vld [vmem:[#allocation4 + $0x188] sm:$0xff]
        %v3995 = vld [vmem:[#allocation4 + $0x190] sm:$0xff]
        %v3996 = vld [vmem:[#allocation4 + $0x198] sm:$0xff]
        %v3997 = vld [vmem:[#allocation4 + $0x1a0] sm:$0xff]
        %v3998 = vld [vmem:[#allocation4 + $0x1a8] sm:$0xff]
        %v3999 = vld [vmem:[#allocation4 + $0x1b0] sm:$0xff]
        %v4000 = vld [vmem:[#allocation4 + $0x1b8] sm:$0xff]
        %v4001 = vld [vmem:[#allocation4 + $0x1c0] sm:$0xff]
        %v4002 = vld [vmem:[#allocation4 + $0x1c8] sm:$0xff]
        %v4003 = vld [vmem:[#allocation4 + $0x1d0] sm:$0xff]
        %v4004 = vld [vmem:[#allocation4 + $0x1d8] sm:$0xff]
        %v4005 = vld [vmem:[#allocation4 + $0x1e0] sm:$0xff]
        %v4006 = vld [vmem:[#allocation4 + $0x1e8] sm:$0xff]
        %v4007 = vld [vmem:[#allocation4 + $0x1f0] sm:$0xff]
        %v4008 = vld [vmem:[#allocation4 + $0x1f8] sm:$0xff]
        %v4009 = vld [vmem:[#allocation4 + $0x200] sm:$0xff]
        %v4010 = vld [vmem:[#allocation4 + $0x208] sm:$0xff]
        %v4011 = vld [vmem:[#allocation4 + $0x210] sm:$0xff]
        %v4012 = vld [vmem:[#allocation4 + $0x218] sm:$0xff]
        %v4013 = vld [vmem:[#allocation4 + $0x220] sm:$0xff]
        %v4014 = vld [vmem:[#allocation4 + $0x228] sm:$0xff]
        %v4015 = vld [vmem:[#allocation4 + $0x230] sm:$0xff]
        %v4016 = vld [vmem:[#allocation4 + $0x238] sm:$0xff]
        %v4017 = vld [vmem:[#allocation4 + $0x240] sm:$0xff]
        %v4018 = vld [vmem:[#allocation4 + $0x248] sm:$0xff]
        %v4019 = vld [vmem:[#allocation4 + $0x250] sm:$0xff]
        %v4020 = vld [vmem:[#allocation4 + $0x258] sm:$0xff]
        %v4021 = vld [vmem:[#allocation4 + $0x260] sm:$0xff]
        %v4022 = vld [vmem:[#allocation4 + $0x268] sm:$0xff]
        %v4023 = vld [vmem:[#allocation4 + $0x270] sm:$0xff]
        %v4024 = vld [vmem:[#allocation4 + $0x278] sm:$0xff]
        %v4025 = vld [vmem:[#allocation4 + $0x280] sm:$0xff]
        %v4026 = vld [vmem:[#allocation4 + $0x288] sm:$0xff]
        %v4027 = vld [vmem:[#allocation4 + $0x290] sm:$0xff]
        %v4028 = vld [vmem:[#allocation4 + $0x298] sm:$0xff]
        %v4029 = vld [vmem:[#allocation4 + $0x2a0] sm:$0xff]
        %v4030 = vld [vmem:[#allocation4 + $0x2a8] sm:$0xff]
        %v4031 = vld [vmem:[#allocation4 + $0x2b0] sm:$0xff]
        %v4032 = vld [vmem:[#allocation4 + $0x2b8] sm:$0xff]
        %v4033 = vld [vmem:[#allocation4 + $0x2c0] sm:$0xff]
        %v4034 = vld [vmem:[#allocation4 + $0x2c8] sm:$0xff]
        %v4035 = vld [vmem:[#allocation4 + $0x2d0] sm:$0xff]
        %v4036 = vld [vmem:[#allocation4 + $0x2d8] sm:$0xff]
        %v4037 = vld [vmem:[#allocation4 + $0x2e0] sm:$0xff]
        %v4038 = vld [vmem:[#allocation4 + $0x2e8] sm:$0xff]
        %v4039 = vld [vmem:[#allocation4 + $0x2f0] sm:$0xff]
        %v4040 = vld [vmem:[#allocation4 + $0x2f8] sm:$0xff]
        %v4041 = vld [vmem:[#allocation4 + $0x300] sm:$0xff]
        %v4042 = vld [vmem:[#allocation4 + $0x308] sm:$0xff]
        %v4043 = vld [vmem:[#allocation4 + $0x310] sm:$0xff]
        %v4044 = vld [vmem:[#allocation4 + $0x318] sm:$0xff]
        %v4045 = vld [vmem:[#allocation4 + $0x320] sm:$0xff]
        %v4046 = vld [vmem:[#allocation4 + $0x328] sm:$0xff]
        %v4047 = vld [vmem:[#allocation4 + $0x330] sm:$0xff]
        %v4048 = vld [vmem:[#allocation4 + $0x338] sm:$0xff]
        %v4049 = vld [vmem:[#allocation4 + $0x340] sm:$0xff]
        %v4050 = vld [vmem:[#allocation4 + $0x348] sm:$0xff]
        %v4051 = vld [vmem:[#allocation4 + $0x350] sm:$0xff]
        %v4052 = vld [vmem:[#allocation4 + $0x358] sm:$0xff]
        %v4053 = vld [vmem:[#allocation4 + $0x360] sm:$0xff]
        %v4054 = vld [vmem:[#allocation4 + $0x368] sm:$0xff]
        %v4055 = vld [vmem:[#allocation4 + $0x370] sm:$0xff]
        %v4056 = vld [vmem:[#allocation4 + $0x378] sm:$0xff]
        %v4057 = vld [vmem:[#allocation4 + $0x380] sm:$0xff]
        %v4058 = vld [vmem:[#allocation4 + $0x388] sm:$0xff]
        %v4059 = vld [vmem:[#allocation4 + $0x390] sm:$0xff]
        %v4060 = vld [vmem:[#allocation4 + $0x398] sm:$0xff]
        %v4061 = vld [vmem:[#allocation4 + $0x3a0] sm:$0xff]
        %v4062 = vld [vmem:[#allocation4 + $0x3a8] sm:$0xff]
        %v4063 = vld [vmem:[#allocation4 + $0x3b0] sm:$0xff]
        %v4064 = vld [vmem:[#allocation4 + $0x3b8] sm:$0xff]
        %v4065 = vld [vmem:[#allocation4 + $0x3c0] sm:$0xff]
        %v4066 = vld [vmem:[#allocation4 + $0x3c8] sm:$0xff]
        %v4067 = vld [vmem:[#allocation4 + $0x3d0] sm:$0xff]
        %v4068 = vld [vmem:[#allocation4 + $0x3d8] sm:$0xff]
        %v4069 = vld [vmem:[#allocation4 + $0x3e0] sm:$0xff]
        %v4070 = vld [vmem:[#allocation4 + $0x3e8] sm:$0xff]
        %v4071 = vld [vmem:[#allocation4 + $0x3f0] sm:$0xff]
        %v4072 = vld [vmem:[#allocation4 + $0x3f8] sm:$0xff]
        %v4073 = vld [vmem:[#allocation4 + $0x400] sm:$0xff]
        %v4074 = vld [vmem:[#allocation4 + $0x408] sm:$0xff]
        %v4075 = vld [vmem:[#allocation4 + $0x410] sm:$0xff]
        %v4076 = vld [vmem:[#allocation4 + $0x418] sm:$0xff]
        %v4077 = vld [vmem:[#allocation4 + $0x420] sm:$0xff]
        %v4078 = vld [vmem:[#allocation4 + $0x428] sm:$0xff]
        %v4079 = vld [vmem:[#allocation4 + $0x430] sm:$0xff]
        %v4080 = vld [vmem:[#allocation4 + $0x438] sm:$0xff]
        %v4081 = vld [vmem:[#allocation4 + $0x440] sm:$0xff]
        %v4082 = vld [vmem:[#allocation4 + $0x448] sm:$0xff]
        %v4083 = vld [vmem:[#allocation4 + $0x450] sm:$0xff]
        %v4084 = vld [vmem:[#allocation4 + $0x458] sm:$0xff]
        %v4085 = vld [vmem:[#allocation4 + $0x460] sm:$0xff]
        %v4086 = vld [vmem:[#allocation4 + $0x468] sm:$0xff]
        %v4087 = vld [vmem:[#allocation4 + $0x470] sm:$0xff]
        %v4088 = vld [vmem:[#allocation4 + $0x478] sm:$0xff]
        %4089 = vmatpush.msra.mxu0 %v3960
        %4090 = vmatpush.msra.mxu0 %v3959
        %4091 = vmatpush.msra.mxu0 %v3958
        %4092 = vmatpush.msra.mxu0 %v3957
        %4093 = vmatpush.msra.mxu0 %v3956
        %4094 = vmatpush.msra.mxu0 %v3955
        %4095 = vmatpush.msra.mxu0 %v3954
        %4096 = vmatpush.msra.mxu0 %v3953
        %4097 = vmatpush.msra.mxu0 %v3952
        %4098 = vmatpush.msra.mxu0 %v3951
        %4099 = vmatpush.msra.mxu0 %v3950
        %4100 = vmatpush.msra.mxu0 %v3949
        %4101 = vmatpush.msra.mxu0 %v3948
        %4102 = vmatpush.msra.mxu0 %v3947
        %4103 = vmatpush.msra.mxu0 %v3946
        %4104 = vmatpush.msra.mxu0 %v3945
        %4105 = vmatmul.f32.gmra.mxu0 %v3621
        %v4106 = vpop.f32.mrf.mxu0
        %v4107 = vadd.f32 0.0, %v4106
        %4108 = vmatmul.f32.gmra.mxu0 %v3630
        %v4109 = vpop.f32.mrf.mxu0
        %v4110 = vadd.f32 0.0, %v4109
        %4111 = vmatmul.f32.gmra.mxu0 %v3639
        %v4112 = vpop.f32.mrf.mxu0
        %v4113 = vadd.f32 0.0, %v4112
        %4114 = vmatmul.f32.gmra.mxu0 %v3648
        %v4115 = vpop.f32.mrf.mxu0
        %v4116 = vadd.f32 0.0, %v4115
        %4117 = vmatmul.f32.gmra.mxu0 %v3657
        %v4118 = vpop.f32.mrf.mxu0
        %v4119 = vadd.f32 0.0, %v4118
        %4120 = vmatmul.f32.gmra.mxu0 %v3666
        %v4121 = vpop.f32.mrf.mxu0
        %v4122 = vadd.f32 0.0, %v4121
        %4123 = vmatmul.f32.gmra.mxu0 %v3675
        %v4124 = vpop.f32.mrf.mxu0
        %v4125 = vadd.f32 0.0, %v4124
        %4126 = vmatmul.f32.gmra.mxu0 %v3684
        %v4127 = vpop.f32.mrf.mxu0
        %v4128 = vadd.f32 0.0, %v4127
        %4129 = vmatmul.f32.gmra.mxu0 %v3693
        %v4130 = vpop.f32.mrf.mxu0
        %v4131 = vadd.f32 0.0, %v4130
        %4132 = vmatmul.f32.gmra.mxu0 %v3702
        %v4133 = vpop.f32.mrf.mxu0
        %v4134 = vadd.f32 0.0, %v4133
        %4135 = vmatmul.f32.gmra.mxu0 %v3711
        %v4136 = vpop.f32.mrf.mxu0
        %v4137 = vadd.f32 0.0, %v4136
        %4138 = vmatmul.f32.gmra.mxu0 %v3720
        %v4139 = vpop.f32.mrf.mxu0
        %v4140 = vadd.f32 0.0, %v4139
        %4141 = vmatmul.f32.gmra.mxu0 %v3729
        %v4142 = vpop.f32.mrf.mxu0
        %v4143 = vadd.f32 0.0, %v4142
        %4144 = vmatmul.f32.gmra.mxu0 %v3738
        %v4145 = vpop.f32.mrf.mxu0
        %v4146 = vadd.f32 0.0, %v4145
        %4147 = vmatmul.f32.gmra.mxu0 %v3747
        %v4148 = vpop.f32.mrf.mxu0
        %v4149 = vadd.f32 0.0, %v4148
        %4150 = vmatmul.f32.gmra.mxu0 %v3756
        %v4151 = vpop.f32.mrf.mxu0
        %v4152 = vadd.f32 0.0, %v4151
        %4153 = vmatmul.f32.gmra.mxu0 %v3765
        %v4154 = vpop.f32.mrf.mxu0
        %v4155 = vadd.f32 0.0, %v4154
        %4156 = vmatmul.f32.gmra.mxu0 %v3774
        %v4157 = vpop.f32.mrf.mxu0
        %v4158 = vadd.f32 0.0, %v4157
        %4159 = vmatmul.f32.gmra.mxu0 %v3783
        %v4160 = vpop.f32.mrf.mxu0
        %v4161 = vadd.f32 0.0, %v4160
        %4162 = vmatmul.f32.gmra.mxu0 %v3792
        %v4163 = vpop.f32.mrf.mxu0
        %v4164 = vadd.f32 0.0, %v4163
        %4165 = vmatmul.f32.gmra.mxu0 %v3801
        %v4166 = vpop.f32.mrf.mxu0
        %v4167 = vadd.f32 0.0, %v4166
        %4168 = vmatmul.f32.gmra.mxu0 %v3810
        %v4169 = vpop.f32.mrf.mxu0
        %v4170 = vadd.f32 0.0, %v4169
        %4171 = vmatmul.f32.gmra.mxu0 %v3819
        %v4172 = vpop.f32.mrf.mxu0
        %v4173 = vadd.f32 0.0, %v4172
        %4174 = vmatmul.f32.gmra.mxu0 %v3828
        %v4175 = vpop.f32.mrf.mxu0
        %v4176 = vadd.f32 0.0, %v4175
        %4177 = vmatmul.f32.gmra.mxu0 %v3837
        %v4178 = vpop.f32.mrf.mxu0
        %v4179 = vadd.f32 0.0, %v4178
        %4180 = vmatmul.f32.gmra.mxu0 %v3846
        %v4181 = vpop.f32.mrf.mxu0
        %v4182 = vadd.f32 0.0, %v4181
        %4183 = vmatmul.f32.gmra.mxu0 %v3855
        %v4184 = vpop.f32.mrf.mxu0
        %v4185 = vadd.f32 0.0, %v4184
        %4186 = vmatmul.f32.gmra.mxu0 %v3864
        %v4187 = vpop.f32.mrf.mxu0
        %v4188 = vadd.f32 0.0, %v4187
        %4189 = vmatmul.f32.gmra.mxu0 %v3873
        %v4190 = vpop.f32.mrf.mxu0
        %v4191 = vadd.f32 0.0, %v4190
        %4192 = vmatmul.f32.gmra.mxu0 %v3882
        %v4193 = vpop.f32.mrf.mxu0
        %v4194 = vadd.f32 0.0, %v4193
        %4195 = vmatmul.f32.gmra.mxu0 %v3891
        %v4196 = vpop.f32.mrf.mxu0
        %v4197 = vadd.f32 0.0, %v4196
        %4198 = vmatmul.f32.gmra.mxu0 %v3900
        %v4199 = vpop.f32.mrf.mxu0
        %v4200 = vadd.f32 0.0, %v4199
        %4201 = vmatmul.f32.gmra.mxu0 %v3909
        %v4202 = vpop.f32.mrf.mxu0
        %v4203 = vadd.f32 0.0, %v4202
        %4204 = vmatmul.f32.gmra.mxu0 %v3918
        %v4205 = vpop.f32.mrf.mxu0
        %v4206 = vadd.f32 0.0, %v4205
        %4207 = vmatmul.f32.gmra.mxu0 %v3927
        %v4208 = vpop.f32.mrf.mxu0
        %v4209 = vadd.f32 0.0, %v4208
        %4210 = vmatmul.f32.gmra.mxu0 %v3936
        %v4211 = vpop.f32.mrf.mxu0
        %v4212 = vadd.f32 0.0, %v4211
        %4213 = vdwg.mxu0
        %4214 = vmatpush.msra.mxu0 %v3976
        %4215 = vmatpush.msra.mxu0 %v3975
        %4216 = vmatpush.msra.mxu0 %v3974
        %4217 = vmatpush.msra.mxu0 %v3973
        %4218 = vmatpush.msra.mxu0 %v3972
        %4219 = vmatpush.msra.mxu0 %v3971
        %4220 = vmatpush.msra.mxu0 %v3970
        %4221 = vmatpush.msra.mxu0 %v3969
        %4222 = vmatpush.msra.mxu0 %v3968
        %4223 = vmatpush.msra.mxu0 %v3967
        %4224 = vmatpush.msra.mxu0 %v3966
        %4225 = vmatpush.msra.mxu0 %v3965
        %4226 = vmatpush.msra.mxu0 %v3964
        %4227 = vmatpush.msra.mxu0 %v3963
        %4228 = vmatpush.msra.mxu0 %v3962
        %4229 = vmatpush.msra.mxu0 %v3961
        %4230 = vmatmul.f32.gmra.mxu0 %v3622
        %v4231 = vpop.f32.mrf.mxu0
        %v4232 = vadd.f32 %v4107, %v4231
        %4233 = vmatmul.f32.gmra.mxu0 %v3631
        %v4234 = vpop.f32.mrf.mxu0
        %v4235 = vadd.f32 %v4110, %v4234
        %4236 = vmatmul.f32.gmra.mxu0 %v3640
        %v4237 = vpop.f32.mrf.mxu0
        %v4238 = vadd.f32 %v4113, %v4237
        %4239 = vmatmul.f32.gmra.mxu0 %v3649
        %v4240 = vpop.f32.mrf.mxu0
        %v4241 = vadd.f32 %v4116, %v4240
        %4242 = vmatmul.f32.gmra.mxu0 %v3658
        %v4243 = vpop.f32.mrf.mxu0
        %v4244 = vadd.f32 %v4119, %v4243
        %4245 = vmatmul.f32.gmra.mxu0 %v3667
        %v4246 = vpop.f32.mrf.mxu0
        %v4247 = vadd.f32 %v4122, %v4246
        %4248 = vmatmul.f32.gmra.mxu0 %v3676
        %v4249 = vpop.f32.mrf.mxu0
        %v4250 = vadd.f32 %v4125, %v4249
        %4251 = vmatmul.f32.gmra.mxu0 %v3685
        %v4252 = vpop.f32.mrf.mxu0
        %v4253 = vadd.f32 %v4128, %v4252
        %4254 = vmatmul.f32.gmra.mxu0 %v3694
        %v4255 = vpop.f32.mrf.mxu0
        %v4256 = vadd.f32 %v4131, %v4255
        %4257 = vmatmul.f32.gmra.mxu0 %v3703
        %v4258 = vpop.f32.mrf.mxu0
        %v4259 = vadd.f32 %v4134, %v4258
        %4260 = vmatmul.f32.gmra.mxu0 %v3712
        %v4261 = vpop.f32.mrf.mxu0
        %v4262 = vadd.f32 %v4137, %v4261
        %4263 = vmatmul.f32.gmra.mxu0 %v3721
        %v4264 = vpop.f32.mrf.mxu0
        %v4265 = vadd.f32 %v4140, %v4264
        %4266 = vmatmul.f32.gmra.mxu0 %v3730
        %v4267 = vpop.f32.mrf.mxu0
        %v4268 = vadd.f32 %v4143, %v4267
        %4269 = vmatmul.f32.gmra.mxu0 %v3739
        %v4270 = vpop.f32.mrf.mxu0
        %v4271 = vadd.f32 %v4146, %v4270
        %4272 = vmatmul.f32.gmra.mxu0 %v3748
        %v4273 = vpop.f32.mrf.mxu0
        %v4274 = vadd.f32 %v4149, %v4273
        %4275 = vmatmul.f32.gmra.mxu0 %v3757
        %v4276 = vpop.f32.mrf.mxu0
        %v4277 = vadd.f32 %v4152, %v4276
        %4278 = vmatmul.f32.gmra.mxu0 %v3766
        %v4279 = vpop.f32.mrf.mxu0
        %v4280 = vadd.f32 %v4155, %v4279
        %4281 = vmatmul.f32.gmra.mxu0 %v3775
        %v4282 = vpop.f32.mrf.mxu0
        %v4283 = vadd.f32 %v4158, %v4282
        %4284 = vmatmul.f32.gmra.mxu0 %v3784
        %v4285 = vpop.f32.mrf.mxu0
        %v4286 = vadd.f32 %v4161, %v4285
        %4287 = vmatmul.f32.gmra.mxu0 %v3793
        %v4288 = vpop.f32.mrf.mxu0
        %v4289 = vadd.f32 %v4164, %v4288
        %4290 = vmatmul.f32.gmra.mxu0 %v3802
        %v4291 = vpop.f32.mrf.mxu0
        %v4292 = vadd.f32 %v4167, %v4291
        %4293 = vmatmul.f32.gmra.mxu0 %v3811
        %v4294 = vpop.f32.mrf.mxu0
        %v4295 = vadd.f32 %v4170, %v4294
        %4296 = vmatmul.f32.gmra.mxu0 %v3820
        %v4297 = vpop.f32.mrf.mxu0
        %v4298 = vadd.f32 %v4173, %v4297
        %4299 = vmatmul.f32.gmra.mxu0 %v3829
        %v4300 = vpop.f32.mrf.mxu0
        %v4301 = vadd.f32 %v4176, %v4300
        %4302 = vmatmul.f32.gmra.mxu0 %v3838
        %v4303 = vpop.f32.mrf.mxu0
        %v4304 = vadd.f32 %v4179, %v4303
        %4305 = vmatmul.f32.gmra.mxu0 %v3847
        %v4306 = vpop.f32.mrf.mxu0
        %v4307 = vadd.f32 %v4182, %v4306
        %4308 = vmatmul.f32.gmra.mxu0 %v3856
        %v4309 = vpop.f32.mrf.mxu0
        %v4310 = vadd.f32 %v4185, %v4309
        %4311 = vmatmul.f32.gmra.mxu0 %v3865
        %v4312 = vpop.f32.mrf.mxu0
        %v4313 = vadd.f32 %v4188, %v4312
        %4314 = vmatmul.f32.gmra.mxu0 %v3874
        %v4315 = vpop.f32.mrf.mxu0
        %v4316 = vadd.f32 %v4191, %v4315
        %4317 = vmatmul.f32.gmra.mxu0 %v3883
        %v4318 = vpop.f32.mrf.mxu0
        %v4319 = vadd.f32 %v4194, %v4318
        %4320 = vmatmul.f32.gmra.mxu0 %v3892
        %v4321 = vpop.f32.mrf.mxu0
        %v4322 = vadd.f32 %v4197, %v4321
        %4323 = vmatmul.f32.gmra.mxu0 %v3901
        %v4324 = vpop.f32.mrf.mxu0
        %v4325 = vadd.f32 %v4200, %v4324
        %4326 = vmatmul.f32.gmra.mxu0 %v3910
        %v4327 = vpop.f32.mrf.mxu0
        %v4328 = vadd.f32 %v4203, %v4327
        %4329 = vmatmul.f32.gmra.mxu0 %v3919
        %v4330 = vpop.f32.mrf.mxu0
        %v4331 = vadd.f32 %v4206, %v4330
        %4332 = vmatmul.f32.gmra.mxu0 %v3928
        %v4333 = vpop.f32.mrf.mxu0
        %v4334 = vadd.f32 %v4209, %v4333
        %4335 = vmatmul.f32.gmra.mxu0 %v3937
        %v4336 = vpop.f32.mrf.mxu0
        %v4337 = vadd.f32 %v4212, %v4336
        %4338 = vdwg.mxu0
        %4339 = vmatpush.msra.mxu0 %v3992
        %4340 = vmatpush.msra.mxu0 %v3991
        %4341 = vmatpush.msra.mxu0 %v3990
        %4342 = vmatpush.msra.mxu0 %v3989
        %4343 = vmatpush.msra.mxu0 %v3988
        %4344 = vmatpush.msra.mxu0 %v3987
        %4345 = vmatpush.msra.mxu0 %v3986
        %4346 = vmatpush.msra.mxu0 %v3985
        %4347 = vmatpush.msra.mxu0 %v3984
        %4348 = vmatpush.msra.mxu0 %v3983
        %4349 = vmatpush.msra.mxu0 %v3982
        %4350 = vmatpush.msra.mxu0 %v3981
        %4351 = vmatpush.msra.mxu0 %v3980
        %4352 = vmatpush.msra.mxu0 %v3979
        %4353 = vmatpush.msra.mxu0 %v3978
        %4354 = vmatpush.msra.mxu0 %v3977
        %4355 = vmatmul.f32.gmra.mxu0 %v3623
        %v4356 = vpop.f32.mrf.mxu0
        %v4357 = vadd.f32 %v4232, %v4356
        %4358 = vmatmul.f32.gmra.mxu0 %v3632
        %v4359 = vpop.f32.mrf.mxu0
        %v4360 = vadd.f32 %v4235, %v4359
        %4361 = vmatmul.f32.gmra.mxu0 %v3641
        %v4362 = vpop.f32.mrf.mxu0
        %v4363 = vadd.f32 %v4238, %v4362
        %4364 = vmatmul.f32.gmra.mxu0 %v3650
        %v4365 = vpop.f32.mrf.mxu0
        %v4366 = vadd.f32 %v4241, %v4365
        %4367 = vmatmul.f32.gmra.mxu0 %v3659
        %v4368 = vpop.f32.mrf.mxu0
        %v4369 = vadd.f32 %v4244, %v4368
        %4370 = vmatmul.f32.gmra.mxu0 %v3668
        %v4371 = vpop.f32.mrf.mxu0
        %v4372 = vadd.f32 %v4247, %v4371
        %4373 = vmatmul.f32.gmra.mxu0 %v3677
        %v4374 = vpop.f32.mrf.mxu0
        %v4375 = vadd.f32 %v4250, %v4374
        %4376 = vmatmul.f32.gmra.mxu0 %v3686
        %v4377 = vpop.f32.mrf.mxu0
        %v4378 = vadd.f32 %v4253, %v4377
        %4379 = vmatmul.f32.gmra.mxu0 %v3695
        %v4380 = vpop.f32.mrf.mxu0
        %v4381 = vadd.f32 %v4256, %v4380
        %4382 = vmatmul.f32.gmra.mxu0 %v3704
        %v4383 = vpop.f32.mrf.mxu0
        %v4384 = vadd.f32 %v4259, %v4383
        %4385 = vmatmul.f32.gmra.mxu0 %v3713
        %v4386 = vpop.f32.mrf.mxu0
        %v4387 = vadd.f32 %v4262, %v4386
        %4388 = vmatmul.f32.gmra.mxu0 %v3722
        %v4389 = vpop.f32.mrf.mxu0
        %v4390 = vadd.f32 %v4265, %v4389
        %4391 = vmatmul.f32.gmra.mxu0 %v3731
        %v4392 = vpop.f32.mrf.mxu0
        %v4393 = vadd.f32 %v4268, %v4392
        %4394 = vmatmul.f32.gmra.mxu0 %v3740
        %v4395 = vpop.f32.mrf.mxu0
        %v4396 = vadd.f32 %v4271, %v4395
        %4397 = vmatmul.f32.gmra.mxu0 %v3749
        %v4398 = vpop.f32.mrf.mxu0
        %v4399 = vadd.f32 %v4274, %v4398
        %4400 = vmatmul.f32.gmra.mxu0 %v3758
        %v4401 = vpop.f32.mrf.mxu0
        %v4402 = vadd.f32 %v4277, %v4401
        %4403 = vmatmul.f32.gmra.mxu0 %v3767
        %v4404 = vpop.f32.mrf.mxu0
        %v4405 = vadd.f32 %v4280, %v4404
        %4406 = vmatmul.f32.gmra.mxu0 %v3776
        %v4407 = vpop.f32.mrf.mxu0
        %v4408 = vadd.f32 %v4283, %v4407
        %4409 = vmatmul.f32.gmra.mxu0 %v3785
        %v4410 = vpop.f32.mrf.mxu0
        %v4411 = vadd.f32 %v4286, %v4410
        %4412 = vmatmul.f32.gmra.mxu0 %v3794
        %v4413 = vpop.f32.mrf.mxu0
        %v4414 = vadd.f32 %v4289, %v4413
        %4415 = vmatmul.f32.gmra.mxu0 %v3803
        %v4416 = vpop.f32.mrf.mxu0
        %v4417 = vadd.f32 %v4292, %v4416
        %4418 = vmatmul.f32.gmra.mxu0 %v3812
        %v4419 = vpop.f32.mrf.mxu0
        %v4420 = vadd.f32 %v4295, %v4419
        %4421 = vmatmul.f32.gmra.mxu0 %v3821
        %v4422 = vpop.f32.mrf.mxu0
        %v4423 = vadd.f32 %v4298, %v4422
        %4424 = vmatmul.f32.gmra.mxu0 %v3830
        %v4425 = vpop.f32.mrf.mxu0
        %v4426 = vadd.f32 %v4301, %v4425
        %4427 = vmatmul.f32.gmra.mxu0 %v3839
        %v4428 = vpop.f32.mrf.mxu0
        %v4429 = vadd.f32 %v4304, %v4428
        %4430 = vmatmul.f32.gmra.mxu0 %v3848
        %v4431 = vpop.f32.mrf.mxu0
        %v4432 = vadd.f32 %v4307, %v4431
        %4433 = vmatmul.f32.gmra.mxu0 %v3857
        %v4434 = vpop.f32.mrf.mxu0
        %v4435 = vadd.f32 %v4310, %v4434
        %4436 = vmatmul.f32.gmra.mxu0 %v3866
        %v4437 = vpop.f32.mrf.mxu0
        %v4438 = vadd.f32 %v4313, %v4437
        %4439 = vmatmul.f32.gmra.mxu0 %v3875
        %v4440 = vpop.f32.mrf.mxu0
        %v4441 = vadd.f32 %v4316, %v4440
        %4442 = vmatmul.f32.gmra.mxu0 %v3884
        %v4443 = vpop.f32.mrf.mxu0
        %v4444 = vadd.f32 %v4319, %v4443
        %4445 = vmatmul.f32.gmra.mxu0 %v3893
        %v4446 = vpop.f32.mrf.mxu0
        %v4447 = vadd.f32 %v4322, %v4446
        %4448 = vmatmul.f32.gmra.mxu0 %v3902
        %v4449 = vpop.f32.mrf.mxu0
        %v4450 = vadd.f32 %v4325, %v4449
        %4451 = vmatmul.f32.gmra.mxu0 %v3911
        %v4452 = vpop.f32.mrf.mxu0
        %v4453 = vadd.f32 %v4328, %v4452
        %4454 = vmatmul.f32.gmra.mxu0 %v3920
        %v4455 = vpop.f32.mrf.mxu0
        %v4456 = vadd.f32 %v4331, %v4455
        %4457 = vmatmul.f32.gmra.mxu0 %v3929
        %v4458 = vpop.f32.mrf.mxu0
        %v4459 = vadd.f32 %v4334, %v4458
        %4460 = vmatmul.f32.gmra.mxu0 %v3938
        %v4461 = vpop.f32.mrf.mxu0
        %v4462 = vadd.f32 %v4337, %v4461
        %4463 = vdwg.mxu0
        %4464 = vmatpush.msra.mxu0 %v4008
        %4465 = vmatpush.msra.mxu0 %v4007
        %4466 = vmatpush.msra.mxu0 %v4006
        %4467 = vmatpush.msra.mxu0 %v4005
        %4468 = vmatpush.msra.mxu0 %v4004
        %4469 = vmatpush.msra.mxu0 %v4003
        %4470 = vmatpush.msra.mxu0 %v4002
        %4471 = vmatpush.msra.mxu0 %v4001
        %4472 = vmatpush.msra.mxu0 %v4000
        %4473 = vmatpush.msra.mxu0 %v3999
        %4474 = vmatpush.msra.mxu0 %v3998
        %4475 = vmatpush.msra.mxu0 %v3997
        %4476 = vmatpush.msra.mxu0 %v3996
        %4477 = vmatpush.msra.mxu0 %v3995
        %4478 = vmatpush.msra.mxu0 %v3994
        %4479 = vmatpush.msra.mxu0 %v3993
        %4480 = vmatmul.f32.gmra.mxu0 %v3624
        %v4481 = vpop.f32.mrf.mxu0
        %v4482 = vadd.f32 %v4357, %v4481
        %4483 = vmatmul.f32.gmra.mxu0 %v3633
        %v4484 = vpop.f32.mrf.mxu0
        %v4485 = vadd.f32 %v4360, %v4484
        %4486 = vmatmul.f32.gmra.mxu0 %v3642
        %v4487 = vpop.f32.mrf.mxu0
        %v4488 = vadd.f32 %v4363, %v4487
        %4489 = vmatmul.f32.gmra.mxu0 %v3651
        %v4490 = vpop.f32.mrf.mxu0
        %v4491 = vadd.f32 %v4366, %v4490
        %4492 = vmatmul.f32.gmra.mxu0 %v3660
        %v4493 = vpop.f32.mrf.mxu0
        %v4494 = vadd.f32 %v4369, %v4493
        %4495 = vmatmul.f32.gmra.mxu0 %v3669
        %v4496 = vpop.f32.mrf.mxu0
        %v4497 = vadd.f32 %v4372, %v4496
        %4498 = vmatmul.f32.gmra.mxu0 %v3678
        %v4499 = vpop.f32.mrf.mxu0
        %v4500 = vadd.f32 %v4375, %v4499
        %4501 = vmatmul.f32.gmra.mxu0 %v3687
        %v4502 = vpop.f32.mrf.mxu0
        %v4503 = vadd.f32 %v4378, %v4502
        %4504 = vmatmul.f32.gmra.mxu0 %v3696
        %v4505 = vpop.f32.mrf.mxu0
        %v4506 = vadd.f32 %v4381, %v4505
        %4507 = vmatmul.f32.gmra.mxu0 %v3705
        %v4508 = vpop.f32.mrf.mxu0
        %v4509 = vadd.f32 %v4384, %v4508
        %4510 = vmatmul.f32.gmra.mxu0 %v3714
        %v4511 = vpop.f32.mrf.mxu0
        %v4512 = vadd.f32 %v4387, %v4511
        %4513 = vmatmul.f32.gmra.mxu0 %v3723
        %v4514 = vpop.f32.mrf.mxu0
        %v4515 = vadd.f32 %v4390, %v4514
        %4516 = vmatmul.f32.gmra.mxu0 %v3732
        %v4517 = vpop.f32.mrf.mxu0
        %v4518 = vadd.f32 %v4393, %v4517
        %4519 = vmatmul.f32.gmra.mxu0 %v3741
        %v4520 = vpop.f32.mrf.mxu0
        %v4521 = vadd.f32 %v4396, %v4520
        %4522 = vmatmul.f32.gmra.mxu0 %v3750
        %v4523 = vpop.f32.mrf.mxu0
        %v4524 = vadd.f32 %v4399, %v4523
        %4525 = vmatmul.f32.gmra.mxu0 %v3759
        %v4526 = vpop.f32.mrf.mxu0
        %v4527 = vadd.f32 %v4402, %v4526
        %4528 = vmatmul.f32.gmra.mxu0 %v3768
        %v4529 = vpop.f32.mrf.mxu0
        %v4530 = vadd.f32 %v4405, %v4529
        %4531 = vmatmul.f32.gmra.mxu0 %v3777
        %v4532 = vpop.f32.mrf.mxu0
        %v4533 = vadd.f32 %v4408, %v4532
        %4534 = vmatmul.f32.gmra.mxu0 %v3786
        %v4535 = vpop.f32.mrf.mxu0
        %v4536 = vadd.f32 %v4411, %v4535
        %4537 = vmatmul.f32.gmra.mxu0 %v3795
        %v4538 = vpop.f32.mrf.mxu0
        %v4539 = vadd.f32 %v4414, %v4538
        %4540 = vmatmul.f32.gmra.mxu0 %v3804
        %v4541 = vpop.f32.mrf.mxu0
        %v4542 = vadd.f32 %v4417, %v4541
        %4543 = vmatmul.f32.gmra.mxu0 %v3813
        %v4544 = vpop.f32.mrf.mxu0
        %v4545 = vadd.f32 %v4420, %v4544
        %4546 = vmatmul.f32.gmra.mxu0 %v3822
        %v4547 = vpop.f32.mrf.mxu0
        %v4548 = vadd.f32 %v4423, %v4547
        %4549 = vmatmul.f32.gmra.mxu0 %v3831
        %v4550 = vpop.f32.mrf.mxu0
        %v4551 = vadd.f32 %v4426, %v4550
        %4552 = vmatmul.f32.gmra.mxu0 %v3840
        %v4553 = vpop.f32.mrf.mxu0
        %v4554 = vadd.f32 %v4429, %v4553
        %4555 = vmatmul.f32.gmra.mxu0 %v3849
        %v4556 = vpop.f32.mrf.mxu0
        %v4557 = vadd.f32 %v4432, %v4556
        %4558 = vmatmul.f32.gmra.mxu0 %v3858
        %v4559 = vpop.f32.mrf.mxu0
        %v4560 = vadd.f32 %v4435, %v4559
        %4561 = vmatmul.f32.gmra.mxu0 %v3867
        %v4562 = vpop.f32.mrf.mxu0
        %v4563 = vadd.f32 %v4438, %v4562
        %4564 = vmatmul.f32.gmra.mxu0 %v3876
        %v4565 = vpop.f32.mrf.mxu0
        %v4566 = vadd.f32 %v4441, %v4565
        %4567 = vmatmul.f32.gmra.mxu0 %v3885
        %v4568 = vpop.f32.mrf.mxu0
        %v4569 = vadd.f32 %v4444, %v4568
        %4570 = vmatmul.f32.gmra.mxu0 %v3894
        %v4571 = vpop.f32.mrf.mxu0
        %v4572 = vadd.f32 %v4447, %v4571
        %4573 = vmatmul.f32.gmra.mxu0 %v3903
        %v4574 = vpop.f32.mrf.mxu0
        %v4575 = vadd.f32 %v4450, %v4574
        %4576 = vmatmul.f32.gmra.mxu0 %v3912
        %v4577 = vpop.f32.mrf.mxu0
        %v4578 = vadd.f32 %v4453, %v4577
        %4579 = vmatmul.f32.gmra.mxu0 %v3921
        %v4580 = vpop.f32.mrf.mxu0
        %v4581 = vadd.f32 %v4456, %v4580
        %4582 = vmatmul.f32.gmra.mxu0 %v3930
        %v4583 = vpop.f32.mrf.mxu0
        %v4584 = vadd.f32 %v4459, %v4583
        %4585 = vmatmul.f32.gmra.mxu0 %v3939
        %v4586 = vpop.f32.mrf.mxu0
        %v4587 = vadd.f32 %v4462, %v4586
        %4588 = vdwg.mxu0
        %4589 = vmatpush.msra.mxu0 %v4024
        %4590 = vmatpush.msra.mxu0 %v4023
        %4591 = vmatpush.msra.mxu0 %v4022
        %4592 = vmatpush.msra.mxu0 %v4021
        %4593 = vmatpush.msra.mxu0 %v4020
        %4594 = vmatpush.msra.mxu0 %v4019
        %4595 = vmatpush.msra.mxu0 %v4018
        %4596 = vmatpush.msra.mxu0 %v4017
        %4597 = vmatpush.msra.mxu0 %v4016
        %4598 = vmatpush.msra.mxu0 %v4015
        %4599 = vmatpush.msra.mxu0 %v4014
        %4600 = vmatpush.msra.mxu0 %v4013
        %4601 = vmatpush.msra.mxu0 %v4012
        %4602 = vmatpush.msra.mxu0 %v4011
        %4603 = vmatpush.msra.mxu0 %v4010
        %4604 = vmatpush.msra.mxu0 %v4009
        %4605 = vmatmul.f32.gmra.mxu0 %v3625
        %v4606 = vpop.f32.mrf.mxu0
        %v4607 = vadd.f32 %v4482, %v4606
        %4608 = vmatmul.f32.gmra.mxu0 %v3634
        %v4609 = vpop.f32.mrf.mxu0
        %v4610 = vadd.f32 %v4485, %v4609
        %4611 = vmatmul.f32.gmra.mxu0 %v3643
        %v4612 = vpop.f32.mrf.mxu0
        %v4613 = vadd.f32 %v4488, %v4612
        %4614 = vmatmul.f32.gmra.mxu0 %v3652
        %v4615 = vpop.f32.mrf.mxu0
        %v4616 = vadd.f32 %v4491, %v4615
        %4617 = vmatmul.f32.gmra.mxu0 %v3661
        %v4618 = vpop.f32.mrf.mxu0
        %v4619 = vadd.f32 %v4494, %v4618
        %4620 = vmatmul.f32.gmra.mxu0 %v3670
        %v4621 = vpop.f32.mrf.mxu0
        %v4622 = vadd.f32 %v4497, %v4621
        %4623 = vmatmul.f32.gmra.mxu0 %v3679
        %v4624 = vpop.f32.mrf.mxu0
        %v4625 = vadd.f32 %v4500, %v4624
        %4626 = vmatmul.f32.gmra.mxu0 %v3688
        %v4627 = vpop.f32.mrf.mxu0
        %v4628 = vadd.f32 %v4503, %v4627
        %4629 = vmatmul.f32.gmra.mxu0 %v3697
        %v4630 = vpop.f32.mrf.mxu0
        %v4631 = vadd.f32 %v4506, %v4630
        %4632 = vmatmul.f32.gmra.mxu0 %v3706
        %v4633 = vpop.f32.mrf.mxu0
        %v4634 = vadd.f32 %v4509, %v4633
        %4635 = vmatmul.f32.gmra.mxu0 %v3715
        %v4636 = vpop.f32.mrf.mxu0
        %v4637 = vadd.f32 %v4512, %v4636
        %4638 = vmatmul.f32.gmra.mxu0 %v3724
        %v4639 = vpop.f32.mrf.mxu0
        %v4640 = vadd.f32 %v4515, %v4639
        %4641 = vmatmul.f32.gmra.mxu0 %v3733
        %v4642 = vpop.f32.mrf.mxu0
        %v4643 = vadd.f32 %v4518, %v4642
        %4644 = vmatmul.f32.gmra.mxu0 %v3742
        %v4645 = vpop.f32.mrf.mxu0
        %v4646 = vadd.f32 %v4521, %v4645
        %4647 = vmatmul.f32.gmra.mxu0 %v3751
        %v4648 = vpop.f32.mrf.mxu0
        %v4649 = vadd.f32 %v4524, %v4648
        %4650 = vmatmul.f32.gmra.mxu0 %v3760
        %v4651 = vpop.f32.mrf.mxu0
        %v4652 = vadd.f32 %v4527, %v4651
        %4653 = vmatmul.f32.gmra.mxu0 %v3769
        %v4654 = vpop.f32.mrf.mxu0
        %v4655 = vadd.f32 %v4530, %v4654
        %4656 = vmatmul.f32.gmra.mxu0 %v3778
        %v4657 = vpop.f32.mrf.mxu0
        %v4658 = vadd.f32 %v4533, %v4657
        %4659 = vmatmul.f32.gmra.mxu0 %v3787
        %v4660 = vpop.f32.mrf.mxu0
        %v4661 = vadd.f32 %v4536, %v4660
        %4662 = vmatmul.f32.gmra.mxu0 %v3796
        %v4663 = vpop.f32.mrf.mxu0
        %v4664 = vadd.f32 %v4539, %v4663
        %4665 = vmatmul.f32.gmra.mxu0 %v3805
        %v4666 = vpop.f32.mrf.mxu0
        %v4667 = vadd.f32 %v4542, %v4666
        %4668 = vmatmul.f32.gmra.mxu0 %v3814
        %v4669 = vpop.f32.mrf.mxu0
        %v4670 = vadd.f32 %v4545, %v4669
        %4671 = vmatmul.f32.gmra.mxu0 %v3823
        %v4672 = vpop.f32.mrf.mxu0
        %v4673 = vadd.f32 %v4548, %v4672
        %4674 = vmatmul.f32.gmra.mxu0 %v3832
        %v4675 = vpop.f32.mrf.mxu0
        %v4676 = vadd.f32 %v4551, %v4675
        %4677 = vmatmul.f32.gmra.mxu0 %v3841
        %v4678 = vpop.f32.mrf.mxu0
        %v4679 = vadd.f32 %v4554, %v4678
        %4680 = vmatmul.f32.gmra.mxu0 %v3850
        %v4681 = vpop.f32.mrf.mxu0
        %v4682 = vadd.f32 %v4557, %v4681
        %4683 = vmatmul.f32.gmra.mxu0 %v3859
        %v4684 = vpop.f32.mrf.mxu0
        %v4685 = vadd.f32 %v4560, %v4684
        %4686 = vmatmul.f32.gmra.mxu0 %v3868
        %v4687 = vpop.f32.mrf.mxu0
        %v4688 = vadd.f32 %v4563, %v4687
        %4689 = vmatmul.f32.gmra.mxu0 %v3877
        %v4690 = vpop.f32.mrf.mxu0
        %v4691 = vadd.f32 %v4566, %v4690
        %4692 = vmatmul.f32.gmra.mxu0 %v3886
        %v4693 = vpop.f32.mrf.mxu0
        %v4694 = vadd.f32 %v4569, %v4693
        %4695 = vmatmul.f32.gmra.mxu0 %v3895
        %v4696 = vpop.f32.mrf.mxu0
        %v4697 = vadd.f32 %v4572, %v4696
        %4698 = vmatmul.f32.gmra.mxu0 %v3904
        %v4699 = vpop.f32.mrf.mxu0
        %v4700 = vadd.f32 %v4575, %v4699
        %4701 = vmatmul.f32.gmra.mxu0 %v3913
        %v4702 = vpop.f32.mrf.mxu0
        %v4703 = vadd.f32 %v4578, %v4702
        %4704 = vmatmul.f32.gmra.mxu0 %v3922
        %v4705 = vpop.f32.mrf.mxu0
        %v4706 = vadd.f32 %v4581, %v4705
        %4707 = vmatmul.f32.gmra.mxu0 %v3931
        %v4708 = vpop.f32.mrf.mxu0
        %v4709 = vadd.f32 %v4584, %v4708
        %4710 = vmatmul.f32.gmra.mxu0 %v3940
        %v4711 = vpop.f32.mrf.mxu0
        %v4712 = vadd.f32 %v4587, %v4711
        %4713 = vdwg.mxu0
        %4714 = vmatpush.msra.mxu0 %v4040
        %4715 = vmatpush.msra.mxu0 %v4039
        %4716 = vmatpush.msra.mxu0 %v4038
        %4717 = vmatpush.msra.mxu0 %v4037
        %4718 = vmatpush.msra.mxu0 %v4036
        %4719 = vmatpush.msra.mxu0 %v4035
        %4720 = vmatpush.msra.mxu0 %v4034
        %4721 = vmatpush.msra.mxu0 %v4033
        %4722 = vmatpush.msra.mxu0 %v4032
        %4723 = vmatpush.msra.mxu0 %v4031
        %4724 = vmatpush.msra.mxu0 %v4030
        %4725 = vmatpush.msra.mxu0 %v4029
        %4726 = vmatpush.msra.mxu0 %v4028
        %4727 = vmatpush.msra.mxu0 %v4027
        %4728 = vmatpush.msra.mxu0 %v4026
        %4729 = vmatpush.msra.mxu0 %v4025
        %4730 = vmatmul.f32.gmra.mxu0 %v3626
        %v4731 = vpop.f32.mrf.mxu0
        %v4732 = vadd.f32 %v4607, %v4731
        %4733 = vmatmul.f32.gmra.mxu0 %v3635
        %v4734 = vpop.f32.mrf.mxu0
        %v4735 = vadd.f32 %v4610, %v4734
        %4736 = vmatmul.f32.gmra.mxu0 %v3644
        %v4737 = vpop.f32.mrf.mxu0
        %v4738 = vadd.f32 %v4613, %v4737
        %4739 = vmatmul.f32.gmra.mxu0 %v3653
        %v4740 = vpop.f32.mrf.mxu0
        %v4741 = vadd.f32 %v4616, %v4740
        %4742 = vmatmul.f32.gmra.mxu0 %v3662
        %v4743 = vpop.f32.mrf.mxu0
        %v4744 = vadd.f32 %v4619, %v4743
        %4745 = vmatmul.f32.gmra.mxu0 %v3671
        %v4746 = vpop.f32.mrf.mxu0
        %v4747 = vadd.f32 %v4622, %v4746
        %4748 = vmatmul.f32.gmra.mxu0 %v3680
        %v4749 = vpop.f32.mrf.mxu0
        %v4750 = vadd.f32 %v4625, %v4749
        %4751 = vmatmul.f32.gmra.mxu0 %v3689
        %v4752 = vpop.f32.mrf.mxu0
        %v4753 = vadd.f32 %v4628, %v4752
        %4754 = vmatmul.f32.gmra.mxu0 %v3698
        %v4755 = vpop.f32.mrf.mxu0
        %v4756 = vadd.f32 %v4631, %v4755
        %4757 = vmatmul.f32.gmra.mxu0 %v3707
        %v4758 = vpop.f32.mrf.mxu0
        %v4759 = vadd.f32 %v4634, %v4758
        %4760 = vmatmul.f32.gmra.mxu0 %v3716
        %v4761 = vpop.f32.mrf.mxu0
        %v4762 = vadd.f32 %v4637, %v4761
        %4763 = vmatmul.f32.gmra.mxu0 %v3725
        %v4764 = vpop.f32.mrf.mxu0
        %v4765 = vadd.f32 %v4640, %v4764
        %4766 = vmatmul.f32.gmra.mxu0 %v3734
        %v4767 = vpop.f32.mrf.mxu0
        %v4768 = vadd.f32 %v4643, %v4767
        %4769 = vmatmul.f32.gmra.mxu0 %v3743
        %v4770 = vpop.f32.mrf.mxu0
        %v4771 = vadd.f32 %v4646, %v4770
        %4772 = vmatmul.f32.gmra.mxu0 %v3752
        %v4773 = vpop.f32.mrf.mxu0
        %v4774 = vadd.f32 %v4649, %v4773
        %4775 = vmatmul.f32.gmra.mxu0 %v3761
        %v4776 = vpop.f32.mrf.mxu0
        %v4777 = vadd.f32 %v4652, %v4776
        %4778 = vmatmul.f32.gmra.mxu0 %v3770
        %v4779 = vpop.f32.mrf.mxu0
        %v4780 = vadd.f32 %v4655, %v4779
        %4781 = vmatmul.f32.gmra.mxu0 %v3779
        %v4782 = vpop.f32.mrf.mxu0
        %v4783 = vadd.f32 %v4658, %v4782
        %4784 = vmatmul.f32.gmra.mxu0 %v3788
        %v4785 = vpop.f32.mrf.mxu0
        %v4786 = vadd.f32 %v4661, %v4785
        %4787 = vmatmul.f32.gmra.mxu0 %v3797
        %v4788 = vpop.f32.mrf.mxu0
        %v4789 = vadd.f32 %v4664, %v4788
        %4790 = vmatmul.f32.gmra.mxu0 %v3806
        %v4791 = vpop.f32.mrf.mxu0
        %v4792 = vadd.f32 %v4667, %v4791
        %4793 = vmatmul.f32.gmra.mxu0 %v3815
        %v4794 = vpop.f32.mrf.mxu0
        %v4795 = vadd.f32 %v4670, %v4794
        %4796 = vmatmul.f32.gmra.mxu0 %v3824
        %v4797 = vpop.f32.mrf.mxu0
        %v4798 = vadd.f32 %v4673, %v4797
        %4799 = vmatmul.f32.gmra.mxu0 %v3833
        %v4800 = vpop.f32.mrf.mxu0
        %v4801 = vadd.f32 %v4676, %v4800
        %4802 = vmatmul.f32.gmra.mxu0 %v3842
        %v4803 = vpop.f32.mrf.mxu0
        %v4804 = vadd.f32 %v4679, %v4803
        %4805 = vmatmul.f32.gmra.mxu0 %v3851
        %v4806 = vpop.f32.mrf.mxu0
        %v4807 = vadd.f32 %v4682, %v4806
        %4808 = vmatmul.f32.gmra.mxu0 %v3860
        %v4809 = vpop.f32.mrf.mxu0
        %v4810 = vadd.f32 %v4685, %v4809
        %4811 = vmatmul.f32.gmra.mxu0 %v3869
        %v4812 = vpop.f32.mrf.mxu0
        %v4813 = vadd.f32 %v4688, %v4812
        %4814 = vmatmul.f32.gmra.mxu0 %v3878
        %v4815 = vpop.f32.mrf.mxu0
        %v4816 = vadd.f32 %v4691, %v4815
        %4817 = vmatmul.f32.gmra.mxu0 %v3887
        %v4818 = vpop.f32.mrf.mxu0
        %v4819 = vadd.f32 %v4694, %v4818
        %4820 = vmatmul.f32.gmra.mxu0 %v3896
        %v4821 = vpop.f32.mrf.mxu0
        %v4822 = vadd.f32 %v4697, %v4821
        %4823 = vmatmul.f32.gmra.mxu0 %v3905
        %v4824 = vpop.f32.mrf.mxu0
        %v4825 = vadd.f32 %v4700, %v4824
        %4826 = vmatmul.f32.gmra.mxu0 %v3914
        %v4827 = vpop.f32.mrf.mxu0
        %v4828 = vadd.f32 %v4703, %v4827
        %4829 = vmatmul.f32.gmra.mxu0 %v3923
        %v4830 = vpop.f32.mrf.mxu0
        %v4831 = vadd.f32 %v4706, %v4830
        %4832 = vmatmul.f32.gmra.mxu0 %v3932
        %v4833 = vpop.f32.mrf.mxu0
        %v4834 = vadd.f32 %v4709, %v4833
        %4835 = vmatmul.f32.gmra.mxu0 %v3941
        %v4836 = vpop.f32.mrf.mxu0
        %v4837 = vadd.f32 %v4712, %v4836
        %4838 = vdwg.mxu0
        %4839 = vmatpush.msra.mxu0 %v4056
        %4840 = vmatpush.msra.mxu0 %v4055
        %4841 = vmatpush.msra.mxu0 %v4054
        %4842 = vmatpush.msra.mxu0 %v4053
        %4843 = vmatpush.msra.mxu0 %v4052
        %4844 = vmatpush.msra.mxu0 %v4051
        %4845 = vmatpush.msra.mxu0 %v4050
        %4846 = vmatpush.msra.mxu0 %v4049
        %4847 = vmatpush.msra.mxu0 %v4048
        %4848 = vmatpush.msra.mxu0 %v4047
        %4849 = vmatpush.msra.mxu0 %v4046
        %4850 = vmatpush.msra.mxu0 %v4045
        %4851 = vmatpush.msra.mxu0 %v4044
        %4852 = vmatpush.msra.mxu0 %v4043
        %4853 = vmatpush.msra.mxu0 %v4042
        %4854 = vmatpush.msra.mxu0 %v4041
        %4855 = vmatmul.f32.gmra.mxu0 %v3627
        %v4856 = vpop.f32.mrf.mxu0
        %v4857 = vadd.f32 %v4732, %v4856
        %4858 = vmatmul.f32.gmra.mxu0 %v3636
        %v4859 = vpop.f32.mrf.mxu0
        %v4860 = vadd.f32 %v4735, %v4859
        %4861 = vmatmul.f32.gmra.mxu0 %v3645
        %v4862 = vpop.f32.mrf.mxu0
        %v4863 = vadd.f32 %v4738, %v4862
        %4864 = vmatmul.f32.gmra.mxu0 %v3654
        %v4865 = vpop.f32.mrf.mxu0
        %v4866 = vadd.f32 %v4741, %v4865
        %4867 = vmatmul.f32.gmra.mxu0 %v3663
        %v4868 = vpop.f32.mrf.mxu0
        %v4869 = vadd.f32 %v4744, %v4868
        %4870 = vmatmul.f32.gmra.mxu0 %v3672
        %v4871 = vpop.f32.mrf.mxu0
        %v4872 = vadd.f32 %v4747, %v4871
        %4873 = vmatmul.f32.gmra.mxu0 %v3681
        %v4874 = vpop.f32.mrf.mxu0
        %v4875 = vadd.f32 %v4750, %v4874
        %4876 = vmatmul.f32.gmra.mxu0 %v3690
        %v4877 = vpop.f32.mrf.mxu0
        %v4878 = vadd.f32 %v4753, %v4877
        %4879 = vmatmul.f32.gmra.mxu0 %v3699
        %v4880 = vpop.f32.mrf.mxu0
        %v4881 = vadd.f32 %v4756, %v4880
        %4882 = vmatmul.f32.gmra.mxu0 %v3708
        %v4883 = vpop.f32.mrf.mxu0
        %v4884 = vadd.f32 %v4759, %v4883
        %4885 = vmatmul.f32.gmra.mxu0 %v3717
        %v4886 = vpop.f32.mrf.mxu0
        %v4887 = vadd.f32 %v4762, %v4886
        %4888 = vmatmul.f32.gmra.mxu0 %v3726
        %v4889 = vpop.f32.mrf.mxu0
        %v4890 = vadd.f32 %v4765, %v4889
        %4891 = vmatmul.f32.gmra.mxu0 %v3735
        %v4892 = vpop.f32.mrf.mxu0
        %v4893 = vadd.f32 %v4768, %v4892
        %4894 = vmatmul.f32.gmra.mxu0 %v3744
        %v4895 = vpop.f32.mrf.mxu0
        %v4896 = vadd.f32 %v4771, %v4895
        %4897 = vmatmul.f32.gmra.mxu0 %v3753
        %v4898 = vpop.f32.mrf.mxu0
        %v4899 = vadd.f32 %v4774, %v4898
        %4900 = vmatmul.f32.gmra.mxu0 %v3762
        %v4901 = vpop.f32.mrf.mxu0
        %v4902 = vadd.f32 %v4777, %v4901
        %4903 = vmatmul.f32.gmra.mxu0 %v3771
        %v4904 = vpop.f32.mrf.mxu0
        %v4905 = vadd.f32 %v4780, %v4904
        %4906 = vmatmul.f32.gmra.mxu0 %v3780
        %v4907 = vpop.f32.mrf.mxu0
        %v4908 = vadd.f32 %v4783, %v4907
        %4909 = vmatmul.f32.gmra.mxu0 %v3789
        %v4910 = vpop.f32.mrf.mxu0
        %v4911 = vadd.f32 %v4786, %v4910
        %4912 = vmatmul.f32.gmra.mxu0 %v3798
        %v4913 = vpop.f32.mrf.mxu0
        %v4914 = vadd.f32 %v4789, %v4913
        %4915 = vmatmul.f32.gmra.mxu0 %v3807
        %v4916 = vpop.f32.mrf.mxu0
        %v4917 = vadd.f32 %v4792, %v4916
        %4918 = vmatmul.f32.gmra.mxu0 %v3816
        %v4919 = vpop.f32.mrf.mxu0
        %v4920 = vadd.f32 %v4795, %v4919
        %4921 = vmatmul.f32.gmra.mxu0 %v3825
        %v4922 = vpop.f32.mrf.mxu0
        %v4923 = vadd.f32 %v4798, %v4922
        %4924 = vmatmul.f32.gmra.mxu0 %v3834
        %v4925 = vpop.f32.mrf.mxu0
        %v4926 = vadd.f32 %v4801, %v4925
        %4927 = vmatmul.f32.gmra.mxu0 %v3843
        %v4928 = vpop.f32.mrf.mxu0
        %v4929 = vadd.f32 %v4804, %v4928
        %4930 = vmatmul.f32.gmra.mxu0 %v3852
        %v4931 = vpop.f32.mrf.mxu0
        %v4932 = vadd.f32 %v4807, %v4931
        %4933 = vmatmul.f32.gmra.mxu0 %v3861
        %v4934 = vpop.f32.mrf.mxu0
        %v4935 = vadd.f32 %v4810, %v4934
        %4936 = vmatmul.f32.gmra.mxu0 %v3870
        %v4937 = vpop.f32.mrf.mxu0
        %v4938 = vadd.f32 %v4813, %v4937
        %4939 = vmatmul.f32.gmra.mxu0 %v3879
        %v4940 = vpop.f32.mrf.mxu0
        %v4941 = vadd.f32 %v4816, %v4940
        %4942 = vmatmul.f32.gmra.mxu0 %v3888
        %v4943 = vpop.f32.mrf.mxu0
        %v4944 = vadd.f32 %v4819, %v4943
        %4945 = vmatmul.f32.gmra.mxu0 %v3897
        %v4946 = vpop.f32.mrf.mxu0
        %v4947 = vadd.f32 %v4822, %v4946
        %4948 = vmatmul.f32.gmra.mxu0 %v3906
        %v4949 = vpop.f32.mrf.mxu0
        %v4950 = vadd.f32 %v4825, %v4949
        %4951 = vmatmul.f32.gmra.mxu0 %v3915
        %v4952 = vpop.f32.mrf.mxu0
        %v4953 = vadd.f32 %v4828, %v4952
        %4954 = vmatmul.f32.gmra.mxu0 %v3924
        %v4955 = vpop.f32.mrf.mxu0
        %v4956 = vadd.f32 %v4831, %v4955
        %4957 = vmatmul.f32.gmra.mxu0 %v3933
        %v4958 = vpop.f32.mrf.mxu0
        %v4959 = vadd.f32 %v4834, %v4958
        %4960 = vmatmul.f32.gmra.mxu0 %v3942
        %v4961 = vpop.f32.mrf.mxu0
        %v4962 = vadd.f32 %v4837, %v4961
        %4963 = vdwg.mxu0
        %4964 = vmatpush.msra.mxu0 %v4072
        %4965 = vmatpush.msra.mxu0 %v4071
        %4966 = vmatpush.msra.mxu0 %v4070
        %4967 = vmatpush.msra.mxu0 %v4069
        %4968 = vmatpush.msra.mxu0 %v4068
        %4969 = vmatpush.msra.mxu0 %v4067
        %4970 = vmatpush.msra.mxu0 %v4066
        %4971 = vmatpush.msra.mxu0 %v4065
        %4972 = vmatpush.msra.mxu0 %v4064
        %4973 = vmatpush.msra.mxu0 %v4063
        %4974 = vmatpush.msra.mxu0 %v4062
        %4975 = vmatpush.msra.mxu0 %v4061
        %4976 = vmatpush.msra.mxu0 %v4060
        %4977 = vmatpush.msra.mxu0 %v4059
        %4978 = vmatpush.msra.mxu0 %v4058
        %4979 = vmatpush.msra.mxu0 %v4057
        %4980 = vmatmul.f32.gmra.mxu0 %v3628
        %v4981 = vpop.f32.mrf.mxu0
        %v4982 = vadd.f32 %v4857, %v4981
        %4983 = vmatmul.f32.gmra.mxu0 %v3637
        %v4984 = vpop.f32.mrf.mxu0
        %v4985 = vadd.f32 %v4860, %v4984
        %4986 = vmatmul.f32.gmra.mxu0 %v3646
        %v4987 = vpop.f32.mrf.mxu0
        %v4988 = vadd.f32 %v4863, %v4987
        %4989 = vmatmul.f32.gmra.mxu0 %v3655
        %v4990 = vpop.f32.mrf.mxu0
        %v4991 = vadd.f32 %v4866, %v4990
        %4992 = vmatmul.f32.gmra.mxu0 %v3664
        %v4993 = vpop.f32.mrf.mxu0
        %v4994 = vadd.f32 %v4869, %v4993
        %4995 = vmatmul.f32.gmra.mxu0 %v3673
        %v4996 = vpop.f32.mrf.mxu0
        %v4997 = vadd.f32 %v4872, %v4996
        %4998 = vmatmul.f32.gmra.mxu0 %v3682
        %v4999 = vpop.f32.mrf.mxu0
        %v5000 = vadd.f32 %v4875, %v4999
        %5001 = vmatmul.f32.gmra.mxu0 %v3691
        %v5002 = vpop.f32.mrf.mxu0
        %v5003 = vadd.f32 %v4878, %v5002
        %5004 = vmatmul.f32.gmra.mxu0 %v3700
        %v5005 = vpop.f32.mrf.mxu0
        %v5006 = vadd.f32 %v4881, %v5005
        %5007 = vmatmul.f32.gmra.mxu0 %v3709
        %v5008 = vpop.f32.mrf.mxu0
        %v5009 = vadd.f32 %v4884, %v5008
        %5010 = vmatmul.f32.gmra.mxu0 %v3718
        %v5011 = vpop.f32.mrf.mxu0
        %v5012 = vadd.f32 %v4887, %v5011
        %5013 = vmatmul.f32.gmra.mxu0 %v3727
        %v5014 = vpop.f32.mrf.mxu0
        %v5015 = vadd.f32 %v4890, %v5014
        %5016 = vmatmul.f32.gmra.mxu0 %v3736
        %v5017 = vpop.f32.mrf.mxu0
        %v5018 = vadd.f32 %v4893, %v5017
        %5019 = vmatmul.f32.gmra.mxu0 %v3745
        %v5020 = vpop.f32.mrf.mxu0
        %v5021 = vadd.f32 %v4896, %v5020
        %5022 = vmatmul.f32.gmra.mxu0 %v3754
        %v5023 = vpop.f32.mrf.mxu0
        %v5024 = vadd.f32 %v4899, %v5023
        %5025 = vmatmul.f32.gmra.mxu0 %v3763
        %v5026 = vpop.f32.mrf.mxu0
        %v5027 = vadd.f32 %v4902, %v5026
        %5028 = vmatmul.f32.gmra.mxu0 %v3772
        %v5029 = vpop.f32.mrf.mxu0
        %v5030 = vadd.f32 %v4905, %v5029
        %5031 = vmatmul.f32.gmra.mxu0 %v3781
        %v5032 = vpop.f32.mrf.mxu0
        %v5033 = vadd.f32 %v4908, %v5032
        %5034 = vmatmul.f32.gmra.mxu0 %v3790
        %v5035 = vpop.f32.mrf.mxu0
        %v5036 = vadd.f32 %v4911, %v5035
        %5037 = vmatmul.f32.gmra.mxu0 %v3799
        %v5038 = vpop.f32.mrf.mxu0
        %v5039 = vadd.f32 %v4914, %v5038
        %5040 = vmatmul.f32.gmra.mxu0 %v3808
        %v5041 = vpop.f32.mrf.mxu0
        %v5042 = vadd.f32 %v4917, %v5041
        %5043 = vmatmul.f32.gmra.mxu0 %v3817
        %v5044 = vpop.f32.mrf.mxu0
        %v5045 = vadd.f32 %v4920, %v5044
        %5046 = vmatmul.f32.gmra.mxu0 %v3826
        %v5047 = vpop.f32.mrf.mxu0
        %v5048 = vadd.f32 %v4923, %v5047
        %5049 = vmatmul.f32.gmra.mxu0 %v3835
        %v5050 = vpop.f32.mrf.mxu0
        %v5051 = vadd.f32 %v4926, %v5050
        %5052 = vmatmul.f32.gmra.mxu0 %v3844
        %v5053 = vpop.f32.mrf.mxu0
        %v5054 = vadd.f32 %v4929, %v5053
        %5055 = vmatmul.f32.gmra.mxu0 %v3853
        %v5056 = vpop.f32.mrf.mxu0
        %v5057 = vadd.f32 %v4932, %v5056
        %5058 = vmatmul.f32.gmra.mxu0 %v3862
        %v5059 = vpop.f32.mrf.mxu0
        %v5060 = vadd.f32 %v4935, %v5059
        %5061 = vmatmul.f32.gmra.mxu0 %v3871
        %v5062 = vpop.f32.mrf.mxu0
        %v5063 = vadd.f32 %v4938, %v5062
        %5064 = vmatmul.f32.gmra.mxu0 %v3880
        %v5065 = vpop.f32.mrf.mxu0
        %v5066 = vadd.f32 %v4941, %v5065
        %5067 = vmatmul.f32.gmra.mxu0 %v3889
        %v5068 = vpop.f32.mrf.mxu0
        %v5069 = vadd.f32 %v4944, %v5068
        %5070 = vmatmul.f32.gmra.mxu0 %v3898
        %v5071 = vpop.f32.mrf.mxu0
        %v5072 = vadd.f32 %v4947, %v5071
        %5073 = vmatmul.f32.gmra.mxu0 %v3907
        %v5074 = vpop.f32.mrf.mxu0
        %v5075 = vadd.f32 %v4950, %v5074
        %5076 = vmatmul.f32.gmra.mxu0 %v3916
        %v5077 = vpop.f32.mrf.mxu0
        %v5078 = vadd.f32 %v4953, %v5077
        %5079 = vmatmul.f32.gmra.mxu0 %v3925
        %v5080 = vpop.f32.mrf.mxu0
        %v5081 = vadd.f32 %v4956, %v5080
        %5082 = vmatmul.f32.gmra.mxu0 %v3934
        %v5083 = vpop.f32.mrf.mxu0
        %v5084 = vadd.f32 %v4959, %v5083
        %5085 = vmatmul.f32.gmra.mxu0 %v3943
        %v5086 = vpop.f32.mrf.mxu0
        %v5087 = vadd.f32 %v4962, %v5086
        %5088 = vdwg.mxu0
        %5089 = vmatpush.msra.mxu0 %v4088
        %5090 = vmatpush.msra.mxu0 %v4087
        %5091 = vmatpush.msra.mxu0 %v4086
        %5092 = vmatpush.msra.mxu0 %v4085
        %5093 = vmatpush.msra.mxu0 %v4084
        %5094 = vmatpush.msra.mxu0 %v4083
        %5095 = vmatpush.msra.mxu0 %v4082
        %5096 = vmatpush.msra.mxu0 %v4081
        %5097 = vmatpush.msra.mxu0 %v4080
        %5098 = vmatpush.msra.mxu0 %v4079
        %5099 = vmatpush.msra.mxu0 %v4078
        %5100 = vmatpush.msra.mxu0 %v4077
        %5101 = vmatpush.msra.mxu0 %v4076
        %5102 = vmatpush.msra.mxu0 %v4075
        %5103 = vmatpush.msra.mxu0 %v4074
        %5104 = vmatpush.msra.mxu0 %v4073
        %5105 = vmatmul.f32.gmra.mxu0 %v3629
        %v5106 = vpop.f32.mrf.mxu0
        %v5107 = vadd.f32 %v4982, %v5106
        %5108 = vmatmul.f32.gmra.mxu0 %v3638
        %v5109 = vpop.f32.mrf.mxu0
        %v5110 = vadd.f32 %v4985, %v5109
        %5111 = vmatmul.f32.gmra.mxu0 %v3647
        %v5112 = vpop.f32.mrf.mxu0
        %v5113 = vadd.f32 %v4988, %v5112
        %5114 = vmatmul.f32.gmra.mxu0 %v3656
        %v5115 = vpop.f32.mrf.mxu0
        %v5116 = vadd.f32 %v4991, %v5115
        %5117 = vmatmul.f32.gmra.mxu0 %v3665
        %v5118 = vpop.f32.mrf.mxu0
        %v5119 = vadd.f32 %v4994, %v5118
        %5120 = vmatmul.f32.gmra.mxu0 %v3674
        %v5121 = vpop.f32.mrf.mxu0
        %v5122 = vadd.f32 %v4997, %v5121
        %5123 = vmatmul.f32.gmra.mxu0 %v3683
        %v5124 = vpop.f32.mrf.mxu0
        %v5125 = vadd.f32 %v5000, %v5124
        %5126 = vmatmul.f32.gmra.mxu0 %v3692
        %v5127 = vpop.f32.mrf.mxu0
        %v5128 = vadd.f32 %v5003, %v5127
        %5129 = vmatmul.f32.gmra.mxu0 %v3701
        %v5130 = vpop.f32.mrf.mxu0
        %v5131 = vadd.f32 %v5006, %v5130
        %5132 = vmatmul.f32.gmra.mxu0 %v3710
        %v5133 = vpop.f32.mrf.mxu0
        %v5134 = vadd.f32 %v5009, %v5133
        %5135 = vmatmul.f32.gmra.mxu0 %v3719
        %v5136 = vpop.f32.mrf.mxu0
        %v5137 = vadd.f32 %v5012, %v5136
        %5138 = vmatmul.f32.gmra.mxu0 %v3728
        %v5139 = vpop.f32.mrf.mxu0
        %v5140 = vadd.f32 %v5015, %v5139
        %5141 = vmatmul.f32.gmra.mxu0 %v3737
        %v5142 = vpop.f32.mrf.mxu0
        %v5143 = vadd.f32 %v5018, %v5142
        %5144 = vmatmul.f32.gmra.mxu0 %v3746
        %v5145 = vpop.f32.mrf.mxu0
        %v5146 = vadd.f32 %v5021, %v5145
        %5147 = vmatmul.f32.gmra.mxu0 %v3755
        %v5148 = vpop.f32.mrf.mxu0
        %v5149 = vadd.f32 %v5024, %v5148
        %5150 = vmatmul.f32.gmra.mxu0 %v3764
        %v5151 = vpop.f32.mrf.mxu0
        %v5152 = vadd.f32 %v5027, %v5151
        %5153 = vmatmul.f32.gmra.mxu0 %v3773
        %v5154 = vpop.f32.mrf.mxu0
        %v5155 = vadd.f32 %v5030, %v5154
        %5156 = vmatmul.f32.gmra.mxu0 %v3782
        %v5157 = vpop.f32.mrf.mxu0
        %v5158 = vadd.f32 %v5033, %v5157
        %5159 = vmatmul.f32.gmra.mxu0 %v3791
        %v5160 = vpop.f32.mrf.mxu0
        %v5161 = vadd.f32 %v5036, %v5160
        %5162 = vmatmul.f32.gmra.mxu0 %v3800
        %v5163 = vpop.f32.mrf.mxu0
        %v5164 = vadd.f32 %v5039, %v5163
        %5165 = vmatmul.f32.gmra.mxu0 %v3809
        %v5166 = vpop.f32.mrf.mxu0
        %v5167 = vadd.f32 %v5042, %v5166
        %5168 = vmatmul.f32.gmra.mxu0 %v3818
        %v5169 = vpop.f32.mrf.mxu0
        %v5170 = vadd.f32 %v5045, %v5169
        %5171 = vmatmul.f32.gmra.mxu0 %v3827
        %v5172 = vpop.f32.mrf.mxu0
        %v5173 = vadd.f32 %v5048, %v5172
        %5174 = vmatmul.f32.gmra.mxu0 %v3836
        %v5175 = vpop.f32.mrf.mxu0
        %v5176 = vadd.f32 %v5051, %v5175
        %5177 = vmatmul.f32.gmra.mxu0 %v3845
        %v5178 = vpop.f32.mrf.mxu0
        %v5179 = vadd.f32 %v5054, %v5178
        %5180 = vmatmul.f32.gmra.mxu0 %v3854
        %v5181 = vpop.f32.mrf.mxu0
        %v5182 = vadd.f32 %v5057, %v5181
        %5183 = vmatmul.f32.gmra.mxu0 %v3863
        %v5184 = vpop.f32.mrf.mxu0
        %v5185 = vadd.f32 %v5060, %v5184
        %5186 = vmatmul.f32.gmra.mxu0 %v3872
        %v5187 = vpop.f32.mrf.mxu0
        %v5188 = vadd.f32 %v5063, %v5187
        %5189 = vmatmul.f32.gmra.mxu0 %v3881
        %v5190 = vpop.f32.mrf.mxu0
        %v5191 = vadd.f32 %v5066, %v5190
        %5192 = vmatmul.f32.gmra.mxu0 %v3890
        %v5193 = vpop.f32.mrf.mxu0
        %v5194 = vadd.f32 %v5069, %v5193
        %5195 = vmatmul.f32.gmra.mxu0 %v3899
        %v5196 = vpop.f32.mrf.mxu0
        %v5197 = vadd.f32 %v5072, %v5196
        %5198 = vmatmul.f32.gmra.mxu0 %v3908
        %v5199 = vpop.f32.mrf.mxu0
        %v5200 = vadd.f32 %v5075, %v5199
        %5201 = vmatmul.f32.gmra.mxu0 %v3917
        %v5202 = vpop.f32.mrf.mxu0
        %v5203 = vadd.f32 %v5078, %v5202
        %5204 = vmatmul.f32.gmra.mxu0 %v3926
        %v5205 = vpop.f32.mrf.mxu0
        %v5206 = vadd.f32 %v5081, %v5205
        %5207 = vmatmul.f32.gmra.mxu0 %v3935
        %v5208 = vpop.f32.mrf.mxu0
        %v5209 = vadd.f32 %v5084, %v5208
        %5210 = vmatmul.f32.gmra.mxu0 %v3944
        %v5211 = vpop.f32.mrf.mxu0
        %v5212 = vadd.f32 %v5087, %v5211
        %5213 = vdwg.mxu0
        %v5214 = vld [vmem:[%s5] sm:$0x1]
        %v5216 = vperm.slane %v5214, 0
        %v5218 = vmul.f32 %v5107, %v5216
        %v5219 = vmul.f32 %v5110, %v5216
        %v5220 = vmul.f32 %v5113, %v5216
        %v5221 = vmul.f32 %v5116, %v5216
        %v5222 = vmul.f32 %v5119, %v5216
        %v5223 = vmul.f32 %v5122, %v5216
        %v5224 = vmul.f32 %v5125, %v5216
        %v5225 = vmul.f32 %v5128, %v5216
        %v5226 = vmul.f32 %v5131, %v5216
        %v5227 = vmul.f32 %v5134, %v5216
        %v5228 = vmul.f32 %v5137, %v5216
        %v5229 = vmul.f32 %v5140, %v5216
        %v5230 = vmul.f32 %v5143, %v5216
        %v5231 = vmul.f32 %v5146, %v5216
        %v5232 = vmul.f32 %v5149, %v5216
        %v5233 = vmul.f32 %v5152, %v5216
        %v5234 = vmul.f32 %v5155, %v5216
        %v5235 = vmul.f32 %v5158, %v5216
        %v5236 = vmul.f32 %v5161, %v5216
        %v5237 = vmul.f32 %v5164, %v5216
        %v5238 = vmul.f32 %v5167, %v5216
        %v5239 = vmul.f32 %v5170, %v5216
        %v5240 = vmul.f32 %v5173, %v5216
        %v5241 = vmul.f32 %v5176, %v5216
        %v5242 = vmul.f32 %v5179, %v5216
        %v5243 = vmul.f32 %v5182, %v5216
        %v5244 = vmul.f32 %v5185, %v5216
        %v5245 = vmul.f32 %v5188, %v5216
        %v5246 = vmul.f32 %v5191, %v5216
        %v5247 = vmul.f32 %v5194, %v5216
        %v5248 = vmul.f32 %v5197, %v5216
        %v5249 = vmul.f32 %v5200, %v5216
        %v5250 = vmul.f32 %v5203, %v5216
        %v5251 = vmul.f32 %v5206, %v5216
        %v5252 = vmul.f32 %v5209, %v5216
        %v5253 = vmul.f32 %v5212, %v5216
        %v5254 = vld [vmem:[%s6] sm:$0x1]
        %v5256 = vperm.slane %v5254, 0
        %v5258 = vadd.f32 %v5218, %v5256
        %v5259 = vadd.f32 %v5219, %v5256
        %v5260 = vadd.f32 %v5220, %v5256
        %v5261 = vadd.f32 %v5221, %v5256
        %v5262 = vadd.f32 %v5222, %v5256
        %v5263 = vadd.f32 %v5223, %v5256
        %v5264 = vadd.f32 %v5224, %v5256
        %v5265 = vadd.f32 %v5225, %v5256
        %v5266 = vadd.f32 %v5226, %v5256
        %v5267 = vadd.f32 %v5227, %v5256
        %v5268 = vadd.f32 %v5228, %v5256
        %v5269 = vadd.f32 %v5229, %v5256
        %v5270 = vadd.f32 %v5230, %v5256
        %v5271 = vadd.f32 %v5231, %v5256
        %v5272 = vadd.f32 %v5232, %v5256
        %v5273 = vadd.f32 %v5233, %v5256
        %v5274 = vadd.f32 %v5234, %v5256
        %v5275 = vadd.f32 %v5235, %v5256
        %v5276 = vadd.f32 %v5236, %v5256
        %v5277 = vadd.f32 %v5237, %v5256
        %v5278 = vadd.f32 %v5238, %v5256
        %v5279 = vadd.f32 %v5239, %v5256
        %v5280 = vadd.f32 %v5240, %v5256
        %v5281 = vadd.f32 %v5241, %v5256
        %v5282 = vadd.f32 %v5242, %v5256
        %v5283 = vadd.f32 %v5243, %v5256
        %v5284 = vadd.f32 %v5244, %v5256
        %v5285 = vadd.f32 %v5245, %v5256
        %v5286 = vadd.f32 %v5246, %v5256
        %v5287 = vadd.f32 %v5247, %v5256
        %v5288 = vadd.f32 %v5248, %v5256
        %v5289 = vadd.f32 %v5249, %v5256
        %v5290 = vadd.f32 %v5250, %v5256
        %v5291 = vadd.f32 %v5251, %v5256
        %v5292 = vadd.f32 %v5252, %v5256
        %v5293 = vadd.f32 %v5253, %v5256
        %v5294 = vld [vmem:[%s320 + $0x13] sm:$0xff]
        %v5295 = vld [vmem:[%s320 + $0x1b] sm:$0xff]
        %v5296 = vld [vmem:[%s320 + $0x23] sm:$0xff]
        %v5297 = vld [vmem:[%s320 + $0x2b] sm:$0xff]
        %v5298 = vld [vmem:[%s320 + $0x33] sm:$0xff]
        %v5299 = vld [vmem:[%s320 + $0x3b] sm:$0xff]
        %v5300 = vld [vmem:[%s320 + $0x43] sm:$0xff]
        %v5301 = vld [vmem:[%s320 + $0x4b] sm:$0xff]
        %v5302 = vld [vmem:[%s320 + $0x53] sm:$0xff]
        %v5303 = vld [vmem:[%s320 + $0x5b] sm:$0xff]
        %v5304 = vld [vmem:[%s320 + $0x63] sm:$0xff]
        %v5305 = vld [vmem:[%s320 + $0x6b] sm:$0xff]
        %v5306 = vld [vmem:[%s320 + $0x73] sm:$0xff]
        %v5307 = vld [vmem:[%s320 + $0x7b] sm:$0xff]
        %v5308 = vld [vmem:[%s320 + $0x83] sm:$0xff]
        %v5309 = vld [vmem:[%s320 + $0x8b] sm:$0xff]
        %v5310 = vld [vmem:[%s320 + $0x93] sm:$0xff]
        %v5311 = vld [vmem:[%s320 + $0x9b] sm:$0xff]
        %v5312 = vld [vmem:[%s320 + $0xa3] sm:$0xff]
        %v5313 = vld [vmem:[%s320 + $0xab] sm:$0xff]
        %v5314 = vld [vmem:[%s320 + $0xb3] sm:$0xff]
        %v5315 = vld [vmem:[%s320 + $0xbb] sm:$0xff]
        %v5316 = vld [vmem:[%s320 + $0xc3] sm:$0xff]
        %v5317 = vld [vmem:[%s320 + $0xcb] sm:$0xff]
        %v5318 = vld [vmem:[%s320 + $0xd3] sm:$0xff]
        %v5319 = vld [vmem:[%s320 + $0xdb] sm:$0xff]
        %v5320 = vld [vmem:[%s320 + $0xe3] sm:$0xff]
        %v5321 = vld [vmem:[%s320 + $0xeb] sm:$0xff]
        %v5322 = vld [vmem:[%s320 + $0xf3] sm:$0xff]
        %v5323 = vld [vmem:[%s320 + $0xfb] sm:$0xff]
        %v5324 = vld [vmem:[%s320 + $0x103] sm:$0xff]
        %v5325 = vld [vmem:[%s320 + $0x10b] sm:$0xff]
        %v5326 = vld [vmem:[%s320 + $0x113] sm:$0xff]
        %v5327 = vld [vmem:[%s320 + $0x11b] sm:$0xff]
        %v5328 = vld [vmem:[%s320 + $0x123] sm:$0xff]
        %v5329 = vld [vmem:[%s320 + $0x12b] sm:$0xff]
        %v5330 = vadd.f32 %v5258, %v5294
        %v5331 = vadd.f32 %v5259, %v5295
        %v5332 = vadd.f32 %v5260, %v5296
        %v5333 = vadd.f32 %v5261, %v5297
        %v5334 = vadd.f32 %v5262, %v5298
        %v5335 = vadd.f32 %v5263, %v5299
        %v5336 = vadd.f32 %v5264, %v5300
        %v5337 = vadd.f32 %v5265, %v5301
        %v5338 = vadd.f32 %v5266, %v5302
        %v5339 = vadd.f32 %v5267, %v5303
        %v5340 = vadd.f32 %v5268, %v5304
        %v5341 = vadd.f32 %v5269, %v5305
        %v5342 = vadd.f32 %v5270, %v5306
        %v5343 = vadd.f32 %v5271, %v5307
        %v5344 = vadd.f32 %v5272, %v5308
        %v5345 = vadd.f32 %v5273, %v5309
        %v5346 = vadd.f32 %v5274, %v5310
        %v5347 = vadd.f32 %v5275, %v5311
        %v5348 = vadd.f32 %v5276, %v5312
        %v5349 = vadd.f32 %v5277, %v5313
        %v5350 = vadd.f32 %v5278, %v5314
        %v5351 = vadd.f32 %v5279, %v5315
        %v5352 = vadd.f32 %v5280, %v5316
        %v5353 = vadd.f32 %v5281, %v5317
        %v5354 = vadd.f32 %v5282, %v5318
        %v5355 = vadd.f32 %v5283, %v5319
        %v5356 = vadd.f32 %v5284, %v5320
        %v5357 = vadd.f32 %v5285, %v5321
        %v5358 = vadd.f32 %v5286, %v5322
        %v5359 = vadd.f32 %v5287, %v5323
        %v5360 = vadd.f32 %v5288, %v5324
        %v5361 = vadd.f32 %v5289, %v5325
        %v5362 = vadd.f32 %v5290, %v5326
        %v5363 = vadd.f32 %v5291, %v5327
        %v5364 = vadd.f32 %v5292, %v5328
        %v5365 = vadd.f32 %v5293, %v5329
        %v5366 = vmax.f32 %v5330, 0.0
        %v5367 = vmax.f32 %v5331, 0.0
        %v5368 = vmax.f32 %v5332, 0.0
        %v5369 = vmax.f32 %v5333, 0.0
        %v5370 = vmax.f32 %v5334, 0.0
        %v5371 = vmax.f32 %v5335, 0.0
        %v5372 = vmax.f32 %v5336, 0.0
        %v5373 = vmax.f32 %v5337, 0.0
        %v5374 = vmax.f32 %v5338, 0.0
        %v5375 = vmax.f32 %v5339, 0.0
        %v5376 = vmax.f32 %v5340, 0.0
        %v5377 = vmax.f32 %v5341, 0.0
        %v5378 = vmax.f32 %v5342, 0.0
        %v5379 = vmax.f32 %v5343, 0.0
        %v5380 = vmax.f32 %v5344, 0.0
        %v5381 = vmax.f32 %v5345, 0.0
        %v5382 = vmax.f32 %v5346, 0.0
        %v5383 = vmax.f32 %v5347, 0.0
        %v5384 = vmax.f32 %v5348, 0.0
        %v5385 = vmax.f32 %v5349, 0.0
        %v5386 = vmax.f32 %v5350, 0.0
        %v5387 = vmax.f32 %v5351, 0.0
        %v5388 = vmax.f32 %v5352, 0.0
        %v5389 = vmax.f32 %v5353, 0.0
        %v5390 = vmax.f32 %v5354, 0.0
        %v5391 = vmax.f32 %v5355, 0.0
        %v5392 = vmax.f32 %v5356, 0.0
        %v5393 = vmax.f32 %v5357, 0.0
        %v5394 = vmax.f32 %v5358, 0.0
        %v5395 = vmax.f32 %v5359, 0.0
        %v5396 = vmax.f32 %v5360, 0.0
        %v5397 = vmax.f32 %v5361, 0.0
        %v5398 = vmax.f32 %v5362, 0.0
        %v5399 = vmax.f32 %v5363, 0.0
        %v5400 = vmax.f32 %v5364, 0.0
        %v5401 = vmax.f32 %v5365, 0.0
        %5402 = vst [vmem:[%s315] sm:$0xff] %v5366
        %5403 = vst [vmem:[%s315 + $0x8] sm:$0xff] %v5367
        %5404 = vst [vmem:[%s315 + $0x10] sm:$0xff] %v5368
        %5405 = vst [vmem:[%s315 + $0x18] sm:$0xff] %v5369
        %5406 = vst [vmem:[%s315 + $0x20] sm:$0xff] %v5370
        %5407 = vst [vmem:[%s315 + $0x28] sm:$0xff] %v5371
        %5408 = vst [vmem:[%s315 + $0x30] sm:$0xff] %v5372
        %5409 = vst [vmem:[%s315 + $0x38] sm:$0xff] %v5373
        %5410 = vst [vmem:[%s315 + $0x40] sm:$0xff] %v5374
        %5411 = vst [vmem:[%s315 + $0x48] sm:$0xff] %v5375
        %5412 = vst [vmem:[%s315 + $0x50] sm:$0xff] %v5376
        %5413 = vst [vmem:[%s315 + $0x58] sm:$0xff] %v5377
        %5414 = vst [vmem:[%s315 + $0x60] sm:$0xff] %v5378
        %5415 = vst [vmem:[%s315 + $0x68] sm:$0xff] %v5379
        %5416 = vst [vmem:[%s315 + $0x70] sm:$0xff] %v5380
        %5417 = vst [vmem:[%s315 + $0x78] sm:$0xff] %v5381
        %5418 = vst [vmem:[%s315 + $0x80] sm:$0xff] %v5382
        %5419 = vst [vmem:[%s315 + $0x88] sm:$0xff] %v5383
        %5420 = vst [vmem:[%s315 + $0x90] sm:$0xff] %v5384
        %5421 = vst [vmem:[%s315 + $0x98] sm:$0xff] %v5385
        %5422 = vst [vmem:[%s315 + $0xa0] sm:$0xff] %v5386
        %5423 = vst [vmem:[%s315 + $0xa8] sm:$0xff] %v5387
        %5424 = vst [vmem:[%s315 + $0xb0] sm:$0xff] %v5388
        %5425 = vst [vmem:[%s315 + $0xb8] sm:$0xff] %v5389
        %5426 = vst [vmem:[%s315 + $0xc0] sm:$0xff] %v5390
        %5427 = vst [vmem:[%s315 + $0xc8] sm:$0xff] %v5391
        %5428 = vst [vmem:[%s315 + $0xd0] sm:$0xff] %v5392
        %5429 = vst [vmem:[%s315 + $0xd8] sm:$0xff] %v5393
        %5430 = vst [vmem:[%s315 + $0xe0] sm:$0xff] %v5394
        %5431 = vst [vmem:[%s315 + $0xe8] sm:$0xff] %v5395
        %5432 = vst [vmem:[%s315 + $0xf0] sm:$0xff] %v5396
        %5433 = vst [vmem:[%s315 + $0xf8] sm:$0xff] %v5397
        %5434 = vst [vmem:[%s315 + $0x100] sm:$0xff] %v5398
        %5435 = vst [vmem:[%s315 + $0x108] sm:$0xff] %v5399
        %5436 = vst [vmem:[%s315 + $0x110] sm:$0xff] %v5400
        %5437 = vst [vmem:[%s315 + $0x118] sm:$0xff] %v5401
        %s5438 = sand.u32 %s204, 1
        %s5439 = scalar_lea.sflag [#allocation6], %s5438
        %s5440 = sand.u32 %s204, 1
        %s5441 = smul.addr %s5440, 288
        %s5442 = scalar_lea.vmem [#allocation7], %s5441
        // Predicated region
        $region57: #{tpu_custom_call.1} parent=51 // pred_check
          %p5443 = pneg %p214
        $region58: #{tpu_custom_call.1} parent=51 // pred_check_branch
          %5445 = sbr.rel (%p5443) target = $region60
        $region59: #{tpu_custom_call.1} parent=51 // pred_region
          %5447 = vsyncadd %s5439, 0
          %s5448 = smul.addr %s23, 36
          %s5449 = smul.addr %s5448, 8
          %s5450 = scalar_lea.hbm %s8, %s5449
          %s5451 = sshll.u32 %s5442, 4
          %s5452 = int_to_ptr.vmem [resolvable:$true] %s5451
          %s5453 = sshll.u32 %s5450, 4
          %s5454 = int_to_ptr.hbm [resolvable:$true] %s5453
          %5459 = dma.vmem_to_hbm [thread:$0]  %s5452, 4608, %s5454, %s5439, 128, 128, 8
        $region60: #{tpu_custom_call.1} parent=51 // pred_fallthru
          _
      $region52: #{tpu_custom_call.1} parent=5 // pred_fallthru
        _
      %p5460 = scmp.le.s32.totalorder 2, %s18
      // Predicated region
      $region61: #{tpu_custom_call.1} parent=5 // pred_check
        %p5461 = pneg %p5460
      $region62: #{tpu_custom_call.1} parent=5 // pred_check_branch
        %5463 = sbr.rel (%p5461) target = $region64
      $region63: #{tpu_custom_call.1} parent=5 // pred_region
        %s5464 = ssub.s32 %s18, 2
        // Predicated region
        $region65: #{tpu_custom_call.1} parent=63 // pred_check
          %p5465 = pneg %p220
        $region66: #{tpu_custom_call.1} parent=63 // pred_check_branch
          %5467 = sbr.rel (%p5465) target = $region68
        $region67: #{tpu_custom_call.1} parent=63 // pred_region
          %s5468 = sand.u32 %s205, 1
          %s5469 = scalar_lea.sflag [#allocation6], %s5468
          %s5470 = sand.u32 %s205, 1
          %s5471 = smul.addr %s5470, 288
          %s5472 = scalar_lea.vmem [#allocation7], %s5471
          %5474 = dma.done %s5469, 4608
        $region68: #{tpu_custom_call.1} parent=63 // pred_fallthru
          _
      $region64: #{tpu_custom_call.1} parent=5 // pred_fallthru
        _
    $region6: #{tpu_custom_call.1} parent=1 // loop_footer
      %s22 = sadd.s32 1, %s18
    $region7: #{tpu_custom_call.1} parent=1 // loop_footer_branch
      %17 = sbr.rel target = $region3
    $region8: #{tpu_custom_call.1} parent=1 // loop_exit
      _
    %5475 = vsyncpa [#allocation5], 1
    %s5476 = scalar_lea.sflag [#allocation5], 1
    %5477 = vsyncpa %s5476, 1
    %5478 = vsyncpa [#allocation6], 1
    %s5479 = scalar_lea.sflag [#allocation6], 1
    %5480 = vsyncpa %s5479, 1

</llo_original>
